<compile_context>
chip_gen: v5e
topology: v5e:2x2
jax: 0.10.0
libtpu: 0.0.40
codegen_flags: <defaults>
</compile_context>

<pallas_src>
import functools

import jax
import jax.numpy as jnp
from jax.experimental import pallas as pl
from jax.experimental.pallas import tpu as pltpu

# ----------------------------------------------------------------------------
# synthetic train_cfg (deterministic, stands in for the YACS config)
# ----------------------------------------------------------------------------
CFG = dict(
    GAN_LOSS="Hinge",
    COLOR_JITTER=False,
    PIX_LOSS=True,
    SCALE_FLOW_LOSS=True,
    WEIGHT_DECAY=1e-4,
    LOSS_WEIGHTS=dict(pix=1.0, vgg_feature=1.0, vgg_style=1.0,
                      feat_match=1.0, GAN_gen=1.0, scale_flow=1.0),
    VGG_NUM_PYRAMIDS=2,
    VGG_FEATURE_LAYERS=(0, 1),
    VGG_STYLE_LAYERS=(0, 1),
)
ENABLE_D = CFG["GAN_LOSS"] not in ["None", None, False]

CPAD = 128                       # padded channel width (MXU lane alignment)
VMEM_LIMIT = 32 * 1024 * 1024    # explicit, safe on v5e / v6e / v7x

VGG_FEAT_C = (8, 16)             # real channel counts of the synthetic vgg blocks
DISC_FEAT_C = (16, 16)           # real channel counts of the disc features (equal -> shared scale)


def _round_up(x, m):
    return (x + m - 1) // m * m


def _pick_tm(m, cap=2048):
    """Row tile: whole (padded) extent when small, else `cap`-row tiles (amortizes step overhead)."""
    mp = _round_up(max(m, 8), 8)
    if mp <= cap:
        return mp, mp
    return cap, _round_up(mp, cap)


# ----------------------------------------------------------------------------
# shared in-kernel helpers
# ----------------------------------------------------------------------------
def _conv3(x, w):
    """x: (M, 3) f32, w: (3, 128) f32 -> (M, 128) f32 via VPU FMA broadcasts.

    Replaces the old HBM-materialized 3->128 channel padding; padded lanes stay exactly 0."""
    h = x[:, 0:1] * w[0:1, :]
    h = h + x[:, 1:2] * w[1:2, :]
    h = h + x[:, 2:3] * w[2:3, :]
    return h


# ----------------------------------------------------------------------------
# Pallas kernel 1: generic (M,128)x(128,128) matmul + activation (vert-embed, VGG layer 2)
# ----------------------------------------------------------------------------
def _mm_act_kernel(a_ref, w_ref, o_ref, *, act):
    acc = jnp.dot(a_ref[...], w_ref[...], preferred_element_type=jnp.float32)
    if act == "relu":
        acc = jnp.maximum(acc, 0.0)
    o_ref[...] = acc.astype(o_ref.dtype)


def pallas_matmul_act(a, w_pad, act="id", out_dtype=jnp.float32):
    """a: (M, K) float; w_pad: (Kp, 128) bf16 pre-padded weight -> (M, 128) out_dtype."""
    M, K = a.shape
    Kp, Np = w_pad.shape
    a = a.astype(jnp.bfloat16)
    TM, Mp = _pick_tm(M)
    if Mp != M or K != Kp:
        a = jnp.pad(a, ((0, Mp - M), (0, Kp - K)))
    out = pl.pallas_call(
        functools.partial(_mm_act_kernel, act=act),
        out_shape=jax.ShapeDtypeStruct((Mp, Np), out_dtype),
        grid=(Mp // TM,),
        in_specs=[pl.BlockSpec((TM, Kp), lambda i: (i, 0)),
                  pl.BlockSpec((Kp, Np), lambda i: (0, 0))],
        out_specs=pl.BlockSpec((TM, Np), lambda i: (i, 0)),
        compiler_params=pltpu.CompilerParams(
            dimension_semantics=("parallel",), vmem_limit_bytes=VMEM_LIMIT),
    )(a, w_pad)
    return out[:M] if Mp != M else out


# ----------------------------------------------------------------------------
# Pallas kernel 2: fused generator chain  g1 -> relu -> +vemb -> g2 -> relu -> heads
# ----------------------------------------------------------------------------
def _gen_chain_kernel(x_ref, vemb_ref, w1_ref, w2_ref, wh_ref, o_ref):
    h = _conv3(x_ref[0], w1_ref[...])                              # (TM, 128) f32
    h = jnp.maximum(h, 0.0) + vemb_ref[0]                          # relu, then per-sample vert embed
    h2 = jnp.dot(h.astype(jnp.bfloat16), w2_ref[...], preferred_element_type=jnp.float32)
    h2 = jnp.maximum(h2, 0.0)
    acc = jnp.dot(h2.astype(jnp.bfloat16), wh_ref[...], preferred_element_type=jnp.float32)
    # fused generator heads: cols 0-1 -> 2*tanh (flow), cols >= 2 -> sigmoid
    col = jax.lax.broadcasted_iota(jnp.int32, acc.shape, 1)
    o_ref[0] = jnp.where(col < 2, 2.0 * jnp.tanh(acc), jax.nn.sigmoid(acc))


def generator_fused(src_nhwc, src_verts, dst_verts, gp):
    B, H, W, _ = src_nhwc.shape
    HW = H * W
    verts = jnp.concatenate([src_verts.reshape(B, -1), dst_verts.reshape(B, -1)], axis=-1)
    vemb = pallas_matmul_act(verts, gp["gv"], act="id").reshape(B, 1, CPAD)   # padded cols are 0

    TM, HWp = _pick_tm(HW)
    x = src_nhwc.reshape(B, HW, 3)
    if HWp != HW:
        x = jnp.pad(x, ((0, 0), (0, HWp - HW), (0, 0)))
    heads = pl.pallas_call(
        _gen_chain_kernel,
        out_shape=jax.ShapeDtypeStruct((B, HWp, CPAD), jnp.float32),
        grid=(B, HWp // TM),
        in_specs=[pl.BlockSpec((1, TM, 3), lambda b, m: (b, m, 0)),
                  pl.BlockSpec((1, 1, CPAD), lambda b, m: (b, 0, 0)),
                  pl.BlockSpec((3, CPAD), lambda b, m: (0, 0)),
                  pl.BlockSpec((CPAD, CPAD), lambda b, m: (0, 0)),
                  pl.BlockSpec((CPAD, CPAD), lambda b, m: (0, 0))],
        out_specs=pl.BlockSpec((1, TM, CPAD), lambda b, m: (b, m, 0)),
        compiler_params=pltpu.CompilerParams(
            dimension_semantics=("parallel", "parallel"), vmem_limit_bytes=VMEM_LIMIT),
    )(x, vemb, gp["w1"], gp["w2"], gp["wheads"])
    heads = heads[:, :HW].reshape(B, H, W, CPAD)

    flow_full = heads[..., 0:2]      # cols 0:2 flow, 2:5 warp_rgb, 5:8 out_img, 8:9 alpha, 9:12 rec
    rec_dst_img = heads[..., 9:12]
    flows_fwd = {"x4": avg_pool(flow_full, 4), "x8": avg_pool(flow_full, 8)}
    mesh_flows_fwd = {k: 0.5 * v for k, v in flows_fwd.items()}
    return mesh_flows_fwd, flows_fwd, rec_dst_img


# ----------------------------------------------------------------------------
# Pallas kernel 3: fused discriminator chain + in-kernel feat-match / hinge-GAN partial reduction
# ----------------------------------------------------------------------------
def _disc_chain(x, w1, w2, w3):
    h = _conv3(x, w1)
    f1 = jnp.where(h >= 0.0, h, 0.2 * h)                           # LeakyReLU(0.2)
    h2 = jnp.dot(f1.astype(jnp.bfloat16), w2, preferred_element_type=jnp.float32)
    f2 = jnp.where(h2 >= 0.0, h2, 0.2 * h2)
    lg = jnp.dot(f2.astype(jnp.bfloat16), w3, preferred_element_type=jnp.float32)
    return f1, f2, lg


def _disc_loss_kernel(r_ref, f_ref, w1_ref, w2_ref, w3_ref, o_ref, *, c_fm, c_gan):
    w1, w2, w3 = w1_ref[...], w2_ref[...], w3_ref[...]
    rf1, rf2, _ = _disc_chain(r_ref[0], w1, w2, w3)
    ff1, ff2, flg = _disc_chain(f_ref[0], w1, w2, w3)
    # padded channels / zero-padded rows are exactly zero (no biases), so full-tile sums are exact.
    fm = jnp.sum(jnp.abs(rf1 - ff1)) + jnp.sum(jnp.abs(rf2 - ff2))
    gan = jnp.sum(-flg)                                            # Hinge generator loss: mean(-fake_logit)
    partial = c_fm * fm + c_gan * gan
    o_ref[0, 0] = jnp.full((8, CPAD), partial, jnp.float32)


def disc_loss_pallas(real_img, fake_img, dp, c_fm, c_gan):
    """real/fake: (B, H, W, 3) f32 -> pre-scaled per-tile loss partials (feat-match + GAN)."""
    B, H, W, _ = real_img.shape
    HW = H * W
    TM, HWp = _pick_tm(HW)
    r = real_img.reshape(B, HW, 3)
    f = fake_img.reshape(B, HW, 3)
    if HWp != HW:
        pad = ((0, 0), (0, HWp - HW), (0, 0))
        r, f = jnp.pad(r, pad), jnp.pad(f, pad)
    mt = HWp // TM
    out = pl.pallas_call(
        functools.partial(_disc_loss_kernel, c_fm=c_fm, c_gan=c_gan),
        out_shape=jax.ShapeDtypeStruct((B, mt, 8, CPAD), jnp.float32),
        grid=(B, mt),
        in_specs=[pl.BlockSpec((1, TM, 3), lambda b, m: (b, m, 0)),
                  pl.BlockSpec((1, TM, 3), lambda b, m: (b, m, 0)),
                  pl.BlockSpec((3, CPAD), lambda b, m: (0, 0)),
                  pl.BlockSpec((CPAD, CPAD), lambda b, m: (0, 0)),
                  pl.BlockSpec((CPAD, CPAD), lambda b, m: (0, 0))],
        out_specs=pl.BlockSpec((1, 1, 8, CPAD), lambda b, m: (b, m, 0, 0)),
        compiler_params=pltpu.CompilerParams(
            dimension_semantics=("parallel", "parallel"), vmem_limit_bytes=VMEM_LIMIT),
    )(r, f, dp["d1"], dp["d2"], dp["d3"])
    return out[:, :, 0, 0].reshape(-1)          # (B * mt,) already-scaled partial sums


# ----------------------------------------------------------------------------
# Pallas kernel 4: VGG first layer (3-channel FMA + relu, bf16 out); layer 2 reuses kernel 1
# ----------------------------------------------------------------------------
def _vgg1_kernel(x_ref, w_ref, o_ref):
    h = _conv3(x_ref[0], w_ref[...])
    o_ref[0] = jnp.maximum(h, 0.0).astype(o_ref.dtype)


def vgg_features_pallas(img_both, vp):
    """img_both: (B2, H, W, 3) f32 -> [h1, h2] 128-padded-channel bf16 feature maps."""
    B2, H, W, _ = img_both.shape
    HW = H * W
    TM, HWp = _pick_tm(HW)
    x = img_both.reshape(B2, HW, 3)
    if HWp != HW:
        x = jnp.pad(x, ((0, 0), (0, HWp - HW), (0, 0)))
    h1 = pl.pallas_call(
        _vgg1_kernel,
        out_shape=jax.ShapeDtypeStruct((B2, HWp, CPAD), jnp.bfloat16),
        grid=(B2, HWp // TM),
        in_specs=[pl.BlockSpec((1, TM, 3), lambda b, m: (b, m, 0)),
                  pl.BlockSpec((3, CPAD), lambda b, m: (0, 0))],
        out_specs=pl.BlockSpec((1, TM, CPAD), lambda b, m: (b, m, 0)),
        compiler_params=pltpu.CompilerParams(
            dimension_semantics=("parallel", "parallel"), vmem_limit_bytes=VMEM_LIMIT),
    )(x, vp["v1"])
    h1 = h1[:, :HW].reshape(B2, H, W, CPAD)
    h1_pool = avg_pool(h1, 2)
    H2, W2 = H // 2, W // 2
    h2 = pallas_matmul_act(h1_pool.reshape(B2 * H2 * W2, CPAD), vp["v2"],
                           act="relu", out_dtype=jnp.bfloat16)
    return [h1, h2.reshape(B2, H2, W2, CPAD)]


# ----------------------------------------------------------------------------
# Pallas kernel 5: K-tiled batched Gram matrices (constant VMEM footprint, bf16 streaming)
# ----------------------------------------------------------------------------
def _gram_kernel(f_ref, o_ref, acc_ref):
    @pl.when(pl.program_id(1) == 0)
    def _init():
        acc_ref[...] = jnp.zeros_like(acc_ref)

    f = f_ref[0].astype(jnp.float32)                                # (TK, 128)
    acc_ref[...] += jnp.dot(f.T, f, preferred_element_type=jnp.float32)

    @pl.when(pl.program_id(1) == pl.num_programs(1) - 1)
    def _store():
        o_ref[0] = acc_ref[...]


def gram_pallas(feat):
    """feat: (B2, H, W, 128) -> (B2, 128, 128) raw (unnormalized) Gram matrices."""
    B2, H, W, C = feat.shape
    HW = H * W
    HWp = _round_up(HW, 128)
    TK = 512 if HWp % 512 == 0 else (256 if HWp % 256 == 0 else 128)
    f = feat.reshape(B2, HW, C).astype(jnp.bfloat16)
    if HWp != HW:
        f = jnp.pad(f, ((0, 0), (0, HWp - HW), (0, 0)))             # zero rows contribute 0
    return pl.pallas_call(
        _gram_kernel,
        out_shape=jax.ShapeDtypeStruct((B2, C, C), jnp.float32),
        grid=(B2, HWp // TK),
        in_specs=[pl.BlockSpec((1, TK, C), lambda b, k: (b, k, 0))],
        out_specs=pl.BlockSpec((1, C, C), lambda b, k: (b, 0, 0)),
        scratch_shapes=[pltpu.VMEM((C, C), jnp.float32)],
        compiler_params=pltpu.CompilerParams(
            dimension_semantics=("parallel", "arbitrary"), vmem_limit_bytes=VMEM_LIMIT),
    )(f)


# ----------------------------------------------------------------------------
# Pallas kernel 6: single tiled sum-reduction (consumes ALL remaining loss summands at once)
# ----------------------------------------------------------------------------
def _sum_accum_kernel(x_ref, o_ref, acc_ref):
    @pl.when(pl.program_id(0) == 0)
    def _init():
        acc_ref[...] = jnp.zeros_like(acc_ref)

    acc_ref[...] += jnp.sum(x_ref[...], axis=0, keepdims=True)

    @pl.when(pl.program_id(0) == pl.num_programs(0) - 1)
    def _store():
        o_ref[...] = acc_ref[...]


def pallas_total_sum(vec):
    n = vec.shape[0]
    cols = 128
    rows = _round_up(max(-(-n // cols), 8), 8)
    blk = min(2048, rows)                       # ~1 MiB per step keeps the stream at HBM roofline
    rows_p = _round_up(rows, blk)
    x = jnp.pad(vec, (0, rows_p * cols - n)).reshape(rows_p, cols)
    out = pl.pallas_call(
        _sum_accum_kernel,
        out_shape=jax.ShapeDtypeStruct((1, cols), jnp.float32),
        grid=(rows_p // blk,),
        in_specs=[pl.BlockSpec((blk, cols), lambda i: (i, 0))],
        out_specs=pl.BlockSpec((1, cols), lambda i: (0, 0)),
        scratch_shapes=[pltpu.VMEM((1, cols), jnp.float32)],
        compiler_params=pltpu.CompilerParams(
            dimension_semantics=("arbitrary",), vmem_limit_bytes=VMEM_LIMIT),
    )(x)
    return jnp.sum(out)


def _acc_add(acc, summand, scale):
    acc.append(summand.astype(jnp.float32).reshape(-1) * float(scale))


def reduce_total(acc):
    return pallas_total_sum(jnp.concatenate(acc))


# ----------------------------------------------------------------------------
# glue ops (plain JAX, NHWC)
# ----------------------------------------------------------------------------
def avg_pool(x, f):
    B, H, W, C = x.shape
    return x.reshape(B, H // f, f, W // f, f, C).mean(axis=(2, 4))


def interp_area(x, out_hw):
    return avg_pool(x, x.shape[1] // out_hw[0])


def image_pyramid(img, num_levels):
    out = [img]
    for _ in range(num_levels - 1):
        out.append(avg_pool(out[-1], 2))
    return out


def backward_warp(img, flow):
    # TODO(synk): data-dependent bilinear gather stays in plain JAX (no clean Pallas gather).
    B, H, W, C = img.shape
    ys = jnp.arange(H, dtype=jnp.float32)[:, None]
    xs = jnp.arange(W, dtype=jnp.float32)[None, :]
    x = xs[None] + flow[..., 0]
    y = ys[None] + flow[..., 1]
    x0f, y0f = jnp.floor(x), jnp.floor(y)
    wx, wy = x - x0f, y - y0f
    x0 = jnp.clip(x0f.astype(jnp.int32), 0, W - 1)
    x1 = jnp.clip(x0f.astype(jnp.int32) + 1, 0, W - 1)
    y0 = jnp.clip(y0f.astype(jnp.int32), 0, H - 1)
    y1 = jnp.clip(y0f.astype(jnp.int32) + 1, 0, H - 1)
    img_flat = img.reshape(B, H * W, C)

    def warp_one(imf, x0b, x1b, y0b, y1b, wxb, wyb):
        def g(yi, xi):
            return imf[(yi * W + xi).reshape(-1)].reshape(H, W, C)
        v00, v01 = g(y0b, x0b), g(y0b, x1b)
        v10, v11 = g(y1b, x0b), g(y1b, x1b)
        wxb = wxb[..., None]
        wyb = wyb[..., None]
        return (v00 * (1 - wxb) * (1 - wyb) + v01 * wxb * (1 - wyb)
                + v10 * (1 - wxb) * wyb + v11 * wxb * wyb)

    return jax.vmap(warp_one)(img_flat, x0, x1, y0, y1, wx, wy)


# ----------------------------------------------------------------------------
# FullGenerator loss pipeline
# ----------------------------------------------------------------------------
def _vgg_terms(acc, pred_list, gt_list, vgg_p, lw):
    for p_img, g_img in zip(pred_list, gt_list):
        B = p_img.shape[0]
        both = jnp.concatenate([p_img, jax.lax.stop_gradient(g_img)], axis=0)   # one batched pass
        feats = vgg_features_pallas(both, vgg_p)
        for i, f in enumerate(feats):
            cr = VGG_FEAT_C[i]
            pf = f[:B, ..., :cr].astype(jnp.float32)
            gf = f[B:, ..., :cr].astype(jnp.float32)
            if i in CFG["VGG_FEATURE_LAYERS"]:
                _acc_add(acc, jnp.abs(pf - gf), lw["vgg_feature"] / pf.size)
            if i in CFG["VGG_STYLE_LAYERS"]:
                grams = gram_pallas(f)                                          # raw Grams
                gp, gg = grams[:B, :cr, :cr], grams[B:, :cr, :cr]
                Hh, Ww = f.shape[1], f.shape[2]
                denom = (B * cr * cr) * (cr * Hh * Ww)
                _acc_add(acc, jnp.abs(gp - gg), lw["vgg_style"] / denom)


def _disc_terms(acc, real_img, fake_img, disc_p, lw):
    if CFG["GAN_LOSS"] != "Hinge":
        # TODO(synk): LS GAN loss would need masked padded rows/lanes in the fused kernel.
        raise NotImplementedError("Unrecognized GAN loss: {}".format(CFG["GAN_LOSS"]))
    B, H, W, _ = real_img.shape
    HW = H * W
    c_fm = lw["feat_match"] / float(B * HW * DISC_FEAT_C[0])
    c_gan = lw["GAN_gen"] / float(B * HW)
    partials = disc_loss_pallas(real_img, fake_img, disc_p, c_fm, c_gan)
    _acc_add(acc, partials, 1.0)


def compute_recon_loss(acc, img_pd_dict, img_gt, pp):
    lw = CFG["LOSS_WEIGHTS"]
    img_pd_list = [img_pd_dict[k] for k in img_pd_dict.keys()]

    if CFG["PIX_LOSS"]:
        for v in img_pd_list:
            _acc_add(acc, jnp.abs(v - img_gt), lw["pix"] / v.size)

    pyr_gt = [jax.lax.stop_gradient(x) for x in image_pyramid(img_gt, CFG["VGG_NUM_PYRAMIDS"])]
    for pd in img_pd_list:
        pyr_pd = image_pyramid(pd, CFG["VGG_NUM_PYRAMIDS"])
        _vgg_terms(acc, pyr_pd, pyr_gt, pp["vgg"], lw)

    if ENABLE_D:
        for pd in img_pd_list:
            _disc_terms(acc, img_gt, pd, pp["disc"], lw)


def compute_warp_loss(acc, flows, src_img, dst_img, pp):
    lw = CFG["LOSS_WEIGHTS"]

    if CFG["SCALE_FLOW_LOSS"]:
        max_reso = sorted(flows.keys(), key=lambda r: int(r.replace("x", "")))[0]
        for reso in flows.keys():
            if reso != max_reso:
                flow = flows[reso]
                target = interp_area(flows[max_reso], flow.shape[1:3])
                _acc_add(acc, jnp.square(flow - target), lw["scale_flow"] / flow.size)

    wp_imgs, ms_imgs, key_list = [], [], []
    for reso, flow in flows.items():
        stride = int(reso.replace("x", ""))
        if stride >= 32:
            continue
        if src_img.shape[1:3] != flow.shape[1:3]:
            img_s = interp_area(src_img, flow.shape[1:3])
            img_d = interp_area(dst_img, flow.shape[1:3])
        else:
            img_s, img_d = src_img, dst_img
        wp_imgs.append(backward_warp(img_s, flow))
        ms_imgs.append(img_d)
        key_list.append(reso)

    _vgg_terms(acc, wp_imgs, ms_imgs, pp["vgg"], lw)

    if ENABLE_D:
        for reso, pd_img, ms_img in zip(key_list, wp_imgs, ms_imgs):
            if reso not in pp["ms_disc"]:
                continue
            _disc_terms(acc, ms_img, pd_img, pp["ms_disc"][reso], lw)

    return dict(zip(key_list, wp_imgs)), dict(zip(key_list, ms_imgs))


def full_generator_forward(params, src_img, dst_img, src_verts, dst_verts):
    # external layout is NCHW (PyTorch); convert ONCE to NHWC for the whole pipeline.
    src = jnp.transpose(src_img, (0, 2, 3, 1))
    dst = jnp.transpose(dst_img, (0, 2, 3, 1))
    pp = params["pad"]

    mesh_flows_fwd, flows_fwd, rec_dst_img = generator_fused(src, src_verts, dst_verts, pp["gen"])
    del mesh_flows_fwd                                   # only consumed by summaries (omitted)

    acc = []
    fwd_recon_imgs = {"rec_dst": rec_dst_img}
    compute_recon_loss(acc, fwd_recon_imgs, dst, pp)
    fwd_wp_imgs, fwd_ms_imgs = compute_warp_loss(acc, flows_fwd, src, dst, pp)

    if CFG["WEIGHT_DECAY"] >= 0:
        for w in params["raw_gen"].values():             # all generator params are weights
            _acc_add(acc, jnp.square(w), CFG["WEIGHT_DECAY"])

    g_loss = reduce_total(acc)                           # ONE Pallas reduction for everything else

    to_nchw = lambda x: jnp.transpose(x, (0, 3, 1, 2))   # restore PyTorch layout at the boundary
    return ({k: to_nchw(v) for k, v in fwd_recon_imgs.items()},
            {k: to_nchw(v) for k, v in fwd_wp_imgs.items()},
            {k: to_nchw(v) for k, v in fwd_ms_imgs.items()},
            g_loss)


# ----------------------------------------------------------------------------
# deterministic parameter init + one-time weight padding/casting
# ----------------------------------------------------------------------------
def init_params(key, num_verts):
    def w(k, shape, scale=0.1):
        return scale * jax.random.normal(k, shape, jnp.float32)

    ks = jax.random.split(key, 16)
    vdim = 2 * num_verts * 3
    gen = dict(g1=w(ks[0], (3, 16)), gv=w(ks[1], (vdim, 16)), g2=w(ks[2], (16, 16)),
               gf=w(ks[3], (16, 2)), gw=w(ks[4], (16, 3)), go=w(ks[5], (16, 3)),
               ga=w(ks[6], (16, 1)), gr=w(ks[7], (16, 3)))
    disc = dict(d1=w(ks[8], (3, 16)), d2=w(ks[9], (16, 16)), d3=w(ks[10], (16, 1)))
    ms_disc = {"x4": dict(d1=w(ks[11], (3, 16)), d2=w(ks[12], (16, 16)), d3=w(ks[13], (16, 1)))}
    vgg = dict(v1=w(ks[14], (3, 8)), v2=w(ks[15], (8, 16)))
    return dict(gen=gen, disc=disc, ms_disc=ms_disc, vgg=vgg)


def prepare_params(raw):
    def pw(w):            # (K, N) -> (128, 128) bf16 padded (MXU operand)
        k, n = w.shape
        kp = _round_up(max(k, CPAD), CPAD)
        return jnp.zeros((kp, CPAD), jnp.bfloat16).at[:k, :n].set(w.astype(jnp.bfloat16))

    def pw3(w):           # (3, N) -> (3, 128) f32 (first conv, consumed by in-kernel FMAs)
        k, n = w.shape
        return jnp.zeros((k, CPAD), jnp.float32).at[:, :n].set(w)

    gen = raw["gen"]
    heads = jnp.concatenate([gen["gf"], gen["gw"], gen["go"], gen["ga"], gen["gr"]], axis=1)
    gen_pad = dict(w1=pw3(gen["g1"]), gv=pw(gen["gv"]), w2=pw(gen["g2"]), wheads=pw(heads))
    disc_pad = dict(d1=pw3(raw["disc"]["d1"]), d2=pw(raw["disc"]["d2"]), d3=pw(raw["disc"]["d3"]))
    ms_disc_pad = {r: dict(d1=pw3(d["d1"]), d2=pw(d["d2"]), d3=pw(d["d3"]))
                   for r, d in raw["ms_disc"].items()}
    vgg_pad = dict(v1=pw3(raw["vgg"]["v1"]), v2=pw(raw["vgg"]["v2"]))
    return dict(raw_gen=gen,
                pad=dict(gen=gen_pad, disc=disc_pad, ms_disc=ms_disc_pad, vgg=vgg_pad))


if __name__ == "__main__":
    key = jax.random.PRNGKey(0)
    k1, k2, k3, k4, kp = jax.random.split(key, 5)
    B, H, W, V = 2, 16, 16, 8
    src_img = jax.random.uniform(k1, (B, 3, H, W), jnp.float32)      # normalized to [0, 1]
    dst_img = jax.random.uniform(k2, (B, 3, H, W), jnp.float32)
    src_verts = jax.random.normal(k3, (B, V, 3), jnp.float32)
    dst_verts = jax.random.normal(k4, (B, V, 3), jnp.float32)

    params = prepare_params(init_params(kp, V))

    fwd = jax.jit(full_generator_forward)
    fwd_recon_imgs, fwd_wp_imgs, fwd_ms_imgs, g_loss = fwd(
        params, src_img, dst_img, src_verts, dst_verts)
    g_loss = jax.block_until_ready(g_loss)
    assert bool(jnp.isfinite(g_loss)), "loss is not finite"
    print("KERNEL_OK")
</pallas_src>

<mosaic_0001>
module attributes {stable_mosaic.version = 11 : i64} {
  func.func @_mm_act_kernel(%arg0: i32, %arg1: memref<8x128xbf16, #tpu.memory_space<vmem>>, %arg2: memref<128x128xbf16, #tpu.memory_space<vmem>>, %arg3: memref<8x128xf32, #tpu.memory_space<vmem>>) attributes {dimension_semantics = [#tpu.dimension_semantics<parallel>], iteration_bounds = array<i64: 1>, scalar_prefetch = 0 : i64, scratch_operands = 0 : i64, tpu.core_type = #tpu.core_type<tc>, window_params = [{transform_indices = @transform_0, window_bounds = array<i64: 8, 128>}, {pipeline_mode = #tpu.pipeline_mode<synchronous>, transform_indices = @transform_1, window_bounds = array<i64: 128, 128>}, {transform_indices = @transform_2, window_bounds = array<i64: 8, 128>}]} {
    %c0 = arith.constant 0 : index
    %c0_0 = arith.constant 0 : index
    %0 = vector.load %arg1[%c0, %c0_0] : memref<8x128xbf16, #tpu.memory_space<vmem>>, vector<8x128xbf16>
    %c0_1 = arith.constant 0 : index
    %c0_2 = arith.constant 0 : index
    %1 = vector.load %arg2[%c0_1, %c0_2] : memref<128x128xbf16, #tpu.memory_space<vmem>>, vector<128x128xbf16>
    %cst = arith.constant dense<0.000000e+00> : vector<8x128xf32>
    %2 = tpu.matmul %0, %1, %cst {dimension_numbers = #tpu.dot_dimension_numbers<[1], [0], [0], [1], [0, 0, 1, 1], [], []>} : vector<8x128xbf16>, vector<128x128xbf16>, vector<8x128xf32> -> vector<8x128xf32>
    %c0_3 = arith.constant 0 : index
    %c0_4 = arith.constant 0 : index
    %3 = vector.load %arg3[%c0_3, %c0_4] : memref<8x128xf32, #tpu.memory_space<vmem>>, vector<8x128xf32>
    tpu.vector_store %arg3[%c0_3, %c0_4], %2 {strides = array<i32>} : memref<8x128xf32, #tpu.memory_space<vmem>>, vector<8x128xf32>,
    return
  }
  func.func @transform_0(%arg0: i32) -> (i32, i32) {
    %c0_i32 = arith.constant 0 : i32
    %c0_i32_0 = arith.constant 0 : i32
    return %arg0, %c0_i32 : i32, i32
  }
  func.func @transform_1(%arg0: i32) -> (i32, i32) {
    %c0_i32 = arith.constant 0 : i32
    %c0_i32_0 = arith.constant 0 : i32
    %c0_i32_1 = arith.constant 0 : i32
    return %c0_i32, %c0_i32_0 : i32, i32
  }
  func.func @transform_2(%arg0: i32) -> (i32, i32) {
    %c0_i32 = arith.constant 0 : i32
    %c0_i32_0 = arith.constant 0 : i32
    return %arg0, %c0_i32 : i32, i32
  }
}

module attributes {stable_mosaic.version = 11 : i64} {
  func.func @_gen_chain_kernel(%arg0: i32, %arg1: i32, %arg2: memref<1x256x3xf32, #tpu.memory_space<vmem>>, %arg3: memref<1x1x128xf32, #tpu.memory_space<vmem>>, %arg4: memref<3x128xf32, #tpu.memory_space<vmem>>, %arg5: memref<128x128xbf16, #tpu.memory_space<vmem>>, %arg6: memref<128x128xbf16, #tpu.memory_space<vmem>>, %arg7: memref<1x256x128xf32, #tpu.memory_space<vmem>>) attributes {dimension_semantics = [#tpu.dimension_semantics<parallel>, #tpu.dimension_semantics<parallel>], iteration_bounds = array<i64: 2, 1>, scalar_prefetch = 0 : i64, scratch_operands = 0 : i64, tpu.core_type = #tpu.core_type<tc>, window_params = [{transform_indices = @transform_0, window_bounds = array<i64: 1, 256, 3>}, {transform_indices = @transform_1, window_bounds = array<i64: 1, 1, 128>}, {pipeline_mode = #tpu.pipeline_mode<synchronous>, transform_indices = @transform_2, window_bounds = array<i64: 3, 128>}, {pipeline_mode = #tpu.pipeline_mode<synchronous>, transform_indices = @transform_3, window_bounds = array<i64: 128, 128>}, {pipeline_mode = #tpu.pipeline_mode<synchronous>, transform_indices = @transform_4, window_bounds = array<i64: 128, 128>}, {transform_indices = @transform_5, window_bounds = array<i64: 1, 256, 128>}]} {
    %c0 = arith.constant 0 : index
    %c0_0 = arith.constant 0 : index
    %c0_1 = arith.constant 0 : index
    %0 = vector.load %arg2[%c0, %c0_0, %c0_1] : memref<1x256x3xf32, #tpu.memory_space<vmem>>, vector<1x256x3xf32>
    %1 = vector.shape_cast %0 : vector<1x256x3xf32> to vector<256x3xf32>
    %c0_2 = arith.constant 0 : index
    %c0_3 = arith.constant 0 : index
    %2 = vector.load %arg4[%c0_2, %c0_3] : memref<3x128xf32, #tpu.memory_space<vmem>>, vector<3x128xf32>
    %3 = vector.extract_strided_slice %1 {offsets = [0, 0], sizes = [256, 1], strides = [1, 1]} : vector<256x3xf32> to vector<256x1xf32>
    %4 = vector.extract_strided_slice %2 {offsets = [0, 0], sizes = [1, 128], strides = [1, 1]} : vector<3x128xf32> to vector<1x128xf32>
    %5 = vector.broadcast %3 : vector<256x1xf32> to vector<256x128xf32>
    %6 = vector.broadcast %4 : vector<1x128xf32> to vector<256x128xf32>
    %7 = arith.mulf %5, %6 : vector<256x128xf32>
    %8 = vector.extract_strided_slice %1 {offsets = [0, 1], sizes = [256, 1], strides = [1, 1]} : vector<256x3xf32> to vector<256x1xf32>
    %9 = vector.extract_strided_slice %2 {offsets = [1, 0], sizes = [1, 128], strides = [1, 1]} : vector<3x128xf32> to vector<1x128xf32>
    %10 = vector.broadcast %8 : vector<256x1xf32> to vector<256x128xf32>
    %11 = vector.broadcast %9 : vector<1x128xf32> to vector<256x128xf32>
    %12 = arith.mulf %10, %11 : vector<256x128xf32>
    %13 = arith.addf %7, %12 : vector<256x128xf32>
    %14 = vector.extract_strided_slice %1 {offsets = [0, 2], sizes = [256, 1], strides = [1, 1]} : vector<256x3xf32> to vector<256x1xf32>
    %15 = vector.extract_strided_slice %2 {offsets = [2, 0], sizes = [1, 128], strides = [1, 1]} : vector<3x128xf32> to vector<1x128xf32>
    %16 = vector.broadcast %14 : vector<256x1xf32> to vector<256x128xf32>
    %17 = vector.broadcast %15 : vector<1x128xf32> to vector<256x128xf32>
    %18 = arith.mulf %16, %17 : vector<256x128xf32>
    %19 = arith.addf %13, %18 : vector<256x128xf32>
    %cst = arith.constant 0.000000e+00 : f32
    %20 = vector.broadcast %cst : f32 to vector<256x128xf32>
    %21 = arith.maximumf %19, %20 : vector<256x128xf32>
    %c0_4 = arith.constant 0 : index
    %c0_5 = arith.constant 0 : index
    %c0_6 = arith.constant 0 : index
    %22 = vector.load %arg3[%c0_4, %c0_5, %c0_6] : memref<1x1x128xf32, #tpu.memory_space<vmem>>, vector<1x1x128xf32>
    %23 = vector.shape_cast %22 : vector<1x1x128xf32> to vector<1x128xf32>
    %24 = vector.broadcast %23 : vector<1x128xf32> to vector<256x128xf32>
    %25 = arith.addf %21, %24 : vector<256x128xf32>
    %26 = arith.truncf %25 : vector<256x128xf32> to vector<256x128xbf16>
    %c0_7 = arith.constant 0 : index
    %c0_8 = arith.constant 0 : index
    %27 = vector.load %arg5[%c0_7, %c0_8] : memref<128x128xbf16, #tpu.memory_space<vmem>>, vector<128x128xbf16>
    %cst_9 = arith.constant dense<0.000000e+00> : vector<256x128xf32>
    %28 = tpu.matmul %26, %27, %cst_9 {dimension_numbers = #tpu.dot_dimension_numbers<[1], [0], [0], [1], [0, 0, 1, 1], [], []>} : vector<256x128xbf16>, vector<128x128xbf16>, vector<256x128xf32> -> vector<256x128xf32>
    %cst_10 = arith.constant 0.000000e+00 : f32
    %29 = vector.broadcast %cst_10 : f32 to vector<256x128xf32>
    %30 = arith.maximumf %28, %29 : vector<256x128xf32>
    %31 = arith.truncf %30 : vector<256x128xf32> to vector<256x128xbf16>
    %c0_11 = arith.constant 0 : index
    %c0_12 = arith.constant 0 : index
    %32 = vector.load %arg6[%c0_11, %c0_12] : memref<128x128xbf16, #tpu.memory_space<vmem>>, vector<128x128xbf16>
    %cst_13 = arith.constant dense<0.000000e+00> : vector<256x128xf32>
    %33 = tpu.matmul %31, %32, %cst_13 {dimension_numbers = #tpu.dot_dimension_numbers<[1], [0], [0], [1], [0, 0, 1, 1], [], []>} : vector<256x128xbf16>, vector<128x128xbf16>, vector<256x128xf32> -> vector<256x128xf32>
    %34 = tpu.iota {dimensions = array<i32: 1>} : vector<256x128xi32>
    %c2_i32 = arith.constant 2 : i32
    %35 = vector.broadcast %c2_i32 : i32 to vector<256x128xi32>
    %36 = arith.cmpi slt, %34, %35 : vector<256x128xi32>
    %37 = math.tanh %33 : vector<256x128xf32>
    %cst_14 = arith.constant 2.000000e+00 : f32
    %38 = vector.broadcast %cst_14 : f32 to vector<256x128xf32>
    %39 = arith.mulf %38, %37 : vector<256x128xf32>
    %40 = arith.negf %33 : vector<256x128xf32>
    %41 = math.exp %40 : vector<256x128xf32>
    %cst_15 = arith.constant 1.000000e+00 : f32
    %42 = vector.broadcast %cst_15 : f32 to vector<256x128xf32>
    %43 = arith.addf %42, %41 : vector<256x128xf32>
    %44 = arith.divf %42, %43 : vector<256x128xf32>
    %45 = arith.select %36, %39, %44 : vector<256x128xi1>, vector<256x128xf32>
    %c0_16 = arith.constant 0 : index
    %c0_17 = arith.constant 0 : index
    %c0_18 = arith.constant 0 : index
    %46 = vector.load %arg7[%c0_16, %c0_17, %c0_18] : memref<1x256x128xf32, #tpu.memory_space<vmem>>, vector<1x256x128xf32>
    %47 = vector.shape_cast %46 : vector<1x256x128xf32> to vector<256x128xf32>
    %48 = vector.shape_cast %45 : vector<256x128xf32> to vector<1x256x128xf32>
    tpu.vector_store %arg7[%c0_16, %c0_17, %c0_18], %48 {strides = array<i32>} : memref<1x256x128xf32, #tpu.memory_space<vmem>>, vector<1x256x128xf32>,
    return
  }
  func.func @transform_0(%arg0: i32, %arg1: i32) -> (i32, i32, i32) {
    %c0_i32 = arith.constant 0 : i32
    %c0_i32_0 = arith.constant 0 : i32
    return %arg0, %arg1, %c0_i32 : i32, i32, i32
  }
  func.func @transform_1(%arg0: i32, %arg1: i32) -> (i32, i32, i32) {
    %c0_i32 = arith.constant 0 : i32
    %c0_i32_0 = arith.constant 0 : i32
    %c0_i32_1 = arith.constant 0 : i32
    return %arg0, %c0_i32, %c0_i32_0 : i32, i32, i32
  }
  func.func @transform_2(%arg0: i32, %arg1: i32) -> (i32, i32) {
    %c0_i32 = arith.constant 0 : i32
    %c0_i32_0 = arith.constant 0 : i32
    %c0_i32_1 = arith.constant 0 : i32
    return %c0_i32, %c0_i32_0 : i32, i32
  }
  func.func @transform_3(%arg0: i32, %arg1: i32) -> (i32, i32) {
    %c0_i32 = arith.constant 0 : i32
    %c0_i32_0 = arith.constant 0 : i32
    %c0_i32_1 = arith.constant 0 : i32
    return %c0_i32, %c0_i32_0 : i32, i32
  }
  func.func @transform_4(%arg0: i32, %arg1: i32) -> (i32, i32) {
    %c0_i32 = arith.constant 0 : i32
    %c0_i32_0 = arith.constant 0 : i32
    %c0_i32_1 = arith.constant 0 : i32
    return %c0_i32, %c0_i32_0 : i32, i32
  }
  func.func @transform_5(%arg0: i32, %arg1: i32) -> (i32, i32, i32) {
    %c0_i32 = arith.constant 0 : i32
    %c0_i32_0 = arith.constant 0 : i32
    return %arg0, %arg1, %c0_i32 : i32, i32, i32
  }
}

module attributes {stable_mosaic.version = 11 : i64} {
  func.func @_vgg1_kernel(%arg0: i32, %arg1: i32, %arg2: memref<1x8x3xf32, #tpu.memory_space<vmem>>, %arg3: memref<3x128xf32, #tpu.memory_space<vmem>>, %arg4: memref<1x8x128xbf16, #tpu.memory_space<vmem>>) attributes {dimension_semantics = [#tpu.dimension_semantics<parallel>, #tpu.dimension_semantics<parallel>], iteration_bounds = array<i64: 4, 1>, scalar_prefetch = 0 : i64, scratch_operands = 0 : i64, tpu.core_type = #tpu.core_type<tc>, window_params = [{transform_indices = @transform_0, window_bounds = array<i64: 1, 8, 3>}, {pipeline_mode = #tpu.pipeline_mode<synchronous>, transform_indices = @transform_1, window_bounds = array<i64: 3, 128>}, {transform_indices = @transform_2, window_bounds = array<i64: 1, 8, 128>}]} {
    %c0 = arith.constant 0 : index
    %c0_0 = arith.constant 0 : index
    %c0_1 = arith.constant 0 : index
    %0 = vector.load %arg2[%c0, %c0_0, %c0_1] : memref<1x8x3xf32, #tpu.memory_space<vmem>>, vector<1x8x3xf32>
    %1 = vector.shape_cast %0 : vector<1x8x3xf32> to vector<8x3xf32>
    %c0_2 = arith.constant 0 : index
    %c0_3 = arith.constant 0 : index
    %2 = vector.load %arg3[%c0_2, %c0_3] : memref<3x128xf32, #tpu.memory_space<vmem>>, vector<3x128xf32>
    %3 = vector.extract_strided_slice %1 {offsets = [0, 0], sizes = [8, 1], strides = [1, 1]} : vector<8x3xf32> to vector<8x1xf32>
    %4 = vector.extract_strided_slice %2 {offsets = [0, 0], sizes = [1, 128], strides = [1, 1]} : vector<3x128xf32> to vector<1x128xf32>
    %5 = vector.broadcast %3 : vector<8x1xf32> to vector<8x128xf32>
    %6 = vector.broadcast %4 : vector<1x128xf32> to vector<8x128xf32>
    %7 = arith.mulf %5, %6 : vector<8x128xf32>
    %8 = vector.extract_strided_slice %1 {offsets = [0, 1], sizes = [8, 1], strides = [1, 1]} : vector<8x3xf32> to vector<8x1xf32>
    %9 = vector.extract_strided_slice %2 {offsets = [1, 0], sizes = [1, 128], strides = [1, 1]} : vector<3x128xf32> to vector<1x128xf32>
    %10 = vector.broadcast %8 : vector<8x1xf32> to vector<8x128xf32>
    %11 = vector.broadcast %9 : vector<1x128xf32> to vector<8x128xf32>
    %12 = arith.mulf %10, %11 : vector<8x128xf32>
    %13 = arith.addf %7, %12 : vector<8x128xf32>
    %14 = vector.extract_strided_slice %1 {offsets = [0, 2], sizes = [8, 1], strides = [1, 1]} : vector<8x3xf32> to vector<8x1xf32>
    %15 = vector.extract_strided_slice %2 {offsets = [2, 0], sizes = [1, 128], strides = [1, 1]} : vector<3x128xf32> to vector<1x128xf32>
    %16 = vector.broadcast %14 : vector<8x1xf32> to vector<8x128xf32>
    %17 = vector.broadcast %15 : vector<1x128xf32> to vector<8x128xf32>
    %18 = arith.mulf %16, %17 : vector<8x128xf32>
    %19 = arith.addf %13, %18 : vector<8x128xf32>
    %cst = arith.constant 0.000000e+00 : f32
    %20 = vector.broadcast %cst : f32 to vector<8x128xf32>
    %21 = arith.maximumf %19, %20 : vector<8x128xf32>
    %22 = arith.truncf %21 : vector<8x128xf32> to vector<8x128xbf16>
    %c0_4 = arith.constant 0 : index
    %c0_5 = arith.constant 0 : index
    %c0_6 = arith.constant 0 : index
    %23 = vector.load %arg4[%c0_4, %c0_5, %c0_6] : memref<1x8x128xbf16, #tpu.memory_space<vmem>>, vector<1x8x128xbf16>
    %24 = vector.shape_cast %23 : vector<1x8x128xbf16> to vector<8x128xbf16>
    %25 = vector.shape_cast %22 : vector<8x128xbf16> to vector<1x8x128xbf16>
    tpu.vector_store %arg4[%c0_4, %c0_5, %c0_6], %25 {strides = array<i32>} : memref<1x8x128xbf16, #tpu.memory_space<vmem>>, vector<1x8x128xbf16>,
    return
  }
  func.func @transform_0(%arg0: i32, %arg1: i32) -> (i32, i32, i32) {
    %c0_i32 = arith.constant 0 : i32
    %c0_i32_0 = arith.constant 0 : i32
    return %arg0, %arg1, %c0_i32 : i32, i32, i32
  }
  func.func @transform_1(%arg0: i32, %arg1: i32) -> (i32, i32) {
    %c0_i32 = arith.constant 0 : i32
    %c0_i32_0 = arith.constant 0 : i32
    %c0_i32_1 = arith.constant 0 : i32
    return %c0_i32, %c0_i32_0 : i32, i32
  }
  func.func @transform_2(%arg0: i32, %arg1: i32) -> (i32, i32, i32) {
    %c0_i32 = arith.constant 0 : i32
    %c0_i32_0 = arith.constant 0 : i32
    return %arg0, %arg1, %c0_i32 : i32, i32, i32
  }
}

module attributes {stable_mosaic.version = 11 : i64} {
  func.func @_mm_act_kernel(%arg0: i32, %arg1: memref<8x128xbf16, #tpu.memory_space<vmem>>, %arg2: memref<128x128xbf16, #tpu.memory_space<vmem>>, %arg3: memref<8x128xbf16, #tpu.memory_space<vmem>>) attributes {dimension_semantics = [#tpu.dimension_semantics<parallel>], iteration_bounds = array<i64: 1>, scalar_prefetch = 0 : i64, scratch_operands = 0 : i64, tpu.core_type = #tpu.core_type<tc>, window_params = [{transform_indices = @transform_0, window_bounds = array<i64: 8, 128>}, {pipeline_mode = #tpu.pipeline_mode<synchronous>, transform_indices = @transform_1, window_bounds = array<i64: 128, 128>}, {transform_indices = @transform_2, window_bounds = array<i64: 8, 128>}]} {
    %c0 = arith.constant 0 : index
    %c0_0 = arith.constant 0 : index
    %0 = vector.load %arg1[%c0, %c0_0] : memref<8x128xbf16, #tpu.memory_space<vmem>>, vector<8x128xbf16>
    %c0_1 = arith.constant 0 : index
    %c0_2 = arith.constant 0 : index
    %1 = vector.load %arg2[%c0_1, %c0_2] : memref<128x128xbf16, #tpu.memory_space<vmem>>, vector<128x128xbf16>
    %cst = arith.constant dense<0.000000e+00> : vector<8x128xf32>
    %2 = tpu.matmul %0, %1, %cst {dimension_numbers = #tpu.dot_dimension_numbers<[1], [0], [0], [1], [0, 0, 1, 1], [], []>} : vector<8x128xbf16>, vector<128x128xbf16>, vector<8x128xf32> -> vector<8x128xf32>
    %cst_3 = arith.constant 0.000000e+00 : f32
    %3 = vector.broadcast %cst_3 : f32 to vector<8x128xf32>
    %4 = arith.maximumf %2, %3 : vector<8x128xf32>
    %5 = arith.truncf %4 : vector<8x128xf32> to vector<8x128xbf16>
    %c0_4 = arith.constant 0 : index
    %c0_5 = arith.constant 0 : index
    %6 = vector.load %arg3[%c0_4, %c0_5] : memref<8x128xbf16, #tpu.memory_space<vmem>>, vector<8x128xbf16>
    tpu.vector_store %arg3[%c0_4, %c0_5], %5 {strides = array<i32>} : memref<8x128xbf16, #tpu.memory_space<vmem>>, vector<8x128xbf16>,
    return
  }
  func.func @transform_0(%arg0: i32) -> (i32, i32) {
    %c0_i32 = arith.constant 0 : i32
    %c0_i32_0 = arith.constant 0 : i32
    return %arg0, %c0_i32 : i32, i32
  }
  func.func @transform_1(%arg0: i32) -> (i32, i32) {
    %c0_i32 = arith.constant 0 : i32
    %c0_i32_0 = arith.constant 0 : i32
    %c0_i32_1 = arith.constant 0 : i32
    return %c0_i32, %c0_i32_0 : i32, i32
  }
  func.func @transform_2(%arg0: i32) -> (i32, i32) {
    %c0_i32 = arith.constant 0 : i32
    %c0_i32_0 = arith.constant 0 : i32
    return %arg0, %c0_i32 : i32, i32
  }
}

module attributes {stable_mosaic.version = 11 : i64} {
  func.func @_disc_loss_kernel(%arg0: i32, %arg1: i32, %arg2: memref<1x16x3xf32, #tpu.memory_space<vmem>>, %arg3: memref<1x16x3xf32, #tpu.memory_space<vmem>>, %arg4: memref<3x128xf32, #tpu.memory_space<vmem>>, %arg5: memref<128x128xbf16, #tpu.memory_space<vmem>>, %arg6: memref<128x128xbf16, #tpu.memory_space<vmem>>, %arg7: memref<1x1x8x128xf32, #tpu.memory_space<vmem>>) attributes {dimension_semantics = [#tpu.dimension_semantics<parallel>, #tpu.dimension_semantics<parallel>], iteration_bounds = array<i64: 2, 1>, scalar_prefetch = 0 : i64, scratch_operands = 0 : i64, tpu.core_type = #tpu.core_type<tc>, window_params = [{transform_indices = @transform_0, window_bounds = array<i64: 1, 16, 3>}, {transform_indices = @transform_1, window_bounds = array<i64: 1, 16, 3>}, {pipeline_mode = #tpu.pipeline_mode<synchronous>, transform_indices = @transform_2, window_bounds = array<i64: 3, 128>}, {pipeline_mode = #tpu.pipeline_mode<synchronous>, transform_indices = @transform_3, window_bounds = array<i64: 128, 128>}, {pipeline_mode = #tpu.pipeline_mode<synchronous>, transform_indices = @transform_4, window_bounds = array<i64: 128, 128>}, {transform_indices = @transform_5, window_bounds = array<i64: 1, 1, 8, 128>}]} {
    %c0 = arith.constant 0 : index
    %c0_0 = arith.constant 0 : index
    %0 = vector.load %arg4[%c0, %c0_0] : memref<3x128xf32, #tpu.memory_space<vmem>>, vector<3x128xf32>
    %c0_1 = arith.constant 0 : index
    %c0_2 = arith.constant 0 : index
    %1 = vector.load %arg5[%c0_1, %c0_2] : memref<128x128xbf16, #tpu.memory_space<vmem>>, vector<128x128xbf16>
    %c0_3 = arith.constant 0 : index
    %c0_4 = arith.constant 0 : index
    %2 = vector.load %arg6[%c0_3, %c0_4] : memref<128x128xbf16, #tpu.memory_space<vmem>>, vector<128x128xbf16>
    %c0_5 = arith.constant 0 : index
    %c0_6 = arith.constant 0 : index
    %c0_7 = arith.constant 0 : index
    %3 = vector.load %arg2[%c0_5, %c0_6, %c0_7] : memref<1x16x3xf32, #tpu.memory_space<vmem>>, vector<1x16x3xf32>
    %4 = vector.shape_cast %3 : vector<1x16x3xf32> to vector<16x3xf32>
    %5 = vector.extract_strided_slice %4 {offsets = [0, 0], sizes = [16, 1], strides = [1, 1]} : vector<16x3xf32> to vector<16x1xf32>
    %6 = vector.extract_strided_slice %0 {offsets = [0, 0], sizes = [1, 128], strides = [1, 1]} : vector<3x128xf32> to vector<1x128xf32>
    %7 = vector.broadcast %5 : vector<16x1xf32> to vector<16x128xf32>
    %8 = vector.broadcast %6 : vector<1x128xf32> to vector<16x128xf32>
    %9 = arith.mulf %7, %8 : vector<16x128xf32>
    %10 = vector.extract_strided_slice %4 {offsets = [0, 1], sizes = [16, 1], strides = [1, 1]} : vector<16x3xf32> to vector<16x1xf32>
    %11 = vector.extract_strided_slice %0 {offsets = [1, 0], sizes = [1, 128], strides = [1, 1]} : vector<3x128xf32> to vector<1x128xf32>
    %12 = vector.broadcast %10 : vector<16x1xf32> to vector<16x128xf32>
    %13 = vector.broadcast %11 : vector<1x128xf32> to vector<16x128xf32>
    %14 = arith.mulf %12, %13 : vector<16x128xf32>
    %15 = arith.addf %9, %14 : vector<16x128xf32>
    %16 = vector.extract_strided_slice %4 {offsets = [0, 2], sizes = [16, 1], strides = [1, 1]} : vector<16x3xf32> to vector<16x1xf32>
    %17 = vector.extract_strided_slice %0 {offsets = [2, 0], sizes = [1, 128], strides = [1, 1]} : vector<3x128xf32> to vector<1x128xf32>
    %18 = vector.broadcast %16 : vector<16x1xf32> to vector<16x128xf32>
    %19 = vector.broadcast %17 : vector<1x128xf32> to vector<16x128xf32>
    %20 = arith.mulf %18, %19 : vector<16x128xf32>
    %21 = arith.addf %15, %20 : vector<16x128xf32>
    %cst = arith.constant 0.000000e+00 : f32
    %22 = vector.broadcast %cst : f32 to vector<16x128xf32>
    %23 = arith.cmpf oge, %21, %22 : vector<16x128xf32>
    %cst_8 = arith.constant 2.000000e-01 : f32
    %24 = vector.broadcast %cst_8 : f32 to vector<16x128xf32>
    %25 = arith.mulf %24, %21 : vector<16x128xf32>
    %26 = arith.select %23, %21, %25 : vector<16x128xi1>, vector<16x128xf32>
    %27 = arith.truncf %26 : vector<16x128xf32> to vector<16x128xbf16>
    %cst_9 = arith.constant dense<0.000000e+00> : vector<16x128xf32>
    %28 = tpu.matmul %27, %1, %cst_9 {dimension_numbers = #tpu.dot_dimension_numbers<[1], [0], [0], [1], [0, 0, 1, 1], [], []>} : vector<16x128xbf16>, vector<128x128xbf16>, vector<16x128xf32> -> vector<16x128xf32>
    %cst_10 = arith.constant 0.000000e+00 : f32
    %29 = vector.broadcast %cst_10 : f32 to vector<16x128xf32>
    %30 = arith.cmpf oge, %28, %29 : vector<16x128xf32>
    %cst_11 = arith.constant 2.000000e-01 : f32
    %31 = vector.broadcast %cst_11 : f32 to vector<16x128xf32>
    %32 = arith.mulf %31, %28 : vector<16x128xf32>
    %33 = arith.select %30, %28, %32 : vector<16x128xi1>, vector<16x128xf32>
    %c0_12 = arith.constant 0 : index
    %c0_13 = arith.constant 0 : index
    %c0_14 = arith.constant 0 : index
    %34 = vector.load %arg3[%c0_12, %c0_13, %c0_14] : memref<1x16x3xf32, #tpu.memory_space<vmem>>, vector<1x16x3xf32>
    %35 = vector.shape_cast %34 : vector<1x16x3xf32> to vector<16x3xf32>
    %36 = vector.extract_strided_slice %35 {offsets = [0, 0], sizes = [16, 1], strides = [1, 1]} : vector<16x3xf32> to vector<16x1xf32>
    %37 = vector.extract_strided_slice %0 {offsets = [0, 0], sizes = [1, 128], strides = [1, 1]} : vector<3x128xf32> to vector<1x128xf32>
    %38 = vector.broadcast %36 : vector<16x1xf32> to vector<16x128xf32>
    %39 = vector.broadcast %37 : vector<1x128xf32> to vector<16x128xf32>
    %40 = arith.mulf %38, %39 : vector<16x128xf32>
    %41 = vector.extract_strided_slice %35 {offsets = [0, 1], sizes = [16, 1], strides = [1, 1]} : vector<16x3xf32> to vector<16x1xf32>
    %42 = vector.extract_strided_slice %0 {offsets = [1, 0], sizes = [1, 128], strides = [1, 1]} : vector<3x128xf32> to vector<1x128xf32>
    %43 = vector.broadcast %41 : vector<16x1xf32> to vector<16x128xf32>
    %44 = vector.broadcast %42 : vector<1x128xf32> to vector<16x128xf32>
    %45 = arith.mulf %43, %44 : vector<16x128xf32>
    %46 = arith.addf %40, %45 : vector<16x128xf32>
    %47 = vector.extract_strided_slice %35 {offsets = [0, 2], sizes = [16, 1], strides = [1, 1]} : vector<16x3xf32> to vector<16x1xf32>
    %48 = vector.extract_strided_slice %0 {offsets = [2, 0], sizes = [1, 128], strides = [1, 1]} : vector<3x128xf32> to vector<1x128xf32>
    %49 = vector.broadcast %47 : vector<16x1xf32> to vector<16x128xf32>
    %50 = vector.broadcast %48 : vector<1x128xf32> to vector<16x128xf32>
    %51 = arith.mulf %49, %50 : vector<16x128xf32>
    %52 = arith.addf %46, %51 : vector<16x128xf32>
    %cst_15 = arith.constant 0.000000e+00 : f32
    %53 = vector.broadcast %cst_15 : f32 to vector<16x128xf32>
    %54 = arith.cmpf oge, %52, %53 : vector<16x128xf32>
    %cst_16 = arith.constant 2.000000e-01 : f32
    %55 = vector.broadcast %cst_16 : f32 to vector<16x128xf32>
    %56 = arith.mulf %55, %52 : vector<16x128xf32>
    %57 = arith.select %54, %52, %56 : vector<16x128xi1>, vector<16x128xf32>
    %58 = arith.truncf %57 : vector<16x128xf32> to vector<16x128xbf16>
    %cst_17 = arith.constant dense<0.000000e+00> : vector<16x128xf32>
    %59 = tpu.matmul %58, %1, %cst_17 {dimension_numbers = #tpu.dot_dimension_numbers<[1], [0], [0], [1], [0, 0, 1, 1], [], []>} : vector<16x128xbf16>, vector<128x128xbf16>, vector<16x128xf32> -> vector<16x128xf32>
    %cst_18 = arith.constant 0.000000e+00 : f32
    %60 = vector.broadcast %cst_18 : f32 to vector<16x128xf32>
    %61 = arith.cmpf oge, %59, %60 : vector<16x128xf32>
    %cst_19 = arith.constant 2.000000e-01 : f32
    %62 = vector.broadcast %cst_19 : f32 to vector<16x128xf32>
    %63 = arith.mulf %62, %59 : vector<16x128xf32>
    %64 = arith.select %61, %59, %63 : vector<16x128xi1>, vector<16x128xf32>
    %65 = arith.truncf %64 : vector<16x128xf32> to vector<16x128xbf16>
    %cst_20 = arith.constant dense<0.000000e+00> : vector<16x128xf32>
    %66 = tpu.matmul %65, %2, %cst_20 {dimension_numbers = #tpu.dot_dimension_numbers<[1], [0], [0], [1], [0, 0, 1, 1], [], []>} : vector<16x128xbf16>, vector<128x128xbf16>, vector<16x128xf32> -> vector<16x128xf32>
    %67 = arith.subf %26, %57 : vector<16x128xf32>
    %68 = math.absf %67 : vector<16x128xf32>
    %69 = vector.shape_cast %68 : vector<16x128xf32> to vector<1x16x128xf32>
    %cst_21 = arith.constant dense<0.000000e+00> : vector<1xf32>
    %70 = vector.multi_reduction <add>, %69, %cst_21 [1, 2] : vector<1x16x128xf32> to vector<1xf32>
    %71 = vector.shape_cast %70 : vector<1xf32> to vector<1x1x1xf32>
    %72 = vector.extract %71[0, 0, 0] : f32 from vector<1x1x1xf32>
    %73 = arith.subf %33, %64 : vector<16x128xf32>
    %74 = math.absf %73 : vector<16x128xf32>
    %75 = vector.shape_cast %74 : vector<16x128xf32> to vector<1x16x128xf32>
    %cst_22 = arith.constant dense<0.000000e+00> : vector<1xf32>
    %76 = vector.multi_reduction <add>, %75, %cst_22 [1, 2] : vector<1x16x128xf32> to vector<1xf32>
    %77 = vector.shape_cast %76 : vector<1xf32> to vector<1x1x1xf32>
    %78 = vector.extract %77[0, 0, 0] : f32 from vector<1x1x1xf32>
    %79 = arith.addf %72, %78 : f32
    %cst_23 = arith.constant 0.000000e+00 : f32
    %80 = vector.broadcast %cst_23 : f32 to vector<16x128xf32>
    %81 = arith.subf %80, %66 : vector<16x128xf32>
    %82 = vector.shape_cast %81 : vector<16x128xf32> to vector<1x16x128xf32>
    %cst_24 = arith.constant dense<0.000000e+00> : vector<1xf32>
    %83 = vector.multi_reduction <add>, %82, %cst_24 [1, 2] : vector<1x16x128xf32> to vector<1xf32>
    %84 = vector.shape_cast %83 : vector<1xf32> to vector<1x1x1xf32>
    %85 = vector.extract %84[0, 0, 0] : f32 from vector<1x1x1xf32>
    %cst_25 = arith.constant 0.001953125 : f32
    %86 = arith.mulf %cst_25, %79 : f32
    %cst_26 = arith.constant 3.125000e-02 : f32
    %87 = arith.mulf %cst_26, %85 : f32
    %88 = arith.addf %86, %87 : f32
    %89 = vector.broadcast %88 : f32 to vector<8x128xf32>
    %c0_27 = arith.constant 0 : index
    %c0_28 = arith.constant 0 : index
    %c0_29 = arith.constant 0 : index
    %c0_30 = arith.constant 0 : index
    %90 = vector.load %arg7[%c0_27, %c0_28, %c0_29, %c0_30] : memref<1x1x8x128xf32, #tpu.memory_space<vmem>>, vector<1x1x8x128xf32>
    %91 = vector.shape_cast %90 : vector<1x1x8x128xf32> to vector<8x128xf32>
    %92 = vector.shape_cast %89 : vector<8x128xf32> to vector<1x1x8x128xf32>
    tpu.vector_store %arg7[%c0_27, %c0_28, %c0_29, %c0_30], %92 {strides = array<i32>} : memref<1x1x8x128xf32, #tpu.memory_space<vmem>>, vector<1x1x8x128xf32>,
    return
  }
  func.func @transform_0(%arg0: i32, %arg1: i32) -> (i32, i32, i32) {
    %c0_i32 = arith.constant 0 : i32
    %c0_i32_0 = arith.constant 0 : i32
    return %arg0, %arg1, %c0_i32 : i32, i32, i32
  }
  func.func @transform_1(%arg0: i32, %arg1: i32) -> (i32, i32, i32) {
    %c0_i32 = arith.constant 0 : i32
    %c0_i32_0 = arith.constant 0 : i32
    return %arg0, %arg1, %c0_i32 : i32, i32, i32
  }
  func.func @transform_2(%arg0: i32, %arg1: i32) -> (i32, i32) {
    %c0_i32 = arith.constant 0 : i32
    %c0_i32_0 = arith.constant 0 : i32
    %c0_i32_1 = arith.constant 0 : i32
    return %c0_i32, %c0_i32_0 : i32, i32
  }
  func.func @transform_3(%arg0: i32, %arg1: i32) -> (i32, i32) {
    %c0_i32 = arith.constant 0 : i32
    %c0_i32_0 = arith.constant 0 : i32
    %c0_i32_1 = arith.constant 0 : i32
    return %c0_i32, %c0_i32_0 : i32, i32
  }
  func.func @transform_4(%arg0: i32, %arg1: i32) -> (i32, i32) {
    %c0_i32 = arith.constant 0 : i32
    %c0_i32_0 = arith.constant 0 : i32
    %c0_i32_1 = arith.constant 0 : i32
    return %c0_i32, %c0_i32_0 : i32, i32
  }
  func.func @transform_5(%arg0: i32, %arg1: i32) -> (i32, i32, i32, i32) {
    %c0_i32 = arith.constant 0 : i32
    %c0_i32_0 = arith.constant 0 : i32
    %c0_i32_1 = arith.constant 0 : i32
    return %arg0, %arg1, %c0_i32, %c0_i32_0 : i32, i32, i32, i32
  }
}

module attributes {stable_mosaic.version = 11 : i64} {
  func.func @_vgg1_kernel(%arg0: i32, %arg1: i32, %arg2: memref<1x16x3xf32, #tpu.memory_space<vmem>>, %arg3: memref<3x128xf32, #tpu.memory_space<vmem>>, %arg4: memref<1x16x128xbf16, #tpu.memory_space<vmem>>) attributes {dimension_semantics = [#tpu.dimension_semantics<parallel>, #tpu.dimension_semantics<parallel>], iteration_bounds = array<i64: 4, 1>, scalar_prefetch = 0 : i64, scratch_operands = 0 : i64, tpu.core_type = #tpu.core_type<tc>, window_params = [{transform_indices = @transform_0, window_bounds = array<i64: 1, 16, 3>}, {pipeline_mode = #tpu.pipeline_mode<synchronous>, transform_indices = @transform_1, window_bounds = array<i64: 3, 128>}, {transform_indices = @transform_2, window_bounds = array<i64: 1, 16, 128>}]} {
    %c0 = arith.constant 0 : index
    %c0_0 = arith.constant 0 : index
    %c0_1 = arith.constant 0 : index
    %0 = vector.load %arg2[%c0, %c0_0, %c0_1] : memref<1x16x3xf32, #tpu.memory_space<vmem>>, vector<1x16x3xf32>
    %1 = vector.shape_cast %0 : vector<1x16x3xf32> to vector<16x3xf32>
    %c0_2 = arith.constant 0 : index
    %c0_3 = arith.constant 0 : index
    %2 = vector.load %arg3[%c0_2, %c0_3] : memref<3x128xf32, #tpu.memory_space<vmem>>, vector<3x128xf32>
    %3 = vector.extract_strided_slice %1 {offsets = [0, 0], sizes = [16, 1], strides = [1, 1]} : vector<16x3xf32> to vector<16x1xf32>
    %4 = vector.extract_strided_slice %2 {offsets = [0, 0], sizes = [1, 128], strides = [1, 1]} : vector<3x128xf32> to vector<1x128xf32>
    %5 = vector.broadcast %3 : vector<16x1xf32> to vector<16x128xf32>
    %6 = vector.broadcast %4 : vector<1x128xf32> to vector<16x128xf32>
    %7 = arith.mulf %5, %6 : vector<16x128xf32>
    %8 = vector.extract_strided_slice %1 {offsets = [0, 1], sizes = [16, 1], strides = [1, 1]} : vector<16x3xf32> to vector<16x1xf32>
    %9 = vector.extract_strided_slice %2 {offsets = [1, 0], sizes = [1, 128], strides = [1, 1]} : vector<3x128xf32> to vector<1x128xf32>
    %10 = vector.broadcast %8 : vector<16x1xf32> to vector<16x128xf32>
    %11 = vector.broadcast %9 : vector<1x128xf32> to vector<16x128xf32>
    %12 = arith.mulf %10, %11 : vector<16x128xf32>
    %13 = arith.addf %7, %12 : vector<16x128xf32>
    %14 = vector.extract_strided_slice %1 {offsets = [0, 2], sizes = [16, 1], strides = [1, 1]} : vector<16x3xf32> to vector<16x1xf32>
    %15 = vector.extract_strided_slice %2 {offsets = [2, 0], sizes = [1, 128], strides = [1, 1]} : vector<3x128xf32> to vector<1x128xf32>
    %16 = vector.broadcast %14 : vector<16x1xf32> to vector<16x128xf32>
    %17 = vector.broadcast %15 : vector<1x128xf32> to vector<16x128xf32>
    %18 = arith.mulf %16, %17 : vector<16x128xf32>
    %19 = arith.addf %13, %18 : vector<16x128xf32>
    %cst = arith.constant 0.000000e+00 : f32
    %20 = vector.broadcast %cst : f32 to vector<16x128xf32>
    %21 = arith.maximumf %19, %20 : vector<16x128xf32>
    %22 = arith.truncf %21 : vector<16x128xf32> to vector<16x128xbf16>
    %c0_4 = arith.constant 0 : index
    %c0_5 = arith.constant 0 : index
    %c0_6 = arith.constant 0 : index
    %23 = vector.load %arg4[%c0_4, %c0_5, %c0_6] : memref<1x16x128xbf16, #tpu.memory_space<vmem>>, vector<1x16x128xbf16>
    %24 = vector.shape_cast %23 : vector<1x16x128xbf16> to vector<16x128xbf16>
    %25 = vector.shape_cast %22 : vector<16x128xbf16> to vector<1x16x128xbf16>
    tpu.vector_store %arg4[%c0_4, %c0_5, %c0_6], %25 {strides = array<i32>} : memref<1x16x128xbf16, #tpu.memory_space<vmem>>, vector<1x16x128xbf16>,
    return
  }
  func.func @transform_0(%arg0: i32, %arg1: i32) -> (i32, i32, i32) {
    %c0_i32 = arith.constant 0 : i32
    %c0_i32_0 = arith.constant 0 : i32
    return %arg0, %arg1, %c0_i32 : i32, i32, i32
  }
  func.func @transform_1(%arg0: i32, %arg1: i32) -> (i32, i32) {
    %c0_i32 = arith.constant 0 : i32
    %c0_i32_0 = arith.constant 0 : i32
    %c0_i32_1 = arith.constant 0 : i32
    return %c0_i32, %c0_i32_0 : i32, i32
  }
  func.func @transform_2(%arg0: i32, %arg1: i32) -> (i32, i32, i32) {
    %c0_i32 = arith.constant 0 : i32
    %c0_i32_0 = arith.constant 0 : i32
    return %arg0, %arg1, %c0_i32 : i32, i32, i32
  }
}

module attributes {stable_mosaic.version = 11 : i64} {
  func.func @_mm_act_kernel(%arg0: i32, %arg1: memref<16x128xbf16, #tpu.memory_space<vmem>>, %arg2: memref<128x128xbf16, #tpu.memory_space<vmem>>, %arg3: memref<16x128xbf16, #tpu.memory_space<vmem>>) attributes {dimension_semantics = [#tpu.dimension_semantics<parallel>], iteration_bounds = array<i64: 1>, scalar_prefetch = 0 : i64, scratch_operands = 0 : i64, tpu.core_type = #tpu.core_type<tc>, window_params = [{transform_indices = @transform_0, window_bounds = array<i64: 16, 128>}, {pipeline_mode = #tpu.pipeline_mode<synchronous>, transform_indices = @transform_1, window_bounds = array<i64: 128, 128>}, {transform_indices = @transform_2, window_bounds = array<i64: 16, 128>}]} {
    %c0 = arith.constant 0 : index
    %c0_0 = arith.constant 0 : index
    %0 = vector.load %arg1[%c0, %c0_0] : memref<16x128xbf16, #tpu.memory_space<vmem>>, vector<16x128xbf16>
    %c0_1 = arith.constant 0 : index
    %c0_2 = arith.constant 0 : index
    %1 = vector.load %arg2[%c0_1, %c0_2] : memref<128x128xbf16, #tpu.memory_space<vmem>>, vector<128x128xbf16>
    %cst = arith.constant dense<0.000000e+00> : vector<16x128xf32>
    %2 = tpu.matmul %0, %1, %cst {dimension_numbers = #tpu.dot_dimension_numbers<[1], [0], [0], [1], [0, 0, 1, 1], [], []>} : vector<16x128xbf16>, vector<128x128xbf16>, vector<16x128xf32> -> vector<16x128xf32>
    %cst_3 = arith.constant 0.000000e+00 : f32
    %3 = vector.broadcast %cst_3 : f32 to vector<16x128xf32>
    %4 = arith.maximumf %2, %3 : vector<16x128xf32>
    %5 = arith.truncf %4 : vector<16x128xf32> to vector<16x128xbf16>
    %c0_4 = arith.constant 0 : index
    %c0_5 = arith.constant 0 : index
    %6 = vector.load %arg3[%c0_4, %c0_5] : memref<16x128xbf16, #tpu.memory_space<vmem>>, vector<16x128xbf16>
    tpu.vector_store %arg3[%c0_4, %c0_5], %5 {strides = array<i32>} : memref<16x128xbf16, #tpu.memory_space<vmem>>, vector<16x128xbf16>,
    return
  }
  func.func @transform_0(%arg0: i32) -> (i32, i32) {
    %c0_i32 = arith.constant 0 : i32
    %c0_i32_0 = arith.constant 0 : i32
    return %arg0, %c0_i32 : i32, i32
  }
  func.func @transform_1(%arg0: i32) -> (i32, i32) {
    %c0_i32 = arith.constant 0 : i32
    %c0_i32_0 = arith.constant 0 : i32
    %c0_i32_1 = arith.constant 0 : i32
    return %c0_i32, %c0_i32_0 : i32, i32
  }
  func.func @transform_2(%arg0: i32) -> (i32, i32) {
    %c0_i32 = arith.constant 0 : i32
    %c0_i32_0 = arith.constant 0 : i32
    return %arg0, %c0_i32 : i32, i32
  }
}

module attributes {stable_mosaic.version = 11 : i64} {
  func.func @_gram_kernel(%arg0: i32, %arg1: i32, %arg2: memref<1x128x128xbf16, #tpu.memory_space<vmem>>, %arg3: memref<1x128x128xf32, #tpu.memory_space<vmem>>, %arg4: memref<128x128xf32, #tpu.memory_space<vmem>>) attributes {dimension_semantics = [#tpu.dimension_semantics<parallel>, #tpu.dimension_semantics<arbitrary>], iteration_bounds = array<i64: 4, 1>, scalar_prefetch = 0 : i64, scratch_operands = 1 : i64, tpu.core_type = #tpu.core_type<tc>, window_params = [{transform_indices = @transform_0, window_bounds = array<i64: 1, 128, 128>}, {transform_indices = @transform_1, window_bounds = array<i64: 1, 128, 128>}]} {
    %c0_i32 = arith.constant 0 : i32
    %0 = arith.cmpi eq, %arg1, %c0_i32 : i32
    %1 = arith.extui %0 : i1 to i32
    %c0_i32_0 = arith.constant 0 : i32
    %2 = arith.cmpi ne, %1, %c0_i32_0 : i32
    scf.if %2 {
      %cst_9 = arith.constant 0.000000e+00 : f32
      %14 = vector.broadcast %cst_9 : f32 to vector<128x128xf32>
      %c0_10 = arith.constant 0 : index
      %c0_11 = arith.constant 0 : index
      %15 = vector.load %arg4[%c0_10, %c0_11] : memref<128x128xf32, #tpu.memory_space<vmem>>, vector<128x128xf32>
      tpu.vector_store %arg4[%c0_10, %c0_11], %14 {strides = array<i32>} : memref<128x128xf32, #tpu.memory_space<vmem>>, vector<128x128xf32>,
    } else {
    }
    %c0 = arith.constant 0 : index
    %c0_1 = arith.constant 0 : index
    %c0_2 = arith.constant 0 : index
    %3 = vector.load %arg2[%c0, %c0_1, %c0_2] : memref<1x128x128xbf16, #tpu.memory_space<vmem>>, vector<1x128x128xbf16>
    %4 = vector.shape_cast %3 : vector<1x128x128xbf16> to vector<128x128xbf16>
    %5 = arith.extf %4 : vector<128x128xbf16> to vector<128x128xf32>
    %c0_3 = arith.constant 0 : index
    %c0_4 = arith.constant 0 : index
    %6 = vector.load %arg4[%c0_3, %c0_4] : memref<128x128xf32, #tpu.memory_space<vmem>>, vector<128x128xf32>
    %7 = tpu.transpose %5, [1, 0] : vector<128x128xf32> -> vector<128x128xf32>
    %cst = arith.constant dense<0.000000e+00> : vector<128x128xf32>
    %8 = tpu.matmul %7, %5, %cst {dimension_numbers = #tpu.dot_dimension_numbers<[1], [0], [0], [1], [0, 0, 1, 1], [], []>} : vector<128x128xf32>, vector<128x128xf32>, vector<128x128xf32> -> vector<128x128xf32>
    %9 = arith.addf %6, %8 : vector<128x128xf32>
    %c0_5 = arith.constant 0 : index
    %c0_6 = arith.constant 0 : index
    %10 = vector.load %arg4[%c0_5, %c0_6] : memref<128x128xf32, #tpu.memory_space<vmem>>, vector<128x128xf32>
    tpu.vector_store %arg4[%c0_5, %c0_6], %9 {strides = array<i32>} : memref<128x128xf32, #tpu.memory_space<vmem>>, vector<128x128xf32>,
    %c0_i32_7 = arith.constant 0 : i32
    %11 = arith.cmpi eq, %arg1, %c0_i32_7 : i32
    %12 = arith.extui %11 : i1 to i32
    %c0_i32_8 = arith.constant 0 : i32
    %13 = arith.cmpi ne, %12, %c0_i32_8 : i32
    scf.if %13 {
      %c0_9 = arith.constant 0 : index
      %c0_10 = arith.constant 0 : index
      %14 = vector.load %arg4[%c0_9, %c0_10] : memref<128x128xf32, #tpu.memory_space<vmem>>, vector<128x128xf32>
      %c0_11 = arith.constant 0 : index
      %c0_12 = arith.constant 0 : index
      %c0_13 = arith.constant 0 : index
      %15 = vector.load %arg3[%c0_11, %c0_12, %c0_13] : memref<1x128x128xf32, #tpu.memory_space<vmem>>, vector<1x128x128xf32>
      %16 = vector.shape_cast %15 : vector<1x128x128xf32> to vector<128x128xf32>
      %17 = vector.shape_cast %14 : vector<128x128xf32> to vector<1x128x128xf32>
      tpu.vector_store %arg3[%c0_11, %c0_12, %c0_13], %17 {strides = array<i32>} : memref<1x128x128xf32, #tpu.memory_space<vmem>>, vector<1x128x128xf32>,
    } else {
    }
    return
  }
  func.func @transform_0(%arg0: i32, %arg1: i32) -> (i32, i32, i32) {
    %c0_i32 = arith.constant 0 : i32
    %c0_i32_0 = arith.constant 0 : i32
    return %arg0, %arg1, %c0_i32 : i32, i32, i32
  }
  func.func @transform_1(%arg0: i32, %arg1: i32) -> (i32, i32, i32) {
    %c0_i32 = arith.constant 0 : i32
    %c0_i32_0 = arith.constant 0 : i32
    %c0_i32_1 = arith.constant 0 : i32
    return %arg0, %c0_i32, %c0_i32_0 : i32, i32, i32
  }
}

module attributes {stable_mosaic.version = 11 : i64} {
  func.func @_disc_loss_kernel(%arg0: i32, %arg1: i32, %arg2: memref<1x256x3xf32, #tpu.memory_space<vmem>>, %arg3: memref<1x256x3xf32, #tpu.memory_space<vmem>>, %arg4: memref<3x128xf32, #tpu.memory_space<vmem>>, %arg5: memref<128x128xbf16, #tpu.memory_space<vmem>>, %arg6: memref<128x128xbf16, #tpu.memory_space<vmem>>, %arg7: memref<1x1x8x128xf32, #tpu.memory_space<vmem>>) attributes {dimension_semantics = [#tpu.dimension_semantics<parallel>, #tpu.dimension_semantics<parallel>], iteration_bounds = array<i64: 2, 1>, scalar_prefetch = 0 : i64, scratch_operands = 0 : i64, tpu.core_type = #tpu.core_type<tc>, window_params = [{transform_indices = @transform_0, window_bounds = array<i64: 1, 256, 3>}, {transform_indices = @transform_1, window_bounds = array<i64: 1, 256, 3>}, {pipeline_mode = #tpu.pipeline_mode<synchronous>, transform_indices = @transform_2, window_bounds = array<i64: 3, 128>}, {pipeline_mode = #tpu.pipeline_mode<synchronous>, transform_indices = @transform_3, window_bounds = array<i64: 128, 128>}, {pipeline_mode = #tpu.pipeline_mode<synchronous>, transform_indices = @transform_4, window_bounds = array<i64: 128, 128>}, {transform_indices = @transform_5, window_bounds = array<i64: 1, 1, 8, 128>}]} {
    %c0 = arith.constant 0 : index
    %c0_0 = arith.constant 0 : index
    %0 = vector.load %arg4[%c0, %c0_0] : memref<3x128xf32, #tpu.memory_space<vmem>>, vector<3x128xf32>
    %c0_1 = arith.constant 0 : index
    %c0_2 = arith.constant 0 : index
    %1 = vector.load %arg5[%c0_1, %c0_2] : memref<128x128xbf16, #tpu.memory_space<vmem>>, vector<128x128xbf16>
    %c0_3 = arith.constant 0 : index
    %c0_4 = arith.constant 0 : index
    %2 = vector.load %arg6[%c0_3, %c0_4] : memref<128x128xbf16, #tpu.memory_space<vmem>>, vector<128x128xbf16>
    %c0_5 = arith.constant 0 : index
    %c0_6 = arith.constant 0 : index
    %c0_7 = arith.constant 0 : index
    %3 = vector.load %arg2[%c0_5, %c0_6, %c0_7] : memref<1x256x3xf32, #tpu.memory_space<vmem>>, vector<1x256x3xf32>
    %4 = vector.shape_cast %3 : vector<1x256x3xf32> to vector<256x3xf32>
    %5 = vector.extract_strided_slice %4 {offsets = [0, 0], sizes = [256, 1], strides = [1, 1]} : vector<256x3xf32> to vector<256x1xf32>
    %6 = vector.extract_strided_slice %0 {offsets = [0, 0], sizes = [1, 128], strides = [1, 1]} : vector<3x128xf32> to vector<1x128xf32>
    %7 = vector.broadcast %5 : vector<256x1xf32> to vector<256x128xf32>
    %8 = vector.broadcast %6 : vector<1x128xf32> to vector<256x128xf32>
    %9 = arith.mulf %7, %8 : vector<256x128xf32>
    %10 = vector.extract_strided_slice %4 {offsets = [0, 1], sizes = [256, 1], strides = [1, 1]} : vector<256x3xf32> to vector<256x1xf32>
    %11 = vector.extract_strided_slice %0 {offsets = [1, 0], sizes = [1, 128], strides = [1, 1]} : vector<3x128xf32> to vector<1x128xf32>
    %12 = vector.broadcast %10 : vector<256x1xf32> to vector<256x128xf32>
    %13 = vector.broadcast %11 : vector<1x128xf32> to vector<256x128xf32>
    %14 = arith.mulf %12, %13 : vector<256x128xf32>
    %15 = arith.addf %9, %14 : vector<256x128xf32>
    %16 = vector.extract_strided_slice %4 {offsets = [0, 2], sizes = [256, 1], strides = [1, 1]} : vector<256x3xf32> to vector<256x1xf32>
    %17 = vector.extract_strided_slice %0 {offsets = [2, 0], sizes = [1, 128], strides = [1, 1]} : vector<3x128xf32> to vector<1x128xf32>
    %18 = vector.broadcast %16 : vector<256x1xf32> to vector<256x128xf32>
    %19 = vector.broadcast %17 : vector<1x128xf32> to vector<256x128xf32>
    %20 = arith.mulf %18, %19 : vector<256x128xf32>
    %21 = arith.addf %15, %20 : vector<256x128xf32>
    %cst = arith.constant 0.000000e+00 : f32
    %22 = vector.broadcast %cst : f32 to vector<256x128xf32>
    %23 = arith.cmpf oge, %21, %22 : vector<256x128xf32>
    %cst_8 = arith.constant 2.000000e-01 : f32
    %24 = vector.broadcast %cst_8 : f32 to vector<256x128xf32>
    %25 = arith.mulf %24, %21 : vector<256x128xf32>
    %26 = arith.select %23, %21, %25 : vector<256x128xi1>, vector<256x128xf32>
    %27 = arith.truncf %26 : vector<256x128xf32> to vector<256x128xbf16>
    %cst_9 = arith.constant dense<0.000000e+00> : vector<256x128xf32>
    %28 = tpu.matmul %27, %1, %cst_9 {dimension_numbers = #tpu.dot_dimension_numbers<[1], [0], [0], [1], [0, 0, 1, 1], [], []>} : vector<256x128xbf16>, vector<128x128xbf16>, vector<256x128xf32> -> vector<256x128xf32>
    %cst_10 = arith.constant 0.000000e+00 : f32
    %29 = vector.broadcast %cst_10 : f32 to vector<256x128xf32>
    %30 = arith.cmpf oge, %28, %29 : vector<256x128xf32>
    %cst_11 = arith.constant 2.000000e-01 : f32
    %31 = vector.broadcast %cst_11 : f32 to vector<256x128xf32>
    %32 = arith.mulf %31, %28 : vector<256x128xf32>
    %33 = arith.select %30, %28, %32 : vector<256x128xi1>, vector<256x128xf32>
    %c0_12 = arith.constant 0 : index
    %c0_13 = arith.constant 0 : index
    %c0_14 = arith.constant 0 : index
    %34 = vector.load %arg3[%c0_12, %c0_13, %c0_14] : memref<1x256x3xf32, #tpu.memory_space<vmem>>, vector<1x256x3xf32>
    %35 = vector.shape_cast %34 : vector<1x256x3xf32> to vector<256x3xf32>
    %36 = vector.extract_strided_slice %35 {offsets = [0, 0], sizes = [256, 1], strides = [1, 1]} : vector<256x3xf32> to vector<256x1xf32>
    %37 = vector.extract_strided_slice %0 {offsets = [0, 0], sizes = [1, 128], strides = [1, 1]} : vector<3x128xf32> to vector<1x128xf32>
    %38 = vector.broadcast %36 : vector<256x1xf32> to vector<256x128xf32>
    %39 = vector.broadcast %37 : vector<1x128xf32> to vector<256x128xf32>
    %40 = arith.mulf %38, %39 : vector<256x128xf32>
    %41 = vector.extract_strided_slice %35 {offsets = [0, 1], sizes = [256, 1], strides = [1, 1]} : vector<256x3xf32> to vector<256x1xf32>
    %42 = vector.extract_strided_slice %0 {offsets = [1, 0], sizes = [1, 128], strides = [1, 1]} : vector<3x128xf32> to vector<1x128xf32>
    %43 = vector.broadcast %41 : vector<256x1xf32> to vector<256x128xf32>
    %44 = vector.broadcast %42 : vector<1x128xf32> to vector<256x128xf32>
    %45 = arith.mulf %43, %44 : vector<256x128xf32>
    %46 = arith.addf %40, %45 : vector<256x128xf32>
    %47 = vector.extract_strided_slice %35 {offsets = [0, 2], sizes = [256, 1], strides = [1, 1]} : vector<256x3xf32> to vector<256x1xf32>
    %48 = vector.extract_strided_slice %0 {offsets = [2, 0], sizes = [1, 128], strides = [1, 1]} : vector<3x128xf32> to vector<1x128xf32>
    %49 = vector.broadcast %47 : vector<256x1xf32> to vector<256x128xf32>
    %50 = vector.broadcast %48 : vector<1x128xf32> to vector<256x128xf32>
    %51 = arith.mulf %49, %50 : vector<256x128xf32>
    %52 = arith.addf %46, %51 : vector<256x128xf32>
    %cst_15 = arith.constant 0.000000e+00 : f32
    %53 = vector.broadcast %cst_15 : f32 to vector<256x128xf32>
    %54 = arith.cmpf oge, %52, %53 : vector<256x128xf32>
    %cst_16 = arith.constant 2.000000e-01 : f32
    %55 = vector.broadcast %cst_16 : f32 to vector<256x128xf32>
    %56 = arith.mulf %55, %52 : vector<256x128xf32>
    %57 = arith.select %54, %52, %56 : vector<256x128xi1>, vector<256x128xf32>
    %58 = arith.truncf %57 : vector<256x128xf32> to vector<256x128xbf16>
    %cst_17 = arith.constant dense<0.000000e+00> : vector<256x128xf32>
    %59 = tpu.matmul %58, %1, %cst_17 {dimension_numbers = #tpu.dot_dimension_numbers<[1], [0], [0], [1], [0, 0, 1, 1], [], []>} : vector<256x128xbf16>, vector<128x128xbf16>, vector<256x128xf32> -> vector<256x128xf32>
    %cst_18 = arith.constant 0.000000e+00 : f32
    %60 = vector.broadcast %cst_18 : f32 to vector<256x128xf32>
    %61 = arith.cmpf oge, %59, %60 : vector<256x128xf32>
    %cst_19 = arith.constant 2.000000e-01 : f32
    %62 = vector.broadcast %cst_19 : f32 to vector<256x128xf32>
    %63 = arith.mulf %62, %59 : vector<256x128xf32>
    %64 = arith.select %61, %59, %63 : vector<256x128xi1>, vector<256x128xf32>
    %65 = arith.truncf %64 : vector<256x128xf32> to vector<256x128xbf16>
    %cst_20 = arith.constant dense<0.000000e+00> : vector<256x128xf32>
    %66 = tpu.matmul %65, %2, %cst_20 {dimension_numbers = #tpu.dot_dimension_numbers<[1], [0], [0], [1], [0, 0, 1, 1], [], []>} : vector<256x128xbf16>, vector<128x128xbf16>, vector<256x128xf32> -> vector<256x128xf32>
    %67 = arith.subf %26, %57 : vector<256x128xf32>
    %68 = math.absf %67 : vector<256x128xf32>
    %69 = vector.shape_cast %68 : vector<256x128xf32> to vector<1x256x128xf32>
    %cst_21 = arith.constant dense<0.000000e+00> : vector<1xf32>
    %70 = vector.multi_reduction <add>, %69, %cst_21 [1, 2] : vector<1x256x128xf32> to vector<1xf32>
    %71 = vector.shape_cast %70 : vector<1xf32> to vector<1x1x1xf32>
    %72 = vector.extract %71[0, 0, 0] : f32 from vector<1x1x1xf32>
    %73 = arith.subf %33, %64 : vector<256x128xf32>
    %74 = math.absf %73 : vector<256x128xf32>
    %75 = vector.shape_cast %74 : vector<256x128xf32> to vector<1x256x128xf32>
    %cst_22 = arith.constant dense<0.000000e+00> : vector<1xf32>
    %76 = vector.multi_reduction <add>, %75, %cst_22 [1, 2] : vector<1x256x128xf32> to vector<1xf32>
    %77 = vector.shape_cast %76 : vector<1xf32> to vector<1x1x1xf32>
    %78 = vector.extract %77[0, 0, 0] : f32 from vector<1x1x1xf32>
    %79 = arith.addf %72, %78 : f32
    %cst_23 = arith.constant 0.000000e+00 : f32
    %80 = vector.broadcast %cst_23 : f32 to vector<256x128xf32>
    %81 = arith.subf %80, %66 : vector<256x128xf32>
    %82 = vector.shape_cast %81 : vector<256x128xf32> to vector<1x256x128xf32>
    %cst_24 = arith.constant dense<0.000000e+00> : vector<1xf32>
    %83 = vector.multi_reduction <add>, %82, %cst_24 [1, 2] : vector<1x256x128xf32> to vector<1xf32>
    %84 = vector.shape_cast %83 : vector<1xf32> to vector<1x1x1xf32>
    %85 = vector.extract %84[0, 0, 0] : f32 from vector<1x1x1xf32>
    %cst_25 = arith.constant 1.22070313E-4 : f32
    %86 = arith.mulf %cst_25, %79 : f32
    %cst_26 = arith.constant 0.001953125 : f32
    %87 = arith.mulf %cst_26, %85 : f32
    %88 = arith.addf %86, %87 : f32
    %89 = vector.broadcast %88 : f32 to vector<8x128xf32>
    %c0_27 = arith.constant 0 : index
    %c0_28 = arith.constant 0 : index
    %c0_29 = arith.constant 0 : index
    %c0_30 = arith.constant 0 : index
    %90 = vector.load %arg7[%c0_27, %c0_28, %c0_29, %c0_30] : memref<1x1x8x128xf32, #tpu.memory_space<vmem>>, vector<1x1x8x128xf32>
    %91 = vector.shape_cast %90 : vector<1x1x8x128xf32> to vector<8x128xf32>
    %92 = vector.shape_cast %89 : vector<8x128xf32> to vector<1x1x8x128xf32>
    tpu.vector_store %arg7[%c0_27, %c0_28, %c0_29, %c0_30], %92 {strides = array<i32>} : memref<1x1x8x128xf32, #tpu.memory_space<vmem>>, vector<1x1x8x128xf32>,
    return
  }
  func.func @transform_0(%arg0: i32, %arg1: i32) -> (i32, i32, i32) {
    %c0_i32 = arith.constant 0 : i32
    %c0_i32_0 = arith.constant 0 : i32
    return %arg0, %arg1, %c0_i32 : i32, i32, i32
  }
  func.func @transform_1(%arg0: i32, %arg1: i32) -> (i32, i32, i32) {
    %c0_i32 = arith.constant 0 : i32
    %c0_i32_0 = arith.constant 0 : i32
    return %arg0, %arg1, %c0_i32 : i32, i32, i32
  }
  func.func @transform_2(%arg0: i32, %arg1: i32) -> (i32, i32) {
    %c0_i32 = arith.constant 0 : i32
    %c0_i32_0 = arith.constant 0 : i32
    %c0_i32_1 = arith.constant 0 : i32
    return %c0_i32, %c0_i32_0 : i32, i32
  }
  func.func @transform_3(%arg0: i32, %arg1: i32) -> (i32, i32) {
    %c0_i32 = arith.constant 0 : i32
    %c0_i32_0 = arith.constant 0 : i32
    %c0_i32_1 = arith.constant 0 : i32
    return %c0_i32, %c0_i32_0 : i32, i32
  }
  func.func @transform_4(%arg0: i32, %arg1: i32) -> (i32, i32) {
    %c0_i32 = arith.constant 0 : i32
    %c0_i32_0 = arith.constant 0 : i32
    %c0_i32_1 = arith.constant 0 : i32
    return %c0_i32, %c0_i32_0 : i32, i32
  }
  func.func @transform_5(%arg0: i32, %arg1: i32) -> (i32, i32, i32, i32) {
    %c0_i32 = arith.constant 0 : i32
    %c0_i32_0 = arith.constant 0 : i32
    %c0_i32_1 = arith.constant 0 : i32
    return %arg0, %arg1, %c0_i32, %c0_i32_0 : i32, i32, i32, i32
  }
}

module attributes {stable_mosaic.version = 11 : i64} {
  func.func @_vgg1_kernel(%arg0: i32, %arg1: i32, %arg2: memref<1x64x3xf32, #tpu.memory_space<vmem>>, %arg3: memref<3x128xf32, #tpu.memory_space<vmem>>, %arg4: memref<1x64x128xbf16, #tpu.memory_space<vmem>>) attributes {dimension_semantics = [#tpu.dimension_semantics<parallel>, #tpu.dimension_semantics<parallel>], iteration_bounds = array<i64: 4, 1>, scalar_prefetch = 0 : i64, scratch_operands = 0 : i64, tpu.core_type = #tpu.core_type<tc>, window_params = [{transform_indices = @transform_0, window_bounds = array<i64: 1, 64, 3>}, {pipeline_mode = #tpu.pipeline_mode<synchronous>, transform_indices = @transform_1, window_bounds = array<i64: 3, 128>}, {transform_indices = @transform_2, window_bounds = array<i64: 1, 64, 128>}]} {
    %c0 = arith.constant 0 : index
    %c0_0 = arith.constant 0 : index
    %c0_1 = arith.constant 0 : index
    %0 = vector.load %arg2[%c0, %c0_0, %c0_1] : memref<1x64x3xf32, #tpu.memory_space<vmem>>, vector<1x64x3xf32>
    %1 = vector.shape_cast %0 : vector<1x64x3xf32> to vector<64x3xf32>
    %c0_2 = arith.constant 0 : index
    %c0_3 = arith.constant 0 : index
    %2 = vector.load %arg3[%c0_2, %c0_3] : memref<3x128xf32, #tpu.memory_space<vmem>>, vector<3x128xf32>
    %3 = vector.extract_strided_slice %1 {offsets = [0, 0], sizes = [64, 1], strides = [1, 1]} : vector<64x3xf32> to vector<64x1xf32>
    %4 = vector.extract_strided_slice %2 {offsets = [0, 0], sizes = [1, 128], strides = [1, 1]} : vector<3x128xf32> to vector<1x128xf32>
    %5 = vector.broadcast %3 : vector<64x1xf32> to vector<64x128xf32>
    %6 = vector.broadcast %4 : vector<1x128xf32> to vector<64x128xf32>
    %7 = arith.mulf %5, %6 : vector<64x128xf32>
    %8 = vector.extract_strided_slice %1 {offsets = [0, 1], sizes = [64, 1], strides = [1, 1]} : vector<64x3xf32> to vector<64x1xf32>
    %9 = vector.extract_strided_slice %2 {offsets = [1, 0], sizes = [1, 128], strides = [1, 1]} : vector<3x128xf32> to vector<1x128xf32>
    %10 = vector.broadcast %8 : vector<64x1xf32> to vector<64x128xf32>
    %11 = vector.broadcast %9 : vector<1x128xf32> to vector<64x128xf32>
    %12 = arith.mulf %10, %11 : vector<64x128xf32>
    %13 = arith.addf %7, %12 : vector<64x128xf32>
    %14 = vector.extract_strided_slice %1 {offsets = [0, 2], sizes = [64, 1], strides = [1, 1]} : vector<64x3xf32> to vector<64x1xf32>
    %15 = vector.extract_strided_slice %2 {offsets = [2, 0], sizes = [1, 128], strides = [1, 1]} : vector<3x128xf32> to vector<1x128xf32>
    %16 = vector.broadcast %14 : vector<64x1xf32> to vector<64x128xf32>
    %17 = vector.broadcast %15 : vector<1x128xf32> to vector<64x128xf32>
    %18 = arith.mulf %16, %17 : vector<64x128xf32>
    %19 = arith.addf %13, %18 : vector<64x128xf32>
    %cst = arith.constant 0.000000e+00 : f32
    %20 = vector.broadcast %cst : f32 to vector<64x128xf32>
    %21 = arith.maximumf %19, %20 : vector<64x128xf32>
    %22 = arith.truncf %21 : vector<64x128xf32> to vector<64x128xbf16>
    %c0_4 = arith.constant 0 : index
    %c0_5 = arith.constant 0 : index
    %c0_6 = arith.constant 0 : index
    %23 = vector.load %arg4[%c0_4, %c0_5, %c0_6] : memref<1x64x128xbf16, #tpu.memory_space<vmem>>, vector<1x64x128xbf16>
    %24 = vector.shape_cast %23 : vector<1x64x128xbf16> to vector<64x128xbf16>
    %25 = vector.shape_cast %22 : vector<64x128xbf16> to vector<1x64x128xbf16>
    tpu.vector_store %arg4[%c0_4, %c0_5, %c0_6], %25 {strides = array<i32>} : memref<1x64x128xbf16, #tpu.memory_space<vmem>>, vector<1x64x128xbf16>,
    return
  }
  func.func @transform_0(%arg0: i32, %arg1: i32) -> (i32, i32, i32) {
    %c0_i32 = arith.constant 0 : i32
    %c0_i32_0 = arith.constant 0 : i32
    return %arg0, %arg1, %c0_i32 : i32, i32, i32
  }
  func.func @transform_1(%arg0: i32, %arg1: i32) -> (i32, i32) {
    %c0_i32 = arith.constant 0 : i32
    %c0_i32_0 = arith.constant 0 : i32
    %c0_i32_1 = arith.constant 0 : i32
    return %c0_i32, %c0_i32_0 : i32, i32
  }
  func.func @transform_2(%arg0: i32, %arg1: i32) -> (i32, i32, i32) {
    %c0_i32 = arith.constant 0 : i32
    %c0_i32_0 = arith.constant 0 : i32
    return %arg0, %arg1, %c0_i32 : i32, i32, i32
  }
}

module attributes {stable_mosaic.version = 11 : i64} {
  func.func @_mm_act_kernel(%arg0: i32, %arg1: memref<64x128xbf16, #tpu.memory_space<vmem>>, %arg2: memref<128x128xbf16, #tpu.memory_space<vmem>>, %arg3: memref<64x128xbf16, #tpu.memory_space<vmem>>) attributes {dimension_semantics = [#tpu.dimension_semantics<parallel>], iteration_bounds = array<i64: 1>, scalar_prefetch = 0 : i64, scratch_operands = 0 : i64, tpu.core_type = #tpu.core_type<tc>, window_params = [{transform_indices = @transform_0, window_bounds = array<i64: 64, 128>}, {pipeline_mode = #tpu.pipeline_mode<synchronous>, transform_indices = @transform_1, window_bounds = array<i64: 128, 128>}, {transform_indices = @transform_2, window_bounds = array<i64: 64, 128>}]} {
    %c0 = arith.constant 0 : index
    %c0_0 = arith.constant 0 : index
    %0 = vector.load %arg1[%c0, %c0_0] : memref<64x128xbf16, #tpu.memory_space<vmem>>, vector<64x128xbf16>
    %c0_1 = arith.constant 0 : index
    %c0_2 = arith.constant 0 : index
    %1 = vector.load %arg2[%c0_1, %c0_2] : memref<128x128xbf16, #tpu.memory_space<vmem>>, vector<128x128xbf16>
    %cst = arith.constant dense<0.000000e+00> : vector<64x128xf32>
    %2 = tpu.matmul %0, %1, %cst {dimension_numbers = #tpu.dot_dimension_numbers<[1], [0], [0], [1], [0, 0, 1, 1], [], []>} : vector<64x128xbf16>, vector<128x128xbf16>, vector<64x128xf32> -> vector<64x128xf32>
    %cst_3 = arith.constant 0.000000e+00 : f32
    %3 = vector.broadcast %cst_3 : f32 to vector<64x128xf32>
    %4 = arith.maximumf %2, %3 : vector<64x128xf32>
    %5 = arith.truncf %4 : vector<64x128xf32> to vector<64x128xbf16>
    %c0_4 = arith.constant 0 : index
    %c0_5 = arith.constant 0 : index
    %6 = vector.load %arg3[%c0_4, %c0_5] : memref<64x128xbf16, #tpu.memory_space<vmem>>, vector<64x128xbf16>
    tpu.vector_store %arg3[%c0_4, %c0_5], %5 {strides = array<i32>} : memref<64x128xbf16, #tpu.memory_space<vmem>>, vector<64x128xbf16>,
    return
  }
  func.func @transform_0(%arg0: i32) -> (i32, i32) {
    %c0_i32 = arith.constant 0 : i32
    %c0_i32_0 = arith.constant 0 : i32
    return %arg0, %c0_i32 : i32, i32
  }
  func.func @transform_1(%arg0: i32) -> (i32, i32) {
    %c0_i32 = arith.constant 0 : i32
    %c0_i32_0 = arith.constant 0 : i32
    %c0_i32_1 = arith.constant 0 : i32
    return %c0_i32, %c0_i32_0 : i32, i32
  }
  func.func @transform_2(%arg0: i32) -> (i32, i32) {
    %c0_i32 = arith.constant 0 : i32
    %c0_i32_0 = arith.constant 0 : i32
    return %arg0, %c0_i32 : i32, i32
  }
}

module attributes {stable_mosaic.version = 11 : i64} {
  func.func @_vgg1_kernel(%arg0: i32, %arg1: i32, %arg2: memref<1x256x3xf32, #tpu.memory_space<vmem>>, %arg3: memref<3x128xf32, #tpu.memory_space<vmem>>, %arg4: memref<1x256x128xbf16, #tpu.memory_space<vmem>>) attributes {dimension_semantics = [#tpu.dimension_semantics<parallel>, #tpu.dimension_semantics<parallel>], iteration_bounds = array<i64: 4, 1>, scalar_prefetch = 0 : i64, scratch_operands = 0 : i64, tpu.core_type = #tpu.core_type<tc>, window_params = [{transform_indices = @transform_0, window_bounds = array<i64: 1, 256, 3>}, {pipeline_mode = #tpu.pipeline_mode<synchronous>, transform_indices = @transform_1, window_bounds = array<i64: 3, 128>}, {transform_indices = @transform_2, window_bounds = array<i64: 1, 256, 128>}]} {
    %c0 = arith.constant 0 : index
    %c0_0 = arith.constant 0 : index
    %c0_1 = arith.constant 0 : index
    %0 = vector.load %arg2[%c0, %c0_0, %c0_1] : memref<1x256x3xf32, #tpu.memory_space<vmem>>, vector<1x256x3xf32>
    %1 = vector.shape_cast %0 : vector<1x256x3xf32> to vector<256x3xf32>
    %c0_2 = arith.constant 0 : index
    %c0_3 = arith.constant 0 : index
    %2 = vector.load %arg3[%c0_2, %c0_3] : memref<3x128xf32, #tpu.memory_space<vmem>>, vector<3x128xf32>
    %3 = vector.extract_strided_slice %1 {offsets = [0, 0], sizes = [256, 1], strides = [1, 1]} : vector<256x3xf32> to vector<256x1xf32>
    %4 = vector.extract_strided_slice %2 {offsets = [0, 0], sizes = [1, 128], strides = [1, 1]} : vector<3x128xf32> to vector<1x128xf32>
    %5 = vector.broadcast %3 : vector<256x1xf32> to vector<256x128xf32>
    %6 = vector.broadcast %4 : vector<1x128xf32> to vector<256x128xf32>
    %7 = arith.mulf %5, %6 : vector<256x128xf32>
    %8 = vector.extract_strided_slice %1 {offsets = [0, 1], sizes = [256, 1], strides = [1, 1]} : vector<256x3xf32> to vector<256x1xf32>
    %9 = vector.extract_strided_slice %2 {offsets = [1, 0], sizes = [1, 128], strides = [1, 1]} : vector<3x128xf32> to vector<1x128xf32>
    %10 = vector.broadcast %8 : vector<256x1xf32> to vector<256x128xf32>
    %11 = vector.broadcast %9 : vector<1x128xf32> to vector<256x128xf32>
    %12 = arith.mulf %10, %11 : vector<256x128xf32>
    %13 = arith.addf %7, %12 : vector<256x128xf32>
    %14 = vector.extract_strided_slice %1 {offsets = [0, 2], sizes = [256, 1], strides = [1, 1]} : vector<256x3xf32> to vector<256x1xf32>
    %15 = vector.extract_strided_slice %2 {offsets = [2, 0], sizes = [1, 128], strides = [1, 1]} : vector<3x128xf32> to vector<1x128xf32>
    %16 = vector.broadcast %14 : vector<256x1xf32> to vector<256x128xf32>
    %17 = vector.broadcast %15 : vector<1x128xf32> to vector<256x128xf32>
    %18 = arith.mulf %16, %17 : vector<256x128xf32>
    %19 = arith.addf %13, %18 : vector<256x128xf32>
    %cst = arith.constant 0.000000e+00 : f32
    %20 = vector.broadcast %cst : f32 to vector<256x128xf32>
    %21 = arith.maximumf %19, %20 : vector<256x128xf32>
    %22 = arith.truncf %21 : vector<256x128xf32> to vector<256x128xbf16>
    %c0_4 = arith.constant 0 : index
    %c0_5 = arith.constant 0 : index
    %c0_6 = arith.constant 0 : index
    %23 = vector.load %arg4[%c0_4, %c0_5, %c0_6] : memref<1x256x128xbf16, #tpu.memory_space<vmem>>, vector<1x256x128xbf16>
    %24 = vector.shape_cast %23 : vector<1x256x128xbf16> to vector<256x128xbf16>
    %25 = vector.shape_cast %22 : vector<256x128xbf16> to vector<1x256x128xbf16>
    tpu.vector_store %arg4[%c0_4, %c0_5, %c0_6], %25 {strides = array<i32>} : memref<1x256x128xbf16, #tpu.memory_space<vmem>>, vector<1x256x128xbf16>,
    return
  }
  func.func @transform_0(%arg0: i32, %arg1: i32) -> (i32, i32, i32) {
    %c0_i32 = arith.constant 0 : i32
    %c0_i32_0 = arith.constant 0 : i32
    return %arg0, %arg1, %c0_i32 : i32, i32, i32
  }
  func.func @transform_1(%arg0: i32, %arg1: i32) -> (i32, i32) {
    %c0_i32 = arith.constant 0 : i32
    %c0_i32_0 = arith.constant 0 : i32
    %c0_i32_1 = arith.constant 0 : i32
    return %c0_i32, %c0_i32_0 : i32, i32
  }
  func.func @transform_2(%arg0: i32, %arg1: i32) -> (i32, i32, i32) {
    %c0_i32 = arith.constant 0 : i32
    %c0_i32_0 = arith.constant 0 : i32
    return %arg0, %arg1, %c0_i32 : i32, i32, i32
  }
}

module attributes {stable_mosaic.version = 11 : i64} {
  func.func @_gram_kernel(%arg0: i32, %arg1: i32, %arg2: memref<1x256x128xbf16, #tpu.memory_space<vmem>>, %arg3: memref<1x128x128xf32, #tpu.memory_space<vmem>>, %arg4: memref<128x128xf32, #tpu.memory_space<vmem>>) attributes {dimension_semantics = [#tpu.dimension_semantics<parallel>, #tpu.dimension_semantics<arbitrary>], iteration_bounds = array<i64: 4, 1>, scalar_prefetch = 0 : i64, scratch_operands = 1 : i64, tpu.core_type = #tpu.core_type<tc>, window_params = [{transform_indices = @transform_0, window_bounds = array<i64: 1, 256, 128>}, {transform_indices = @transform_1, window_bounds = array<i64: 1, 128, 128>}]} {
    %c0_i32 = arith.constant 0 : i32
    %0 = arith.cmpi eq, %arg1, %c0_i32 : i32
    %1 = arith.extui %0 : i1 to i32
    %c0_i32_0 = arith.constant 0 : i32
    %2 = arith.cmpi ne, %1, %c0_i32_0 : i32
    scf.if %2 {
      %cst_9 = arith.constant 0.000000e+00 : f32
      %14 = vector.broadcast %cst_9 : f32 to vector<128x128xf32>
      %c0_10 = arith.constant 0 : index
      %c0_11 = arith.constant 0 : index
      %15 = vector.load %arg4[%c0_10, %c0_11] : memref<128x128xf32, #tpu.memory_space<vmem>>, vector<128x128xf32>
      tpu.vector_store %arg4[%c0_10, %c0_11], %14 {strides = array<i32>} : memref<128x128xf32, #tpu.memory_space<vmem>>, vector<128x128xf32>,
    } else {
    }
    %c0 = arith.constant 0 : index
    %c0_1 = arith.constant 0 : index
    %c0_2 = arith.constant 0 : index
    %3 = vector.load %arg2[%c0, %c0_1, %c0_2] : memref<1x256x128xbf16, #tpu.memory_space<vmem>>, vector<1x256x128xbf16>
    %4 = vector.shape_cast %3 : vector<1x256x128xbf16> to vector<256x128xbf16>
    %5 = arith.extf %4 : vector<256x128xbf16> to vector<256x128xf32>
    %c0_3 = arith.constant 0 : index
    %c0_4 = arith.constant 0 : index
    %6 = vector.load %arg4[%c0_3, %c0_4] : memref<128x128xf32, #tpu.memory_space<vmem>>, vector<128x128xf32>
    %7 = tpu.transpose %5, [1, 0] : vector<256x128xf32> -> vector<128x256xf32>
    %cst = arith.constant dense<0.000000e+00> : vector<128x128xf32>
    %8 = tpu.matmul %7, %5, %cst {dimension_numbers = #tpu.dot_dimension_numbers<[1], [0], [0], [1], [0, 0, 1, 1], [], []>} : vector<128x256xf32>, vector<256x128xf32>, vector<128x128xf32> -> vector<128x128xf32>
    %9 = arith.addf %6, %8 : vector<128x128xf32>
    %c0_5 = arith.constant 0 : index
    %c0_6 = arith.constant 0 : index
    %10 = vector.load %arg4[%c0_5, %c0_6] : memref<128x128xf32, #tpu.memory_space<vmem>>, vector<128x128xf32>
    tpu.vector_store %arg4[%c0_5, %c0_6], %9 {strides = array<i32>} : memref<128x128xf32, #tpu.memory_space<vmem>>, vector<128x128xf32>,
    %c0_i32_7 = arith.constant 0 : i32
    %11 = arith.cmpi eq, %arg1, %c0_i32_7 : i32
    %12 = arith.extui %11 : i1 to i32
    %c0_i32_8 = arith.constant 0 : i32
    %13 = arith.cmpi ne, %12, %c0_i32_8 : i32
    scf.if %13 {
      %c0_9 = arith.constant 0 : index
      %c0_10 = arith.constant 0 : index
      %14 = vector.load %arg4[%c0_9, %c0_10] : memref<128x128xf32, #tpu.memory_space<vmem>>, vector<128x128xf32>
      %c0_11 = arith.constant 0 : index
      %c0_12 = arith.constant 0 : index
      %c0_13 = arith.constant 0 : index
      %15 = vector.load %arg3[%c0_11, %c0_12, %c0_13] : memref<1x128x128xf32, #tpu.memory_space<vmem>>, vector<1x128x128xf32>
      %16 = vector.shape_cast %15 : vector<1x128x128xf32> to vector<128x128xf32>
      %17 = vector.shape_cast %14 : vector<128x128xf32> to vector<1x128x128xf32>
      tpu.vector_store %arg3[%c0_11, %c0_12, %c0_13], %17 {strides = array<i32>} : memref<1x128x128xf32, #tpu.memory_space<vmem>>, vector<1x128x128xf32>,
    } else {
    }
    return
  }
  func.func @transform_0(%arg0: i32, %arg1: i32) -> (i32, i32, i32) {
    %c0_i32 = arith.constant 0 : i32
    %c0_i32_0 = arith.constant 0 : i32
    return %arg0, %arg1, %c0_i32 : i32, i32, i32
  }
  func.func @transform_1(%arg0: i32, %arg1: i32) -> (i32, i32, i32) {
    %c0_i32 = arith.constant 0 : i32
    %c0_i32_0 = arith.constant 0 : i32
    %c0_i32_1 = arith.constant 0 : i32
    return %arg0, %c0_i32, %c0_i32_0 : i32, i32, i32
  }
}

module attributes {stable_mosaic.version = 11 : i64} {
  func.func @_mm_act_kernel(%arg0: i32, %arg1: memref<256x128xbf16, #tpu.memory_space<vmem>>, %arg2: memref<128x128xbf16, #tpu.memory_space<vmem>>, %arg3: memref<256x128xbf16, #tpu.memory_space<vmem>>) attributes {dimension_semantics = [#tpu.dimension_semantics<parallel>], iteration_bounds = array<i64: 1>, scalar_prefetch = 0 : i64, scratch_operands = 0 : i64, tpu.core_type = #tpu.core_type<tc>, window_params = [{transform_indices = @transform_0, window_bounds = array<i64: 256, 128>}, {pipeline_mode = #tpu.pipeline_mode<synchronous>, transform_indices = @transform_1, window_bounds = array<i64: 128, 128>}, {transform_indices = @transform_2, window_bounds = array<i64: 256, 128>}]} {
    %c0 = arith.constant 0 : index
    %c0_0 = arith.constant 0 : index
    %0 = vector.load %arg1[%c0, %c0_0] : memref<256x128xbf16, #tpu.memory_space<vmem>>, vector<256x128xbf16>
    %c0_1 = arith.constant 0 : index
    %c0_2 = arith.constant 0 : index
    %1 = vector.load %arg2[%c0_1, %c0_2] : memref<128x128xbf16, #tpu.memory_space<vmem>>, vector<128x128xbf16>
    %cst = arith.constant dense<0.000000e+00> : vector<256x128xf32>
    %2 = tpu.matmul %0, %1, %cst {dimension_numbers = #tpu.dot_dimension_numbers<[1], [0], [0], [1], [0, 0, 1, 1], [], []>} : vector<256x128xbf16>, vector<128x128xbf16>, vector<256x128xf32> -> vector<256x128xf32>
    %cst_3 = arith.constant 0.000000e+00 : f32
    %3 = vector.broadcast %cst_3 : f32 to vector<256x128xf32>
    %4 = arith.maximumf %2, %3 : vector<256x128xf32>
    %5 = arith.truncf %4 : vector<256x128xf32> to vector<256x128xbf16>
    %c0_4 = arith.constant 0 : index
    %c0_5 = arith.constant 0 : index
    %6 = vector.load %arg3[%c0_4, %c0_5] : memref<256x128xbf16, #tpu.memory_space<vmem>>, vector<256x128xbf16>
    tpu.vector_store %arg3[%c0_4, %c0_5], %5 {strides = array<i32>} : memref<256x128xbf16, #tpu.memory_space<vmem>>, vector<256x128xbf16>,
    return
  }
  func.func @transform_0(%arg0: i32) -> (i32, i32) {
    %c0_i32 = arith.constant 0 : i32
    %c0_i32_0 = arith.constant 0 : i32
    return %arg0, %c0_i32 : i32, i32
  }
  func.func @transform_1(%arg0: i32) -> (i32, i32) {
    %c0_i32 = arith.constant 0 : i32
    %c0_i32_0 = arith.constant 0 : i32
    %c0_i32_1 = arith.constant 0 : i32
    return %c0_i32, %c0_i32_0 : i32, i32
  }
  func.func @transform_2(%arg0: i32) -> (i32, i32) {
    %c0_i32 = arith.constant 0 : i32
    %c0_i32_0 = arith.constant 0 : i32
    return %arg0, %c0_i32 : i32, i32
  }
}

module attributes {stable_mosaic.version = 11 : i64} {
  func.func @_sum_accum_kernel(%arg0: i32, %arg1: memref<112x128xf32, #tpu.memory_space<vmem>>, %arg2: memref<1x128xf32, #tpu.memory_space<vmem>>, %arg3: memref<1x128xf32, #tpu.memory_space<vmem>>) attributes {dimension_semantics = [#tpu.dimension_semantics<arbitrary>], iteration_bounds = array<i64: 1>, scalar_prefetch = 0 : i64, scratch_operands = 1 : i64, tpu.core_type = #tpu.core_type<tc>, window_params = [{transform_indices = @transform_0, window_bounds = array<i64: 112, 128>}, {pipeline_mode = #tpu.pipeline_mode<synchronous>, transform_indices = @transform_1, window_bounds = array<i64: 1, 128>}]} {
    %c0_i32 = arith.constant 0 : i32
    %0 = arith.cmpi eq, %arg0, %c0_i32 : i32
    %1 = arith.extui %0 : i1 to i32
    %c0_i32_0 = arith.constant 0 : i32
    %2 = arith.cmpi ne, %1, %c0_i32_0 : i32
    scf.if %2 {
      %cst_8 = arith.constant 0.000000e+00 : f32
      %12 = vector.broadcast %cst_8 : f32 to vector<1x128xf32>
      %c0_9 = arith.constant 0 : index
      %c0_10 = arith.constant 0 : index
      %13 = vector.load %arg3[%c0_9, %c0_10] : memref<1x128xf32, #tpu.memory_space<vmem>>, vector<1x128xf32>
      tpu.vector_store %arg3[%c0_9, %c0_10], %12 {strides = array<i32>} : memref<1x128xf32, #tpu.memory_space<vmem>>, vector<1x128xf32>,
    } else {
    }
    %c0 = arith.constant 0 : index
    %c0_1 = arith.constant 0 : index
    %3 = vector.load %arg3[%c0, %c0_1] : memref<1x128xf32, #tpu.memory_space<vmem>>, vector<1x128xf32>
    %c0_2 = arith.constant 0 : index
    %c0_3 = arith.constant 0 : index
    %4 = vector.load %arg1[%c0_2, %c0_3] : memref<112x128xf32, #tpu.memory_space<vmem>>, vector<112x128xf32>
    %cst = arith.constant dense<0.000000e+00> : vector<128xf32>
    %5 = vector.multi_reduction <add>, %4, %cst [0] : vector<112x128xf32> to vector<128xf32>
    %6 = vector.shape_cast %5 : vector<128xf32> to vector<1x128xf32>
    %7 = arith.addf %3, %6 : vector<1x128xf32>
    %c0_4 = arith.constant 0 : index
    %c0_5 = arith.constant 0 : index
    %8 = vector.load %arg3[%c0_4, %c0_5] : memref<1x128xf32, #tpu.memory_space<vmem>>, vector<1x128xf32>
    tpu.vector_store %arg3[%c0_4, %c0_5], %7 {strides = array<i32>} : memref<1x128xf32, #tpu.memory_space<vmem>>, vector<1x128xf32>,
    %c0_i32_6 = arith.constant 0 : i32
    %9 = arith.cmpi eq, %arg0, %c0_i32_6 : i32
    %10 = arith.extui %9 : i1 to i32
    %c0_i32_7 = arith.constant 0 : i32
    %11 = arith.cmpi ne, %10, %c0_i32_7 : i32
    scf.if %11 {
      %c0_8 = arith.constant 0 : index
      %c0_9 = arith.constant 0 : index
      %12 = vector.load %arg3[%c0_8, %c0_9] : memref<1x128xf32, #tpu.memory_space<vmem>>, vector<1x128xf32>
      %c0_10 = arith.constant 0 : index
      %c0_11 = arith.constant 0 : index
      %13 = vector.load %arg2[%c0_10, %c0_11] : memref<1x128xf32, #tpu.memory_space<vmem>>, vector<1x128xf32>
      tpu.vector_store %arg2[%c0_10, %c0_11], %12 {strides = array<i32>} : memref<1x128xf32, #tpu.memory_space<vmem>>, vector<1x128xf32>,
    } else {
    }
    return
  }
  func.func @transform_0(%arg0: i32) -> (i32, i32) {
    %c0_i32 = arith.constant 0 : i32
    %c0_i32_0 = arith.constant 0 : i32
    return %arg0, %c0_i32 : i32, i32
  }
  func.func @transform_1(%arg0: i32) -> (i32, i32) {
    %c0_i32 = arith.constant 0 : i32
    %c0_i32_0 = arith.constant 0 : i32
    %c0_i32_1 = arith.constant 0 : i32
    return %c0_i32, %c0_i32_0 : i32, i32
  }
}

</mosaic_0001>

<llo_original>
// kernel: full_generator_forward.21
$region0: #{full_generator_forward.21}
  #allocation0 [shape = 'u32[]', space=smem, size = 0x4, offset = 0x4, fixed_abs, tag = 'smem constant byte address 0x4 - core index']
  #allocation1 [shape = 'u32[72,128]{1,0:T(1,128)}', space=vmem, size = 0x9000, scoped, tag = 'internal scratch']
  %s0 = inlined_call_operand.vmem [shape: bf16[8,128], index: 0, kind: input, shape index: {}]
  %s1 = inlined_call_operand.vmem [shape: bf16[128,128], index: 1, kind: input, shape index: {}]
  %s2 = inlined_call_operand.vmem [shape: f32[8,128], index: 2, kind: output, shape index: {}]
  %s3 = sld [smem:[#allocation0]]
  $region18: #{full_generator_forward.21} parent=0
    _
  %s5 = ssub.s32 1, %s3
  %s6 = scalar_select 0, %s5, %s3
  // Predicated region
  $region2: #{full_generator_forward.21} parent=0 // pred_check
    _
  $region3: #{full_generator_forward.21} parent=0 // pred_check_branch
    %8 = sbr.rel (0) target = $region5
  $region4: #{full_generator_forward.21} parent=0 // pred_region
    _
  $region5: #{full_generator_forward.21} parent=0 // pred_fallthru
    _
  // Predicated region
  $region6: #{full_generator_forward.21} parent=0 // pred_check
    _
  $region7: #{full_generator_forward.21} parent=0 // pred_check_branch
    %10 = sbr.rel (0) target = $region9
  $region8: #{full_generator_forward.21} parent=0 // pred_region
    _
  $region9: #{full_generator_forward.21} parent=0 // pred_fallthru
    _
  %v11 = vld [vmem:[%s0] sm:$0xf]
  %v12 = vld [vmem:[%s1] sm:$0xf]
  %v13 = vld [vmem:[%s1 + $0x4] sm:$0xf]
  %v14 = vld [vmem:[%s1 + $0x8] sm:$0xf]
  %v15 = vld [vmem:[%s1 + $0xc] sm:$0xf]
  %v16 = vld [vmem:[%s1 + $0x10] sm:$0xf]
  %v17 = vld [vmem:[%s1 + $0x14] sm:$0xf]
  %v18 = vld [vmem:[%s1 + $0x18] sm:$0xf]
  %v19 = vld [vmem:[%s1 + $0x1c] sm:$0xf]
  %v20 = vld [vmem:[%s1 + $0x20] sm:$0xf]
  %v21 = vld [vmem:[%s1 + $0x24] sm:$0xf]
  %v22 = vld [vmem:[%s1 + $0x28] sm:$0xf]
  %v23 = vld [vmem:[%s1 + $0x2c] sm:$0xf]
  %v24 = vld [vmem:[%s1 + $0x30] sm:$0xf]
  %v25 = vld [vmem:[%s1 + $0x34] sm:$0xf]
  %v26 = vld [vmem:[%s1 + $0x38] sm:$0xf]
  %v27 = vld [vmem:[%s1 + $0x3c] sm:$0xf]
  %v44 = vunpack.c.l.b16 %v12
  %v45 = vunpack.c.l.b16 %v13
  %v46 = vunpack.c.l.b16 %v14
  %v47 = vunpack.c.l.b16 %v15
  %v48 = vunpack.c.l.b16 %v16
  %v49 = vunpack.c.l.b16 %v17
  %v50 = vunpack.c.l.b16 %v18
  %v51 = vunpack.c.l.b16 %v19
  %v52 = vunpack.c.l.b16 %v20
  %v53 = vunpack.c.l.b16 %v21
  %v54 = vunpack.c.l.b16 %v22
  %v55 = vunpack.c.l.b16 %v23
  %v56 = vunpack.c.l.b16 %v24
  %v57 = vunpack.c.l.b16 %v25
  %v58 = vunpack.c.l.b16 %v26
  %v59 = vunpack.c.l.b16 %v27
  %v60 = vpack.c.b16 %v45, %v44
  %v61 = vpack.c.b16 %v47, %v46
  %v62 = vpack.c.b16 %v49, %v48
  %v63 = vpack.c.b16 %v51, %v50
  %v64 = vpack.c.b16 %v53, %v52
  %v65 = vpack.c.b16 %v55, %v54
  %v66 = vpack.c.b16 %v57, %v56
  %v67 = vpack.c.b16 %v59, %v58
  %76 = vmatpush.bf16.msra.mxu0 %v67
  %77 = vmatpush.bf16.msra.mxu0 %v66
  %78 = vmatpush.bf16.msra.mxu0 %v65
  %79 = vmatpush.bf16.msra.mxu0 %v64
  %80 = vmatpush.bf16.msra.mxu0 %v63
  %81 = vmatpush.bf16.msra.mxu0 %v62
  %82 = vmatpush.bf16.msra.mxu0 %v61
  %83 = vmatpush.bf16.msra.mxu0 %v60
  %84 = vmatmul.bf16.gmra.mxu0 %v11
  %v85 = vpop.f32.mrf.mxu0
  %v86 = vadd.f32 0.0, %v85
  %v87 = vpop.f32.mrf.mxu0
  %88 = vdwg.mxu0
  %89 = vst [vmem:[%s2] sm:$0xff] %v86
  // Predicated region
  $region10: #{full_generator_forward.21} parent=0 // pred_check
    _
  $region11: #{full_generator_forward.21} parent=0 // pred_check_branch
    %91 = sbr.rel (0) target = $region13
  $region12: #{full_generator_forward.21} parent=0 // pred_region
    _
  $region13: #{full_generator_forward.21} parent=0 // pred_fallthru
    _
  // Predicated region
  $region14: #{full_generator_forward.21} parent=0 // pred_check
    _
  $region15: #{full_generator_forward.21} parent=0 // pred_check_branch
    %93 = sbr.rel (0) target = $region17
  $region16: #{full_generator_forward.21} parent=0 // pred_region
    _
  $region17: #{full_generator_forward.21} parent=0 // pred_fallthru
    _

// kernel: full_generator_forward.22
$region0: #{full_generator_forward.22}
  #allocation0 [shape = 'u32[]', space=smem, size = 0x4, offset = 0x4, fixed_abs, tag = 'smem constant byte address 0x4 - core index']
  #allocation1 [shape = 'u32[72,128]{1,0:T(1,128)}', space=vmem, size = 0x9000, scoped, tag = 'internal scratch']
  %s0 = inlined_call_operand.vmem [shape: f32[2,256,3], index: 0, kind: input, shape index: {}]
  %s1 = inlined_call_operand.vmem [shape: f32[2,1,128], index: 1, kind: input, shape index: {}]
  %s2 = inlined_call_operand.vmem [shape: f32[3,128], index: 2, kind: input, shape index: {}]
  %s3 = inlined_call_operand.vmem [shape: bf16[128,128], index: 3, kind: input, shape index: {}]
  %s4 = inlined_call_operand.vmem [shape: bf16[128,128], index: 4, kind: input, shape index: {}]
  %s5 = inlined_call_operand.vmem [shape: f32[2,256,128], index: 5, kind: output, shape index: {}]
  %s6 = sld [smem:[#allocation0]]
  $region53: #{full_generator_forward.22} parent=0
    _
  %s8 = ssub.s32 1, %s6
  %s9 = scalar_select 0, %s8, %s6
  loop: start=0, step=1, limit=4
  $region2: #{full_generator_forward.22} parent=0 // loop_pre_header
    _
  $region3: #{full_generator_forward.22} parent=0 // loop_header
    %s11 = sphi 0, %s15
    %p12 = scmp.ge.s32.totalorder %s11, 4
    %s18 = sphi 0, %s30
    %s19 = sphi 0, %s26
    %s20 = sphi 0, %s18
    %s21 = sphi 0, %s19
    %s22 = sphi 0, %s20
    %s23 = sphi 0, %s21
    %s35 = sphi 0, %s37
    %s38 = sphi 0, %s35
    %s39 = sphi 0, %s38
    %s55 = sphi 0, %s39
    %s61 = sphi 0, %s63
    %s64 = sphi 0, %s61
    %s65 = sphi 0, %s64
    %s81 = sphi 0, %s65
    %s85 = sphi 0, %s85
    %s87 = sphi 0, %s85
    %s88 = sphi 0, %s87
    %s102 = sphi 0, %s88
    %s106 = sphi 0, %s106
    %s108 = sphi 0, %s106
    %s109 = sphi 0, %s108
    %s123 = sphi 0, %s109
    %s127 = sphi 0, %s127
    %s129 = sphi 0, %s127
    %s130 = sphi 0, %s129
    %s144 = sphi 0, %s130
    %s152 = sphi 0, %s154
    %s155 = sphi 0, %s152
    %s156 = sphi 0, %s155
    %s172 = sphi 0, %s156
  $region4: #{full_generator_forward.22} parent=0 // loop_header_branch
    %14 = sbr.rel (%p12) target = $region8
  $region5: #{full_generator_forward.22} parent=0 // loop_body
    %s16 = ssub.s32 %s11, 1
    %s17 = ssub.s32 %s11, 2
    %s24 = sadd.s32 1, %s19
    %p25 = scmp.ge.s32.totalorder %s24, 1
    %s26 = scalar_select %p25, 0, %s24
    %s27 = sadd.s32 1, %s18
    %s28 = scalar_select %p25, %s27, %s18
    %p29 = scmp.ge.s32.totalorder %s28, 2
    %s30 = scalar_select %p29, 0, %s28
    %s31 = ssub.s32 %s18, %s30
    %s32 = ssub.s32 %s19, %s26
    %s33 = sor.u32 %s31, %s32
    %p34 = scmp.eq.s32.totalorder %s33, 0
    %s36 = sadd.s32 %s35, 1
    %s37 = scalar_select %p34, %s35, %s36
    %p40 = pneg %p34
    %p41 = scmp.eq.s32.totalorder %s11, 1
    %p42 = por %p40, %p41
    %p43 = scmp.ne.s32.totalorder %s35, %s38
    %p44 = scmp.eq.s32.totalorder %s11, 0
    %p45 = por %p43, %p44
    %p46 = scmp.ne.s32.totalorder %s35, %s38
    %p47 = scmp.eq.s32.totalorder %s16, 1
    %p48 = por %p46, %p47
    %p49 = scmp.ne.s32.totalorder %s38, %s39
    %p50 = scmp.eq.s32.totalorder %s16, 0
    %p51 = por %p49, %p50
    %p52 = scmp.ne.s32.totalorder %s38, %s39
    %p53 = scmp.eq.s32.totalorder %s17, 1
    %p54 = por %p52, %p53
    %p56 = scmp.ne.s32.totalorder %s39, %s55
    %p57 = scmp.eq.s32.totalorder %s17, 0
    %p58 = por %p56, %p57
    %s59 = ssub.s32 %s18, %s30
    %p60 = scmp.eq.s32.totalorder %s59, 0
    %s62 = sadd.s32 %s61, 1
    %s63 = scalar_select %p60, %s61, %s62
    %p66 = pneg %p60
    %p67 = scmp.eq.s32.totalorder %s11, 1
    %p68 = por %p66, %p67
    %p69 = scmp.ne.s32.totalorder %s61, %s64
    %p70 = scmp.eq.s32.totalorder %s11, 0
    %p71 = por %p69, %p70
    %p72 = scmp.ne.s32.totalorder %s61, %s64
    %p73 = scmp.eq.s32.totalorder %s16, 1
    %p74 = por %p72, %p73
    %p75 = scmp.ne.s32.totalorder %s64, %s65
    %p76 = scmp.eq.s32.totalorder %s16, 0
    %p77 = por %p75, %p76
    %p78 = scmp.ne.s32.totalorder %s64, %s65
    %p79 = scmp.eq.s32.totalorder %s17, 1
    %p80 = por %p78, %p79
    %p82 = scmp.ne.s32.totalorder %s65, %s81
    %p83 = scmp.eq.s32.totalorder %s17, 0
    %p84 = por %p82, %p83
    %s86 = sadd.s32 %s85, 1
    %p89 = scmp.eq.s32.totalorder %s11, 1
    %p90 = scmp.ne.s32.totalorder %s85, %s87
    %p91 = scmp.eq.s32.totalorder %s11, 0
    %p92 = por %p90, %p91
    %p93 = scmp.ne.s32.totalorder %s85, %s87
    %p94 = scmp.eq.s32.totalorder %s16, 1
    %p95 = por %p93, %p94
    %p96 = scmp.ne.s32.totalorder %s87, %s88
    %p97 = scmp.eq.s32.totalorder %s16, 0
    %p98 = por %p96, %p97
    %p99 = scmp.ne.s32.totalorder %s87, %s88
    %p100 = scmp.eq.s32.totalorder %s17, 1
    %p101 = por %p99, %p100
    %p103 = scmp.ne.s32.totalorder %s88, %s102
    %p104 = scmp.eq.s32.totalorder %s17, 0
    %p105 = por %p103, %p104
    %s107 = sadd.s32 %s106, 1
    %p110 = scmp.eq.s32.totalorder %s11, 1
    %p111 = scmp.ne.s32.totalorder %s106, %s108
    %p112 = scmp.eq.s32.totalorder %s11, 0
    %p113 = por %p111, %p112
    %p114 = scmp.ne.s32.totalorder %s106, %s108
    %p115 = scmp.eq.s32.totalorder %s16, 1
    %p116 = por %p114, %p115
    %p117 = scmp.ne.s32.totalorder %s108, %s109
    %p118 = scmp.eq.s32.totalorder %s16, 0
    %p119 = por %p117, %p118
    %p120 = scmp.ne.s32.totalorder %s108, %s109
    %p121 = scmp.eq.s32.totalorder %s17, 1
    %p122 = por %p120, %p121
    %p124 = scmp.ne.s32.totalorder %s109, %s123
    %p125 = scmp.eq.s32.totalorder %s17, 0
    %p126 = por %p124, %p125
    %s128 = sadd.s32 %s127, 1
    %p131 = scmp.eq.s32.totalorder %s11, 1
    %p132 = scmp.ne.s32.totalorder %s127, %s129
    %p133 = scmp.eq.s32.totalorder %s11, 0
    %p134 = por %p132, %p133
    %p135 = scmp.ne.s32.totalorder %s127, %s129
    %p136 = scmp.eq.s32.totalorder %s16, 1
    %p137 = por %p135, %p136
    %p138 = scmp.ne.s32.totalorder %s129, %s130
    %p139 = scmp.eq.s32.totalorder %s16, 0
    %p140 = por %p138, %p139
    %p141 = scmp.ne.s32.totalorder %s129, %s130
    %p142 = scmp.eq.s32.totalorder %s17, 1
    %p143 = por %p141, %p142
    %p145 = scmp.ne.s32.totalorder %s130, %s144
    %p146 = scmp.eq.s32.totalorder %s17, 0
    %p147 = por %p145, %p146
    %s148 = ssub.s32 %s18, %s30
    %s149 = ssub.s32 %s19, %s26
    %s150 = sor.u32 %s148, %s149
    %p151 = scmp.eq.s32.totalorder %s150, 0
    %s153 = sadd.s32 %s152, 1
    %s154 = scalar_select %p151, %s152, %s153
    %p157 = pneg %p151
    %p158 = scmp.eq.s32.totalorder %s11, 1
    %p159 = por %p157, %p158
    %p160 = scmp.ne.s32.totalorder %s152, %s155
    %p161 = scmp.eq.s32.totalorder %s11, 0
    %p162 = por %p160, %p161
    %p163 = scmp.ne.s32.totalorder %s152, %s155
    %p164 = scmp.eq.s32.totalorder %s16, 1
    %p165 = por %p163, %p164
    %p166 = scmp.ne.s32.totalorder %s155, %s156
    %p167 = scmp.eq.s32.totalorder %s16, 0
    %p168 = por %p166, %p167
    %p169 = scmp.ne.s32.totalorder %s155, %s156
    %p170 = scmp.eq.s32.totalorder %s17, 1
    %p171 = por %p169, %p170
    %p173 = scmp.ne.s32.totalorder %s156, %s172
    %p174 = scmp.eq.s32.totalorder %s17, 0
    %p175 = por %p173, %p174
    %p176 = scmp.le.s32.totalorder 1, %s11
    %p177 = scmp.lt.s32.totalorder %s11, 3
    %p178 = pnand %p176, %p177
    %p179 = pneg %p178
    // Predicated region
    $region9: #{full_generator_forward.22} parent=5 // pred_check
      _
    $region10: #{full_generator_forward.22} parent=5 // pred_check_branch
      %181 = sbr.rel (%p178) target = $region12
    $region11: #{full_generator_forward.22} parent=5 // pred_region
      %s182 = ssub.s32 %s11, 1
      // Predicated region
      $region13: #{full_generator_forward.22} parent=11 // pred_check
        %p183 = pneg %p98
      $region14: #{full_generator_forward.22} parent=11 // pred_check_branch
        %185 = sbr.rel (%p183) target = $region16
      $region15: #{full_generator_forward.22} parent=11 // pred_region
        _
      $region16: #{full_generator_forward.22} parent=11 // pred_fallthru
        _
      // Predicated region
      $region17: #{full_generator_forward.22} parent=11 // pred_check
        %p186 = pneg %p119
      $region18: #{full_generator_forward.22} parent=11 // pred_check_branch
        %188 = sbr.rel (%p186) target = $region20
      $region19: #{full_generator_forward.22} parent=11 // pred_region
        _
      $region20: #{full_generator_forward.22} parent=11 // pred_fallthru
        _
      // Predicated region
      $region21: #{full_generator_forward.22} parent=11 // pred_check
        %p189 = pneg %p140
      $region22: #{full_generator_forward.22} parent=11 // pred_check_branch
        %191 = sbr.rel (%p189) target = $region24
      $region23: #{full_generator_forward.22} parent=11 // pred_region
        _
      $region24: #{full_generator_forward.22} parent=11 // pred_fallthru
        _
    $region12: #{full_generator_forward.22} parent=5 // pred_fallthru
      _
    %p192 = scmp.lt.s32.totalorder %s11, 2
    // Predicated region
    $region25: #{full_generator_forward.22} parent=5 // pred_check
      %p193 = pneg %p192
    $region26: #{full_generator_forward.22} parent=5 // pred_check_branch
      %195 = sbr.rel (%p193) target = $region28
    $region27: #{full_generator_forward.22} parent=5 // pred_region
      // Predicated region
      $region29: #{full_generator_forward.22} parent=27 // pred_check
        %p196 = pneg %p45
      $region30: #{full_generator_forward.22} parent=27 // pred_check_branch
        %198 = sbr.rel (%p196) target = $region32
      $region31: #{full_generator_forward.22} parent=27 // pred_region
        %s199 = smul.u32 32, %s19
        %p200 = scmp.lt.s32.totalorder %s18, 1
        %s201 = scalar_select %p200, %s18, 1
        %p202 = scmp.lt.s32.totalorder %s199, 31
        %s203 = scalar_select %p202, %s199, 31
        %s204 = smul.addr %s201, 32
        %s205 = sadd.s32 %s203, %s204
        %s206 = smul.addr %s205, 8
        %s207 = scalar_lea.vmem %s0, %s206
        %s208 = smul.u32 32, %s19
      $region32: #{full_generator_forward.22} parent=27 // pred_fallthru
        _
      // Predicated region
      $region33: #{full_generator_forward.22} parent=27 // pred_check
        %p209 = pneg %p71
      $region34: #{full_generator_forward.22} parent=27 // pred_check_branch
        %211 = sbr.rel (%p209) target = $region36
      $region35: #{full_generator_forward.22} parent=27 // pred_region
        %p212 = scmp.lt.s32.totalorder %s18, 1
        %s213 = scalar_select %p212, %s18, 1
        %s214 = scalar_lea.vmem %s1, %s213
      $region36: #{full_generator_forward.22} parent=27 // pred_fallthru
        _
    $region28: #{full_generator_forward.22} parent=5 // pred_fallthru
      _
    %p215 = scmp.le.s32.totalorder 1, %s11
    %p216 = scmp.lt.s32.totalorder %s11, 3
    %p217 = pnand %p215, %p216
    %p218 = pneg %p217
    // Predicated region
    $region37: #{full_generator_forward.22} parent=5 // pred_check
      _
    $region38: #{full_generator_forward.22} parent=5 // pred_check_branch
      %220 = sbr.rel (%p217) target = $region40
    $region39: #{full_generator_forward.22} parent=5 // pred_region
      %s221 = ssub.s32 %s11, 1
      %s222 = smul.u32 32, %s21
      %p223 = scmp.lt.s32.totalorder %s20, 1
      %s224 = scalar_select %p223, %s20, 1
      %p225 = scmp.lt.s32.totalorder %s222, 31
      %s226 = scalar_select %p225, %s222, 31
      %s227 = smul.addr %s224, 32
      %s228 = sadd.s32 %s226, %s227
      %s229 = smul.addr %s228, 8
      %s230 = scalar_lea.vmem %s0, %s229
      %p231 = pneg %p51
      %p232 = pneg %p48
      %p233 = scmp.lt.s32.totalorder %s20, 1
      %s234 = scalar_select %p233, %s20, 1
      %s235 = scalar_lea.vmem %s1, %s234
      %p236 = pneg %p77
      %p237 = pneg %p74
      %p238 = pneg %p98
      %p239 = pneg %p95
      %p240 = pneg %p119
      %p241 = pneg %p116
      %p242 = pneg %p140
      %p243 = pneg %p137
      %p244 = pneg %p168
      %p245 = pneg %p165
      %s246 = smul.u32 32, %s21
      %p247 = scmp.lt.s32.totalorder %s20, 1
      %s248 = scalar_select %p247, %s20, 1
      %p249 = scmp.lt.s32.totalorder %s246, 31
      %s250 = scalar_select %p249, %s246, 31
      %s251 = smul.addr %s248, 32
      %s252 = sadd.s32 %s250, %s251
      %s253 = smul.addr %s252, 8
      %s254 = scalar_lea.vmem %s5, %s253
      %s255 = smul.u32 32, %s21
      %p256 = scmp.lt.s32.totalorder %s20, 1
      %s257 = scalar_select %p256, %s20, 1
      %p258 = scmp.lt.s32.totalorder %s255, 31
      %s259 = scalar_select %p258, %s255, 31
      %s260 = smul.addr %s257, 32
      %s261 = sadd.s32 %s259, %s260
      %s262 = smul.addr %s261, 8
      %s263 = scalar_lea.vmem %s0, %s262
      %s264 = smul.u32 32, %s21
      %p265 = scmp.lt.s32.totalorder %s20, 1
      %s266 = scalar_select %p265, %s20, 1
      %s267 = scalar_lea.vmem %s1, %s266
      %s268 = smul.u32 32, %s21
      %p269 = scmp.lt.s32.totalorder %s20, 1
      %s270 = scalar_select %p269, %s20, 1
      %p271 = scmp.lt.s32.totalorder %s268, 31
      %s272 = scalar_select %p271, %s268, 31
      %s273 = smul.addr %s270, 32
      %s274 = sadd.s32 %s272, %s273
      %s275 = smul.addr %s274, 8
      %s276 = scalar_lea.vmem %s5, %s275
      %s277 = smul.u32 32, %s21
      %v278 = vld [vmem:[%s263] sm:$0xff]
      %v279 = vld [vmem:[%s263 + $0x8] sm:$0xff]
      %v280 = vld [vmem:[%s263 + $0x10] sm:$0xff]
      %v281 = vld [vmem:[%s263 + $0x18] sm:$0xff]
      %v282 = vld [vmem:[%s263 + $0x20] sm:$0xff]
      %v283 = vld [vmem:[%s263 + $0x28] sm:$0xff]
      %v284 = vld [vmem:[%s263 + $0x30] sm:$0xff]
      %v285 = vld [vmem:[%s263 + $0x38] sm:$0xff]
      %v286 = vld [vmem:[%s263 + $0x40] sm:$0xff]
      %v287 = vld [vmem:[%s263 + $0x48] sm:$0xff]
      %v288 = vld [vmem:[%s263 + $0x50] sm:$0xff]
      %v289 = vld [vmem:[%s263 + $0x58] sm:$0xff]
      %v290 = vld [vmem:[%s263 + $0x60] sm:$0xff]
      %v291 = vld [vmem:[%s263 + $0x68] sm:$0xff]
      %v292 = vld [vmem:[%s263 + $0x70] sm:$0xff]
      %v293 = vld [vmem:[%s263 + $0x78] sm:$0xff]
      %v294 = vld [vmem:[%s263 + $0x80] sm:$0xff]
      %v295 = vld [vmem:[%s263 + $0x88] sm:$0xff]
      %v296 = vld [vmem:[%s263 + $0x90] sm:$0xff]
      %v297 = vld [vmem:[%s263 + $0x98] sm:$0xff]
      %v298 = vld [vmem:[%s263 + $0xa0] sm:$0xff]
      %v299 = vld [vmem:[%s263 + $0xa8] sm:$0xff]
      %v300 = vld [vmem:[%s263 + $0xb0] sm:$0xff]
      %v301 = vld [vmem:[%s263 + $0xb8] sm:$0xff]
      %v302 = vld [vmem:[%s263 + $0xc0] sm:$0xff]
      %v303 = vld [vmem:[%s263 + $0xc8] sm:$0xff]
      %v304 = vld [vmem:[%s263 + $0xd0] sm:$0xff]
      %v305 = vld [vmem:[%s263 + $0xd8] sm:$0xff]
      %v306 = vld [vmem:[%s263 + $0xe0] sm:$0xff]
      %v307 = vld [vmem:[%s263 + $0xe8] sm:$0xff]
      %v308 = vld [vmem:[%s263 + $0xf0] sm:$0xff]
      %v309 = vld [vmem:[%s263 + $0xf8] sm:$0xff]
      %v310 = vld [vmem:[%s2] sm:$0x7]
      %312 = vset.pattern.permute.xlu0 0
      %313 = vperm.xlu0 %312, %v278
      %v314 = vpop.permute.xlu0 %313
      %317 = vset.pattern.permute.xlu0 0
      %318 = vperm.xlu0 %317, %v279
      %v319 = vpop.permute.xlu0 %318
      %322 = vset.pattern.permute.xlu0 0
      %323 = vperm.xlu0 %322, %v280
      %v324 = vpop.permute.xlu0 %323
      %327 = vset.pattern.permute.xlu0 0
      %328 = vperm.xlu0 %327, %v281
      %v329 = vpop.permute.xlu0 %328
      %332 = vset.pattern.permute.xlu0 0
      %333 = vperm.xlu0 %332, %v282
      %v334 = vpop.permute.xlu0 %333
      %337 = vset.pattern.permute.xlu0 0
      %338 = vperm.xlu0 %337, %v283
      %v339 = vpop.permute.xlu0 %338
      %342 = vset.pattern.permute.xlu0 0
      %343 = vperm.xlu0 %342, %v284
      %v344 = vpop.permute.xlu0 %343
      %347 = vset.pattern.permute.xlu0 0
      %348 = vperm.xlu0 %347, %v285
      %v349 = vpop.permute.xlu0 %348
      %352 = vset.pattern.permute.xlu0 0
      %353 = vperm.xlu0 %352, %v286
      %v354 = vpop.permute.xlu0 %353
      %357 = vset.pattern.permute.xlu0 0
      %358 = vperm.xlu0 %357, %v287
      %v359 = vpop.permute.xlu0 %358
      %362 = vset.pattern.permute.xlu0 0
      %363 = vperm.xlu0 %362, %v288
      %v364 = vpop.permute.xlu0 %363
      %367 = vset.pattern.permute.xlu0 0
      %368 = vperm.xlu0 %367, %v289
      %v369 = vpop.permute.xlu0 %368
      %372 = vset.pattern.permute.xlu0 0
      %373 = vperm.xlu0 %372, %v290
      %v374 = vpop.permute.xlu0 %373
      %377 = vset.pattern.permute.xlu0 0
      %378 = vperm.xlu0 %377, %v291
      %v379 = vpop.permute.xlu0 %378
      %382 = vset.pattern.permute.xlu0 0
      %383 = vperm.xlu0 %382, %v292
      %v384 = vpop.permute.xlu0 %383
      %387 = vset.pattern.permute.xlu0 0
      %388 = vperm.xlu0 %387, %v293
      %v389 = vpop.permute.xlu0 %388
      %392 = vset.pattern.permute.xlu0 0
      %393 = vperm.xlu0 %392, %v294
      %v394 = vpop.permute.xlu0 %393
      %397 = vset.pattern.permute.xlu0 0
      %398 = vperm.xlu0 %397, %v295
      %v399 = vpop.permute.xlu0 %398
      %402 = vset.pattern.permute.xlu0 0
      %403 = vperm.xlu0 %402, %v296
      %v404 = vpop.permute.xlu0 %403
      %407 = vset.pattern.permute.xlu0 0
      %408 = vperm.xlu0 %407, %v297
      %v409 = vpop.permute.xlu0 %408
      %412 = vset.pattern.permute.xlu0 0
      %413 = vperm.xlu0 %412, %v298
      %v414 = vpop.permute.xlu0 %413
      %417 = vset.pattern.permute.xlu0 0
      %418 = vperm.xlu0 %417, %v299
      %v419 = vpop.permute.xlu0 %418
      %422 = vset.pattern.permute.xlu0 0
      %423 = vperm.xlu0 %422, %v300
      %v424 = vpop.permute.xlu0 %423
      %427 = vset.pattern.permute.xlu0 0
      %428 = vperm.xlu0 %427, %v301
      %v429 = vpop.permute.xlu0 %428
      %432 = vset.pattern.permute.xlu0 0
      %433 = vperm.xlu0 %432, %v302
      %v434 = vpop.permute.xlu0 %433
      %437 = vset.pattern.permute.xlu0 0
      %438 = vperm.xlu0 %437, %v303
      %v439 = vpop.permute.xlu0 %438
      %442 = vset.pattern.permute.xlu0 0
      %443 = vperm.xlu0 %442, %v304
      %v444 = vpop.permute.xlu0 %443
      %447 = vset.pattern.permute.xlu0 0
      %448 = vperm.xlu0 %447, %v305
      %v449 = vpop.permute.xlu0 %448
      %452 = vset.pattern.permute.xlu0 0
      %453 = vperm.xlu0 %452, %v306
      %v454 = vpop.permute.xlu0 %453
      %457 = vset.pattern.permute.xlu0 0
      %458 = vperm.xlu0 %457, %v307
      %v459 = vpop.permute.xlu0 %458
      %462 = vset.pattern.permute.xlu0 0
      %463 = vperm.xlu0 %462, %v308
      %v464 = vpop.permute.xlu0 %463
      %467 = vset.pattern.permute.xlu0 0
      %468 = vperm.xlu0 %467, %v309
      %v469 = vpop.permute.xlu0 %468
      %v471 = vperm.slane %v310, 0
      %v472 = vmul.f32 %v314, %v471
      %v473 = vmul.f32 %v319, %v471
      %v474 = vmul.f32 %v324, %v471
      %v475 = vmul.f32 %v329, %v471
      %v476 = vmul.f32 %v334, %v471
      %v477 = vmul.f32 %v339, %v471
      %v478 = vmul.f32 %v344, %v471
      %v479 = vmul.f32 %v349, %v471
      %v480 = vmul.f32 %v354, %v471
      %v481 = vmul.f32 %v359, %v471
      %v482 = vmul.f32 %v364, %v471
      %v483 = vmul.f32 %v369, %v471
      %v484 = vmul.f32 %v374, %v471
      %v485 = vmul.f32 %v379, %v471
      %v486 = vmul.f32 %v384, %v471
      %v487 = vmul.f32 %v389, %v471
      %v488 = vmul.f32 %v394, %v471
      %v489 = vmul.f32 %v399, %v471
      %v490 = vmul.f32 %v404, %v471
      %v491 = vmul.f32 %v409, %v471
      %v492 = vmul.f32 %v414, %v471
      %v493 = vmul.f32 %v419, %v471
      %v494 = vmul.f32 %v424, %v471
      %v495 = vmul.f32 %v429, %v471
      %v496 = vmul.f32 %v434, %v471
      %v497 = vmul.f32 %v439, %v471
      %v498 = vmul.f32 %v444, %v471
      %v499 = vmul.f32 %v449, %v471
      %v500 = vmul.f32 %v454, %v471
      %v501 = vmul.f32 %v459, %v471
      %v502 = vmul.f32 %v464, %v471
      %v503 = vmul.f32 %v469, %v471
      %504 = vset.pattern.permute.xlu0 1
      %505 = vperm.xlu0 %504, %v278
      %v506 = vpop.permute.xlu0 %505
      %508 = vset.pattern.permute.xlu0 1
      %509 = vperm.xlu0 %508, %v279
      %v510 = vpop.permute.xlu0 %509
      %512 = vset.pattern.permute.xlu0 1
      %513 = vperm.xlu0 %512, %v280
      %v514 = vpop.permute.xlu0 %513
      %516 = vset.pattern.permute.xlu0 1
      %517 = vperm.xlu0 %516, %v281
      %v518 = vpop.permute.xlu0 %517
      %520 = vset.pattern.permute.xlu0 1
      %521 = vperm.xlu0 %520, %v282
      %v522 = vpop.permute.xlu0 %521
      %524 = vset.pattern.permute.xlu0 1
      %525 = vperm.xlu0 %524, %v283
      %v526 = vpop.permute.xlu0 %525
      %528 = vset.pattern.permute.xlu0 1
      %529 = vperm.xlu0 %528, %v284
      %v530 = vpop.permute.xlu0 %529
      %532 = vset.pattern.permute.xlu0 1
      %533 = vperm.xlu0 %532, %v285
      %v534 = vpop.permute.xlu0 %533
      %536 = vset.pattern.permute.xlu0 1
      %537 = vperm.xlu0 %536, %v286
      %v538 = vpop.permute.xlu0 %537
      %540 = vset.pattern.permute.xlu0 1
      %541 = vperm.xlu0 %540, %v287
      %v542 = vpop.permute.xlu0 %541
      %544 = vset.pattern.permute.xlu0 1
      %545 = vperm.xlu0 %544, %v288
      %v546 = vpop.permute.xlu0 %545
      %548 = vset.pattern.permute.xlu0 1
      %549 = vperm.xlu0 %548, %v289
      %v550 = vpop.permute.xlu0 %549
      %552 = vset.pattern.permute.xlu0 1
      %553 = vperm.xlu0 %552, %v290
      %v554 = vpop.permute.xlu0 %553
      %556 = vset.pattern.permute.xlu0 1
      %557 = vperm.xlu0 %556, %v291
      %v558 = vpop.permute.xlu0 %557
      %560 = vset.pattern.permute.xlu0 1
      %561 = vperm.xlu0 %560, %v292
      %v562 = vpop.permute.xlu0 %561
      %564 = vset.pattern.permute.xlu0 1
      %565 = vperm.xlu0 %564, %v293
      %v566 = vpop.permute.xlu0 %565
      %568 = vset.pattern.permute.xlu0 1
      %569 = vperm.xlu0 %568, %v294
      %v570 = vpop.permute.xlu0 %569
      %572 = vset.pattern.permute.xlu0 1
      %573 = vperm.xlu0 %572, %v295
      %v574 = vpop.permute.xlu0 %573
      %576 = vset.pattern.permute.xlu0 1
      %577 = vperm.xlu0 %576, %v296
      %v578 = vpop.permute.xlu0 %577
      %580 = vset.pattern.permute.xlu0 1
      %581 = vperm.xlu0 %580, %v297
      %v582 = vpop.permute.xlu0 %581
      %584 = vset.pattern.permute.xlu0 1
      %585 = vperm.xlu0 %584, %v298
      %v586 = vpop.permute.xlu0 %585
      %588 = vset.pattern.permute.xlu0 1
      %589 = vperm.xlu0 %588, %v299
      %v590 = vpop.permute.xlu0 %589
      %592 = vset.pattern.permute.xlu0 1
      %593 = vperm.xlu0 %592, %v300
      %v594 = vpop.permute.xlu0 %593
      %596 = vset.pattern.permute.xlu0 1
      %597 = vperm.xlu0 %596, %v301
      %v598 = vpop.permute.xlu0 %597
      %600 = vset.pattern.permute.xlu0 1
      %601 = vperm.xlu0 %600, %v302
      %v602 = vpop.permute.xlu0 %601
      %604 = vset.pattern.permute.xlu0 1
      %605 = vperm.xlu0 %604, %v303
      %v606 = vpop.permute.xlu0 %605
      %608 = vset.pattern.permute.xlu0 1
      %609 = vperm.xlu0 %608, %v304
      %v610 = vpop.permute.xlu0 %609
      %612 = vset.pattern.permute.xlu0 1
      %613 = vperm.xlu0 %612, %v305
      %v614 = vpop.permute.xlu0 %613
      %616 = vset.pattern.permute.xlu0 1
      %617 = vperm.xlu0 %616, %v306
      %v618 = vpop.permute.xlu0 %617
      %620 = vset.pattern.permute.xlu0 1
      %621 = vperm.xlu0 %620, %v307
      %v622 = vpop.permute.xlu0 %621
      %624 = vset.pattern.permute.xlu0 1
      %625 = vperm.xlu0 %624, %v308
      %v626 = vpop.permute.xlu0 %625
      %628 = vset.pattern.permute.xlu0 1
      %629 = vperm.xlu0 %628, %v309
      %v630 = vpop.permute.xlu0 %629
      %v632 = vperm.slane %v310, 1
      %v633 = vmul.f32 %v506, %v632
      %v634 = vmul.f32 %v510, %v632
      %v635 = vmul.f32 %v514, %v632
      %v636 = vmul.f32 %v518, %v632
      %v637 = vmul.f32 %v522, %v632
      %v638 = vmul.f32 %v526, %v632
      %v639 = vmul.f32 %v530, %v632
      %v640 = vmul.f32 %v534, %v632
      %v641 = vmul.f32 %v538, %v632
      %v642 = vmul.f32 %v542, %v632
      %v643 = vmul.f32 %v546, %v632
      %v644 = vmul.f32 %v550, %v632
      %v645 = vmul.f32 %v554, %v632
      %v646 = vmul.f32 %v558, %v632
      %v647 = vmul.f32 %v562, %v632
      %v648 = vmul.f32 %v566, %v632
      %v649 = vmul.f32 %v570, %v632
      %v650 = vmul.f32 %v574, %v632
      %v651 = vmul.f32 %v578, %v632
      %v652 = vmul.f32 %v582, %v632
      %v653 = vmul.f32 %v586, %v632
      %v654 = vmul.f32 %v590, %v632
      %v655 = vmul.f32 %v594, %v632
      %v656 = vmul.f32 %v598, %v632
      %v657 = vmul.f32 %v602, %v632
      %v658 = vmul.f32 %v606, %v632
      %v659 = vmul.f32 %v610, %v632
      %v660 = vmul.f32 %v614, %v632
      %v661 = vmul.f32 %v618, %v632
      %v662 = vmul.f32 %v622, %v632
      %v663 = vmul.f32 %v626, %v632
      %v664 = vmul.f32 %v630, %v632
      %v665 = vadd.f32 %v472, %v633
      %v666 = vadd.f32 %v473, %v634
      %v667 = vadd.f32 %v474, %v635
      %v668 = vadd.f32 %v475, %v636
      %v669 = vadd.f32 %v476, %v637
      %v670 = vadd.f32 %v477, %v638
      %v671 = vadd.f32 %v478, %v639
      %v672 = vadd.f32 %v479, %v640
      %v673 = vadd.f32 %v480, %v641
      %v674 = vadd.f32 %v481, %v642
      %v675 = vadd.f32 %v482, %v643
      %v676 = vadd.f32 %v483, %v644
      %v677 = vadd.f32 %v484, %v645
      %v678 = vadd.f32 %v485, %v646
      %v679 = vadd.f32 %v486, %v647
      %v680 = vadd.f32 %v487, %v648
      %v681 = vadd.f32 %v488, %v649
      %v682 = vadd.f32 %v489, %v650
      %v683 = vadd.f32 %v490, %v651
      %v684 = vadd.f32 %v491, %v652
      %v685 = vadd.f32 %v492, %v653
      %v686 = vadd.f32 %v493, %v654
      %v687 = vadd.f32 %v494, %v655
      %v688 = vadd.f32 %v495, %v656
      %v689 = vadd.f32 %v496, %v657
      %v690 = vadd.f32 %v497, %v658
      %v691 = vadd.f32 %v498, %v659
      %v692 = vadd.f32 %v499, %v660
      %v693 = vadd.f32 %v500, %v661
      %v694 = vadd.f32 %v501, %v662
      %v695 = vadd.f32 %v502, %v663
      %v696 = vadd.f32 %v503, %v664
      %697 = vset.pattern.permute.xlu0 2
      %698 = vperm.xlu0 %697, %v278
      %v699 = vpop.permute.xlu0 %698
      %701 = vset.pattern.permute.xlu0 2
      %702 = vperm.xlu0 %701, %v279
      %v703 = vpop.permute.xlu0 %702
      %705 = vset.pattern.permute.xlu0 2
      %706 = vperm.xlu0 %705, %v280
      %v707 = vpop.permute.xlu0 %706
      %709 = vset.pattern.permute.xlu0 2
      %710 = vperm.xlu0 %709, %v281
      %v711 = vpop.permute.xlu0 %710
      %713 = vset.pattern.permute.xlu0 2
      %714 = vperm.xlu0 %713, %v282
      %v715 = vpop.permute.xlu0 %714
      %717 = vset.pattern.permute.xlu0 2
      %718 = vperm.xlu0 %717, %v283
      %v719 = vpop.permute.xlu0 %718
      %721 = vset.pattern.permute.xlu0 2
      %722 = vperm.xlu0 %721, %v284
      %v723 = vpop.permute.xlu0 %722
      %725 = vset.pattern.permute.xlu0 2
      %726 = vperm.xlu0 %725, %v285
      %v727 = vpop.permute.xlu0 %726
      %729 = vset.pattern.permute.xlu0 2
      %730 = vperm.xlu0 %729, %v286
      %v731 = vpop.permute.xlu0 %730
      %733 = vset.pattern.permute.xlu0 2
      %734 = vperm.xlu0 %733, %v287
      %v735 = vpop.permute.xlu0 %734
      %737 = vset.pattern.permute.xlu0 2
      %738 = vperm.xlu0 %737, %v288
      %v739 = vpop.permute.xlu0 %738
      %741 = vset.pattern.permute.xlu0 2
      %742 = vperm.xlu0 %741, %v289
      %v743 = vpop.permute.xlu0 %742
      %745 = vset.pattern.permute.xlu0 2
      %746 = vperm.xlu0 %745, %v290
      %v747 = vpop.permute.xlu0 %746
      %749 = vset.pattern.permute.xlu0 2
      %750 = vperm.xlu0 %749, %v291
      %v751 = vpop.permute.xlu0 %750
      %753 = vset.pattern.permute.xlu0 2
      %754 = vperm.xlu0 %753, %v292
      %v755 = vpop.permute.xlu0 %754
      %757 = vset.pattern.permute.xlu0 2
      %758 = vperm.xlu0 %757, %v293
      %v759 = vpop.permute.xlu0 %758
      %761 = vset.pattern.permute.xlu0 2
      %762 = vperm.xlu0 %761, %v294
      %v763 = vpop.permute.xlu0 %762
      %765 = vset.pattern.permute.xlu0 2
      %766 = vperm.xlu0 %765, %v295
      %v767 = vpop.permute.xlu0 %766
      %769 = vset.pattern.permute.xlu0 2
      %770 = vperm.xlu0 %769, %v296
      %v771 = vpop.permute.xlu0 %770
      %773 = vset.pattern.permute.xlu0 2
      %774 = vperm.xlu0 %773, %v297
      %v775 = vpop.permute.xlu0 %774
      %777 = vset.pattern.permute.xlu0 2
      %778 = vperm.xlu0 %777, %v298
      %v779 = vpop.permute.xlu0 %778
      %781 = vset.pattern.permute.xlu0 2
      %782 = vperm.xlu0 %781, %v299
      %v783 = vpop.permute.xlu0 %782
      %785 = vset.pattern.permute.xlu0 2
      %786 = vperm.xlu0 %785, %v300
      %v787 = vpop.permute.xlu0 %786
      %789 = vset.pattern.permute.xlu0 2
      %790 = vperm.xlu0 %789, %v301
      %v791 = vpop.permute.xlu0 %790
      %793 = vset.pattern.permute.xlu0 2
      %794 = vperm.xlu0 %793, %v302
      %v795 = vpop.permute.xlu0 %794
      %797 = vset.pattern.permute.xlu0 2
      %798 = vperm.xlu0 %797, %v303
      %v799 = vpop.permute.xlu0 %798
      %801 = vset.pattern.permute.xlu0 2
      %802 = vperm.xlu0 %801, %v304
      %v803 = vpop.permute.xlu0 %802
      %805 = vset.pattern.permute.xlu0 2
      %806 = vperm.xlu0 %805, %v305
      %v807 = vpop.permute.xlu0 %806
      %809 = vset.pattern.permute.xlu0 2
      %810 = vperm.xlu0 %809, %v306
      %v811 = vpop.permute.xlu0 %810
      %813 = vset.pattern.permute.xlu0 2
      %814 = vperm.xlu0 %813, %v307
      %v815 = vpop.permute.xlu0 %814
      %817 = vset.pattern.permute.xlu0 2
      %818 = vperm.xlu0 %817, %v308
      %v819 = vpop.permute.xlu0 %818
      %821 = vset.pattern.permute.xlu0 2
      %822 = vperm.xlu0 %821, %v309
      %v823 = vpop.permute.xlu0 %822
      %v825 = vperm.slane %v310, 2
      %v826 = vmul.f32 %v699, %v825
      %v827 = vmul.f32 %v703, %v825
      %v828 = vmul.f32 %v707, %v825
      %v829 = vmul.f32 %v711, %v825
      %v830 = vmul.f32 %v715, %v825
      %v831 = vmul.f32 %v719, %v825
      %v832 = vmul.f32 %v723, %v825
      %v833 = vmul.f32 %v727, %v825
      %v834 = vmul.f32 %v731, %v825
      %v835 = vmul.f32 %v735, %v825
      %v836 = vmul.f32 %v739, %v825
      %v837 = vmul.f32 %v743, %v825
      %v838 = vmul.f32 %v747, %v825
      %v839 = vmul.f32 %v751, %v825
      %v840 = vmul.f32 %v755, %v825
      %v841 = vmul.f32 %v759, %v825
      %v842 = vmul.f32 %v763, %v825
      %v843 = vmul.f32 %v767, %v825
      %v844 = vmul.f32 %v771, %v825
      %v845 = vmul.f32 %v775, %v825
      %v846 = vmul.f32 %v779, %v825
      %v847 = vmul.f32 %v783, %v825
      %v848 = vmul.f32 %v787, %v825
      %v849 = vmul.f32 %v791, %v825
      %v850 = vmul.f32 %v795, %v825
      %v851 = vmul.f32 %v799, %v825
      %v852 = vmul.f32 %v803, %v825
      %v853 = vmul.f32 %v807, %v825
      %v854 = vmul.f32 %v811, %v825
      %v855 = vmul.f32 %v815, %v825
      %v856 = vmul.f32 %v819, %v825
      %v857 = vmul.f32 %v823, %v825
      %v858 = vadd.f32 %v665, %v826
      %v859 = vadd.f32 %v666, %v827
      %v860 = vadd.f32 %v667, %v828
      %v861 = vadd.f32 %v668, %v829
      %v862 = vadd.f32 %v669, %v830
      %v863 = vadd.f32 %v670, %v831
      %v864 = vadd.f32 %v671, %v832
      %v865 = vadd.f32 %v672, %v833
      %v866 = vadd.f32 %v673, %v834
      %v867 = vadd.f32 %v674, %v835
      %v868 = vadd.f32 %v675, %v836
      %v869 = vadd.f32 %v676, %v837
      %v870 = vadd.f32 %v677, %v838
      %v871 = vadd.f32 %v678, %v839
      %v872 = vadd.f32 %v679, %v840
      %v873 = vadd.f32 %v680, %v841
      %v874 = vadd.f32 %v681, %v842
      %v875 = vadd.f32 %v682, %v843
      %v876 = vadd.f32 %v683, %v844
      %v877 = vadd.f32 %v684, %v845
      %v878 = vadd.f32 %v685, %v846
      %v879 = vadd.f32 %v686, %v847
      %v880 = vadd.f32 %v687, %v848
      %v881 = vadd.f32 %v688, %v849
      %v882 = vadd.f32 %v689, %v850
      %v883 = vadd.f32 %v690, %v851
      %v884 = vadd.f32 %v691, %v852
      %v885 = vadd.f32 %v692, %v853
      %v886 = vadd.f32 %v693, %v854
      %v887 = vadd.f32 %v694, %v855
      %v888 = vadd.f32 %v695, %v856
      %v889 = vadd.f32 %v696, %v857
      %v890 = vmax.f32 %v858, 0.0
      %v891 = vmax.f32 %v859, 0.0
      %v892 = vmax.f32 %v860, 0.0
      %v893 = vmax.f32 %v861, 0.0
      %v894 = vmax.f32 %v862, 0.0
      %v895 = vmax.f32 %v863, 0.0
      %v896 = vmax.f32 %v864, 0.0
      %v897 = vmax.f32 %v865, 0.0
      %v898 = vmax.f32 %v866, 0.0
      %v899 = vmax.f32 %v867, 0.0
      %v900 = vmax.f32 %v868, 0.0
      %v901 = vmax.f32 %v869, 0.0
      %v902 = vmax.f32 %v870, 0.0
      %v903 = vmax.f32 %v871, 0.0
      %v904 = vmax.f32 %v872, 0.0
      %v905 = vmax.f32 %v873, 0.0
      %v906 = vmax.f32 %v874, 0.0
      %v907 = vmax.f32 %v875, 0.0
      %v908 = vmax.f32 %v876, 0.0
      %v909 = vmax.f32 %v877, 0.0
      %v910 = vmax.f32 %v878, 0.0
      %v911 = vmax.f32 %v879, 0.0
      %v912 = vmax.f32 %v880, 0.0
      %v913 = vmax.f32 %v881, 0.0
      %v914 = vmax.f32 %v882, 0.0
      %v915 = vmax.f32 %v883, 0.0
      %v916 = vmax.f32 %v884, 0.0
      %v917 = vmax.f32 %v885, 0.0
      %v918 = vmax.f32 %v886, 0.0
      %v919 = vmax.f32 %v887, 0.0
      %v920 = vmax.f32 %v888, 0.0
      %v921 = vmax.f32 %v889, 0.0
      %v922 = vld [vmem:[%s267] sm:$0x1]
      %v924 = vperm.slane %v922, 0
      %v926 = vadd.f32 %v890, %v924
      %v927 = vadd.f32 %v891, %v924
      %v928 = vadd.f32 %v892, %v924
      %v929 = vadd.f32 %v893, %v924
      %v930 = vadd.f32 %v894, %v924
      %v931 = vadd.f32 %v895, %v924
      %v932 = vadd.f32 %v896, %v924
      %v933 = vadd.f32 %v897, %v924
      %v934 = vadd.f32 %v898, %v924
      %v935 = vadd.f32 %v899, %v924
      %v936 = vadd.f32 %v900, %v924
      %v937 = vadd.f32 %v901, %v924
      %v938 = vadd.f32 %v902, %v924
      %v939 = vadd.f32 %v903, %v924
      %v940 = vadd.f32 %v904, %v924
      %v941 = vadd.f32 %v905, %v924
      %v942 = vadd.f32 %v906, %v924
      %v943 = vadd.f32 %v907, %v924
      %v944 = vadd.f32 %v908, %v924
      %v945 = vadd.f32 %v909, %v924
      %v946 = vadd.f32 %v910, %v924
      %v947 = vadd.f32 %v911, %v924
      %v948 = vadd.f32 %v912, %v924
      %v949 = vadd.f32 %v913, %v924
      %v950 = vadd.f32 %v914, %v924
      %v951 = vadd.f32 %v915, %v924
      %v952 = vadd.f32 %v916, %v924
      %v953 = vadd.f32 %v917, %v924
      %v954 = vadd.f32 %v918, %v924
      %v955 = vadd.f32 %v919, %v924
      %v956 = vadd.f32 %v920, %v924
      %v957 = vadd.f32 %v921, %v924
      %v958 = vpack.c.bf16 %v927, %v926
      %v959 = vpack.c.bf16 %v929, %v928
      %v960 = vpack.c.bf16 %v931, %v930
      %v961 = vpack.c.bf16 %v933, %v932
      %v962 = vpack.c.bf16 %v935, %v934
      %v963 = vpack.c.bf16 %v937, %v936
      %v964 = vpack.c.bf16 %v939, %v938
      %v965 = vpack.c.bf16 %v941, %v940
      %v966 = vpack.c.bf16 %v943, %v942
      %v967 = vpack.c.bf16 %v945, %v944
      %v968 = vpack.c.bf16 %v947, %v946
      %v969 = vpack.c.bf16 %v949, %v948
      %v970 = vpack.c.bf16 %v951, %v950
      %v971 = vpack.c.bf16 %v953, %v952
      %v972 = vpack.c.bf16 %v955, %v954
      %v973 = vpack.c.bf16 %v957, %v956
      %v974 = vld [vmem:[%s3] sm:$0xf]
      %v975 = vld [vmem:[%s3 + $0x4] sm:$0xf]
      %v976 = vld [vmem:[%s3 + $0x8] sm:$0xf]
      %v977 = vld [vmem:[%s3 + $0xc] sm:$0xf]
      %v978 = vld [vmem:[%s3 + $0x10] sm:$0xf]
      %v979 = vld [vmem:[%s3 + $0x14] sm:$0xf]
      %v980 = vld [vmem:[%s3 + $0x18] sm:$0xf]
      %v981 = vld [vmem:[%s3 + $0x1c] sm:$0xf]
      %v982 = vld [vmem:[%s3 + $0x20] sm:$0xf]
      %v983 = vld [vmem:[%s3 + $0x24] sm:$0xf]
      %v984 = vld [vmem:[%s3 + $0x28] sm:$0xf]
      %v985 = vld [vmem:[%s3 + $0x2c] sm:$0xf]
      %v986 = vld [vmem:[%s3 + $0x30] sm:$0xf]
      %v987 = vld [vmem:[%s3 + $0x34] sm:$0xf]
      %v988 = vld [vmem:[%s3 + $0x38] sm:$0xf]
      %v989 = vld [vmem:[%s3 + $0x3c] sm:$0xf]
      %v1006 = vunpack.c.l.b16 %v974
      %v1007 = vunpack.c.l.b16 %v975
      %v1008 = vunpack.c.l.b16 %v976
      %v1009 = vunpack.c.l.b16 %v977
      %v1010 = vunpack.c.l.b16 %v978
      %v1011 = vunpack.c.l.b16 %v979
      %v1012 = vunpack.c.l.b16 %v980
      %v1013 = vunpack.c.l.b16 %v981
      %v1014 = vunpack.c.l.b16 %v982
      %v1015 = vunpack.c.l.b16 %v983
      %v1016 = vunpack.c.l.b16 %v984
      %v1017 = vunpack.c.l.b16 %v985
      %v1018 = vunpack.c.l.b16 %v986
      %v1019 = vunpack.c.l.b16 %v987
      %v1020 = vunpack.c.l.b16 %v988
      %v1021 = vunpack.c.l.b16 %v989
      %v1022 = vpack.c.b16 %v1007, %v1006
      %v1023 = vpack.c.b16 %v1009, %v1008
      %v1024 = vpack.c.b16 %v1011, %v1010
      %v1025 = vpack.c.b16 %v1013, %v1012
      %v1026 = vpack.c.b16 %v1015, %v1014
      %v1027 = vpack.c.b16 %v1017, %v1016
      %v1028 = vpack.c.b16 %v1019, %v1018
      %v1029 = vpack.c.b16 %v1021, %v1020
      %1038 = vmatpush.bf16.msra.mxu0 %v1029
      %1039 = vmatpush.bf16.msra.mxu0 %v1028
      %1040 = vmatpush.bf16.msra.mxu0 %v1027
      %1041 = vmatpush.bf16.msra.mxu0 %v1026
      %1042 = vmatpush.bf16.msra.mxu0 %v1025
      %1043 = vmatpush.bf16.msra.mxu0 %v1024
      %1044 = vmatpush.bf16.msra.mxu0 %v1023
      %1045 = vmatpush.bf16.msra.mxu0 %v1022
      %1046 = vmatmul.bf16.gmra.mxu0 %v958
      %v1047 = vpop.f32.mrf.mxu0
      %v1048 = vadd.f32 0.0, %v1047
      %v1049 = vpop.f32.mrf.mxu0
      %v1050 = vadd.f32 0.0, %v1049
      %1051 = vmatmul.bf16.gmra.mxu0 %v959
      %v1052 = vpop.f32.mrf.mxu0
      %v1053 = vadd.f32 0.0, %v1052
      %v1054 = vpop.f32.mrf.mxu0
      %v1055 = vadd.f32 0.0, %v1054
      %1056 = vmatmul.bf16.gmra.mxu0 %v960
      %v1057 = vpop.f32.mrf.mxu0
      %v1058 = vadd.f32 0.0, %v1057
      %v1059 = vpop.f32.mrf.mxu0
      %v1060 = vadd.f32 0.0, %v1059
      %1061 = vmatmul.bf16.gmra.mxu0 %v961
      %v1062 = vpop.f32.mrf.mxu0
      %v1063 = vadd.f32 0.0, %v1062
      %v1064 = vpop.f32.mrf.mxu0
      %v1065 = vadd.f32 0.0, %v1064
      %1066 = vmatmul.bf16.gmra.mxu0 %v962
      %v1067 = vpop.f32.mrf.mxu0
      %v1068 = vadd.f32 0.0, %v1067
      %v1069 = vpop.f32.mrf.mxu0
      %v1070 = vadd.f32 0.0, %v1069
      %1071 = vmatmul.bf16.gmra.mxu0 %v963
      %v1072 = vpop.f32.mrf.mxu0
      %v1073 = vadd.f32 0.0, %v1072
      %v1074 = vpop.f32.mrf.mxu0
      %v1075 = vadd.f32 0.0, %v1074
      %1076 = vmatmul.bf16.gmra.mxu0 %v964
      %v1077 = vpop.f32.mrf.mxu0
      %v1078 = vadd.f32 0.0, %v1077
      %v1079 = vpop.f32.mrf.mxu0
      %v1080 = vadd.f32 0.0, %v1079
      %1081 = vmatmul.bf16.gmra.mxu0 %v965
      %v1082 = vpop.f32.mrf.mxu0
      %v1083 = vadd.f32 0.0, %v1082
      %v1084 = vpop.f32.mrf.mxu0
      %v1085 = vadd.f32 0.0, %v1084
      %1086 = vmatmul.bf16.gmra.mxu0 %v966
      %v1087 = vpop.f32.mrf.mxu0
      %v1088 = vadd.f32 0.0, %v1087
      %v1089 = vpop.f32.mrf.mxu0
      %v1090 = vadd.f32 0.0, %v1089
      %1091 = vmatmul.bf16.gmra.mxu0 %v967
      %v1092 = vpop.f32.mrf.mxu0
      %v1093 = vadd.f32 0.0, %v1092
      %v1094 = vpop.f32.mrf.mxu0
      %v1095 = vadd.f32 0.0, %v1094
      %1096 = vmatmul.bf16.gmra.mxu0 %v968
      %v1097 = vpop.f32.mrf.mxu0
      %v1098 = vadd.f32 0.0, %v1097
      %v1099 = vpop.f32.mrf.mxu0
      %v1100 = vadd.f32 0.0, %v1099
      %1101 = vmatmul.bf16.gmra.mxu0 %v969
      %v1102 = vpop.f32.mrf.mxu0
      %v1103 = vadd.f32 0.0, %v1102
      %v1104 = vpop.f32.mrf.mxu0
      %v1105 = vadd.f32 0.0, %v1104
      %1106 = vmatmul.bf16.gmra.mxu0 %v970
      %v1107 = vpop.f32.mrf.mxu0
      %v1108 = vadd.f32 0.0, %v1107
      %v1109 = vpop.f32.mrf.mxu0
      %v1110 = vadd.f32 0.0, %v1109
      %1111 = vmatmul.bf16.gmra.mxu0 %v971
      %v1112 = vpop.f32.mrf.mxu0
      %v1113 = vadd.f32 0.0, %v1112
      %v1114 = vpop.f32.mrf.mxu0
      %v1115 = vadd.f32 0.0, %v1114
      %1116 = vmatmul.bf16.gmra.mxu0 %v972
      %v1117 = vpop.f32.mrf.mxu0
      %v1118 = vadd.f32 0.0, %v1117
      %v1119 = vpop.f32.mrf.mxu0
      %v1120 = vadd.f32 0.0, %v1119
      %1121 = vmatmul.bf16.gmra.mxu0 %v973
      %v1122 = vpop.f32.mrf.mxu0
      %v1123 = vadd.f32 0.0, %v1122
      %v1124 = vpop.f32.mrf.mxu0
      %v1125 = vadd.f32 0.0, %v1124
      %1126 = vdwg.mxu0
      %v1127 = vmax.f32 %v1048, 0.0
      %v1128 = vmax.f32 %v1050, 0.0
      %v1129 = vmax.f32 %v1053, 0.0
      %v1130 = vmax.f32 %v1055, 0.0
      %v1131 = vmax.f32 %v1058, 0.0
      %v1132 = vmax.f32 %v1060, 0.0
      %v1133 = vmax.f32 %v1063, 0.0
      %v1134 = vmax.f32 %v1065, 0.0
      %v1135 = vmax.f32 %v1068, 0.0
      %v1136 = vmax.f32 %v1070, 0.0
      %v1137 = vmax.f32 %v1073, 0.0
      %v1138 = vmax.f32 %v1075, 0.0
      %v1139 = vmax.f32 %v1078, 0.0
      %v1140 = vmax.f32 %v1080, 0.0
      %v1141 = vmax.f32 %v1083, 0.0
      %v1142 = vmax.f32 %v1085, 0.0
      %v1143 = vmax.f32 %v1088, 0.0
      %v1144 = vmax.f32 %v1090, 0.0
      %v1145 = vmax.f32 %v1093, 0.0
      %v1146 = vmax.f32 %v1095, 0.0
      %v1147 = vmax.f32 %v1098, 0.0
      %v1148 = vmax.f32 %v1100, 0.0
      %v1149 = vmax.f32 %v1103, 0.0
      %v1150 = vmax.f32 %v1105, 0.0
      %v1151 = vmax.f32 %v1108, 0.0
      %v1152 = vmax.f32 %v1110, 0.0
      %v1153 = vmax.f32 %v1113, 0.0
      %v1154 = vmax.f32 %v1115, 0.0
      %v1155 = vmax.f32 %v1118, 0.0
      %v1156 = vmax.f32 %v1120, 0.0
      %v1157 = vmax.f32 %v1123, 0.0
      %v1158 = vmax.f32 %v1125, 0.0
      %v1159 = vpack.c.bf16 %v1128, %v1127
      %v1160 = vpack.c.bf16 %v1130, %v1129
      %v1161 = vpack.c.bf16 %v1132, %v1131
      %v1162 = vpack.c.bf16 %v1134, %v1133
      %v1163 = vpack.c.bf16 %v1136, %v1135
      %v1164 = vpack.c.bf16 %v1138, %v1137
      %v1165 = vpack.c.bf16 %v1140, %v1139
      %v1166 = vpack.c.bf16 %v1142, %v1141
      %v1167 = vpack.c.bf16 %v1144, %v1143
      %v1168 = vpack.c.bf16 %v1146, %v1145
      %v1169 = vpack.c.bf16 %v1148, %v1147
      %v1170 = vpack.c.bf16 %v1150, %v1149
      %v1171 = vpack.c.bf16 %v1152, %v1151
      %v1172 = vpack.c.bf16 %v1154, %v1153
      %v1173 = vpack.c.bf16 %v1156, %v1155
      %v1174 = vpack.c.bf16 %v1158, %v1157
      %v1175 = vld [vmem:[%s4] sm:$0xf]
      %v1176 = vld [vmem:[%s4 + $0x4] sm:$0xf]
      %v1177 = vld [vmem:[%s4 + $0x8] sm:$0xf]
      %v1178 = vld [vmem:[%s4 + $0xc] sm:$0xf]
      %v1179 = vld [vmem:[%s4 + $0x10] sm:$0xf]
      %v1180 = vld [vmem:[%s4 + $0x14] sm:$0xf]
      %v1181 = vld [vmem:[%s4 + $0x18] sm:$0xf]
      %v1182 = vld [vmem:[%s4 + $0x1c] sm:$0xf]
      %v1183 = vld [vmem:[%s4 + $0x20] sm:$0xf]
      %v1184 = vld [vmem:[%s4 + $0x24] sm:$0xf]
      %v1185 = vld [vmem:[%s4 + $0x28] sm:$0xf]
      %v1186 = vld [vmem:[%s4 + $0x2c] sm:$0xf]
      %v1187 = vld [vmem:[%s4 + $0x30] sm:$0xf]
      %v1188 = vld [vmem:[%s4 + $0x34] sm:$0xf]
      %v1189 = vld [vmem:[%s4 + $0x38] sm:$0xf]
      %v1190 = vld [vmem:[%s4 + $0x3c] sm:$0xf]
      %v1207 = vunpack.c.l.b16 %v1175
      %v1208 = vunpack.c.l.b16 %v1176
      %v1209 = vunpack.c.l.b16 %v1177
      %v1210 = vunpack.c.l.b16 %v1178
      %v1211 = vunpack.c.l.b16 %v1179
      %v1212 = vunpack.c.l.b16 %v1180
      %v1213 = vunpack.c.l.b16 %v1181
      %v1214 = vunpack.c.l.b16 %v1182
      %v1215 = vunpack.c.l.b16 %v1183
      %v1216 = vunpack.c.l.b16 %v1184
      %v1217 = vunpack.c.l.b16 %v1185
      %v1218 = vunpack.c.l.b16 %v1186
      %v1219 = vunpack.c.l.b16 %v1187
      %v1220 = vunpack.c.l.b16 %v1188
      %v1221 = vunpack.c.l.b16 %v1189
      %v1222 = vunpack.c.l.b16 %v1190
      %v1223 = vpack.c.b16 %v1208, %v1207
      %v1224 = vpack.c.b16 %v1210, %v1209
      %v1225 = vpack.c.b16 %v1212, %v1211
      %v1226 = vpack.c.b16 %v1214, %v1213
      %v1227 = vpack.c.b16 %v1216, %v1215
      %v1228 = vpack.c.b16 %v1218, %v1217
      %v1229 = vpack.c.b16 %v1220, %v1219
      %v1230 = vpack.c.b16 %v1222, %v1221
      %1239 = vmatpush.bf16.msra.mxu0 %v1230
      %1240 = vmatpush.bf16.msra.mxu0 %v1229
      %1241 = vmatpush.bf16.msra.mxu0 %v1228
      %1242 = vmatpush.bf16.msra.mxu0 %v1227
      %1243 = vmatpush.bf16.msra.mxu0 %v1226
      %1244 = vmatpush.bf16.msra.mxu0 %v1225
      %1245 = vmatpush.bf16.msra.mxu0 %v1224
      %1246 = vmatpush.bf16.msra.mxu0 %v1223
      %1247 = vmatmul.bf16.gmra.mxu0 %v1159
      %v1248 = vpop.f32.mrf.mxu0
      %v1249 = vadd.f32 0.0, %v1248
      %v1250 = vpop.f32.mrf.mxu0
      %v1251 = vadd.f32 0.0, %v1250
      %1252 = vmatmul.bf16.gmra.mxu0 %v1160
      %v1253 = vpop.f32.mrf.mxu0
      %v1254 = vadd.f32 0.0, %v1253
      %v1255 = vpop.f32.mrf.mxu0
      %v1256 = vadd.f32 0.0, %v1255
      %1257 = vmatmul.bf16.gmra.mxu0 %v1161
      %v1258 = vpop.f32.mrf.mxu0
      %v1259 = vadd.f32 0.0, %v1258
      %v1260 = vpop.f32.mrf.mxu0
      %v1261 = vadd.f32 0.0, %v1260
      %1262 = vmatmul.bf16.gmra.mxu0 %v1162
      %v1263 = vpop.f32.mrf.mxu0
      %v1264 = vadd.f32 0.0, %v1263
      %v1265 = vpop.f32.mrf.mxu0
      %v1266 = vadd.f32 0.0, %v1265
      %1267 = vmatmul.bf16.gmra.mxu0 %v1163
      %v1268 = vpop.f32.mrf.mxu0
      %v1269 = vadd.f32 0.0, %v1268
      %v1270 = vpop.f32.mrf.mxu0
      %v1271 = vadd.f32 0.0, %v1270
      %1272 = vmatmul.bf16.gmra.mxu0 %v1164
      %v1273 = vpop.f32.mrf.mxu0
      %v1274 = vadd.f32 0.0, %v1273
      %v1275 = vpop.f32.mrf.mxu0
      %v1276 = vadd.f32 0.0, %v1275
      %1277 = vmatmul.bf16.gmra.mxu0 %v1165
      %v1278 = vpop.f32.mrf.mxu0
      %v1279 = vadd.f32 0.0, %v1278
      %v1280 = vpop.f32.mrf.mxu0
      %v1281 = vadd.f32 0.0, %v1280
      %1282 = vmatmul.bf16.gmra.mxu0 %v1166
      %v1283 = vpop.f32.mrf.mxu0
      %v1284 = vadd.f32 0.0, %v1283
      %v1285 = vpop.f32.mrf.mxu0
      %v1286 = vadd.f32 0.0, %v1285
      %1287 = vmatmul.bf16.gmra.mxu0 %v1167
      %v1288 = vpop.f32.mrf.mxu0
      %v1289 = vadd.f32 0.0, %v1288
      %v1290 = vpop.f32.mrf.mxu0
      %v1291 = vadd.f32 0.0, %v1290
      %1292 = vmatmul.bf16.gmra.mxu0 %v1168
      %v1293 = vpop.f32.mrf.mxu0
      %v1294 = vadd.f32 0.0, %v1293
      %v1295 = vpop.f32.mrf.mxu0
      %v1296 = vadd.f32 0.0, %v1295
      %1297 = vmatmul.bf16.gmra.mxu0 %v1169
      %v1298 = vpop.f32.mrf.mxu0
      %v1299 = vadd.f32 0.0, %v1298
      %v1300 = vpop.f32.mrf.mxu0
      %v1301 = vadd.f32 0.0, %v1300
      %1302 = vmatmul.bf16.gmra.mxu0 %v1170
      %v1303 = vpop.f32.mrf.mxu0
      %v1304 = vadd.f32 0.0, %v1303
      %v1305 = vpop.f32.mrf.mxu0
      %v1306 = vadd.f32 0.0, %v1305
      %1307 = vmatmul.bf16.gmra.mxu0 %v1171
      %v1308 = vpop.f32.mrf.mxu0
      %v1309 = vadd.f32 0.0, %v1308
      %v1310 = vpop.f32.mrf.mxu0
      %v1311 = vadd.f32 0.0, %v1310
      %1312 = vmatmul.bf16.gmra.mxu0 %v1172
      %v1313 = vpop.f32.mrf.mxu0
      %v1314 = vadd.f32 0.0, %v1313
      %v1315 = vpop.f32.mrf.mxu0
      %v1316 = vadd.f32 0.0, %v1315
      %1317 = vmatmul.bf16.gmra.mxu0 %v1173
      %v1318 = vpop.f32.mrf.mxu0
      %v1319 = vadd.f32 0.0, %v1318
      %v1320 = vpop.f32.mrf.mxu0
      %v1321 = vadd.f32 0.0, %v1320
      %1322 = vmatmul.bf16.gmra.mxu0 %v1174
      %v1323 = vpop.f32.mrf.mxu0
      %v1324 = vadd.f32 0.0, %v1323
      %v1325 = vpop.f32.mrf.mxu0
      %v1326 = vadd.f32 0.0, %v1325
      %1327 = vdwg.mxu0
      %v1328 = vlaneseq
      %v1329 = vand.u32 %v1328, 127
      %vm1330 = vcmp.lt.s32.totalorder %v1329, 2
      %v1331 = vtanh.pop %v1249
      %v1332 = vtanh.pop %v1251
      %v1333 = vtanh.pop %v1254
      %v1334 = vtanh.pop %v1256
      %v1335 = vtanh.pop %v1259
      %v1336 = vtanh.pop %v1261
      %v1337 = vtanh.pop %v1264
      %v1338 = vtanh.pop %v1266
      %v1339 = vtanh.pop %v1269
      %v1340 = vtanh.pop %v1271
      %v1341 = vtanh.pop %v1274
      %v1342 = vtanh.pop %v1276
      %v1343 = vtanh.pop %v1279
      %v1344 = vtanh.pop %v1281
      %v1345 = vtanh.pop %v1284
      %v1346 = vtanh.pop %v1286
      %v1347 = vtanh.pop %v1289
      %v1348 = vtanh.pop %v1291
      %v1349 = vtanh.pop %v1294
      %v1350 = vtanh.pop %v1296
      %v1351 = vtanh.pop %v1299
      %v1352 = vtanh.pop %v1301
      %v1353 = vtanh.pop %v1304
      %v1354 = vtanh.pop %v1306
      %v1355 = vtanh.pop %v1309
      %v1356 = vtanh.pop %v1311
      %v1357 = vtanh.pop %v1314
      %v1358 = vtanh.pop %v1316
      %v1359 = vtanh.pop %v1319
      %v1360 = vtanh.pop %v1321
      %v1361 = vtanh.pop %v1324
      %v1362 = vtanh.pop %v1326
      %v1363 = vmul.f32 %v1331, 2.0
      %v1364 = vmul.f32 %v1332, 2.0
      %v1365 = vmul.f32 %v1333, 2.0
      %v1366 = vmul.f32 %v1334, 2.0
      %v1367 = vmul.f32 %v1335, 2.0
      %v1368 = vmul.f32 %v1336, 2.0
      %v1369 = vmul.f32 %v1337, 2.0
      %v1370 = vmul.f32 %v1338, 2.0
      %v1371 = vmul.f32 %v1339, 2.0
      %v1372 = vmul.f32 %v1340, 2.0
      %v1373 = vmul.f32 %v1341, 2.0
      %v1374 = vmul.f32 %v1342, 2.0
      %v1375 = vmul.f32 %v1343, 2.0
      %v1376 = vmul.f32 %v1344, 2.0
      %v1377 = vmul.f32 %v1345, 2.0
      %v1378 = vmul.f32 %v1346, 2.0
      %v1379 = vmul.f32 %v1347, 2.0
      %v1380 = vmul.f32 %v1348, 2.0
      %v1381 = vmul.f32 %v1349, 2.0
      %v1382 = vmul.f32 %v1350, 2.0
      %v1383 = vmul.f32 %v1351, 2.0
      %v1384 = vmul.f32 %v1352, 2.0
      %v1385 = vmul.f32 %v1353, 2.0
      %v1386 = vmul.f32 %v1354, 2.0
      %v1387 = vmul.f32 %v1355, 2.0
      %v1388 = vmul.f32 %v1356, 2.0
      %v1389 = vmul.f32 %v1357, 2.0
      %v1390 = vmul.f32 %v1358, 2.0
      %v1391 = vmul.f32 %v1359, 2.0
      %v1392 = vmul.f32 %v1360, 2.0
      %v1393 = vmul.f32 %v1361, 2.0
      %v1394 = vmul.f32 %v1362, 2.0
      %v1395 = vxor.u32 %v1249, 2147483648
      %v1396 = vxor.u32 %v1251, 2147483648
      %v1397 = vxor.u32 %v1254, 2147483648
      %v1398 = vxor.u32 %v1256, 2147483648
      %v1399 = vxor.u32 %v1259, 2147483648
      %v1400 = vxor.u32 %v1261, 2147483648
      %v1401 = vxor.u32 %v1264, 2147483648
      %v1402 = vxor.u32 %v1266, 2147483648
      %v1403 = vxor.u32 %v1269, 2147483648
      %v1404 = vxor.u32 %v1271, 2147483648
      %v1405 = vxor.u32 %v1274, 2147483648
      %v1406 = vxor.u32 %v1276, 2147483648
      %v1407 = vxor.u32 %v1279, 2147483648
      %v1408 = vxor.u32 %v1281, 2147483648
      %v1409 = vxor.u32 %v1284, 2147483648
      %v1410 = vxor.u32 %v1286, 2147483648
      %v1411 = vxor.u32 %v1289, 2147483648
      %v1412 = vxor.u32 %v1291, 2147483648
      %v1413 = vxor.u32 %v1294, 2147483648
      %v1414 = vxor.u32 %v1296, 2147483648
      %v1415 = vxor.u32 %v1299, 2147483648
      %v1416 = vxor.u32 %v1301, 2147483648
      %v1417 = vxor.u32 %v1304, 2147483648
      %v1418 = vxor.u32 %v1306, 2147483648
      %v1419 = vxor.u32 %v1309, 2147483648
      %v1420 = vxor.u32 %v1311, 2147483648
      %v1421 = vxor.u32 %v1314, 2147483648
      %v1422 = vxor.u32 %v1316, 2147483648
      %v1423 = vxor.u32 %v1319, 2147483648
      %v1424 = vxor.u32 %v1321, 2147483648
      %v1425 = vxor.u32 %v1324, 2147483648
      %v1426 = vxor.u32 %v1326, 2147483648
      %v1427 = vmul.f32 %v1395, 1.442695
      %v1428 = vpow.pop %v1427
      %v1429 = vmul.f32 %v1396, 1.442695
      %v1430 = vpow.pop %v1429
      %v1431 = vmul.f32 %v1397, 1.442695
      %v1432 = vpow.pop %v1431
      %v1433 = vmul.f32 %v1398, 1.442695
      %v1434 = vpow.pop %v1433
      %v1435 = vmul.f32 %v1399, 1.442695
      %v1436 = vpow.pop %v1435
      %v1437 = vmul.f32 %v1400, 1.442695
      %v1438 = vpow.pop %v1437
      %v1439 = vmul.f32 %v1401, 1.442695
      %v1440 = vpow.pop %v1439
      %v1441 = vmul.f32 %v1402, 1.442695
      %v1442 = vpow.pop %v1441
      %v1443 = vmul.f32 %v1403, 1.442695
      %v1444 = vpow.pop %v1443
      %v1445 = vmul.f32 %v1404, 1.442695
      %v1446 = vpow.pop %v1445
      %v1447 = vmul.f32 %v1405, 1.442695
      %v1448 = vpow.pop %v1447
      %v1449 = vmul.f32 %v1406, 1.442695
      %v1450 = vpow.pop %v1449
      %v1451 = vmul.f32 %v1407, 1.442695
      %v1452 = vpow.pop %v1451
      %v1453 = vmul.f32 %v1408, 1.442695
      %v1454 = vpow.pop %v1453
      %v1455 = vmul.f32 %v1409, 1.442695
      %v1456 = vpow.pop %v1455
      %v1457 = vmul.f32 %v1410, 1.442695
      %v1458 = vpow.pop %v1457
      %v1459 = vmul.f32 %v1411, 1.442695
      %v1460 = vpow.pop %v1459
      %v1461 = vmul.f32 %v1412, 1.442695
      %v1462 = vpow.pop %v1461
      %v1463 = vmul.f32 %v1413, 1.442695
      %v1464 = vpow.pop %v1463
      %v1465 = vmul.f32 %v1414, 1.442695
      %v1466 = vpow.pop %v1465
      %v1467 = vmul.f32 %v1415, 1.442695
      %v1468 = vpow.pop %v1467
      %v1469 = vmul.f32 %v1416, 1.442695
      %v1470 = vpow.pop %v1469
      %v1471 = vmul.f32 %v1417, 1.442695
      %v1472 = vpow.pop %v1471
      %v1473 = vmul.f32 %v1418, 1.442695
      %v1474 = vpow.pop %v1473
      %v1475 = vmul.f32 %v1419, 1.442695
      %v1476 = vpow.pop %v1475
      %v1477 = vmul.f32 %v1420, 1.442695
      %v1478 = vpow.pop %v1477
      %v1479 = vmul.f32 %v1421, 1.442695
      %v1480 = vpow.pop %v1479
      %v1481 = vmul.f32 %v1422, 1.442695
      %v1482 = vpow.pop %v1481
      %v1483 = vmul.f32 %v1423, 1.442695
      %v1484 = vpow.pop %v1483
      %v1485 = vmul.f32 %v1424, 1.442695
      %v1486 = vpow.pop %v1485
      %v1487 = vmul.f32 %v1425, 1.442695
      %v1488 = vpow.pop %v1487
      %v1489 = vmul.f32 %v1426, 1.442695
      %v1490 = vpow.pop %v1489
      %v1491 = vadd.f32 %v1428, 1.0
      %v1492 = vadd.f32 %v1430, 1.0
      %v1493 = vadd.f32 %v1432, 1.0
      %v1494 = vadd.f32 %v1434, 1.0
      %v1495 = vadd.f32 %v1436, 1.0
      %v1496 = vadd.f32 %v1438, 1.0
      %v1497 = vadd.f32 %v1440, 1.0
      %v1498 = vadd.f32 %v1442, 1.0
      %v1499 = vadd.f32 %v1444, 1.0
      %v1500 = vadd.f32 %v1446, 1.0
      %v1501 = vadd.f32 %v1448, 1.0
      %v1502 = vadd.f32 %v1450, 1.0
      %v1503 = vadd.f32 %v1452, 1.0
      %v1504 = vadd.f32 %v1454, 1.0
      %v1505 = vadd.f32 %v1456, 1.0
      %v1506 = vadd.f32 %v1458, 1.0
      %v1507 = vadd.f32 %v1460, 1.0
      %v1508 = vadd.f32 %v1462, 1.0
      %v1509 = vadd.f32 %v1464, 1.0
      %v1510 = vadd.f32 %v1466, 1.0
      %v1511 = vadd.f32 %v1468, 1.0
      %v1512 = vadd.f32 %v1470, 1.0
      %v1513 = vadd.f32 %v1472, 1.0
      %v1514 = vadd.f32 %v1474, 1.0
      %v1515 = vadd.f32 %v1476, 1.0
      %v1516 = vadd.f32 %v1478, 1.0
      %v1517 = vadd.f32 %v1480, 1.0
      %v1518 = vadd.f32 %v1482, 1.0
      %v1519 = vadd.f32 %v1484, 1.0
      %v1520 = vadd.f32 %v1486, 1.0
      %v1521 = vadd.f32 %v1488, 1.0
      %v1522 = vadd.f32 %v1490, 1.0
      %v1523 = vrcp.pop %v1491
      %v1524 = vmul.f32 %v1491, %v1523
      %v1525 = vsub.f32 1.0, %v1524
      %v1526 = vmul.f32 %v1523, %v1525
      %v1527 = vadd.f32 %v1523, %v1526
      %vm1528 = vweird.f32 %v1491
      %vm1529 = vweird.f32 %v1523
      %vm1530 = vmor %vm1528, %vm1529
      %v1531 = vsel %vm1530, %v1523, %v1527
      %v1532 = vand.u32 2147483647, %v1491
      %vm1533 = vcmp.eq.f32.partialorder %v1532, 8.507059e+37
      %v1534 = vand.u32 %v1491, 2147483648
      %v1535 = vor.u32 1.1754944e-38, %v1534
      %v1536 = vsel %vm1533, %v1535, %v1531
      %v1537 = vmul.f32 1.0, %v1536
      %v1538 = vrcp.pop %v1492
      %v1539 = vmul.f32 %v1492, %v1538
      %v1540 = vsub.f32 1.0, %v1539
      %v1541 = vmul.f32 %v1538, %v1540
      %v1542 = vadd.f32 %v1538, %v1541
      %vm1543 = vweird.f32 %v1492
      %vm1544 = vweird.f32 %v1538
      %vm1545 = vmor %vm1543, %vm1544
      %v1546 = vsel %vm1545, %v1538, %v1542
      %v1547 = vand.u32 2147483647, %v1492
      %vm1548 = vcmp.eq.f32.partialorder %v1547, 8.507059e+37
      %v1549 = vand.u32 %v1492, 2147483648
      %v1550 = vor.u32 1.1754944e-38, %v1549
      %v1551 = vsel %vm1548, %v1550, %v1546
      %v1552 = vmul.f32 1.0, %v1551
      %v1553 = vrcp.pop %v1493
      %v1554 = vmul.f32 %v1493, %v1553
      %v1555 = vsub.f32 1.0, %v1554
      %v1556 = vmul.f32 %v1553, %v1555
      %v1557 = vadd.f32 %v1553, %v1556
      %vm1558 = vweird.f32 %v1493
      %vm1559 = vweird.f32 %v1553
      %vm1560 = vmor %vm1558, %vm1559
      %v1561 = vsel %vm1560, %v1553, %v1557
      %v1562 = vand.u32 2147483647, %v1493
      %vm1563 = vcmp.eq.f32.partialorder %v1562, 8.507059e+37
      %v1564 = vand.u32 %v1493, 2147483648
      %v1565 = vor.u32 1.1754944e-38, %v1564
      %v1566 = vsel %vm1563, %v1565, %v1561
      %v1567 = vmul.f32 1.0, %v1566
      %v1568 = vrcp.pop %v1494
      %v1569 = vmul.f32 %v1494, %v1568
      %v1570 = vsub.f32 1.0, %v1569
      %v1571 = vmul.f32 %v1568, %v1570
      %v1572 = vadd.f32 %v1568, %v1571
      %vm1573 = vweird.f32 %v1494
      %vm1574 = vweird.f32 %v1568
      %vm1575 = vmor %vm1573, %vm1574
      %v1576 = vsel %vm1575, %v1568, %v1572
      %v1577 = vand.u32 2147483647, %v1494
      %vm1578 = vcmp.eq.f32.partialorder %v1577, 8.507059e+37
      %v1579 = vand.u32 %v1494, 2147483648
      %v1580 = vor.u32 1.1754944e-38, %v1579
      %v1581 = vsel %vm1578, %v1580, %v1576
      %v1582 = vmul.f32 1.0, %v1581
      %v1583 = vrcp.pop %v1495
      %v1584 = vmul.f32 %v1495, %v1583
      %v1585 = vsub.f32 1.0, %v1584
      %v1586 = vmul.f32 %v1583, %v1585
      %v1587 = vadd.f32 %v1583, %v1586
      %vm1588 = vweird.f32 %v1495
      %vm1589 = vweird.f32 %v1583
      %vm1590 = vmor %vm1588, %vm1589
      %v1591 = vsel %vm1590, %v1583, %v1587
      %v1592 = vand.u32 2147483647, %v1495
      %vm1593 = vcmp.eq.f32.partialorder %v1592, 8.507059e+37
      %v1594 = vand.u32 %v1495, 2147483648
      %v1595 = vor.u32 1.1754944e-38, %v1594
      %v1596 = vsel %vm1593, %v1595, %v1591
      %v1597 = vmul.f32 1.0, %v1596
      %v1598 = vrcp.pop %v1496
      %v1599 = vmul.f32 %v1496, %v1598
      %v1600 = vsub.f32 1.0, %v1599
      %v1601 = vmul.f32 %v1598, %v1600
      %v1602 = vadd.f32 %v1598, %v1601
      %vm1603 = vweird.f32 %v1496
      %vm1604 = vweird.f32 %v1598
      %vm1605 = vmor %vm1603, %vm1604
      %v1606 = vsel %vm1605, %v1598, %v1602
      %v1607 = vand.u32 2147483647, %v1496
      %vm1608 = vcmp.eq.f32.partialorder %v1607, 8.507059e+37
      %v1609 = vand.u32 %v1496, 2147483648
      %v1610 = vor.u32 1.1754944e-38, %v1609
      %v1611 = vsel %vm1608, %v1610, %v1606
      %v1612 = vmul.f32 1.0, %v1611
      %v1613 = vrcp.pop %v1497
      %v1614 = vmul.f32 %v1497, %v1613
      %v1615 = vsub.f32 1.0, %v1614
      %v1616 = vmul.f32 %v1613, %v1615
      %v1617 = vadd.f32 %v1613, %v1616
      %vm1618 = vweird.f32 %v1497
      %vm1619 = vweird.f32 %v1613
      %vm1620 = vmor %vm1618, %vm1619
      %v1621 = vsel %vm1620, %v1613, %v1617
      %v1622 = vand.u32 2147483647, %v1497
      %vm1623 = vcmp.eq.f32.partialorder %v1622, 8.507059e+37
      %v1624 = vand.u32 %v1497, 2147483648
      %v1625 = vor.u32 1.1754944e-38, %v1624
      %v1626 = vsel %vm1623, %v1625, %v1621
      %v1627 = vmul.f32 1.0, %v1626
      %v1628 = vrcp.pop %v1498
      %v1629 = vmul.f32 %v1498, %v1628
      %v1630 = vsub.f32 1.0, %v1629
      %v1631 = vmul.f32 %v1628, %v1630
      %v1632 = vadd.f32 %v1628, %v1631
      %vm1633 = vweird.f32 %v1498
      %vm1634 = vweird.f32 %v1628
      %vm1635 = vmor %vm1633, %vm1634
      %v1636 = vsel %vm1635, %v1628, %v1632
      %v1637 = vand.u32 2147483647, %v1498
      %vm1638 = vcmp.eq.f32.partialorder %v1637, 8.507059e+37
      %v1639 = vand.u32 %v1498, 2147483648
      %v1640 = vor.u32 1.1754944e-38, %v1639
      %v1641 = vsel %vm1638, %v1640, %v1636
      %v1642 = vmul.f32 1.0, %v1641
      %v1643 = vrcp.pop %v1499
      %v1644 = vmul.f32 %v1499, %v1643
      %v1645 = vsub.f32 1.0, %v1644
      %v1646 = vmul.f32 %v1643, %v1645
      %v1647 = vadd.f32 %v1643, %v1646
      %vm1648 = vweird.f32 %v1499
      %vm1649 = vweird.f32 %v1643
      %vm1650 = vmor %vm1648, %vm1649
      %v1651 = vsel %vm1650, %v1643, %v1647
      %v1652 = vand.u32 2147483647, %v1499
      %vm1653 = vcmp.eq.f32.partialorder %v1652, 8.507059e+37
      %v1654 = vand.u32 %v1499, 2147483648
      %v1655 = vor.u32 1.1754944e-38, %v1654
      %v1656 = vsel %vm1653, %v1655, %v1651
      %v1657 = vmul.f32 1.0, %v1656
      %v1658 = vrcp.pop %v1500
      %v1659 = vmul.f32 %v1500, %v1658
      %v1660 = vsub.f32 1.0, %v1659
      %v1661 = vmul.f32 %v1658, %v1660
      %v1662 = vadd.f32 %v1658, %v1661
      %vm1663 = vweird.f32 %v1500
      %vm1664 = vweird.f32 %v1658
      %vm1665 = vmor %vm1663, %vm1664
      %v1666 = vsel %vm1665, %v1658, %v1662
      %v1667 = vand.u32 2147483647, %v1500
      %vm1668 = vcmp.eq.f32.partialorder %v1667, 8.507059e+37
      %v1669 = vand.u32 %v1500, 2147483648
      %v1670 = vor.u32 1.1754944e-38, %v1669
      %v1671 = vsel %vm1668, %v1670, %v1666
      %v1672 = vmul.f32 1.0, %v1671
      %v1673 = vrcp.pop %v1501
      %v1674 = vmul.f32 %v1501, %v1673
      %v1675 = vsub.f32 1.0, %v1674
      %v1676 = vmul.f32 %v1673, %v1675
      %v1677 = vadd.f32 %v1673, %v1676
      %vm1678 = vweird.f32 %v1501
      %vm1679 = vweird.f32 %v1673
      %vm1680 = vmor %vm1678, %vm1679
      %v1681 = vsel %vm1680, %v1673, %v1677
      %v1682 = vand.u32 2147483647, %v1501
      %vm1683 = vcmp.eq.f32.partialorder %v1682, 8.507059e+37
      %v1684 = vand.u32 %v1501, 2147483648
      %v1685 = vor.u32 1.1754944e-38, %v1684
      %v1686 = vsel %vm1683, %v1685, %v1681
      %v1687 = vmul.f32 1.0, %v1686
      %v1688 = vrcp.pop %v1502
      %v1689 = vmul.f32 %v1502, %v1688
      %v1690 = vsub.f32 1.0, %v1689
      %v1691 = vmul.f32 %v1688, %v1690
      %v1692 = vadd.f32 %v1688, %v1691
      %vm1693 = vweird.f32 %v1502
      %vm1694 = vweird.f32 %v1688
      %vm1695 = vmor %vm1693, %vm1694
      %v1696 = vsel %vm1695, %v1688, %v1692
      %v1697 = vand.u32 2147483647, %v1502
      %vm1698 = vcmp.eq.f32.partialorder %v1697, 8.507059e+37
      %v1699 = vand.u32 %v1502, 2147483648
      %v1700 = vor.u32 1.1754944e-38, %v1699
      %v1701 = vsel %vm1698, %v1700, %v1696
      %v1702 = vmul.f32 1.0, %v1701
      %v1703 = vrcp.pop %v1503
      %v1704 = vmul.f32 %v1503, %v1703
      %v1705 = vsub.f32 1.0, %v1704
      %v1706 = vmul.f32 %v1703, %v1705
      %v1707 = vadd.f32 %v1703, %v1706
      %vm1708 = vweird.f32 %v1503
      %vm1709 = vweird.f32 %v1703
      %vm1710 = vmor %vm1708, %vm1709
      %v1711 = vsel %vm1710, %v1703, %v1707
      %v1712 = vand.u32 2147483647, %v1503
      %vm1713 = vcmp.eq.f32.partialorder %v1712, 8.507059e+37
      %v1714 = vand.u32 %v1503, 2147483648
      %v1715 = vor.u32 1.1754944e-38, %v1714
      %v1716 = vsel %vm1713, %v1715, %v1711
      %v1717 = vmul.f32 1.0, %v1716
      %v1718 = vrcp.pop %v1504
      %v1719 = vmul.f32 %v1504, %v1718
      %v1720 = vsub.f32 1.0, %v1719
      %v1721 = vmul.f32 %v1718, %v1720
      %v1722 = vadd.f32 %v1718, %v1721
      %vm1723 = vweird.f32 %v1504
      %vm1724 = vweird.f32 %v1718
      %vm1725 = vmor %vm1723, %vm1724
      %v1726 = vsel %vm1725, %v1718, %v1722
      %v1727 = vand.u32 2147483647, %v1504
      %vm1728 = vcmp.eq.f32.partialorder %v1727, 8.507059e+37
      %v1729 = vand.u32 %v1504, 2147483648
      %v1730 = vor.u32 1.1754944e-38, %v1729
      %v1731 = vsel %vm1728, %v1730, %v1726
      %v1732 = vmul.f32 1.0, %v1731
      %v1733 = vrcp.pop %v1505
      %v1734 = vmul.f32 %v1505, %v1733
      %v1735 = vsub.f32 1.0, %v1734
      %v1736 = vmul.f32 %v1733, %v1735
      %v1737 = vadd.f32 %v1733, %v1736
      %vm1738 = vweird.f32 %v1505
      %vm1739 = vweird.f32 %v1733
      %vm1740 = vmor %vm1738, %vm1739
      %v1741 = vsel %vm1740, %v1733, %v1737
      %v1742 = vand.u32 2147483647, %v1505
      %vm1743 = vcmp.eq.f32.partialorder %v1742, 8.507059e+37
      %v1744 = vand.u32 %v1505, 2147483648
      %v1745 = vor.u32 1.1754944e-38, %v1744
      %v1746 = vsel %vm1743, %v1745, %v1741
      %v1747 = vmul.f32 1.0, %v1746
      %v1748 = vrcp.pop %v1506
      %v1749 = vmul.f32 %v1506, %v1748
      %v1750 = vsub.f32 1.0, %v1749
      %v1751 = vmul.f32 %v1748, %v1750
      %v1752 = vadd.f32 %v1748, %v1751
      %vm1753 = vweird.f32 %v1506
      %vm1754 = vweird.f32 %v1748
      %vm1755 = vmor %vm1753, %vm1754
      %v1756 = vsel %vm1755, %v1748, %v1752
      %v1757 = vand.u32 2147483647, %v1506
      %vm1758 = vcmp.eq.f32.partialorder %v1757, 8.507059e+37
      %v1759 = vand.u32 %v1506, 2147483648
      %v1760 = vor.u32 1.1754944e-38, %v1759
      %v1761 = vsel %vm1758, %v1760, %v1756
      %v1762 = vmul.f32 1.0, %v1761
      %v1763 = vrcp.pop %v1507
      %v1764 = vmul.f32 %v1507, %v1763
      %v1765 = vsub.f32 1.0, %v1764
      %v1766 = vmul.f32 %v1763, %v1765
      %v1767 = vadd.f32 %v1763, %v1766
      %vm1768 = vweird.f32 %v1507
      %vm1769 = vweird.f32 %v1763
      %vm1770 = vmor %vm1768, %vm1769
      %v1771 = vsel %vm1770, %v1763, %v1767
      %v1772 = vand.u32 2147483647, %v1507
      %vm1773 = vcmp.eq.f32.partialorder %v1772, 8.507059e+37
      %v1774 = vand.u32 %v1507, 2147483648
      %v1775 = vor.u32 1.1754944e-38, %v1774
      %v1776 = vsel %vm1773, %v1775, %v1771
      %v1777 = vmul.f32 1.0, %v1776
      %v1778 = vrcp.pop %v1508
      %v1779 = vmul.f32 %v1508, %v1778
      %v1780 = vsub.f32 1.0, %v1779
      %v1781 = vmul.f32 %v1778, %v1780
      %v1782 = vadd.f32 %v1778, %v1781
      %vm1783 = vweird.f32 %v1508
      %vm1784 = vweird.f32 %v1778
      %vm1785 = vmor %vm1783, %vm1784
      %v1786 = vsel %vm1785, %v1778, %v1782
      %v1787 = vand.u32 2147483647, %v1508
      %vm1788 = vcmp.eq.f32.partialorder %v1787, 8.507059e+37
      %v1789 = vand.u32 %v1508, 2147483648
      %v1790 = vor.u32 1.1754944e-38, %v1789
      %v1791 = vsel %vm1788, %v1790, %v1786
      %v1792 = vmul.f32 1.0, %v1791
      %v1793 = vrcp.pop %v1509
      %v1794 = vmul.f32 %v1509, %v1793
      %v1795 = vsub.f32 1.0, %v1794
      %v1796 = vmul.f32 %v1793, %v1795
      %v1797 = vadd.f32 %v1793, %v1796
      %vm1798 = vweird.f32 %v1509
      %vm1799 = vweird.f32 %v1793
      %vm1800 = vmor %vm1798, %vm1799
      %v1801 = vsel %vm1800, %v1793, %v1797
      %v1802 = vand.u32 2147483647, %v1509
      %vm1803 = vcmp.eq.f32.partialorder %v1802, 8.507059e+37
      %v1804 = vand.u32 %v1509, 2147483648
      %v1805 = vor.u32 1.1754944e-38, %v1804
      %v1806 = vsel %vm1803, %v1805, %v1801
      %v1807 = vmul.f32 1.0, %v1806
      %v1808 = vrcp.pop %v1510
      %v1809 = vmul.f32 %v1510, %v1808
      %v1810 = vsub.f32 1.0, %v1809
      %v1811 = vmul.f32 %v1808, %v1810
      %v1812 = vadd.f32 %v1808, %v1811
      %vm1813 = vweird.f32 %v1510
      %vm1814 = vweird.f32 %v1808
      %vm1815 = vmor %vm1813, %vm1814
      %v1816 = vsel %vm1815, %v1808, %v1812
      %v1817 = vand.u32 2147483647, %v1510
      %vm1818 = vcmp.eq.f32.partialorder %v1817, 8.507059e+37
      %v1819 = vand.u32 %v1510, 2147483648
      %v1820 = vor.u32 1.1754944e-38, %v1819
      %v1821 = vsel %vm1818, %v1820, %v1816
      %v1822 = vmul.f32 1.0, %v1821
      %v1823 = vrcp.pop %v1511
      %v1824 = vmul.f32 %v1511, %v1823
      %v1825 = vsub.f32 1.0, %v1824
      %v1826 = vmul.f32 %v1823, %v1825
      %v1827 = vadd.f32 %v1823, %v1826
      %vm1828 = vweird.f32 %v1511
      %vm1829 = vweird.f32 %v1823
      %vm1830 = vmor %vm1828, %vm1829
      %v1831 = vsel %vm1830, %v1823, %v1827
      %v1832 = vand.u32 2147483647, %v1511
      %vm1833 = vcmp.eq.f32.partialorder %v1832, 8.507059e+37
      %v1834 = vand.u32 %v1511, 2147483648
      %v1835 = vor.u32 1.1754944e-38, %v1834
      %v1836 = vsel %vm1833, %v1835, %v1831
      %v1837 = vmul.f32 1.0, %v1836
      %v1838 = vrcp.pop %v1512
      %v1839 = vmul.f32 %v1512, %v1838
      %v1840 = vsub.f32 1.0, %v1839
      %v1841 = vmul.f32 %v1838, %v1840
      %v1842 = vadd.f32 %v1838, %v1841
      %vm1843 = vweird.f32 %v1512
      %vm1844 = vweird.f32 %v1838
      %vm1845 = vmor %vm1843, %vm1844
      %v1846 = vsel %vm1845, %v1838, %v1842
      %v1847 = vand.u32 2147483647, %v1512
      %vm1848 = vcmp.eq.f32.partialorder %v1847, 8.507059e+37
      %v1849 = vand.u32 %v1512, 2147483648
      %v1850 = vor.u32 1.1754944e-38, %v1849
      %v1851 = vsel %vm1848, %v1850, %v1846
      %v1852 = vmul.f32 1.0, %v1851
      %v1853 = vrcp.pop %v1513
      %v1854 = vmul.f32 %v1513, %v1853
      %v1855 = vsub.f32 1.0, %v1854
      %v1856 = vmul.f32 %v1853, %v1855
      %v1857 = vadd.f32 %v1853, %v1856
      %vm1858 = vweird.f32 %v1513
      %vm1859 = vweird.f32 %v1853
      %vm1860 = vmor %vm1858, %vm1859
      %v1861 = vsel %vm1860, %v1853, %v1857
      %v1862 = vand.u32 2147483647, %v1513
      %vm1863 = vcmp.eq.f32.partialorder %v1862, 8.507059e+37
      %v1864 = vand.u32 %v1513, 2147483648
      %v1865 = vor.u32 1.1754944e-38, %v1864
      %v1866 = vsel %vm1863, %v1865, %v1861
      %v1867 = vmul.f32 1.0, %v1866
      %v1868 = vrcp.pop %v1514
      %v1869 = vmul.f32 %v1514, %v1868
      %v1870 = vsub.f32 1.0, %v1869
      %v1871 = vmul.f32 %v1868, %v1870
      %v1872 = vadd.f32 %v1868, %v1871
      %vm1873 = vweird.f32 %v1514
      %vm1874 = vweird.f32 %v1868
      %vm1875 = vmor %vm1873, %vm1874
      %v1876 = vsel %vm1875, %v1868, %v1872
      %v1877 = vand.u32 2147483647, %v1514
      %vm1878 = vcmp.eq.f32.partialorder %v1877, 8.507059e+37
      %v1879 = vand.u32 %v1514, 2147483648
      %v1880 = vor.u32 1.1754944e-38, %v1879
      %v1881 = vsel %vm1878, %v1880, %v1876
      %v1882 = vmul.f32 1.0, %v1881
      %v1883 = vrcp.pop %v1515
      %v1884 = vmul.f32 %v1515, %v1883
      %v1885 = vsub.f32 1.0, %v1884
      %v1886 = vmul.f32 %v1883, %v1885
      %v1887 = vadd.f32 %v1883, %v1886
      %vm1888 = vweird.f32 %v1515
      %vm1889 = vweird.f32 %v1883
      %vm1890 = vmor %vm1888, %vm1889
      %v1891 = vsel %vm1890, %v1883, %v1887
      %v1892 = vand.u32 2147483647, %v1515
      %vm1893 = vcmp.eq.f32.partialorder %v1892, 8.507059e+37
      %v1894 = vand.u32 %v1515, 2147483648
      %v1895 = vor.u32 1.1754944e-38, %v1894
      %v1896 = vsel %vm1893, %v1895, %v1891
      %v1897 = vmul.f32 1.0, %v1896
      %v1898 = vrcp.pop %v1516
      %v1899 = vmul.f32 %v1516, %v1898
      %v1900 = vsub.f32 1.0, %v1899
      %v1901 = vmul.f32 %v1898, %v1900
      %v1902 = vadd.f32 %v1898, %v1901
      %vm1903 = vweird.f32 %v1516
      %vm1904 = vweird.f32 %v1898
      %vm1905 = vmor %vm1903, %vm1904
      %v1906 = vsel %vm1905, %v1898, %v1902
      %v1907 = vand.u32 2147483647, %v1516
      %vm1908 = vcmp.eq.f32.partialorder %v1907, 8.507059e+37
      %v1909 = vand.u32 %v1516, 2147483648
      %v1910 = vor.u32 1.1754944e-38, %v1909
      %v1911 = vsel %vm1908, %v1910, %v1906
      %v1912 = vmul.f32 1.0, %v1911
      %v1913 = vrcp.pop %v1517
      %v1914 = vmul.f32 %v1517, %v1913
      %v1915 = vsub.f32 1.0, %v1914
      %v1916 = vmul.f32 %v1913, %v1915
      %v1917 = vadd.f32 %v1913, %v1916
      %vm1918 = vweird.f32 %v1517
      %vm1919 = vweird.f32 %v1913
      %vm1920 = vmor %vm1918, %vm1919
      %v1921 = vsel %vm1920, %v1913, %v1917
      %v1922 = vand.u32 2147483647, %v1517
      %vm1923 = vcmp.eq.f32.partialorder %v1922, 8.507059e+37
      %v1924 = vand.u32 %v1517, 2147483648
      %v1925 = vor.u32 1.1754944e-38, %v1924
      %v1926 = vsel %vm1923, %v1925, %v1921
      %v1927 = vmul.f32 1.0, %v1926
      %v1928 = vrcp.pop %v1518
      %v1929 = vmul.f32 %v1518, %v1928
      %v1930 = vsub.f32 1.0, %v1929
      %v1931 = vmul.f32 %v1928, %v1930
      %v1932 = vadd.f32 %v1928, %v1931
      %vm1933 = vweird.f32 %v1518
      %vm1934 = vweird.f32 %v1928
      %vm1935 = vmor %vm1933, %vm1934
      %v1936 = vsel %vm1935, %v1928, %v1932
      %v1937 = vand.u32 2147483647, %v1518
      %vm1938 = vcmp.eq.f32.partialorder %v1937, 8.507059e+37
      %v1939 = vand.u32 %v1518, 2147483648
      %v1940 = vor.u32 1.1754944e-38, %v1939
      %v1941 = vsel %vm1938, %v1940, %v1936
      %v1942 = vmul.f32 1.0, %v1941
      %v1943 = vrcp.pop %v1519
      %v1944 = vmul.f32 %v1519, %v1943
      %v1945 = vsub.f32 1.0, %v1944
      %v1946 = vmul.f32 %v1943, %v1945
      %v1947 = vadd.f32 %v1943, %v1946
      %vm1948 = vweird.f32 %v1519
      %vm1949 = vweird.f32 %v1943
      %vm1950 = vmor %vm1948, %vm1949
      %v1951 = vsel %vm1950, %v1943, %v1947
      %v1952 = vand.u32 2147483647, %v1519
      %vm1953 = vcmp.eq.f32.partialorder %v1952, 8.507059e+37
      %v1954 = vand.u32 %v1519, 2147483648
      %v1955 = vor.u32 1.1754944e-38, %v1954
      %v1956 = vsel %vm1953, %v1955, %v1951
      %v1957 = vmul.f32 1.0, %v1956
      %v1958 = vrcp.pop %v1520
      %v1959 = vmul.f32 %v1520, %v1958
      %v1960 = vsub.f32 1.0, %v1959
      %v1961 = vmul.f32 %v1958, %v1960
      %v1962 = vadd.f32 %v1958, %v1961
      %vm1963 = vweird.f32 %v1520
      %vm1964 = vweird.f32 %v1958
      %vm1965 = vmor %vm1963, %vm1964
      %v1966 = vsel %vm1965, %v1958, %v1962
      %v1967 = vand.u32 2147483647, %v1520
      %vm1968 = vcmp.eq.f32.partialorder %v1967, 8.507059e+37
      %v1969 = vand.u32 %v1520, 2147483648
      %v1970 = vor.u32 1.1754944e-38, %v1969
      %v1971 = vsel %vm1968, %v1970, %v1966
      %v1972 = vmul.f32 1.0, %v1971
      %v1973 = vrcp.pop %v1521
      %v1974 = vmul.f32 %v1521, %v1973
      %v1975 = vsub.f32 1.0, %v1974
      %v1976 = vmul.f32 %v1973, %v1975
      %v1977 = vadd.f32 %v1973, %v1976
      %vm1978 = vweird.f32 %v1521
      %vm1979 = vweird.f32 %v1973
      %vm1980 = vmor %vm1978, %vm1979
      %v1981 = vsel %vm1980, %v1973, %v1977
      %v1982 = vand.u32 2147483647, %v1521
      %vm1983 = vcmp.eq.f32.partialorder %v1982, 8.507059e+37
      %v1984 = vand.u32 %v1521, 2147483648
      %v1985 = vor.u32 1.1754944e-38, %v1984
      %v1986 = vsel %vm1983, %v1985, %v1981
      %v1987 = vmul.f32 1.0, %v1986
      %v1988 = vrcp.pop %v1522
      %v1989 = vmul.f32 %v1522, %v1988
      %v1990 = vsub.f32 1.0, %v1989
      %v1991 = vmul.f32 %v1988, %v1990
      %v1992 = vadd.f32 %v1988, %v1991
      %vm1993 = vweird.f32 %v1522
      %vm1994 = vweird.f32 %v1988
      %vm1995 = vmor %vm1993, %vm1994
      %v1996 = vsel %vm1995, %v1988, %v1992
      %v1997 = vand.u32 2147483647, %v1522
      %vm1998 = vcmp.eq.f32.partialorder %v1997, 8.507059e+37
      %v1999 = vand.u32 %v1522, 2147483648
      %v2000 = vor.u32 1.1754944e-38, %v1999
      %v2001 = vsel %vm1998, %v2000, %v1996
      %v2002 = vmul.f32 1.0, %v2001
      %v2003 = vsel %vm1330, %v1363, %v1537
      %v2004 = vsel %vm1330, %v1364, %v1552
      %v2005 = vsel %vm1330, %v1365, %v1567
      %v2006 = vsel %vm1330, %v1366, %v1582
      %v2007 = vsel %vm1330, %v1367, %v1597
      %v2008 = vsel %vm1330, %v1368, %v1612
      %v2009 = vsel %vm1330, %v1369, %v1627
      %v2010 = vsel %vm1330, %v1370, %v1642
      %v2011 = vsel %vm1330, %v1371, %v1657
      %v2012 = vsel %vm1330, %v1372, %v1672
      %v2013 = vsel %vm1330, %v1373, %v1687
      %v2014 = vsel %vm1330, %v1374, %v1702
      %v2015 = vsel %vm1330, %v1375, %v1717
      %v2016 = vsel %vm1330, %v1376, %v1732
      %v2017 = vsel %vm1330, %v1377, %v1747
      %v2018 = vsel %vm1330, %v1378, %v1762
      %v2019 = vsel %vm1330, %v1379, %v1777
      %v2020 = vsel %vm1330, %v1380, %v1792
      %v2021 = vsel %vm1330, %v1381, %v1807
      %v2022 = vsel %vm1330, %v1382, %v1822
      %v2023 = vsel %vm1330, %v1383, %v1837
      %v2024 = vsel %vm1330, %v1384, %v1852
      %v2025 = vsel %vm1330, %v1385, %v1867
      %v2026 = vsel %vm1330, %v1386, %v1882
      %v2027 = vsel %vm1330, %v1387, %v1897
      %v2028 = vsel %vm1330, %v1388, %v1912
      %v2029 = vsel %vm1330, %v1389, %v1927
      %v2030 = vsel %vm1330, %v1390, %v1942
      %v2031 = vsel %vm1330, %v1391, %v1957
      %v2032 = vsel %vm1330, %v1392, %v1972
      %v2033 = vsel %vm1330, %v1393, %v1987
      %v2034 = vsel %vm1330, %v1394, %v2002
      %2035 = vst [vmem:[%s276] sm:$0xff] %v2003
      %2036 = vst [vmem:[%s276 + $0x8] sm:$0xff] %v2004
      %2037 = vst [vmem:[%s276 + $0x10] sm:$0xff] %v2005
      %2038 = vst [vmem:[%s276 + $0x18] sm:$0xff] %v2006
      %2039 = vst [vmem:[%s276 + $0x20] sm:$0xff] %v2007
      %2040 = vst [vmem:[%s276 + $0x28] sm:$0xff] %v2008
      %2041 = vst [vmem:[%s276 + $0x30] sm:$0xff] %v2009
      %2042 = vst [vmem:[%s276 + $0x38] sm:$0xff] %v2010
      %2043 = vst [vmem:[%s276 + $0x40] sm:$0xff] %v2011
      %2044 = vst [vmem:[%s276 + $0x48] sm:$0xff] %v2012
      %2045 = vst [vmem:[%s276 + $0x50] sm:$0xff] %v2013
      %2046 = vst [vmem:[%s276 + $0x58] sm:$0xff] %v2014
      %2047 = vst [vmem:[%s276 + $0x60] sm:$0xff] %v2015
      %2048 = vst [vmem:[%s276 + $0x68] sm:$0xff] %v2016
      %2049 = vst [vmem:[%s276 + $0x70] sm:$0xff] %v2017
      %2050 = vst [vmem:[%s276 + $0x78] sm:$0xff] %v2018
      %2051 = vst [vmem:[%s276 + $0x80] sm:$0xff] %v2019
      %2052 = vst [vmem:[%s276 + $0x88] sm:$0xff] %v2020
      %2053 = vst [vmem:[%s276 + $0x90] sm:$0xff] %v2021
      %2054 = vst [vmem:[%s276 + $0x98] sm:$0xff] %v2022
      %2055 = vst [vmem:[%s276 + $0xa0] sm:$0xff] %v2023
      %2056 = vst [vmem:[%s276 + $0xa8] sm:$0xff] %v2024
      %2057 = vst [vmem:[%s276 + $0xb0] sm:$0xff] %v2025
      %2058 = vst [vmem:[%s276 + $0xb8] sm:$0xff] %v2026
      %2059 = vst [vmem:[%s276 + $0xc0] sm:$0xff] %v2027
      %2060 = vst [vmem:[%s276 + $0xc8] sm:$0xff] %v2028
      %2061 = vst [vmem:[%s276 + $0xd0] sm:$0xff] %v2029
      %2062 = vst [vmem:[%s276 + $0xd8] sm:$0xff] %v2030
      %2063 = vst [vmem:[%s276 + $0xe0] sm:$0xff] %v2031
      %2064 = vst [vmem:[%s276 + $0xe8] sm:$0xff] %v2032
      %2065 = vst [vmem:[%s276 + $0xf0] sm:$0xff] %v2033
      %2066 = vst [vmem:[%s276 + $0xf8] sm:$0xff] %v2034
      %s2067 = smul.u32 32, %s21
      %p2068 = scmp.lt.s32.totalorder %s20, 1
      %s2069 = scalar_select %p2068, %s20, 1
      %p2070 = scmp.lt.s32.totalorder %s2067, 31
      %s2071 = scalar_select %p2070, %s2067, 31
      %s2072 = smul.addr %s2069, 32
      %s2073 = sadd.s32 %s2071, %s2072
      %s2074 = smul.addr %s2073, 8
      %s2075 = scalar_lea.vmem %s5, %s2074
      // Predicated region
      $region41: #{full_generator_forward.22} parent=39 // pred_check
        %p2076 = pneg %p165
      $region42: #{full_generator_forward.22} parent=39 // pred_check_branch
        %2078 = sbr.rel (%p2076) target = $region44
      $region43: #{full_generator_forward.22} parent=39 // pred_region
        %s2079 = smul.u32 32, %s21
      $region44: #{full_generator_forward.22} parent=39 // pred_fallthru
        _
    $region40: #{full_generator_forward.22} parent=5 // pred_fallthru
      _
    %p2080 = scmp.le.s32.totalorder 2, %s11
    // Predicated region
    $region45: #{full_generator_forward.22} parent=5 // pred_check
      %p2081 = pneg %p2080
    $region46: #{full_generator_forward.22} parent=5 // pred_check_branch
      %2083 = sbr.rel (%p2081) target = $region48
    $region47: #{full_generator_forward.22} parent=5 // pred_region
      %s2084 = ssub.s32 %s11, 2
      // Predicated region
      $region49: #{full_generator_forward.22} parent=47 // pred_check
        %p2085 = pneg %p171
      $region50: #{full_generator_forward.22} parent=47 // pred_check_branch
        %2087 = sbr.rel (%p2085) target = $region52
      $region51: #{full_generator_forward.22} parent=47 // pred_region
        %s2088 = smul.u32 32, %s23
        %p2089 = scmp.lt.s32.totalorder %s22, 1
        %s2090 = scalar_select %p2089, %s22, 1
        %p2091 = scmp.lt.s32.totalorder %s2088, 31
        %s2092 = scalar_select %p2091, %s2088, 31
        %s2093 = smul.addr %s2090, 32
        %s2094 = sadd.s32 %s2092, %s2093
        %s2095 = smul.addr %s2094, 8
        %s2096 = scalar_lea.vmem %s5, %s2095
      $region52: #{full_generator_forward.22} parent=47 // pred_fallthru
        _
    $region48: #{full_generator_forward.22} parent=5 // pred_fallthru
      _
  $region6: #{full_generator_forward.22} parent=0 // loop_footer
    %s15 = sadd.s32 1, %s11
  $region7: #{full_generator_forward.22} parent=0 // loop_footer_branch
    %10 = sbr.rel target = $region3
  $region8: #{full_generator_forward.22} parent=0 // loop_exit
    _

// kernel: full_generator_forward.36
$region0: #{full_generator_forward.36}
  #allocation0 [shape = 'u32[]', space=smem, size = 0x4, offset = 0x4, fixed_abs, tag = 'smem constant byte address 0x4 - core index']
  #allocation1 [shape = 'u32[72,128]{1,0:T(1,128)}', space=vmem, size = 0x9000, scoped, tag = 'internal scratch']
  %s0 = inlined_call_operand.vmem [shape: f32[4,8,3], index: 0, kind: input, shape index: {}]
  %s1 = inlined_call_operand.vmem [shape: f32[3,128], index: 1, kind: input, shape index: {}]
  %s2 = inlined_call_operand.vmem [shape: bf16[4,8,128], index: 2, kind: output, shape index: {}]
  %s3 = sld [smem:[#allocation0]]
  $region41: #{full_generator_forward.36} parent=0
    _
  %s5 = ssub.s32 1, %s3
  %s6 = scalar_select 0, %s5, %s3
  loop: start=0, step=1, limit=6
  $region2: #{full_generator_forward.36} parent=0 // loop_pre_header
    _
  $region3: #{full_generator_forward.36} parent=0 // loop_header
    %s8 = sphi 0, %s12
    %p9 = scmp.ge.s32.totalorder %s8, 6
    %s15 = sphi 0, %s27
    %s16 = sphi 0, %s23
    %s17 = sphi 0, %s15
    %s18 = sphi 0, %s16
    %s19 = sphi 0, %s17
    %s20 = sphi 0, %s18
    %s32 = sphi 0, %s34
    %s35 = sphi 0, %s32
    %s36 = sphi 0, %s35
    %s52 = sphi 0, %s36
    %s56 = sphi 0, %s56
    %s58 = sphi 0, %s56
    %s59 = sphi 0, %s58
    %s73 = sphi 0, %s59
    %s81 = sphi 0, %s83
    %s84 = sphi 0, %s81
    %s85 = sphi 0, %s84
    %s101 = sphi 0, %s85
  $region4: #{full_generator_forward.36} parent=0 // loop_header_branch
    %11 = sbr.rel (%p9) target = $region8
  $region5: #{full_generator_forward.36} parent=0 // loop_body
    %s13 = ssub.s32 %s8, 1
    %s14 = ssub.s32 %s8, 2
    %s21 = sadd.s32 1, %s16
    %p22 = scmp.ge.s32.totalorder %s21, 1
    %s23 = scalar_select %p22, 0, %s21
    %s24 = sadd.s32 1, %s15
    %s25 = scalar_select %p22, %s24, %s15
    %p26 = scmp.ge.s32.totalorder %s25, 4
    %s27 = scalar_select %p26, 0, %s25
    %s28 = ssub.s32 %s15, %s27
    %s29 = ssub.s32 %s16, %s23
    %s30 = sor.u32 %s28, %s29
    %p31 = scmp.eq.s32.totalorder %s30, 0
    %s33 = sadd.s32 %s32, 1
    %s34 = scalar_select %p31, %s32, %s33
    %p37 = pneg %p31
    %p38 = scmp.eq.s32.totalorder %s8, 3
    %p39 = por %p37, %p38
    %p40 = scmp.ne.s32.totalorder %s32, %s35
    %p41 = scmp.eq.s32.totalorder %s8, 0
    %p42 = por %p40, %p41
    %p43 = scmp.ne.s32.totalorder %s32, %s35
    %p44 = scmp.eq.s32.totalorder %s13, 3
    %p45 = por %p43, %p44
    %p46 = scmp.ne.s32.totalorder %s35, %s36
    %p47 = scmp.eq.s32.totalorder %s13, 0
    %p48 = por %p46, %p47
    %p49 = scmp.ne.s32.totalorder %s35, %s36
    %p50 = scmp.eq.s32.totalorder %s14, 3
    %p51 = por %p49, %p50
    %p53 = scmp.ne.s32.totalorder %s36, %s52
    %p54 = scmp.eq.s32.totalorder %s14, 0
    %p55 = por %p53, %p54
    %s57 = sadd.s32 %s56, 1
    %p60 = scmp.eq.s32.totalorder %s8, 3
    %p61 = scmp.ne.s32.totalorder %s56, %s58
    %p62 = scmp.eq.s32.totalorder %s8, 0
    %p63 = por %p61, %p62
    %p64 = scmp.ne.s32.totalorder %s56, %s58
    %p65 = scmp.eq.s32.totalorder %s13, 3
    %p66 = por %p64, %p65
    %p67 = scmp.ne.s32.totalorder %s58, %s59
    %p68 = scmp.eq.s32.totalorder %s13, 0
    %p69 = por %p67, %p68
    %p70 = scmp.ne.s32.totalorder %s58, %s59
    %p71 = scmp.eq.s32.totalorder %s14, 3
    %p72 = por %p70, %p71
    %p74 = scmp.ne.s32.totalorder %s59, %s73
    %p75 = scmp.eq.s32.totalorder %s14, 0
    %p76 = por %p74, %p75
    %s77 = ssub.s32 %s15, %s27
    %s78 = ssub.s32 %s16, %s23
    %s79 = sor.u32 %s77, %s78
    %p80 = scmp.eq.s32.totalorder %s79, 0
    %s82 = sadd.s32 %s81, 1
    %s83 = scalar_select %p80, %s81, %s82
    %p86 = pneg %p80
    %p87 = scmp.eq.s32.totalorder %s8, 3
    %p88 = por %p86, %p87
    %p89 = scmp.ne.s32.totalorder %s81, %s84
    %p90 = scmp.eq.s32.totalorder %s8, 0
    %p91 = por %p89, %p90
    %p92 = scmp.ne.s32.totalorder %s81, %s84
    %p93 = scmp.eq.s32.totalorder %s13, 3
    %p94 = por %p92, %p93
    %p95 = scmp.ne.s32.totalorder %s84, %s85
    %p96 = scmp.eq.s32.totalorder %s13, 0
    %p97 = por %p95, %p96
    %p98 = scmp.ne.s32.totalorder %s84, %s85
    %p99 = scmp.eq.s32.totalorder %s14, 3
    %p100 = por %p98, %p99
    %p102 = scmp.ne.s32.totalorder %s85, %s101
    %p103 = scmp.eq.s32.totalorder %s14, 0
    %p104 = por %p102, %p103
    %p105 = scmp.le.s32.totalorder 1, %s8
    %p106 = scmp.lt.s32.totalorder %s8, 5
    %p107 = pnand %p105, %p106
    %p108 = pneg %p107
    // Predicated region
    $region9: #{full_generator_forward.36} parent=5 // pred_check
      _
    $region10: #{full_generator_forward.36} parent=5 // pred_check_branch
      %110 = sbr.rel (%p107) target = $region12
    $region11: #{full_generator_forward.36} parent=5 // pred_region
      %s111 = ssub.s32 %s8, 1
      // Predicated region
      $region13: #{full_generator_forward.36} parent=11 // pred_check
        %p112 = pneg %p69
      $region14: #{full_generator_forward.36} parent=11 // pred_check_branch
        %114 = sbr.rel (%p112) target = $region16
      $region15: #{full_generator_forward.36} parent=11 // pred_region
        _
      $region16: #{full_generator_forward.36} parent=11 // pred_fallthru
        _
    $region12: #{full_generator_forward.36} parent=5 // pred_fallthru
      _
    %p115 = scmp.lt.s32.totalorder %s8, 4
    // Predicated region
    $region17: #{full_generator_forward.36} parent=5 // pred_check
      %p116 = pneg %p115
    $region18: #{full_generator_forward.36} parent=5 // pred_check_branch
      %118 = sbr.rel (%p116) target = $region20
    $region19: #{full_generator_forward.36} parent=5 // pred_region
      // Predicated region
      $region21: #{full_generator_forward.36} parent=19 // pred_check
        %p119 = pneg %p42
      $region22: #{full_generator_forward.36} parent=19 // pred_check_branch
        %121 = sbr.rel (%p119) target = $region24
      $region23: #{full_generator_forward.36} parent=19 // pred_region
        %p122 = scmp.lt.s32.totalorder %s15, 3
        %s123 = scalar_select %p122, %s15, 3
        %p124 = scmp.lt.s32.totalorder %s16, 0
        %s125 = scalar_select %p124, %s16, 0
        %s126 = sadd.s32 %s125, %s123
        %s127 = smul.addr %s126, 8
        %s128 = scalar_lea.vmem %s0, %s127
      $region24: #{full_generator_forward.36} parent=19 // pred_fallthru
        _
    $region20: #{full_generator_forward.36} parent=5 // pred_fallthru
      _
    %p129 = scmp.le.s32.totalorder 1, %s8
    %p130 = scmp.lt.s32.totalorder %s8, 5
    %p131 = pnand %p129, %p130
    %p132 = pneg %p131
    // Predicated region
    $region25: #{full_generator_forward.36} parent=5 // pred_check
      _
    $region26: #{full_generator_forward.36} parent=5 // pred_check_branch
      %134 = sbr.rel (%p131) target = $region28
    $region27: #{full_generator_forward.36} parent=5 // pred_region
      %s135 = ssub.s32 %s8, 1
      %p136 = scmp.lt.s32.totalorder %s17, 3
      %s137 = scalar_select %p136, %s17, 3
      %p138 = scmp.lt.s32.totalorder %s18, 0
      %s139 = scalar_select %p138, %s18, 0
      %s140 = sadd.s32 %s139, %s137
      %s141 = smul.addr %s140, 8
      %s142 = scalar_lea.vmem %s0, %s141
      %p143 = pneg %p48
      %p144 = pneg %p45
      %p145 = pneg %p69
      %p146 = pneg %p66
      %p147 = pneg %p97
      %p148 = pneg %p94
      %p149 = scmp.lt.s32.totalorder %s17, 3
      %s150 = scalar_select %p149, %s17, 3
      %p151 = scmp.lt.s32.totalorder %s18, 0
      %s152 = scalar_select %p151, %s18, 0
      %s153 = sadd.s32 %s152, %s150
      %s154 = smul.addr %s153, 4
      %s155 = scalar_lea.vmem %s2, %s154
      %p156 = scmp.lt.s32.totalorder %s17, 3
      %s157 = scalar_select %p156, %s17, 3
      %p158 = scmp.lt.s32.totalorder %s18, 0
      %s159 = scalar_select %p158, %s18, 0
      %s160 = sadd.s32 %s159, %s157
      %s161 = smul.addr %s160, 8
      %s162 = scalar_lea.vmem %s0, %s161
      %p163 = scmp.lt.s32.totalorder %s17, 3
      %s164 = scalar_select %p163, %s17, 3
      %p165 = scmp.lt.s32.totalorder %s18, 0
      %s166 = scalar_select %p165, %s18, 0
      %s167 = sadd.s32 %s166, %s164
      %s168 = smul.addr %s167, 4
      %s169 = scalar_lea.vmem %s2, %s168
      %v170 = vld [vmem:[%s162] sm:$0xff]
      %v171 = vld [vmem:[%s1] sm:$0x7]
      %173 = vset.pattern.permute.xlu0 0
      %174 = vperm.xlu0 %173, %v170
      %v175 = vpop.permute.xlu0 %174
      %v177 = vperm.slane %v171, 0
      %v178 = vmul.f32 %v175, %v177
      %179 = vset.pattern.permute.xlu0 1
      %180 = vperm.xlu0 %179, %v170
      %v181 = vpop.permute.xlu0 %180
      %v183 = vperm.slane %v171, 1
      %v184 = vmul.f32 %v181, %v183
      %v185 = vadd.f32 %v178, %v184
      %186 = vset.pattern.permute.xlu0 2
      %187 = vperm.xlu0 %186, %v170
      %v188 = vpop.permute.xlu0 %187
      %v190 = vperm.slane %v171, 2
      %v191 = vmul.f32 %v188, %v190
      %v192 = vadd.f32 %v185, %v191
      %v193 = vmax.f32 %v192, 0.0
      %v194 = vpack.c.bf16 %v193, %v193
      %195 = vst [vmem:[%s169] sm:$0xf] %v194
      %p196 = scmp.lt.s32.totalorder %s17, 3
      %s197 = scalar_select %p196, %s17, 3
      %p198 = scmp.lt.s32.totalorder %s18, 0
      %s199 = scalar_select %p198, %s18, 0
      %s200 = sadd.s32 %s199, %s197
      %s201 = smul.addr %s200, 4
      %s202 = scalar_lea.vmem %s2, %s201
      // Predicated region
      $region29: #{full_generator_forward.36} parent=27 // pred_check
        %p203 = pneg %p94
      $region30: #{full_generator_forward.36} parent=27 // pred_check_branch
        %205 = sbr.rel (%p203) target = $region32
      $region31: #{full_generator_forward.36} parent=27 // pred_region
        _
      $region32: #{full_generator_forward.36} parent=27 // pred_fallthru
        _
    $region28: #{full_generator_forward.36} parent=5 // pred_fallthru
      _
    %p206 = scmp.le.s32.totalorder 2, %s8
    // Predicated region
    $region33: #{full_generator_forward.36} parent=5 // pred_check
      %p207 = pneg %p206
    $region34: #{full_generator_forward.36} parent=5 // pred_check_branch
      %209 = sbr.rel (%p207) target = $region36
    $region35: #{full_generator_forward.36} parent=5 // pred_region
      %s210 = ssub.s32 %s8, 2
      // Predicated region
      $region37: #{full_generator_forward.36} parent=35 // pred_check
        %p211 = pneg %p100
      $region38: #{full_generator_forward.36} parent=35 // pred_check_branch
        %213 = sbr.rel (%p211) target = $region40
      $region39: #{full_generator_forward.36} parent=35 // pred_region
        %p214 = scmp.lt.s32.totalorder %s19, 3
        %s215 = scalar_select %p214, %s19, 3
        %p216 = scmp.lt.s32.totalorder %s20, 0
        %s217 = scalar_select %p216, %s20, 0
        %s218 = sadd.s32 %s217, %s215
        %s219 = smul.addr %s218, 4
        %s220 = scalar_lea.vmem %s2, %s219
      $region40: #{full_generator_forward.36} parent=35 // pred_fallthru
        _
    $region36: #{full_generator_forward.36} parent=5 // pred_fallthru
      _
  $region6: #{full_generator_forward.36} parent=0 // loop_footer
    %s12 = sadd.s32 1, %s8
  $region7: #{full_generator_forward.36} parent=0 // loop_footer_branch
    %7 = sbr.rel target = $region3
  $region8: #{full_generator_forward.36} parent=0 // loop_exit
    _

// kernel: full_generator_forward.37
$region0: #{full_generator_forward.37}
  #allocation0 [shape = 'u32[]', space=smem, size = 0x4, offset = 0x4, fixed_abs, tag = 'smem constant byte address 0x4 - core index']
  #allocation1 [shape = 'u32[72,128]{1,0:T(1,128)}', space=vmem, size = 0x9000, scoped, tag = 'internal scratch']
  %s0 = inlined_call_operand.vmem [shape: bf16[8,128], index: 0, kind: input, shape index: {}]
  %s1 = inlined_call_operand.vmem [shape: bf16[128,128], index: 1, kind: input, shape index: {}]
  %s2 = inlined_call_operand.vmem [shape: bf16[8,128], index: 2, kind: output, shape index: {}]
  %s3 = sld [smem:[#allocation0]]
  $region18: #{full_generator_forward.37} parent=0
    _
  %s5 = ssub.s32 1, %s3
  %s6 = scalar_select 0, %s5, %s3
  // Predicated region
  $region2: #{full_generator_forward.37} parent=0 // pred_check
    _
  $region3: #{full_generator_forward.37} parent=0 // pred_check_branch
    %8 = sbr.rel (0) target = $region5
  $region4: #{full_generator_forward.37} parent=0 // pred_region
    _
  $region5: #{full_generator_forward.37} parent=0 // pred_fallthru
    _
  // Predicated region
  $region6: #{full_generator_forward.37} parent=0 // pred_check
    _
  $region7: #{full_generator_forward.37} parent=0 // pred_check_branch
    %10 = sbr.rel (0) target = $region9
  $region8: #{full_generator_forward.37} parent=0 // pred_region
    _
  $region9: #{full_generator_forward.37} parent=0 // pred_fallthru
    _
  %v11 = vld [vmem:[%s0] sm:$0xf]
  %v12 = vld [vmem:[%s1] sm:$0xf]
  %v13 = vld [vmem:[%s1 + $0x4] sm:$0xf]
  %v14 = vld [vmem:[%s1 + $0x8] sm:$0xf]
  %v15 = vld [vmem:[%s1 + $0xc] sm:$0xf]
  %v16 = vld [vmem:[%s1 + $0x10] sm:$0xf]
  %v17 = vld [vmem:[%s1 + $0x14] sm:$0xf]
  %v18 = vld [vmem:[%s1 + $0x18] sm:$0xf]
  %v19 = vld [vmem:[%s1 + $0x1c] sm:$0xf]
  %v20 = vld [vmem:[%s1 + $0x20] sm:$0xf]
  %v21 = vld [vmem:[%s1 + $0x24] sm:$0xf]
  %v22 = vld [vmem:[%s1 + $0x28] sm:$0xf]
  %v23 = vld [vmem:[%s1 + $0x2c] sm:$0xf]
  %v24 = vld [vmem:[%s1 + $0x30] sm:$0xf]
  %v25 = vld [vmem:[%s1 + $0x34] sm:$0xf]
  %v26 = vld [vmem:[%s1 + $0x38] sm:$0xf]
  %v27 = vld [vmem:[%s1 + $0x3c] sm:$0xf]
  %v44 = vunpack.c.l.b16 %v12
  %v45 = vunpack.c.l.b16 %v13
  %v46 = vunpack.c.l.b16 %v14
  %v47 = vunpack.c.l.b16 %v15
  %v48 = vunpack.c.l.b16 %v16
  %v49 = vunpack.c.l.b16 %v17
  %v50 = vunpack.c.l.b16 %v18
  %v51 = vunpack.c.l.b16 %v19
  %v52 = vunpack.c.l.b16 %v20
  %v53 = vunpack.c.l.b16 %v21
  %v54 = vunpack.c.l.b16 %v22
  %v55 = vunpack.c.l.b16 %v23
  %v56 = vunpack.c.l.b16 %v24
  %v57 = vunpack.c.l.b16 %v25
  %v58 = vunpack.c.l.b16 %v26
  %v59 = vunpack.c.l.b16 %v27
  %v60 = vpack.c.b16 %v45, %v44
  %v61 = vpack.c.b16 %v47, %v46
  %v62 = vpack.c.b16 %v49, %v48
  %v63 = vpack.c.b16 %v51, %v50
  %v64 = vpack.c.b16 %v53, %v52
  %v65 = vpack.c.b16 %v55, %v54
  %v66 = vpack.c.b16 %v57, %v56
  %v67 = vpack.c.b16 %v59, %v58
  %76 = vmatpush.bf16.msra.mxu0 %v67
  %77 = vmatpush.bf16.msra.mxu0 %v66
  %78 = vmatpush.bf16.msra.mxu0 %v65
  %79 = vmatpush.bf16.msra.mxu0 %v64
  %80 = vmatpush.bf16.msra.mxu0 %v63
  %81 = vmatpush.bf16.msra.mxu0 %v62
  %82 = vmatpush.bf16.msra.mxu0 %v61
  %83 = vmatpush.bf16.msra.mxu0 %v60
  %84 = vmatmul.bf16.gmra.mxu0 %v11
  %v85 = vpop.f32.mrf.mxu0
  %v86 = vadd.f32 0.0, %v85
  %v87 = vpop.f32.mrf.mxu0
  %88 = vdwg.mxu0
  %v89 = vmax.f32 %v86, 0.0
  %v90 = vpack.c.bf16 %v89, %v89
  %91 = vst [vmem:[%s2] sm:$0xf] %v90
  // Predicated region
  $region10: #{full_generator_forward.37} parent=0 // pred_check
    _
  $region11: #{full_generator_forward.37} parent=0 // pred_check_branch
    %93 = sbr.rel (0) target = $region13
  $region12: #{full_generator_forward.37} parent=0 // pred_region
    _
  $region13: #{full_generator_forward.37} parent=0 // pred_fallthru
    _
  // Predicated region
  $region14: #{full_generator_forward.37} parent=0 // pred_check
    _
  $region15: #{full_generator_forward.37} parent=0 // pred_check_branch
    %95 = sbr.rel (0) target = $region17
  $region16: #{full_generator_forward.37} parent=0 // pred_region
    _
  $region17: #{full_generator_forward.37} parent=0 // pred_fallthru
    _

// kernel: full_generator_forward.40
$region0: #{full_generator_forward.40}
  #allocation0 [shape = 'u32[]', space=smem, size = 0x4, offset = 0x4, fixed_abs, tag = 'smem constant byte address 0x4 - core index']
  #allocation1 [shape = 'u32[72,128]{1,0:T(1,128)}', space=vmem, size = 0x9000, scoped, tag = 'internal scratch']
  %s0 = inlined_call_operand.vmem [shape: f32[2,16,3], index: 0, kind: input, shape index: {}]
  %s1 = inlined_call_operand.vmem [shape: f32[2,16,3], index: 1, kind: input, shape index: {}]
  %s2 = inlined_call_operand.vmem [shape: f32[3,128], index: 2, kind: input, shape index: {}]
  %s3 = inlined_call_operand.vmem [shape: bf16[128,128], index: 3, kind: input, shape index: {}]
  %s4 = inlined_call_operand.vmem [shape: bf16[128,128], index: 4, kind: input, shape index: {}]
  %s5 = inlined_call_operand.vmem [shape: f32[2,1,8,128], index: 5, kind: output, shape index: {}]
  %s6 = sld [smem:[#allocation0]]
  $region53: #{full_generator_forward.40} parent=0
    _
  %s8 = ssub.s32 1, %s6
  %s9 = scalar_select 0, %s8, %s6
  loop: start=0, step=1, limit=4
  $region2: #{full_generator_forward.40} parent=0 // loop_pre_header
    _
  $region3: #{full_generator_forward.40} parent=0 // loop_header
    %s11 = sphi 0, %s15
    %p12 = scmp.ge.s32.totalorder %s11, 4
    %s18 = sphi 0, %s30
    %s19 = sphi 0, %s26
    %s20 = sphi 0, %s18
    %s21 = sphi 0, %s19
    %s22 = sphi 0, %s20
    %s23 = sphi 0, %s21
    %s35 = sphi 0, %s37
    %s38 = sphi 0, %s35
    %s39 = sphi 0, %s38
    %s55 = sphi 0, %s39
    %s63 = sphi 0, %s65
    %s66 = sphi 0, %s63
    %s67 = sphi 0, %s66
    %s83 = sphi 0, %s67
    %s87 = sphi 0, %s87
    %s89 = sphi 0, %s87
    %s90 = sphi 0, %s89
    %s104 = sphi 0, %s90
    %s108 = sphi 0, %s108
    %s110 = sphi 0, %s108
    %s111 = sphi 0, %s110
    %s125 = sphi 0, %s111
    %s129 = sphi 0, %s129
    %s131 = sphi 0, %s129
    %s132 = sphi 0, %s131
    %s146 = sphi 0, %s132
    %s154 = sphi 0, %s156
    %s157 = sphi 0, %s154
    %s158 = sphi 0, %s157
    %s174 = sphi 0, %s158
  $region4: #{full_generator_forward.40} parent=0 // loop_header_branch
    %14 = sbr.rel (%p12) target = $region8
  $region5: #{full_generator_forward.40} parent=0 // loop_body
    %s16 = ssub.s32 %s11, 1
    %s17 = ssub.s32 %s11, 2
    %s24 = sadd.s32 1, %s19
    %p25 = scmp.ge.s32.totalorder %s24, 1
    %s26 = scalar_select %p25, 0, %s24
    %s27 = sadd.s32 1, %s18
    %s28 = scalar_select %p25, %s27, %s18
    %p29 = scmp.ge.s32.totalorder %s28, 2
    %s30 = scalar_select %p29, 0, %s28
    %s31 = ssub.s32 %s18, %s30
    %s32 = ssub.s32 %s19, %s26
    %s33 = sor.u32 %s31, %s32
    %p34 = scmp.eq.s32.totalorder %s33, 0
    %s36 = sadd.s32 %s35, 1
    %s37 = scalar_select %p34, %s35, %s36
    %p40 = pneg %p34
    %p41 = scmp.eq.s32.totalorder %s11, 1
    %p42 = por %p40, %p41
    %p43 = scmp.ne.s32.totalorder %s35, %s38
    %p44 = scmp.eq.s32.totalorder %s11, 0
    %p45 = por %p43, %p44
    %p46 = scmp.ne.s32.totalorder %s35, %s38
    %p47 = scmp.eq.s32.totalorder %s16, 1
    %p48 = por %p46, %p47
    %p49 = scmp.ne.s32.totalorder %s38, %s39
    %p50 = scmp.eq.s32.totalorder %s16, 0
    %p51 = por %p49, %p50
    %p52 = scmp.ne.s32.totalorder %s38, %s39
    %p53 = scmp.eq.s32.totalorder %s17, 1
    %p54 = por %p52, %p53
    %p56 = scmp.ne.s32.totalorder %s39, %s55
    %p57 = scmp.eq.s32.totalorder %s17, 0
    %p58 = por %p56, %p57
    %s59 = ssub.s32 %s18, %s30
    %s60 = ssub.s32 %s19, %s26
    %s61 = sor.u32 %s59, %s60
    %p62 = scmp.eq.s32.totalorder %s61, 0
    %s64 = sadd.s32 %s63, 1
    %s65 = scalar_select %p62, %s63, %s64
    %p68 = pneg %p62
    %p69 = scmp.eq.s32.totalorder %s11, 1
    %p70 = por %p68, %p69
    %p71 = scmp.ne.s32.totalorder %s63, %s66
    %p72 = scmp.eq.s32.totalorder %s11, 0
    %p73 = por %p71, %p72
    %p74 = scmp.ne.s32.totalorder %s63, %s66
    %p75 = scmp.eq.s32.totalorder %s16, 1
    %p76 = por %p74, %p75
    %p77 = scmp.ne.s32.totalorder %s66, %s67
    %p78 = scmp.eq.s32.totalorder %s16, 0
    %p79 = por %p77, %p78
    %p80 = scmp.ne.s32.totalorder %s66, %s67
    %p81 = scmp.eq.s32.totalorder %s17, 1
    %p82 = por %p80, %p81
    %p84 = scmp.ne.s32.totalorder %s67, %s83
    %p85 = scmp.eq.s32.totalorder %s17, 0
    %p86 = por %p84, %p85
    %s88 = sadd.s32 %s87, 1
    %p91 = scmp.eq.s32.totalorder %s11, 1
    %p92 = scmp.ne.s32.totalorder %s87, %s89
    %p93 = scmp.eq.s32.totalorder %s11, 0
    %p94 = por %p92, %p93
    %p95 = scmp.ne.s32.totalorder %s87, %s89
    %p96 = scmp.eq.s32.totalorder %s16, 1
    %p97 = por %p95, %p96
    %p98 = scmp.ne.s32.totalorder %s89, %s90
    %p99 = scmp.eq.s32.totalorder %s16, 0
    %p100 = por %p98, %p99
    %p101 = scmp.ne.s32.totalorder %s89, %s90
    %p102 = scmp.eq.s32.totalorder %s17, 1
    %p103 = por %p101, %p102
    %p105 = scmp.ne.s32.totalorder %s90, %s104
    %p106 = scmp.eq.s32.totalorder %s17, 0
    %p107 = por %p105, %p106
    %s109 = sadd.s32 %s108, 1
    %p112 = scmp.eq.s32.totalorder %s11, 1
    %p113 = scmp.ne.s32.totalorder %s108, %s110
    %p114 = scmp.eq.s32.totalorder %s11, 0
    %p115 = por %p113, %p114
    %p116 = scmp.ne.s32.totalorder %s108, %s110
    %p117 = scmp.eq.s32.totalorder %s16, 1
    %p118 = por %p116, %p117
    %p119 = scmp.ne.s32.totalorder %s110, %s111
    %p120 = scmp.eq.s32.totalorder %s16, 0
    %p121 = por %p119, %p120
    %p122 = scmp.ne.s32.totalorder %s110, %s111
    %p123 = scmp.eq.s32.totalorder %s17, 1
    %p124 = por %p122, %p123
    %p126 = scmp.ne.s32.totalorder %s111, %s125
    %p127 = scmp.eq.s32.totalorder %s17, 0
    %p128 = por %p126, %p127
    %s130 = sadd.s32 %s129, 1
    %p133 = scmp.eq.s32.totalorder %s11, 1
    %p134 = scmp.ne.s32.totalorder %s129, %s131
    %p135 = scmp.eq.s32.totalorder %s11, 0
    %p136 = por %p134, %p135
    %p137 = scmp.ne.s32.totalorder %s129, %s131
    %p138 = scmp.eq.s32.totalorder %s16, 1
    %p139 = por %p137, %p138
    %p140 = scmp.ne.s32.totalorder %s131, %s132
    %p141 = scmp.eq.s32.totalorder %s16, 0
    %p142 = por %p140, %p141
    %p143 = scmp.ne.s32.totalorder %s131, %s132
    %p144 = scmp.eq.s32.totalorder %s17, 1
    %p145 = por %p143, %p144
    %p147 = scmp.ne.s32.totalorder %s132, %s146
    %p148 = scmp.eq.s32.totalorder %s17, 0
    %p149 = por %p147, %p148
    %s150 = ssub.s32 %s18, %s30
    %s151 = ssub.s32 %s19, %s26
    %s152 = sor.u32 %s150, %s151
    %p153 = scmp.eq.s32.totalorder %s152, 0
    %s155 = sadd.s32 %s154, 1
    %s156 = scalar_select %p153, %s154, %s155
    %p159 = pneg %p153
    %p160 = scmp.eq.s32.totalorder %s11, 1
    %p161 = por %p159, %p160
    %p162 = scmp.ne.s32.totalorder %s154, %s157
    %p163 = scmp.eq.s32.totalorder %s11, 0
    %p164 = por %p162, %p163
    %p165 = scmp.ne.s32.totalorder %s154, %s157
    %p166 = scmp.eq.s32.totalorder %s16, 1
    %p167 = por %p165, %p166
    %p168 = scmp.ne.s32.totalorder %s157, %s158
    %p169 = scmp.eq.s32.totalorder %s16, 0
    %p170 = por %p168, %p169
    %p171 = scmp.ne.s32.totalorder %s157, %s158
    %p172 = scmp.eq.s32.totalorder %s17, 1
    %p173 = por %p171, %p172
    %p175 = scmp.ne.s32.totalorder %s158, %s174
    %p176 = scmp.eq.s32.totalorder %s17, 0
    %p177 = por %p175, %p176
    %p178 = scmp.le.s32.totalorder 1, %s11
    %p179 = scmp.lt.s32.totalorder %s11, 3
    %p180 = pnand %p178, %p179
    %p181 = pneg %p180
    // Predicated region
    $region9: #{full_generator_forward.40} parent=5 // pred_check
      _
    $region10: #{full_generator_forward.40} parent=5 // pred_check_branch
      %183 = sbr.rel (%p180) target = $region12
    $region11: #{full_generator_forward.40} parent=5 // pred_region
      %s184 = ssub.s32 %s11, 1
      // Predicated region
      $region13: #{full_generator_forward.40} parent=11 // pred_check
        %p185 = pneg %p100
      $region14: #{full_generator_forward.40} parent=11 // pred_check_branch
        %187 = sbr.rel (%p185) target = $region16
      $region15: #{full_generator_forward.40} parent=11 // pred_region
        _
      $region16: #{full_generator_forward.40} parent=11 // pred_fallthru
        _
      // Predicated region
      $region17: #{full_generator_forward.40} parent=11 // pred_check
        %p188 = pneg %p121
      $region18: #{full_generator_forward.40} parent=11 // pred_check_branch
        %190 = sbr.rel (%p188) target = $region20
      $region19: #{full_generator_forward.40} parent=11 // pred_region
        _
      $region20: #{full_generator_forward.40} parent=11 // pred_fallthru
        _
      // Predicated region
      $region21: #{full_generator_forward.40} parent=11 // pred_check
        %p191 = pneg %p142
      $region22: #{full_generator_forward.40} parent=11 // pred_check_branch
        %193 = sbr.rel (%p191) target = $region24
      $region23: #{full_generator_forward.40} parent=11 // pred_region
        _
      $region24: #{full_generator_forward.40} parent=11 // pred_fallthru
        _
    $region12: #{full_generator_forward.40} parent=5 // pred_fallthru
      _
    %p194 = scmp.lt.s32.totalorder %s11, 2
    // Predicated region
    $region25: #{full_generator_forward.40} parent=5 // pred_check
      %p195 = pneg %p194
    $region26: #{full_generator_forward.40} parent=5 // pred_check_branch
      %197 = sbr.rel (%p195) target = $region28
    $region27: #{full_generator_forward.40} parent=5 // pred_region
      // Predicated region
      $region29: #{full_generator_forward.40} parent=27 // pred_check
        %p198 = pneg %p45
      $region30: #{full_generator_forward.40} parent=27 // pred_check_branch
        %200 = sbr.rel (%p198) target = $region32
      $region31: #{full_generator_forward.40} parent=27 // pred_region
        %s201 = smul.u32 2, %s19
        %p202 = scmp.lt.s32.totalorder %s18, 1
        %s203 = scalar_select %p202, %s18, 1
        %p204 = scmp.lt.s32.totalorder %s201, 1
        %s205 = scalar_select %p204, %s201, 1
        %s206 = smul.addr %s203, 2
        %s207 = sadd.s32 %s205, %s206
        %s208 = smul.addr %s207, 8
        %s209 = scalar_lea.vmem %s0, %s208
        %s210 = smul.u32 2, %s19
      $region32: #{full_generator_forward.40} parent=27 // pred_fallthru
        _
      // Predicated region
      $region33: #{full_generator_forward.40} parent=27 // pred_check
        %p211 = pneg %p73
      $region34: #{full_generator_forward.40} parent=27 // pred_check_branch
        %213 = sbr.rel (%p211) target = $region36
      $region35: #{full_generator_forward.40} parent=27 // pred_region
        %s214 = smul.u32 2, %s19
        %p215 = scmp.lt.s32.totalorder %s18, 1
        %s216 = scalar_select %p215, %s18, 1
        %p217 = scmp.lt.s32.totalorder %s214, 1
        %s218 = scalar_select %p217, %s214, 1
        %s219 = smul.addr %s216, 2
        %s220 = sadd.s32 %s218, %s219
        %s221 = smul.addr %s220, 8
        %s222 = scalar_lea.vmem %s1, %s221
        %s223 = smul.u32 2, %s19
      $region36: #{full_generator_forward.40} parent=27 // pred_fallthru
        _
    $region28: #{full_generator_forward.40} parent=5 // pred_fallthru
      _
    %p224 = scmp.le.s32.totalorder 1, %s11
    %p225 = scmp.lt.s32.totalorder %s11, 3
    %p226 = pnand %p224, %p225
    %p227 = pneg %p226
    // Predicated region
    $region37: #{full_generator_forward.40} parent=5 // pred_check
      _
    $region38: #{full_generator_forward.40} parent=5 // pred_check_branch
      %229 = sbr.rel (%p226) target = $region40
    $region39: #{full_generator_forward.40} parent=5 // pred_region
      %s230 = ssub.s32 %s11, 1
      %s231 = smul.u32 2, %s21
      %p232 = scmp.lt.s32.totalorder %s20, 1
      %s233 = scalar_select %p232, %s20, 1
      %p234 = scmp.lt.s32.totalorder %s231, 1
      %s235 = scalar_select %p234, %s231, 1
      %s236 = smul.addr %s233, 2
      %s237 = sadd.s32 %s235, %s236
      %s238 = smul.addr %s237, 8
      %s239 = scalar_lea.vmem %s0, %s238
      %p240 = pneg %p51
      %p241 = pneg %p48
      %s242 = smul.u32 2, %s21
      %p243 = scmp.lt.s32.totalorder %s20, 1
      %s244 = scalar_select %p243, %s20, 1
      %p245 = scmp.lt.s32.totalorder %s242, 1
      %s246 = scalar_select %p245, %s242, 1
      %s247 = smul.addr %s244, 2
      %s248 = sadd.s32 %s246, %s247
      %s249 = smul.addr %s248, 8
      %s250 = scalar_lea.vmem %s1, %s249
      %p251 = pneg %p79
      %p252 = pneg %p76
      %p253 = pneg %p100
      %p254 = pneg %p97
      %p255 = pneg %p121
      %p256 = pneg %p118
      %p257 = pneg %p142
      %p258 = pneg %p139
      %p259 = pneg %p170
      %p260 = pneg %p167
      %p261 = scmp.lt.s32.totalorder %s20, 1
      %s262 = scalar_select %p261, %s20, 1
      %p263 = scmp.lt.s32.totalorder %s21, 0
      %s264 = scalar_select %p263, %s21, 0
      %s265 = sadd.s32 %s264, %s262
      %s266 = smul.addr %s265, 8
      %s267 = scalar_lea.vmem %s5, %s266
      %s268 = smul.u32 2, %s21
      %p269 = scmp.lt.s32.totalorder %s20, 1
      %s270 = scalar_select %p269, %s20, 1
      %p271 = scmp.lt.s32.totalorder %s268, 1
      %s272 = scalar_select %p271, %s268, 1
      %s273 = smul.addr %s270, 2
      %s274 = sadd.s32 %s272, %s273
      %s275 = smul.addr %s274, 8
      %s276 = scalar_lea.vmem %s0, %s275
      %s277 = smul.u32 2, %s21
      %s278 = smul.u32 2, %s21
      %p279 = scmp.lt.s32.totalorder %s20, 1
      %s280 = scalar_select %p279, %s20, 1
      %p281 = scmp.lt.s32.totalorder %s278, 1
      %s282 = scalar_select %p281, %s278, 1
      %s283 = smul.addr %s280, 2
      %s284 = sadd.s32 %s282, %s283
      %s285 = smul.addr %s284, 8
      %s286 = scalar_lea.vmem %s1, %s285
      %s287 = smul.u32 2, %s21
      %p288 = scmp.lt.s32.totalorder %s20, 1
      %s289 = scalar_select %p288, %s20, 1
      %p290 = scmp.lt.s32.totalorder %s21, 0
      %s291 = scalar_select %p290, %s21, 0
      %s292 = sadd.s32 %s291, %s289
      %s293 = smul.addr %s292, 8
      %s294 = scalar_lea.vmem %s5, %s293
      %v295 = vld [vmem:[%s2] sm:$0x7]
      %v296 = vld [vmem:[%s3] sm:$0xf]
      %v297 = vld [vmem:[%s3 + $0x4] sm:$0xf]
      %v298 = vld [vmem:[%s3 + $0x8] sm:$0xf]
      %v299 = vld [vmem:[%s3 + $0xc] sm:$0xf]
      %v300 = vld [vmem:[%s3 + $0x10] sm:$0xf]
      %v301 = vld [vmem:[%s3 + $0x14] sm:$0xf]
      %v302 = vld [vmem:[%s3 + $0x18] sm:$0xf]
      %v303 = vld [vmem:[%s3 + $0x1c] sm:$0xf]
      %v304 = vld [vmem:[%s3 + $0x20] sm:$0xf]
      %v305 = vld [vmem:[%s3 + $0x24] sm:$0xf]
      %v306 = vld [vmem:[%s3 + $0x28] sm:$0xf]
      %v307 = vld [vmem:[%s3 + $0x2c] sm:$0xf]
      %v308 = vld [vmem:[%s3 + $0x30] sm:$0xf]
      %v309 = vld [vmem:[%s3 + $0x34] sm:$0xf]
      %v310 = vld [vmem:[%s3 + $0x38] sm:$0xf]
      %v311 = vld [vmem:[%s3 + $0x3c] sm:$0xf]
      %v312 = vld [vmem:[%s4] sm:$0xf]
      %v313 = vld [vmem:[%s4 + $0x4] sm:$0xf]
      %v314 = vld [vmem:[%s4 + $0x8] sm:$0xf]
      %v315 = vld [vmem:[%s4 + $0xc] sm:$0xf]
      %v316 = vld [vmem:[%s4 + $0x10] sm:$0xf]
      %v317 = vld [vmem:[%s4 + $0x14] sm:$0xf]
      %v318 = vld [vmem:[%s4 + $0x18] sm:$0xf]
      %v319 = vld [vmem:[%s4 + $0x1c] sm:$0xf]
      %v320 = vld [vmem:[%s4 + $0x20] sm:$0xf]
      %v321 = vld [vmem:[%s4 + $0x24] sm:$0xf]
      %v322 = vld [vmem:[%s4 + $0x28] sm:$0xf]
      %v323 = vld [vmem:[%s4 + $0x2c] sm:$0xf]
      %v324 = vld [vmem:[%s4 + $0x30] sm:$0xf]
      %v325 = vld [vmem:[%s4 + $0x34] sm:$0xf]
      %v326 = vld [vmem:[%s4 + $0x38] sm:$0xf]
      %v327 = vld [vmem:[%s4 + $0x3c] sm:$0xf]
      %v328 = vld [vmem:[%s276] sm:$0xff]
      %v329 = vld [vmem:[%s276 + $0x8] sm:$0xff]
      %331 = vset.pattern.permute.xlu0 0
      %332 = vperm.xlu0 %331, %v328
      %v333 = vpop.permute.xlu0 %332
      %336 = vset.pattern.permute.xlu0 0
      %337 = vperm.xlu0 %336, %v329
      %v338 = vpop.permute.xlu0 %337
      %v340 = vperm.slane %v295, 0
      %v341 = vmul.f32 %v333, %v340
      %v342 = vmul.f32 %v338, %v340
      %343 = vset.pattern.permute.xlu0 1
      %344 = vperm.xlu0 %343, %v328
      %v345 = vpop.permute.xlu0 %344
      %347 = vset.pattern.permute.xlu0 1
      %348 = vperm.xlu0 %347, %v329
      %v349 = vpop.permute.xlu0 %348
      %v351 = vperm.slane %v295, 1
      %v352 = vmul.f32 %v345, %v351
      %v353 = vmul.f32 %v349, %v351
      %v354 = vadd.f32 %v341, %v352
      %v355 = vadd.f32 %v342, %v353
      %356 = vset.pattern.permute.xlu0 2
      %357 = vperm.xlu0 %356, %v328
      %v358 = vpop.permute.xlu0 %357
      %360 = vset.pattern.permute.xlu0 2
      %361 = vperm.xlu0 %360, %v329
      %v362 = vpop.permute.xlu0 %361
      %v364 = vperm.slane %v295, 2
      %v365 = vmul.f32 %v358, %v364
      %v366 = vmul.f32 %v362, %v364
      %v367 = vadd.f32 %v354, %v365
      %v368 = vadd.f32 %v355, %v366
      %vm369 = vcmp.ge.f32.partialorder %v367, 0.0
      %vm370 = vcmp.ge.f32.partialorder %v368, 0.0
      %v371 = vmul.f32 %v367, 0.2
      %v372 = vmul.f32 %v368, 0.2
      %v373 = vsel %vm369, %v367, %v371
      %v374 = vsel %vm370, %v368, %v372
      %v375 = vpack.c.bf16 %v374, %v373
      %v392 = vunpack.c.l.b16 %v296
      %v393 = vunpack.c.l.b16 %v297
      %v394 = vunpack.c.l.b16 %v298
      %v395 = vunpack.c.l.b16 %v299
      %v396 = vunpack.c.l.b16 %v300
      %v397 = vunpack.c.l.b16 %v301
      %v398 = vunpack.c.l.b16 %v302
      %v399 = vunpack.c.l.b16 %v303
      %v400 = vunpack.c.l.b16 %v304
      %v401 = vunpack.c.l.b16 %v305
      %v402 = vunpack.c.l.b16 %v306
      %v403 = vunpack.c.l.b16 %v307
      %v404 = vunpack.c.l.b16 %v308
      %v405 = vunpack.c.l.b16 %v309
      %v406 = vunpack.c.l.b16 %v310
      %v407 = vunpack.c.l.b16 %v311
      %v408 = vpack.c.b16 %v393, %v392
      %v409 = vpack.c.b16 %v395, %v394
      %v410 = vpack.c.b16 %v397, %v396
      %v411 = vpack.c.b16 %v399, %v398
      %v412 = vpack.c.b16 %v401, %v400
      %v413 = vpack.c.b16 %v403, %v402
      %v414 = vpack.c.b16 %v405, %v404
      %v415 = vpack.c.b16 %v407, %v406
      %424 = vmatpush.bf16.msra.mxu0 %v415
      %425 = vmatpush.bf16.msra.mxu0 %v414
      %426 = vmatpush.bf16.msra.mxu0 %v413
      %427 = vmatpush.bf16.msra.mxu0 %v412
      %428 = vmatpush.bf16.msra.mxu0 %v411
      %429 = vmatpush.bf16.msra.mxu0 %v410
      %430 = vmatpush.bf16.msra.mxu0 %v409
      %431 = vmatpush.bf16.msra.mxu0 %v408
      %432 = vmatmul.bf16.gmra.mxu0 %v375
      %v433 = vpop.f32.mrf.mxu0
      %v434 = vadd.f32 0.0, %v433
      %v435 = vpop.f32.mrf.mxu0
      %v436 = vadd.f32 0.0, %v435
      %437 = vdwg.mxu0
      %vm438 = vcmp.ge.f32.partialorder %v434, 0.0
      %vm439 = vcmp.ge.f32.partialorder %v436, 0.0
      %v440 = vmul.f32 %v434, 0.2
      %v441 = vmul.f32 %v436, 0.2
      %v442 = vsel %vm438, %v434, %v440
      %v443 = vsel %vm439, %v436, %v441
      %v444 = vld [vmem:[%s286] sm:$0xff]
      %v445 = vld [vmem:[%s286 + $0x8] sm:$0xff]
      %447 = vset.pattern.permute.xlu0 0
      %448 = vperm.xlu0 %447, %v444
      %v449 = vpop.permute.xlu0 %448
      %452 = vset.pattern.permute.xlu0 0
      %453 = vperm.xlu0 %452, %v445
      %v454 = vpop.permute.xlu0 %453
      %v456 = vmul.f32 %v449, %v340
      %v457 = vmul.f32 %v454, %v340
      %458 = vset.pattern.permute.xlu0 1
      %459 = vperm.xlu0 %458, %v444
      %v460 = vpop.permute.xlu0 %459
      %462 = vset.pattern.permute.xlu0 1
      %463 = vperm.xlu0 %462, %v445
      %v464 = vpop.permute.xlu0 %463
      %v466 = vmul.f32 %v460, %v351
      %v467 = vmul.f32 %v464, %v351
      %v468 = vadd.f32 %v456, %v466
      %v469 = vadd.f32 %v457, %v467
      %470 = vset.pattern.permute.xlu0 2
      %471 = vperm.xlu0 %470, %v444
      %v472 = vpop.permute.xlu0 %471
      %474 = vset.pattern.permute.xlu0 2
      %475 = vperm.xlu0 %474, %v445
      %v476 = vpop.permute.xlu0 %475
      %v478 = vmul.f32 %v472, %v364
      %v479 = vmul.f32 %v476, %v364
      %v480 = vadd.f32 %v468, %v478
      %v481 = vadd.f32 %v469, %v479
      %vm482 = vcmp.ge.f32.partialorder %v480, 0.0
      %vm483 = vcmp.ge.f32.partialorder %v481, 0.0
      %v484 = vmul.f32 %v480, 0.2
      %v485 = vmul.f32 %v481, 0.2
      %v486 = vsel %vm482, %v480, %v484
      %v487 = vsel %vm483, %v481, %v485
      %v488 = vpack.c.bf16 %v487, %v486
      %489 = vmatpush.bf16.msra.mxu0 %v415
      %490 = vmatpush.bf16.msra.mxu0 %v414
      %491 = vmatpush.bf16.msra.mxu0 %v413
      %492 = vmatpush.bf16.msra.mxu0 %v412
      %493 = vmatpush.bf16.msra.mxu0 %v411
      %494 = vmatpush.bf16.msra.mxu0 %v410
      %495 = vmatpush.bf16.msra.mxu0 %v409
      %496 = vmatpush.bf16.msra.mxu0 %v408
      %497 = vmatmul.bf16.gmra.mxu0 %v488
      %v498 = vpop.f32.mrf.mxu0
      %v499 = vadd.f32 0.0, %v498
      %v500 = vpop.f32.mrf.mxu0
      %v501 = vadd.f32 0.0, %v500
      %502 = vdwg.mxu0
      %vm503 = vcmp.ge.f32.partialorder %v499, 0.0
      %vm504 = vcmp.ge.f32.partialorder %v501, 0.0
      %v505 = vmul.f32 %v499, 0.2
      %v506 = vmul.f32 %v501, 0.2
      %v507 = vsel %vm503, %v499, %v505
      %v508 = vsel %vm504, %v501, %v506
      %v509 = vpack.c.bf16 %v508, %v507
      %v526 = vunpack.c.l.b16 %v312
      %v527 = vunpack.c.l.b16 %v313
      %v528 = vunpack.c.l.b16 %v314
      %v529 = vunpack.c.l.b16 %v315
      %v530 = vunpack.c.l.b16 %v316
      %v531 = vunpack.c.l.b16 %v317
      %v532 = vunpack.c.l.b16 %v318
      %v533 = vunpack.c.l.b16 %v319
      %v534 = vunpack.c.l.b16 %v320
      %v535 = vunpack.c.l.b16 %v321
      %v536 = vunpack.c.l.b16 %v322
      %v537 = vunpack.c.l.b16 %v323
      %v538 = vunpack.c.l.b16 %v324
      %v539 = vunpack.c.l.b16 %v325
      %v540 = vunpack.c.l.b16 %v326
      %v541 = vunpack.c.l.b16 %v327
      %v542 = vpack.c.b16 %v527, %v526
      %v543 = vpack.c.b16 %v529, %v528
      %v544 = vpack.c.b16 %v531, %v530
      %v545 = vpack.c.b16 %v533, %v532
      %v546 = vpack.c.b16 %v535, %v534
      %v547 = vpack.c.b16 %v537, %v536
      %v548 = vpack.c.b16 %v539, %v538
      %v549 = vpack.c.b16 %v541, %v540
      %558 = vmatpush.bf16.msra.mxu0 %v549
      %559 = vmatpush.bf16.msra.mxu0 %v548
      %560 = vmatpush.bf16.msra.mxu0 %v547
      %561 = vmatpush.bf16.msra.mxu0 %v546
      %562 = vmatpush.bf16.msra.mxu0 %v545
      %563 = vmatpush.bf16.msra.mxu0 %v544
      %564 = vmatpush.bf16.msra.mxu0 %v543
      %565 = vmatpush.bf16.msra.mxu0 %v542
      %566 = vmatmul.bf16.gmra.mxu0 %v509
      %v567 = vpop.f32.mrf.mxu0
      %v568 = vadd.f32 0.0, %v567
      %v569 = vpop.f32.mrf.mxu0
      %v570 = vadd.f32 0.0, %v569
      %571 = vdwg.mxu0
      %v572 = vsub.f32 %v373, %v486
      %v573 = vsub.f32 %v374, %v487
      %v574 = vand.u32 2147483647, %v572
      %v575 = vand.u32 2147483647, %v573
      %v576 = vadd.f32 %v574, %v575
      %577 = vadd.xlane.f32.xlu0 %v576
      %v578 = vpop.xlane.xlu0 %577
      %v579 = vrot.slane %v578, 4
      %v580 = vadd.f32 %v578, %v579
      %v581 = vrot.slane %v580, 2
      %v582 = vadd.f32 %v580, %v581
      %v583 = vrot.slane %v582, 1
      %v584 = vadd.f32 %v582, %v583
      %s585 = vtos %v584
      %v586 = vsub.f32 %v442, %v507
      %v587 = vsub.f32 %v443, %v508
      %v588 = vand.u32 2147483647, %v586
      %v589 = vand.u32 2147483647, %v587
      %v590 = vadd.f32 %v588, %v589
      %591 = vadd.xlane.f32.xlu0 %v590
      %v592 = vpop.xlane.xlu0 %591
      %v593 = vrot.slane %v592, 4
      %v594 = vadd.f32 %v592, %v593
      %v595 = vrot.slane %v594, 2
      %v596 = vadd.f32 %v594, %v595
      %v597 = vrot.slane %v596, 1
      %v598 = vadd.f32 %v596, %v597
      %s599 = vtos %v598
      %s600 = sadd.f32 %s585, %s599
      %v601 = vsub.f32 0.0, %v568
      %v602 = vsub.f32 0.0, %v570
      %v603 = vadd.f32 %v601, %v602
      %604 = vadd.xlane.f32.xlu0 %v603
      %v605 = vpop.xlane.xlu0 %604
      %v606 = vrot.slane %v605, 4
      %v607 = vadd.f32 %v605, %v606
      %v608 = vrot.slane %v607, 2
      %v609 = vadd.f32 %v607, %v608
      %v610 = vrot.slane %v609, 1
      %v611 = vadd.f32 %v609, %v610
      %s612 = vtos %v611
      %s613 = smul.f32 %s600, 0.001953125
      %s614 = smul.f32 %s612, 0.03125
      %s615 = sadd.f32 %s613, %s614
      %v616 = vstv %s615
      %617 = vst [vmem:[%s294] sm:$0xff] %v616
      %p618 = scmp.lt.s32.totalorder %s20, 1
      %s619 = scalar_select %p618, %s20, 1
      %p620 = scmp.lt.s32.totalorder %s21, 0
      %s621 = scalar_select %p620, %s21, 0
      %s622 = sadd.s32 %s621, %s619
      %s623 = smul.addr %s622, 8
      %s624 = scalar_lea.vmem %s5, %s623
      // Predicated region
      $region41: #{full_generator_forward.40} parent=39 // pred_check
        %p625 = pneg %p167
      $region42: #{full_generator_forward.40} parent=39 // pred_check_branch
        %627 = sbr.rel (%p625) target = $region44
      $region43: #{full_generator_forward.40} parent=39 // pred_region
        _
      $region44: #{full_generator_forward.40} parent=39 // pred_fallthru
        _
    $region40: #{full_generator_forward.40} parent=5 // pred_fallthru
      _
    %p628 = scmp.le.s32.totalorder 2, %s11
    // Predicated region
    $region45: #{full_generator_forward.40} parent=5 // pred_check
      %p629 = pneg %p628
    $region46: #{full_generator_forward.40} parent=5 // pred_check_branch
      %631 = sbr.rel (%p629) target = $region48
    $region47: #{full_generator_forward.40} parent=5 // pred_region
      %s632 = ssub.s32 %s11, 2
      // Predicated region
      $region49: #{full_generator_forward.40} parent=47 // pred_check
        %p633 = pneg %p173
      $region50: #{full_generator_forward.40} parent=47 // pred_check_branch
        %635 = sbr.rel (%p633) target = $region52
      $region51: #{full_generator_forward.40} parent=47 // pred_region
        %p636 = scmp.lt.s32.totalorder %s22, 1
        %s637 = scalar_select %p636, %s22, 1
        %p638 = scmp.lt.s32.totalorder %s23, 0
        %s639 = scalar_select %p638, %s23, 0
        %s640 = sadd.s32 %s639, %s637
        %s641 = smul.addr %s640, 8
        %s642 = scalar_lea.vmem %s5, %s641
      $region52: #{full_generator_forward.40} parent=47 // pred_fallthru
        _
    $region48: #{full_generator_forward.40} parent=5 // pred_fallthru
      _
  $region6: #{full_generator_forward.40} parent=0 // loop_footer
    %s15 = sadd.s32 1, %s11
  $region7: #{full_generator_forward.40} parent=0 // loop_footer_branch
    %10 = sbr.rel target = $region3
  $region8: #{full_generator_forward.40} parent=0 // loop_exit
    _

// kernel: full_generator_forward.32
$region0: #{full_generator_forward.32}
  #allocation0 [shape = 'u32[]', space=smem, size = 0x4, offset = 0x4, fixed_abs, tag = 'smem constant byte address 0x4 - core index']
  #allocation1 [shape = 'u32[72,128]{1,0:T(1,128)}', space=vmem, size = 0x9000, scoped, tag = 'internal scratch']
  %s0 = inlined_call_operand.vmem [shape: f32[4,16,3], index: 0, kind: input, shape index: {}]
  %s1 = inlined_call_operand.vmem [shape: f32[3,128], index: 1, kind: input, shape index: {}]
  %s2 = inlined_call_operand.vmem [shape: bf16[4,16,128], index: 2, kind: output, shape index: {}]
  %s3 = sld [smem:[#allocation0]]
  $region41: #{full_generator_forward.32} parent=0
    _
  %s5 = ssub.s32 1, %s3
  %s6 = scalar_select 0, %s5, %s3
  loop: start=0, step=1, limit=6
  $region2: #{full_generator_forward.32} parent=0 // loop_pre_header
    _
  $region3: #{full_generator_forward.32} parent=0 // loop_header
    %s8 = sphi 0, %s12
    %p9 = scmp.ge.s32.totalorder %s8, 6
    %s15 = sphi 0, %s27
    %s16 = sphi 0, %s23
    %s17 = sphi 0, %s15
    %s18 = sphi 0, %s16
    %s19 = sphi 0, %s17
    %s20 = sphi 0, %s18
    %s32 = sphi 0, %s34
    %s35 = sphi 0, %s32
    %s36 = sphi 0, %s35
    %s52 = sphi 0, %s36
    %s56 = sphi 0, %s56
    %s58 = sphi 0, %s56
    %s59 = sphi 0, %s58
    %s73 = sphi 0, %s59
    %s81 = sphi 0, %s83
    %s84 = sphi 0, %s81
    %s85 = sphi 0, %s84
    %s101 = sphi 0, %s85
  $region4: #{full_generator_forward.32} parent=0 // loop_header_branch
    %11 = sbr.rel (%p9) target = $region8
  $region5: #{full_generator_forward.32} parent=0 // loop_body
    %s13 = ssub.s32 %s8, 1
    %s14 = ssub.s32 %s8, 2
    %s21 = sadd.s32 1, %s16
    %p22 = scmp.ge.s32.totalorder %s21, 1
    %s23 = scalar_select %p22, 0, %s21
    %s24 = sadd.s32 1, %s15
    %s25 = scalar_select %p22, %s24, %s15
    %p26 = scmp.ge.s32.totalorder %s25, 4
    %s27 = scalar_select %p26, 0, %s25
    %s28 = ssub.s32 %s15, %s27
    %s29 = ssub.s32 %s16, %s23
    %s30 = sor.u32 %s28, %s29
    %p31 = scmp.eq.s32.totalorder %s30, 0
    %s33 = sadd.s32 %s32, 1
    %s34 = scalar_select %p31, %s32, %s33
    %p37 = pneg %p31
    %p38 = scmp.eq.s32.totalorder %s8, 3
    %p39 = por %p37, %p38
    %p40 = scmp.ne.s32.totalorder %s32, %s35
    %p41 = scmp.eq.s32.totalorder %s8, 0
    %p42 = por %p40, %p41
    %p43 = scmp.ne.s32.totalorder %s32, %s35
    %p44 = scmp.eq.s32.totalorder %s13, 3
    %p45 = por %p43, %p44
    %p46 = scmp.ne.s32.totalorder %s35, %s36
    %p47 = scmp.eq.s32.totalorder %s13, 0
    %p48 = por %p46, %p47
    %p49 = scmp.ne.s32.totalorder %s35, %s36
    %p50 = scmp.eq.s32.totalorder %s14, 3
    %p51 = por %p49, %p50
    %p53 = scmp.ne.s32.totalorder %s36, %s52
    %p54 = scmp.eq.s32.totalorder %s14, 0
    %p55 = por %p53, %p54
    %s57 = sadd.s32 %s56, 1
    %p60 = scmp.eq.s32.totalorder %s8, 3
    %p61 = scmp.ne.s32.totalorder %s56, %s58
    %p62 = scmp.eq.s32.totalorder %s8, 0
    %p63 = por %p61, %p62
    %p64 = scmp.ne.s32.totalorder %s56, %s58
    %p65 = scmp.eq.s32.totalorder %s13, 3
    %p66 = por %p64, %p65
    %p67 = scmp.ne.s32.totalorder %s58, %s59
    %p68 = scmp.eq.s32.totalorder %s13, 0
    %p69 = por %p67, %p68
    %p70 = scmp.ne.s32.totalorder %s58, %s59
    %p71 = scmp.eq.s32.totalorder %s14, 3
    %p72 = por %p70, %p71
    %p74 = scmp.ne.s32.totalorder %s59, %s73
    %p75 = scmp.eq.s32.totalorder %s14, 0
    %p76 = por %p74, %p75
    %s77 = ssub.s32 %s15, %s27
    %s78 = ssub.s32 %s16, %s23
    %s79 = sor.u32 %s77, %s78
    %p80 = scmp.eq.s32.totalorder %s79, 0
    %s82 = sadd.s32 %s81, 1
    %s83 = scalar_select %p80, %s81, %s82
    %p86 = pneg %p80
    %p87 = scmp.eq.s32.totalorder %s8, 3
    %p88 = por %p86, %p87
    %p89 = scmp.ne.s32.totalorder %s81, %s84
    %p90 = scmp.eq.s32.totalorder %s8, 0
    %p91 = por %p89, %p90
    %p92 = scmp.ne.s32.totalorder %s81, %s84
    %p93 = scmp.eq.s32.totalorder %s13, 3
    %p94 = por %p92, %p93
    %p95 = scmp.ne.s32.totalorder %s84, %s85
    %p96 = scmp.eq.s32.totalorder %s13, 0
    %p97 = por %p95, %p96
    %p98 = scmp.ne.s32.totalorder %s84, %s85
    %p99 = scmp.eq.s32.totalorder %s14, 3
    %p100 = por %p98, %p99
    %p102 = scmp.ne.s32.totalorder %s85, %s101
    %p103 = scmp.eq.s32.totalorder %s14, 0
    %p104 = por %p102, %p103
    %p105 = scmp.le.s32.totalorder 1, %s8
    %p106 = scmp.lt.s32.totalorder %s8, 5
    %p107 = pnand %p105, %p106
    %p108 = pneg %p107
    // Predicated region
    $region9: #{full_generator_forward.32} parent=5 // pred_check
      _
    $region10: #{full_generator_forward.32} parent=5 // pred_check_branch
      %110 = sbr.rel (%p107) target = $region12
    $region11: #{full_generator_forward.32} parent=5 // pred_region
      %s111 = ssub.s32 %s8, 1
      // Predicated region
      $region13: #{full_generator_forward.32} parent=11 // pred_check
        %p112 = pneg %p69
      $region14: #{full_generator_forward.32} parent=11 // pred_check_branch
        %114 = sbr.rel (%p112) target = $region16
      $region15: #{full_generator_forward.32} parent=11 // pred_region
        _
      $region16: #{full_generator_forward.32} parent=11 // pred_fallthru
        _
    $region12: #{full_generator_forward.32} parent=5 // pred_fallthru
      _
    %p115 = scmp.lt.s32.totalorder %s8, 4
    // Predicated region
    $region17: #{full_generator_forward.32} parent=5 // pred_check
      %p116 = pneg %p115
    $region18: #{full_generator_forward.32} parent=5 // pred_check_branch
      %118 = sbr.rel (%p116) target = $region20
    $region19: #{full_generator_forward.32} parent=5 // pred_region
      // Predicated region
      $region21: #{full_generator_forward.32} parent=19 // pred_check
        %p119 = pneg %p42
      $region22: #{full_generator_forward.32} parent=19 // pred_check_branch
        %121 = sbr.rel (%p119) target = $region24
      $region23: #{full_generator_forward.32} parent=19 // pred_region
        %s122 = smul.u32 2, %s16
        %p123 = scmp.lt.s32.totalorder %s15, 3
        %s124 = scalar_select %p123, %s15, 3
        %p125 = scmp.lt.s32.totalorder %s122, 1
        %s126 = scalar_select %p125, %s122, 1
        %s127 = smul.addr %s124, 2
        %s128 = sadd.s32 %s126, %s127
        %s129 = smul.addr %s128, 8
        %s130 = scalar_lea.vmem %s0, %s129
        %s131 = smul.u32 2, %s16
      $region24: #{full_generator_forward.32} parent=19 // pred_fallthru
        _
    $region20: #{full_generator_forward.32} parent=5 // pred_fallthru
      _
    %p132 = scmp.le.s32.totalorder 1, %s8
    %p133 = scmp.lt.s32.totalorder %s8, 5
    %p134 = pnand %p132, %p133
    %p135 = pneg %p134
    // Predicated region
    $region25: #{full_generator_forward.32} parent=5 // pred_check
      _
    $region26: #{full_generator_forward.32} parent=5 // pred_check_branch
      %137 = sbr.rel (%p134) target = $region28
    $region27: #{full_generator_forward.32} parent=5 // pred_region
      %s138 = ssub.s32 %s8, 1
      %s139 = smul.u32 2, %s18
      %p140 = scmp.lt.s32.totalorder %s17, 3
      %s141 = scalar_select %p140, %s17, 3
      %p142 = scmp.lt.s32.totalorder %s139, 1
      %s143 = scalar_select %p142, %s139, 1
      %s144 = smul.addr %s141, 2
      %s145 = sadd.s32 %s143, %s144
      %s146 = smul.addr %s145, 8
      %s147 = scalar_lea.vmem %s0, %s146
      %p148 = pneg %p48
      %p149 = pneg %p45
      %p150 = pneg %p69
      %p151 = pneg %p66
      %p152 = pneg %p97
      %p153 = pneg %p94
      %s154 = smul.u32 2, %s18
      %p155 = scmp.lt.s32.totalorder %s17, 3
      %s156 = scalar_select %p155, %s17, 3
      %p157 = scmp.lt.s32.totalorder %s154, 1
      %s158 = scalar_select %p157, %s154, 1
      %s159 = smul.addr %s156, 2
      %s160 = sadd.s32 %s158, %s159
      %s161 = smul.addr %s160, 4
      %s162 = scalar_lea.vmem %s2, %s161
      %s163 = smul.u32 2, %s18
      %p164 = scmp.lt.s32.totalorder %s17, 3
      %s165 = scalar_select %p164, %s17, 3
      %p166 = scmp.lt.s32.totalorder %s163, 1
      %s167 = scalar_select %p166, %s163, 1
      %s168 = smul.addr %s165, 2
      %s169 = sadd.s32 %s167, %s168
      %s170 = smul.addr %s169, 8
      %s171 = scalar_lea.vmem %s0, %s170
      %s172 = smul.u32 2, %s18
      %s173 = smul.u32 2, %s18
      %p174 = scmp.lt.s32.totalorder %s17, 3
      %s175 = scalar_select %p174, %s17, 3
      %p176 = scmp.lt.s32.totalorder %s173, 1
      %s177 = scalar_select %p176, %s173, 1
      %s178 = smul.addr %s175, 2
      %s179 = sadd.s32 %s177, %s178
      %s180 = smul.addr %s179, 4
      %s181 = scalar_lea.vmem %s2, %s180
      %s182 = smul.u32 2, %s18
      %v183 = vld [vmem:[%s171] sm:$0xff]
      %v184 = vld [vmem:[%s171 + $0x8] sm:$0xff]
      %v185 = vld [vmem:[%s1] sm:$0x7]
      %187 = vset.pattern.permute.xlu0 0
      %188 = vperm.xlu0 %187, %v183
      %v189 = vpop.permute.xlu0 %188
      %192 = vset.pattern.permute.xlu0 0
      %193 = vperm.xlu0 %192, %v184
      %v194 = vpop.permute.xlu0 %193
      %v196 = vperm.slane %v185, 0
      %v197 = vmul.f32 %v189, %v196
      %v198 = vmul.f32 %v194, %v196
      %199 = vset.pattern.permute.xlu0 1
      %200 = vperm.xlu0 %199, %v183
      %v201 = vpop.permute.xlu0 %200
      %203 = vset.pattern.permute.xlu0 1
      %204 = vperm.xlu0 %203, %v184
      %v205 = vpop.permute.xlu0 %204
      %v207 = vperm.slane %v185, 1
      %v208 = vmul.f32 %v201, %v207
      %v209 = vmul.f32 %v205, %v207
      %v210 = vadd.f32 %v197, %v208
      %v211 = vadd.f32 %v198, %v209
      %212 = vset.pattern.permute.xlu0 2
      %213 = vperm.xlu0 %212, %v183
      %v214 = vpop.permute.xlu0 %213
      %216 = vset.pattern.permute.xlu0 2
      %217 = vperm.xlu0 %216, %v184
      %v218 = vpop.permute.xlu0 %217
      %v220 = vperm.slane %v185, 2
      %v221 = vmul.f32 %v214, %v220
      %v222 = vmul.f32 %v218, %v220
      %v223 = vadd.f32 %v210, %v221
      %v224 = vadd.f32 %v211, %v222
      %v225 = vmax.f32 %v223, 0.0
      %v226 = vmax.f32 %v224, 0.0
      %v227 = vpack.c.bf16 %v225, %v225
      %v228 = vpack.c.bf16 %v226, %v226
      %229 = vst [vmem:[%s181] sm:$0xf] %v227
      %230 = vst [vmem:[%s181 + $0x4] sm:$0xf] %v228
      %s231 = smul.u32 2, %s18
      %p232 = scmp.lt.s32.totalorder %s17, 3
      %s233 = scalar_select %p232, %s17, 3
      %p234 = scmp.lt.s32.totalorder %s231, 1
      %s235 = scalar_select %p234, %s231, 1
      %s236 = smul.addr %s233, 2
      %s237 = sadd.s32 %s235, %s236
      %s238 = smul.addr %s237, 4
      %s239 = scalar_lea.vmem %s2, %s238
      // Predicated region
      $region29: #{full_generator_forward.32} parent=27 // pred_check
        %p240 = pneg %p94
      $region30: #{full_generator_forward.32} parent=27 // pred_check_branch
        %242 = sbr.rel (%p240) target = $region32
      $region31: #{full_generator_forward.32} parent=27 // pred_region
        %s243 = smul.u32 2, %s18
      $region32: #{full_generator_forward.32} parent=27 // pred_fallthru
        _
    $region28: #{full_generator_forward.32} parent=5 // pred_fallthru
      _
    %p244 = scmp.le.s32.totalorder 2, %s8
    // Predicated region
    $region33: #{full_generator_forward.32} parent=5 // pred_check
      %p245 = pneg %p244
    $region34: #{full_generator_forward.32} parent=5 // pred_check_branch
      %247 = sbr.rel (%p245) target = $region36
    $region35: #{full_generator_forward.32} parent=5 // pred_region
      %s248 = ssub.s32 %s8, 2
      // Predicated region
      $region37: #{full_generator_forward.32} parent=35 // pred_check
        %p249 = pneg %p100
      $region38: #{full_generator_forward.32} parent=35 // pred_check_branch
        %251 = sbr.rel (%p249) target = $region40
      $region39: #{full_generator_forward.32} parent=35 // pred_region
        %s252 = smul.u32 2, %s20
        %p253 = scmp.lt.s32.totalorder %s19, 3
        %s254 = scalar_select %p253, %s19, 3
        %p255 = scmp.lt.s32.totalorder %s252, 1
        %s256 = scalar_select %p255, %s252, 1
        %s257 = smul.addr %s254, 2
        %s258 = sadd.s32 %s256, %s257
        %s259 = smul.addr %s258, 4
        %s260 = scalar_lea.vmem %s2, %s259
      $region40: #{full_generator_forward.32} parent=35 // pred_fallthru
        _
    $region36: #{full_generator_forward.32} parent=5 // pred_fallthru
      _
  $region6: #{full_generator_forward.32} parent=0 // loop_footer
    %s12 = sadd.s32 1, %s8
  $region7: #{full_generator_forward.32} parent=0 // loop_footer_branch
    %7 = sbr.rel target = $region3
  $region8: #{full_generator_forward.32} parent=0 // loop_exit
    _

// kernel: full_generator_forward.33
$region0: #{full_generator_forward.33}
  #allocation0 [shape = 'u32[]', space=smem, size = 0x4, offset = 0x4, fixed_abs, tag = 'smem constant byte address 0x4 - core index']
  #allocation1 [shape = 'u32[72,128]{1,0:T(1,128)}', space=vmem, size = 0x9000, scoped, tag = 'internal scratch']
  %s0 = inlined_call_operand.vmem [shape: bf16[16,128], index: 0, kind: input, shape index: {}]
  %s1 = inlined_call_operand.vmem [shape: bf16[128,128], index: 1, kind: input, shape index: {}]
  %s2 = inlined_call_operand.vmem [shape: bf16[16,128], index: 2, kind: output, shape index: {}]
  %s3 = sld [smem:[#allocation0]]
  $region18: #{full_generator_forward.33} parent=0
    _
  %s5 = ssub.s32 1, %s3
  %s6 = scalar_select 0, %s5, %s3
  // Predicated region
  $region2: #{full_generator_forward.33} parent=0 // pred_check
    _
  $region3: #{full_generator_forward.33} parent=0 // pred_check_branch
    %8 = sbr.rel (0) target = $region5
  $region4: #{full_generator_forward.33} parent=0 // pred_region
    _
  $region5: #{full_generator_forward.33} parent=0 // pred_fallthru
    _
  // Predicated region
  $region6: #{full_generator_forward.33} parent=0 // pred_check
    _
  $region7: #{full_generator_forward.33} parent=0 // pred_check_branch
    %10 = sbr.rel (0) target = $region9
  $region8: #{full_generator_forward.33} parent=0 // pred_region
    _
  $region9: #{full_generator_forward.33} parent=0 // pred_fallthru
    _
  %v11 = vld [vmem:[%s0] sm:$0xf]
  %v12 = vld [vmem:[%s0 + $0x4] sm:$0xf]
  %v13 = vld [vmem:[%s1] sm:$0xf]
  %v14 = vld [vmem:[%s1 + $0x4] sm:$0xf]
  %v15 = vld [vmem:[%s1 + $0x8] sm:$0xf]
  %v16 = vld [vmem:[%s1 + $0xc] sm:$0xf]
  %v17 = vld [vmem:[%s1 + $0x10] sm:$0xf]
  %v18 = vld [vmem:[%s1 + $0x14] sm:$0xf]
  %v19 = vld [vmem:[%s1 + $0x18] sm:$0xf]
  %v20 = vld [vmem:[%s1 + $0x1c] sm:$0xf]
  %v21 = vld [vmem:[%s1 + $0x20] sm:$0xf]
  %v22 = vld [vmem:[%s1 + $0x24] sm:$0xf]
  %v23 = vld [vmem:[%s1 + $0x28] sm:$0xf]
  %v24 = vld [vmem:[%s1 + $0x2c] sm:$0xf]
  %v25 = vld [vmem:[%s1 + $0x30] sm:$0xf]
  %v26 = vld [vmem:[%s1 + $0x34] sm:$0xf]
  %v27 = vld [vmem:[%s1 + $0x38] sm:$0xf]
  %v28 = vld [vmem:[%s1 + $0x3c] sm:$0xf]
  %v31 = vunpack.c.l.b16 %v11
  %v32 = vunpack.c.l.b16 %v12
  %v33 = vpack.c.b16 %v32, %v31
  %v51 = vunpack.c.l.b16 %v13
  %v52 = vunpack.c.l.b16 %v14
  %v53 = vunpack.c.l.b16 %v15
  %v54 = vunpack.c.l.b16 %v16
  %v55 = vunpack.c.l.b16 %v17
  %v56 = vunpack.c.l.b16 %v18
  %v57 = vunpack.c.l.b16 %v19
  %v58 = vunpack.c.l.b16 %v20
  %v59 = vunpack.c.l.b16 %v21
  %v60 = vunpack.c.l.b16 %v22
  %v61 = vunpack.c.l.b16 %v23
  %v62 = vunpack.c.l.b16 %v24
  %v63 = vunpack.c.l.b16 %v25
  %v64 = vunpack.c.l.b16 %v26
  %v65 = vunpack.c.l.b16 %v27
  %v66 = vunpack.c.l.b16 %v28
  %v67 = vpack.c.b16 %v52, %v51
  %v68 = vpack.c.b16 %v54, %v53
  %v69 = vpack.c.b16 %v56, %v55
  %v70 = vpack.c.b16 %v58, %v57
  %v71 = vpack.c.b16 %v60, %v59
  %v72 = vpack.c.b16 %v62, %v61
  %v73 = vpack.c.b16 %v64, %v63
  %v74 = vpack.c.b16 %v66, %v65
  %83 = vmatpush.bf16.msra.mxu0 %v74
  %84 = vmatpush.bf16.msra.mxu0 %v73
  %85 = vmatpush.bf16.msra.mxu0 %v72
  %86 = vmatpush.bf16.msra.mxu0 %v71
  %87 = vmatpush.bf16.msra.mxu0 %v70
  %88 = vmatpush.bf16.msra.mxu0 %v69
  %89 = vmatpush.bf16.msra.mxu0 %v68
  %90 = vmatpush.bf16.msra.mxu0 %v67
  %91 = vmatmul.bf16.gmra.mxu0 %v33
  %v92 = vpop.f32.mrf.mxu0
  %v93 = vadd.f32 0.0, %v92
  %v94 = vpop.f32.mrf.mxu0
  %v95 = vadd.f32 0.0, %v94
  %96 = vdwg.mxu0
  %v97 = vmax.f32 %v93, 0.0
  %v98 = vmax.f32 %v95, 0.0
  %v99 = vpack.c.bf16 %v97, %v97
  %v100 = vpack.c.bf16 %v98, %v98
  %101 = vst [vmem:[%s2] sm:$0xf] %v99
  %102 = vst [vmem:[%s2 + $0x4] sm:$0xf] %v100
  // Predicated region
  $region10: #{full_generator_forward.33} parent=0 // pred_check
    _
  $region11: #{full_generator_forward.33} parent=0 // pred_check_branch
    %104 = sbr.rel (0) target = $region13
  $region12: #{full_generator_forward.33} parent=0 // pred_region
    _
  $region13: #{full_generator_forward.33} parent=0 // pred_fallthru
    _
  // Predicated region
  $region14: #{full_generator_forward.33} parent=0 // pred_check
    _
  $region15: #{full_generator_forward.33} parent=0 // pred_check_branch
    %106 = sbr.rel (0) target = $region17
  $region16: #{full_generator_forward.33} parent=0 // pred_region
    _
  $region17: #{full_generator_forward.33} parent=0 // pred_fallthru
    _

// kernel: full_generator_forward.39
$region0: #{full_generator_forward.39}
  #allocation0 [shape = 'u32[]', space=smem, size = 0x4, offset = 0x4, fixed_abs, tag = 'smem constant byte address 0x4 - core index']
  #allocation1 [shape = 'u32[72,128]{1,0:T(1,128)}', space=vmem, size = 0x9000, scoped, tag = 'internal scratch']
  #allocation2 [shape = 'f32[128,128]{1,0:T(8,128)}', space=vmem, size = 0x10000, scoped, tag = 'scratch operand']
  %s0 = inlined_call_operand.vmem [shape: bf16[4,128,128], index: 0, kind: input, shape index: {}]
  %s1 = inlined_call_operand.vmem [shape: f32[4,128,128], index: 1, kind: output, shape index: {}]
  %s2 = sld [smem:[#allocation0]]
  $region45: #{full_generator_forward.39} parent=0
    _
  %s4 = ssub.s32 1, %s2
  %s5 = scalar_select 0, %s4, %s2
  loop: start=0, step=1, limit=6
  $region2: #{full_generator_forward.39} parent=0 // loop_pre_header
    _
  $region3: #{full_generator_forward.39} parent=0 // loop_header
    %s7 = sphi 0, %s11
    %p8 = scmp.ge.s32.totalorder %s7, 6
    %s14 = sphi 0, %s26
    %s15 = sphi 0, %s22
    %s16 = sphi 0, %s14
    %s17 = sphi 0, %s15
    %s18 = sphi 0, %s16
    %s19 = sphi 0, %s17
    %s31 = sphi 0, %s33
    %s34 = sphi 0, %s31
    %s35 = sphi 0, %s34
    %s51 = sphi 0, %s35
    %s57 = sphi 0, %s59
    %s60 = sphi 0, %s57
    %s61 = sphi 0, %s60
    %s77 = sphi 0, %s61
  $region4: #{full_generator_forward.39} parent=0 // loop_header_branch
    %10 = sbr.rel (%p8) target = $region8
  $region5: #{full_generator_forward.39} parent=0 // loop_body
    %s12 = ssub.s32 %s7, 1
    %s13 = ssub.s32 %s7, 2
    %s20 = sadd.s32 1, %s15
    %p21 = scmp.ge.s32.totalorder %s20, 1
    %s22 = scalar_select %p21, 0, %s20
    %s23 = sadd.s32 1, %s14
    %s24 = scalar_select %p21, %s23, %s14
    %p25 = scmp.ge.s32.totalorder %s24, 4
    %s26 = scalar_select %p25, 0, %s24
    %s27 = ssub.s32 %s14, %s26
    %s28 = ssub.s32 %s15, %s22
    %s29 = sor.u32 %s27, %s28
    %p30 = scmp.eq.s32.totalorder %s29, 0
    %s32 = sadd.s32 %s31, 1
    %s33 = scalar_select %p30, %s31, %s32
    %p36 = pneg %p30
    %p37 = scmp.eq.s32.totalorder %s7, 3
    %p38 = por %p36, %p37
    %p39 = scmp.ne.s32.totalorder %s31, %s34
    %p40 = scmp.eq.s32.totalorder %s7, 0
    %p41 = por %p39, %p40
    %p42 = scmp.ne.s32.totalorder %s31, %s34
    %p43 = scmp.eq.s32.totalorder %s12, 3
    %p44 = por %p42, %p43
    %p45 = scmp.ne.s32.totalorder %s34, %s35
    %p46 = scmp.eq.s32.totalorder %s12, 0
    %p47 = por %p45, %p46
    %p48 = scmp.ne.s32.totalorder %s34, %s35
    %p49 = scmp.eq.s32.totalorder %s13, 3
    %p50 = por %p48, %p49
    %p52 = scmp.ne.s32.totalorder %s35, %s51
    %p53 = scmp.eq.s32.totalorder %s13, 0
    %p54 = por %p52, %p53
    %s55 = ssub.s32 %s14, %s26
    %p56 = scmp.eq.s32.totalorder %s55, 0
    %s58 = sadd.s32 %s57, 1
    %s59 = scalar_select %p56, %s57, %s58
    %p62 = pneg %p56
    %p63 = scmp.eq.s32.totalorder %s7, 3
    %p64 = por %p62, %p63
    %p65 = scmp.ne.s32.totalorder %s57, %s60
    %p66 = scmp.eq.s32.totalorder %s7, 0
    %p67 = por %p65, %p66
    %p68 = scmp.ne.s32.totalorder %s57, %s60
    %p69 = scmp.eq.s32.totalorder %s12, 3
    %p70 = por %p68, %p69
    %p71 = scmp.ne.s32.totalorder %s60, %s61
    %p72 = scmp.eq.s32.totalorder %s12, 0
    %p73 = por %p71, %p72
    %p74 = scmp.ne.s32.totalorder %s60, %s61
    %p75 = scmp.eq.s32.totalorder %s13, 3
    %p76 = por %p74, %p75
    %p78 = scmp.ne.s32.totalorder %s61, %s77
    %p79 = scmp.eq.s32.totalorder %s13, 0
    %p80 = por %p78, %p79
    %p81 = scmp.le.s32.totalorder 1, %s7
    %p82 = scmp.lt.s32.totalorder %s7, 5
    %p83 = pnand %p81, %p82
    %p84 = pneg %p83
    // Predicated region
    $region9: #{full_generator_forward.39} parent=5 // pred_check
      _
    $region10: #{full_generator_forward.39} parent=5 // pred_check_branch
      %86 = sbr.rel (%p83) target = $region12
    $region11: #{full_generator_forward.39} parent=5 // pred_region
      %s87 = ssub.s32 %s7, 1
    $region12: #{full_generator_forward.39} parent=5 // pred_fallthru
      _
    %p88 = scmp.lt.s32.totalorder %s7, 4
    // Predicated region
    $region13: #{full_generator_forward.39} parent=5 // pred_check
      %p89 = pneg %p88
    $region14: #{full_generator_forward.39} parent=5 // pred_check_branch
      %91 = sbr.rel (%p89) target = $region16
    $region15: #{full_generator_forward.39} parent=5 // pred_region
      // Predicated region
      $region17: #{full_generator_forward.39} parent=15 // pred_check
        %p92 = pneg %p41
      $region18: #{full_generator_forward.39} parent=15 // pred_check_branch
        %94 = sbr.rel (%p92) target = $region20
      $region19: #{full_generator_forward.39} parent=15 // pred_region
        %s95 = smul.u32 16, %s15
        %p96 = scmp.lt.s32.totalorder %s14, 3
        %s97 = scalar_select %p96, %s14, 3
        %p98 = scmp.lt.s32.totalorder %s95, 15
        %s99 = scalar_select %p98, %s95, 15
        %s100 = smul.addr %s97, 16
        %s101 = sadd.s32 %s99, %s100
        %s102 = smul.addr %s101, 4
        %s103 = scalar_lea.vmem %s0, %s102
        %s104 = smul.u32 16, %s15
      $region20: #{full_generator_forward.39} parent=15 // pred_fallthru
        _
    $region16: #{full_generator_forward.39} parent=5 // pred_fallthru
      _
    %p105 = scmp.le.s32.totalorder 1, %s7
    %p106 = scmp.lt.s32.totalorder %s7, 5
    %p107 = pnand %p105, %p106
    %p108 = pneg %p107
    // Predicated region
    $region21: #{full_generator_forward.39} parent=5 // pred_check
      _
    $region22: #{full_generator_forward.39} parent=5 // pred_check_branch
      %110 = sbr.rel (%p107) target = $region24
    $region23: #{full_generator_forward.39} parent=5 // pred_region
      %s111 = ssub.s32 %s7, 1
      %s112 = smul.u32 16, %s17
      %p113 = scmp.lt.s32.totalorder %s16, 3
      %s114 = scalar_select %p113, %s16, 3
      %p115 = scmp.lt.s32.totalorder %s112, 15
      %s116 = scalar_select %p115, %s112, 15
      %s117 = smul.addr %s114, 16
      %s118 = sadd.s32 %s116, %s117
      %s119 = smul.addr %s118, 4
      %s120 = scalar_lea.vmem %s0, %s119
      %p121 = pneg %p47
      %p122 = pneg %p44
      %p123 = pneg %p73
      %p124 = pneg %p70
      %p125 = scmp.lt.s32.totalorder %s16, 3
      %s126 = scalar_select %p125, %s16, 3
      %s127 = smul.addr %s126, 16
      %s128 = smul.addr %s127, 8
      %s129 = scalar_lea.vmem %s1, %s128
      %s130 = smul.u32 16, %s17
      %p131 = scmp.lt.s32.totalorder %s16, 3
      %s132 = scalar_select %p131, %s16, 3
      %p133 = scmp.lt.s32.totalorder %s130, 15
      %s134 = scalar_select %p133, %s130, 15
      %s135 = smul.addr %s132, 16
      %s136 = sadd.s32 %s134, %s135
      %s137 = smul.addr %s136, 4
      %s138 = scalar_lea.vmem %s0, %s137
      %s139 = smul.u32 16, %s17
      %p140 = scmp.lt.s32.totalorder %s16, 3
      %s141 = scalar_select %p140, %s16, 3
      %s142 = smul.addr %s141, 16
      %s143 = smul.addr %s142, 8
      %s144 = scalar_lea.vmem %s1, %s143
      %p145 = scmp.eq.s32.totalorder %s17, 0
      // Predicated region
      $region25: #{full_generator_forward.39} parent=23 // pred_check
        %p146 = pneg %p145
      $region26: #{full_generator_forward.39} parent=23 // pred_check_branch
        %148 = sbr.rel (%p146) target = $region28
      $region27: #{full_generator_forward.39} parent=23 // pred_region
        %149 = vst [vmem:[#allocation2] sm:$0xff] 0.0
        %150 = vst [vmem:[#allocation2 + $0x8] sm:$0xff] 0.0
        %151 = vst [vmem:[#allocation2 + $0x10] sm:$0xff] 0.0
        %152 = vst [vmem:[#allocation2 + $0x18] sm:$0xff] 0.0
        %153 = vst [vmem:[#allocation2 + $0x20] sm:$0xff] 0.0
        %154 = vst [vmem:[#allocation2 + $0x28] sm:$0xff] 0.0
        %155 = vst [vmem:[#allocation2 + $0x30] sm:$0xff] 0.0
        %156 = vst [vmem:[#allocation2 + $0x38] sm:$0xff] 0.0
        %157 = vst [vmem:[#allocation2 + $0x40] sm:$0xff] 0.0
        %158 = vst [vmem:[#allocation2 + $0x48] sm:$0xff] 0.0
        %159 = vst [vmem:[#allocation2 + $0x50] sm:$0xff] 0.0
        %160 = vst [vmem:[#allocation2 + $0x58] sm:$0xff] 0.0
        %161 = vst [vmem:[#allocation2 + $0x60] sm:$0xff] 0.0
        %162 = vst [vmem:[#allocation2 + $0x68] sm:$0xff] 0.0
        %163 = vst [vmem:[#allocation2 + $0x70] sm:$0xff] 0.0
        %164 = vst [vmem:[#allocation2 + $0x78] sm:$0xff] 0.0
      $region28: #{full_generator_forward.39} parent=23 // pred_fallthru
        _
      %v165 = vld [vmem:[%s138] sm:$0xf]
      %v166 = vld [vmem:[%s138 + $0x4] sm:$0xf]
      %v167 = vld [vmem:[%s138 + $0x8] sm:$0xf]
      %v168 = vld [vmem:[%s138 + $0xc] sm:$0xf]
      %v169 = vld [vmem:[%s138 + $0x10] sm:$0xf]
      %v170 = vld [vmem:[%s138 + $0x14] sm:$0xf]
      %v171 = vld [vmem:[%s138 + $0x18] sm:$0xf]
      %v172 = vld [vmem:[%s138 + $0x1c] sm:$0xf]
      %v173 = vld [vmem:[%s138 + $0x20] sm:$0xf]
      %v174 = vld [vmem:[%s138 + $0x24] sm:$0xf]
      %v175 = vld [vmem:[%s138 + $0x28] sm:$0xf]
      %v176 = vld [vmem:[%s138 + $0x2c] sm:$0xf]
      %v177 = vld [vmem:[%s138 + $0x30] sm:$0xf]
      %v178 = vld [vmem:[%s138 + $0x34] sm:$0xf]
      %v179 = vld [vmem:[%s138 + $0x38] sm:$0xf]
      %v180 = vld [vmem:[%s138 + $0x3c] sm:$0xf]
      %v181 = vunpack.c.l.bf16 %v165
      %v182 = vunpack.c.l.bf16 %v166
      %v183 = vunpack.c.l.bf16 %v167
      %v184 = vunpack.c.l.bf16 %v168
      %v185 = vunpack.c.l.bf16 %v169
      %v186 = vunpack.c.l.bf16 %v170
      %v187 = vunpack.c.l.bf16 %v171
      %v188 = vunpack.c.l.bf16 %v172
      %v189 = vunpack.c.l.bf16 %v173
      %v190 = vunpack.c.l.bf16 %v174
      %v191 = vunpack.c.l.bf16 %v175
      %v192 = vunpack.c.l.bf16 %v176
      %v193 = vunpack.c.l.bf16 %v177
      %v194 = vunpack.c.l.bf16 %v178
      %v195 = vunpack.c.l.bf16 %v179
      %v196 = vunpack.c.l.bf16 %v180
      %v197 = vld [vmem:[#allocation2] sm:$0xff]
      %v198 = vld [vmem:[#allocation2 + $0x8] sm:$0xff]
      %v199 = vld [vmem:[#allocation2 + $0x10] sm:$0xff]
      %v200 = vld [vmem:[#allocation2 + $0x18] sm:$0xff]
      %v201 = vld [vmem:[#allocation2 + $0x20] sm:$0xff]
      %v202 = vld [vmem:[#allocation2 + $0x28] sm:$0xff]
      %v203 = vld [vmem:[#allocation2 + $0x30] sm:$0xff]
      %v204 = vld [vmem:[#allocation2 + $0x38] sm:$0xff]
      %v205 = vld [vmem:[#allocation2 + $0x40] sm:$0xff]
      %v206 = vld [vmem:[#allocation2 + $0x48] sm:$0xff]
      %v207 = vld [vmem:[#allocation2 + $0x50] sm:$0xff]
      %v208 = vld [vmem:[#allocation2 + $0x58] sm:$0xff]
      %v209 = vld [vmem:[#allocation2 + $0x60] sm:$0xff]
      %v210 = vld [vmem:[#allocation2 + $0x68] sm:$0xff]
      %v211 = vld [vmem:[#allocation2 + $0x70] sm:$0xff]
      %v212 = vld [vmem:[#allocation2 + $0x78] sm:$0xff]
      %213 = vxpose.xlu0.b32.start [1/16] %v181, 128
      %214 = vxpose.xlu0.b32.cont [2/16] %v182, 128
      %215 = vxpose.xlu0.b32.cont [3/16] %v183, 128
      %216 = vxpose.xlu0.b32.cont [4/16] %v184, 128
      %217 = vxpose.xlu0.b32.cont [5/16] %v185, 128
      %218 = vxpose.xlu0.b32.cont [6/16] %v186, 128
      %219 = vxpose.xlu0.b32.cont [7/16] %v187, 128
      %220 = vxpose.xlu0.b32.cont [8/16] %v188, 128
      %221 = vxpose.xlu0.b32.cont [9/16] %v189, 128
      %222 = vxpose.xlu0.b32.cont [10/16] %v190, 128
      %223 = vxpose.xlu0.b32.cont [11/16] %v191, 128
      %224 = vxpose.xlu0.b32.cont [12/16] %v192, 128
      %225 = vxpose.xlu0.b32.cont [13/16] %v193, 128
      %226 = vxpose.xlu0.b32.cont [14/16] %v194, 128
      %227 = vxpose.xlu0.b32.cont [15/16] %v195, 128
      %228 = vxpose.xlu0.b32.end [16/16] %v196, 128
      %v229 = vpop.trf.xlu0
      %v230 = vpop.trf.xlu0
      %v231 = vpop.trf.xlu0
      %v232 = vpop.trf.xlu0
      %v233 = vpop.trf.xlu0
      %v234 = vpop.trf.xlu0
      %v235 = vpop.trf.xlu0
      %v236 = vpop.trf.xlu0
      %v237 = vpop.trf.xlu0
      %v238 = vpop.trf.xlu0
      %v239 = vpop.trf.xlu0
      %v240 = vpop.trf.xlu0
      %v241 = vpop.trf.xlu0
      %v242 = vpop.trf.xlu0
      %v243 = vpop.trf.xlu0
      %v244 = vpop.trf.xlu0
      %245 = vmatpush.msra.mxu0 %v196
      %246 = vmatpush.msra.mxu0 %v195
      %247 = vmatpush.msra.mxu0 %v194
      %248 = vmatpush.msra.mxu0 %v193
      %249 = vmatpush.msra.mxu0 %v192
      %250 = vmatpush.msra.mxu0 %v191
      %251 = vmatpush.msra.mxu0 %v190
      %252 = vmatpush.msra.mxu0 %v189
      %253 = vmatpush.msra.mxu0 %v188
      %254 = vmatpush.msra.mxu0 %v187
      %255 = vmatpush.msra.mxu0 %v186
      %256 = vmatpush.msra.mxu0 %v185
      %257 = vmatpush.msra.mxu0 %v184
      %258 = vmatpush.msra.mxu0 %v183
      %259 = vmatpush.msra.mxu0 %v182
      %260 = vmatpush.msra.mxu0 %v181
      %261 = vmatmul.f32.gmra.mxu0 %v229
      %v262 = vpop.f32.mrf.mxu0
      %v263 = vadd.f32 0.0, %v262
      %264 = vmatmul.f32.gmra.mxu0 %v230
      %v265 = vpop.f32.mrf.mxu0
      %v266 = vadd.f32 0.0, %v265
      %267 = vmatmul.f32.gmra.mxu0 %v231
      %v268 = vpop.f32.mrf.mxu0
      %v269 = vadd.f32 0.0, %v268
      %270 = vmatmul.f32.gmra.mxu0 %v232
      %v271 = vpop.f32.mrf.mxu0
      %v272 = vadd.f32 0.0, %v271
      %273 = vmatmul.f32.gmra.mxu0 %v233
      %v274 = vpop.f32.mrf.mxu0
      %v275 = vadd.f32 0.0, %v274
      %276 = vmatmul.f32.gmra.mxu0 %v234
      %v277 = vpop.f32.mrf.mxu0
      %v278 = vadd.f32 0.0, %v277
      %279 = vmatmul.f32.gmra.mxu0 %v235
      %v280 = vpop.f32.mrf.mxu0
      %v281 = vadd.f32 0.0, %v280
      %282 = vmatmul.f32.gmra.mxu0 %v236
      %v283 = vpop.f32.mrf.mxu0
      %v284 = vadd.f32 0.0, %v283
      %285 = vmatmul.f32.gmra.mxu0 %v237
      %v286 = vpop.f32.mrf.mxu0
      %v287 = vadd.f32 0.0, %v286
      %288 = vmatmul.f32.gmra.mxu0 %v238
      %v289 = vpop.f32.mrf.mxu0
      %v290 = vadd.f32 0.0, %v289
      %291 = vmatmul.f32.gmra.mxu0 %v239
      %v292 = vpop.f32.mrf.mxu0
      %v293 = vadd.f32 0.0, %v292
      %294 = vmatmul.f32.gmra.mxu0 %v240
      %v295 = vpop.f32.mrf.mxu0
      %v296 = vadd.f32 0.0, %v295
      %297 = vmatmul.f32.gmra.mxu0 %v241
      %v298 = vpop.f32.mrf.mxu0
      %v299 = vadd.f32 0.0, %v298
      %300 = vmatmul.f32.gmra.mxu0 %v242
      %v301 = vpop.f32.mrf.mxu0
      %v302 = vadd.f32 0.0, %v301
      %303 = vmatmul.f32.gmra.mxu0 %v243
      %v304 = vpop.f32.mrf.mxu0
      %v305 = vadd.f32 0.0, %v304
      %306 = vmatmul.f32.gmra.mxu0 %v244
      %v307 = vpop.f32.mrf.mxu0
      %v308 = vadd.f32 0.0, %v307
      %309 = vdwg.mxu0
      %v310 = vadd.f32 %v197, %v263
      %v311 = vadd.f32 %v198, %v266
      %v312 = vadd.f32 %v199, %v269
      %v313 = vadd.f32 %v200, %v272
      %v314 = vadd.f32 %v201, %v275
      %v315 = vadd.f32 %v202, %v278
      %v316 = vadd.f32 %v203, %v281
      %v317 = vadd.f32 %v204, %v284
      %v318 = vadd.f32 %v205, %v287
      %v319 = vadd.f32 %v206, %v290
      %v320 = vadd.f32 %v207, %v293
      %v321 = vadd.f32 %v208, %v296
      %v322 = vadd.f32 %v209, %v299
      %v323 = vadd.f32 %v210, %v302
      %v324 = vadd.f32 %v211, %v305
      %v325 = vadd.f32 %v212, %v308
      %326 = vst [vmem:[#allocation2] sm:$0xff] %v310
      %327 = vst [vmem:[#allocation2 + $0x8] sm:$0xff] %v311
      %328 = vst [vmem:[#allocation2 + $0x10] sm:$0xff] %v312
      %329 = vst [vmem:[#allocation2 + $0x18] sm:$0xff] %v313
      %330 = vst [vmem:[#allocation2 + $0x20] sm:$0xff] %v314
      %331 = vst [vmem:[#allocation2 + $0x28] sm:$0xff] %v315
      %332 = vst [vmem:[#allocation2 + $0x30] sm:$0xff] %v316
      %333 = vst [vmem:[#allocation2 + $0x38] sm:$0xff] %v317
      %334 = vst [vmem:[#allocation2 + $0x40] sm:$0xff] %v318
      %335 = vst [vmem:[#allocation2 + $0x48] sm:$0xff] %v319
      %336 = vst [vmem:[#allocation2 + $0x50] sm:$0xff] %v320
      %337 = vst [vmem:[#allocation2 + $0x58] sm:$0xff] %v321
      %338 = vst [vmem:[#allocation2 + $0x60] sm:$0xff] %v322
      %339 = vst [vmem:[#allocation2 + $0x68] sm:$0xff] %v323
      %340 = vst [vmem:[#allocation2 + $0x70] sm:$0xff] %v324
      %341 = vst [vmem:[#allocation2 + $0x78] sm:$0xff] %v325
      // Predicated region
      $region29: #{full_generator_forward.39} parent=23 // pred_check
        %p342 = pneg %p145
      $region30: #{full_generator_forward.39} parent=23 // pred_check_branch
        %344 = sbr.rel (%p342) target = $region32
      $region31: #{full_generator_forward.39} parent=23 // pred_region
        %v345 = vld [vmem:[#allocation2] sm:$0xff]
        %v346 = vld [vmem:[#allocation2 + $0x8] sm:$0xff]
        %v347 = vld [vmem:[#allocation2 + $0x10] sm:$0xff]
        %v348 = vld [vmem:[#allocation2 + $0x18] sm:$0xff]
        %v349 = vld [vmem:[#allocation2 + $0x20] sm:$0xff]
        %v350 = vld [vmem:[#allocation2 + $0x28] sm:$0xff]
        %v351 = vld [vmem:[#allocation2 + $0x30] sm:$0xff]
        %v352 = vld [vmem:[#allocation2 + $0x38] sm:$0xff]
        %v353 = vld [vmem:[#allocation2 + $0x40] sm:$0xff]
        %v354 = vld [vmem:[#allocation2 + $0x48] sm:$0xff]
        %v355 = vld [vmem:[#allocation2 + $0x50] sm:$0xff]
        %v356 = vld [vmem:[#allocation2 + $0x58] sm:$0xff]
        %v357 = vld [vmem:[#allocation2 + $0x60] sm:$0xff]
        %v358 = vld [vmem:[#allocation2 + $0x68] sm:$0xff]
        %v359 = vld [vmem:[#allocation2 + $0x70] sm:$0xff]
        %v360 = vld [vmem:[#allocation2 + $0x78] sm:$0xff]
        %361 = vst [vmem:[%s144] sm:$0xff] %v345
        %362 = vst [vmem:[%s144 + $0x8] sm:$0xff] %v346
        %363 = vst [vmem:[%s144 + $0x10] sm:$0xff] %v347
        %364 = vst [vmem:[%s144 + $0x18] sm:$0xff] %v348
        %365 = vst [vmem:[%s144 + $0x20] sm:$0xff] %v349
        %366 = vst [vmem:[%s144 + $0x28] sm:$0xff] %v350
        %367 = vst [vmem:[%s144 + $0x30] sm:$0xff] %v351
        %368 = vst [vmem:[%s144 + $0x38] sm:$0xff] %v352
        %369 = vst [vmem:[%s144 + $0x40] sm:$0xff] %v353
        %370 = vst [vmem:[%s144 + $0x48] sm:$0xff] %v354
        %371 = vst [vmem:[%s144 + $0x50] sm:$0xff] %v355
        %372 = vst [vmem:[%s144 + $0x58] sm:$0xff] %v356
        %373 = vst [vmem:[%s144 + $0x60] sm:$0xff] %v357
        %374 = vst [vmem:[%s144 + $0x68] sm:$0xff] %v358
        %375 = vst [vmem:[%s144 + $0x70] sm:$0xff] %v359
        %376 = vst [vmem:[%s144 + $0x78] sm:$0xff] %v360
      $region32: #{full_generator_forward.39} parent=23 // pred_fallthru
        _
      %p377 = scmp.lt.s32.totalorder %s16, 3
      %s378 = scalar_select %p377, %s16, 3
      %s379 = smul.addr %s378, 16
      %s380 = smul.addr %s379, 8
      %s381 = scalar_lea.vmem %s1, %s380
      // Predicated region
      $region33: #{full_generator_forward.39} parent=23 // pred_check
        %p382 = pneg %p70
      $region34: #{full_generator_forward.39} parent=23 // pred_check_branch
        %384 = sbr.rel (%p382) target = $region36
      $region35: #{full_generator_forward.39} parent=23 // pred_region
        _
      $region36: #{full_generator_forward.39} parent=23 // pred_fallthru
        _
    $region24: #{full_generator_forward.39} parent=5 // pred_fallthru
      _
    %p385 = scmp.le.s32.totalorder 2, %s7
    // Predicated region
    $region37: #{full_generator_forward.39} parent=5 // pred_check
      %p386 = pneg %p385
    $region38: #{full_generator_forward.39} parent=5 // pred_check_branch
      %388 = sbr.rel (%p386) target = $region40
    $region39: #{full_generator_forward.39} parent=5 // pred_region
      %s389 = ssub.s32 %s7, 2
      // Predicated region
      $region41: #{full_generator_forward.39} parent=39 // pred_check
        %p390 = pneg %p76
      $region42: #{full_generator_forward.39} parent=39 // pred_check_branch
        %392 = sbr.rel (%p390) target = $region44
      $region43: #{full_generator_forward.39} parent=39 // pred_region
        %p393 = scmp.lt.s32.totalorder %s18, 3
        %s394 = scalar_select %p393, %s18, 3
        %s395 = smul.addr %s394, 16
        %s396 = smul.addr %s395, 8
        %s397 = scalar_lea.vmem %s1, %s396
      $region44: #{full_generator_forward.39} parent=39 // pred_fallthru
        _
    $region40: #{full_generator_forward.39} parent=5 // pred_fallthru
      _
  $region6: #{full_generator_forward.39} parent=0 // loop_footer
    %s11 = sadd.s32 1, %s7
  $region7: #{full_generator_forward.39} parent=0 // loop_footer_branch
    %6 = sbr.rel target = $region3
  $region8: #{full_generator_forward.39} parent=0 // loop_exit
    _

// kernel: full_generator_forward.27
$region0: #{full_generator_forward.27}
  #allocation0 [shape = 'u32[]', space=smem, size = 0x4, offset = 0x4, fixed_abs, tag = 'smem constant byte address 0x4 - core index']
  #allocation1 [shape = 'u32[72,128]{1,0:T(1,128)}', space=vmem, size = 0x9000, scoped, tag = 'internal scratch']
  %s0 = inlined_call_operand.vmem [shape: f32[4,64,3], index: 0, kind: input, shape index: {}]
  %s1 = inlined_call_operand.vmem [shape: f32[3,128], index: 1, kind: input, shape index: {}]
  %s2 = inlined_call_operand.vmem [shape: bf16[4,64,128], index: 2, kind: output, shape index: {}]
  %s3 = sld [smem:[#allocation0]]
  $region41: #{full_generator_forward.27} parent=0
    _
  %s5 = ssub.s32 1, %s3
  %s6 = scalar_select 0, %s5, %s3
  loop: start=0, step=1, limit=6
  $region2: #{full_generator_forward.27} parent=0 // loop_pre_header
    _
  $region3: #{full_generator_forward.27} parent=0 // loop_header
    %s8 = sphi 0, %s12
    %p9 = scmp.ge.s32.totalorder %s8, 6
    %s15 = sphi 0, %s27
    %s16 = sphi 0, %s23
    %s17 = sphi 0, %s15
    %s18 = sphi 0, %s16
    %s19 = sphi 0, %s17
    %s20 = sphi 0, %s18
    %s32 = sphi 0, %s34
    %s35 = sphi 0, %s32
    %s36 = sphi 0, %s35
    %s52 = sphi 0, %s36
    %s56 = sphi 0, %s56
    %s58 = sphi 0, %s56
    %s59 = sphi 0, %s58
    %s73 = sphi 0, %s59
    %s81 = sphi 0, %s83
    %s84 = sphi 0, %s81
    %s85 = sphi 0, %s84
    %s101 = sphi 0, %s85
  $region4: #{full_generator_forward.27} parent=0 // loop_header_branch
    %11 = sbr.rel (%p9) target = $region8
  $region5: #{full_generator_forward.27} parent=0 // loop_body
    %s13 = ssub.s32 %s8, 1
    %s14 = ssub.s32 %s8, 2
    %s21 = sadd.s32 1, %s16
    %p22 = scmp.ge.s32.totalorder %s21, 1
    %s23 = scalar_select %p22, 0, %s21
    %s24 = sadd.s32 1, %s15
    %s25 = scalar_select %p22, %s24, %s15
    %p26 = scmp.ge.s32.totalorder %s25, 4
    %s27 = scalar_select %p26, 0, %s25
    %s28 = ssub.s32 %s15, %s27
    %s29 = ssub.s32 %s16, %s23
    %s30 = sor.u32 %s28, %s29
    %p31 = scmp.eq.s32.totalorder %s30, 0
    %s33 = sadd.s32 %s32, 1
    %s34 = scalar_select %p31, %s32, %s33
    %p37 = pneg %p31
    %p38 = scmp.eq.s32.totalorder %s8, 3
    %p39 = por %p37, %p38
    %p40 = scmp.ne.s32.totalorder %s32, %s35
    %p41 = scmp.eq.s32.totalorder %s8, 0
    %p42 = por %p40, %p41
    %p43 = scmp.ne.s32.totalorder %s32, %s35
    %p44 = scmp.eq.s32.totalorder %s13, 3
    %p45 = por %p43, %p44
    %p46 = scmp.ne.s32.totalorder %s35, %s36
    %p47 = scmp.eq.s32.totalorder %s13, 0
    %p48 = por %p46, %p47
    %p49 = scmp.ne.s32.totalorder %s35, %s36
    %p50 = scmp.eq.s32.totalorder %s14, 3
    %p51 = por %p49, %p50
    %p53 = scmp.ne.s32.totalorder %s36, %s52
    %p54 = scmp.eq.s32.totalorder %s14, 0
    %p55 = por %p53, %p54
    %s57 = sadd.s32 %s56, 1
    %p60 = scmp.eq.s32.totalorder %s8, 3
    %p61 = scmp.ne.s32.totalorder %s56, %s58
    %p62 = scmp.eq.s32.totalorder %s8, 0
    %p63 = por %p61, %p62
    %p64 = scmp.ne.s32.totalorder %s56, %s58
    %p65 = scmp.eq.s32.totalorder %s13, 3
    %p66 = por %p64, %p65
    %p67 = scmp.ne.s32.totalorder %s58, %s59
    %p68 = scmp.eq.s32.totalorder %s13, 0
    %p69 = por %p67, %p68
    %p70 = scmp.ne.s32.totalorder %s58, %s59
    %p71 = scmp.eq.s32.totalorder %s14, 3
    %p72 = por %p70, %p71
    %p74 = scmp.ne.s32.totalorder %s59, %s73
    %p75 = scmp.eq.s32.totalorder %s14, 0
    %p76 = por %p74, %p75
    %s77 = ssub.s32 %s15, %s27
    %s78 = ssub.s32 %s16, %s23
    %s79 = sor.u32 %s77, %s78
    %p80 = scmp.eq.s32.totalorder %s79, 0
    %s82 = sadd.s32 %s81, 1
    %s83 = scalar_select %p80, %s81, %s82
    %p86 = pneg %p80
    %p87 = scmp.eq.s32.totalorder %s8, 3
    %p88 = por %p86, %p87
    %p89 = scmp.ne.s32.totalorder %s81, %s84
    %p90 = scmp.eq.s32.totalorder %s8, 0
    %p91 = por %p89, %p90
    %p92 = scmp.ne.s32.totalorder %s81, %s84
    %p93 = scmp.eq.s32.totalorder %s13, 3
    %p94 = por %p92, %p93
    %p95 = scmp.ne.s32.totalorder %s84, %s85
    %p96 = scmp.eq.s32.totalorder %s13, 0
    %p97 = por %p95, %p96
    %p98 = scmp.ne.s32.totalorder %s84, %s85
    %p99 = scmp.eq.s32.totalorder %s14, 3
    %p100 = por %p98, %p99
    %p102 = scmp.ne.s32.totalorder %s85, %s101
    %p103 = scmp.eq.s32.totalorder %s14, 0
    %p104 = por %p102, %p103
    %p105 = scmp.le.s32.totalorder 1, %s8
    %p106 = scmp.lt.s32.totalorder %s8, 5
    %p107 = pnand %p105, %p106
    %p108 = pneg %p107
    // Predicated region
    $region9: #{full_generator_forward.27} parent=5 // pred_check
      _
    $region10: #{full_generator_forward.27} parent=5 // pred_check_branch
      %110 = sbr.rel (%p107) target = $region12
    $region11: #{full_generator_forward.27} parent=5 // pred_region
      %s111 = ssub.s32 %s8, 1
      // Predicated region
      $region13: #{full_generator_forward.27} parent=11 // pred_check
        %p112 = pneg %p69
      $region14: #{full_generator_forward.27} parent=11 // pred_check_branch
        %114 = sbr.rel (%p112) target = $region16
      $region15: #{full_generator_forward.27} parent=11 // pred_region
        _
      $region16: #{full_generator_forward.27} parent=11 // pred_fallthru
        _
    $region12: #{full_generator_forward.27} parent=5 // pred_fallthru
      _
    %p115 = scmp.lt.s32.totalorder %s8, 4
    // Predicated region
    $region17: #{full_generator_forward.27} parent=5 // pred_check
      %p116 = pneg %p115
    $region18: #{full_generator_forward.27} parent=5 // pred_check_branch
      %118 = sbr.rel (%p116) target = $region20
    $region19: #{full_generator_forward.27} parent=5 // pred_region
      // Predicated region
      $region21: #{full_generator_forward.27} parent=19 // pred_check
        %p119 = pneg %p42
      $region22: #{full_generator_forward.27} parent=19 // pred_check_branch
        %121 = sbr.rel (%p119) target = $region24
      $region23: #{full_generator_forward.27} parent=19 // pred_region
        %s122 = smul.u32 8, %s16
        %p123 = scmp.lt.s32.totalorder %s15, 3
        %s124 = scalar_select %p123, %s15, 3
        %p125 = scmp.lt.s32.totalorder %s122, 7
        %s126 = scalar_select %p125, %s122, 7
        %s127 = smul.addr %s124, 8
        %s128 = sadd.s32 %s126, %s127
        %s129 = smul.addr %s128, 8
        %s130 = scalar_lea.vmem %s0, %s129
        %s131 = smul.u32 8, %s16
      $region24: #{full_generator_forward.27} parent=19 // pred_fallthru
        _
    $region20: #{full_generator_forward.27} parent=5 // pred_fallthru
      _
    %p132 = scmp.le.s32.totalorder 1, %s8
    %p133 = scmp.lt.s32.totalorder %s8, 5
    %p134 = pnand %p132, %p133
    %p135 = pneg %p134
    // Predicated region
    $region25: #{full_generator_forward.27} parent=5 // pred_check
      _
    $region26: #{full_generator_forward.27} parent=5 // pred_check_branch
      %137 = sbr.rel (%p134) target = $region28
    $region27: #{full_generator_forward.27} parent=5 // pred_region
      %s138 = ssub.s32 %s8, 1
      %s139 = smul.u32 8, %s18
      %p140 = scmp.lt.s32.totalorder %s17, 3
      %s141 = scalar_select %p140, %s17, 3
      %p142 = scmp.lt.s32.totalorder %s139, 7
      %s143 = scalar_select %p142, %s139, 7
      %s144 = smul.addr %s141, 8
      %s145 = sadd.s32 %s143, %s144
      %s146 = smul.addr %s145, 8
      %s147 = scalar_lea.vmem %s0, %s146
      %p148 = pneg %p48
      %p149 = pneg %p45
      %p150 = pneg %p69
      %p151 = pneg %p66
      %p152 = pneg %p97
      %p153 = pneg %p94
      %s154 = smul.u32 8, %s18
      %p155 = scmp.lt.s32.totalorder %s17, 3
      %s156 = scalar_select %p155, %s17, 3
      %p157 = scmp.lt.s32.totalorder %s154, 7
      %s158 = scalar_select %p157, %s154, 7
      %s159 = smul.addr %s156, 8
      %s160 = sadd.s32 %s158, %s159
      %s161 = smul.addr %s160, 4
      %s162 = scalar_lea.vmem %s2, %s161
      %s163 = smul.u32 8, %s18
      %p164 = scmp.lt.s32.totalorder %s17, 3
      %s165 = scalar_select %p164, %s17, 3
      %p166 = scmp.lt.s32.totalorder %s163, 7
      %s167 = scalar_select %p166, %s163, 7
      %s168 = smul.addr %s165, 8
      %s169 = sadd.s32 %s167, %s168
      %s170 = smul.addr %s169, 8
      %s171 = scalar_lea.vmem %s0, %s170
      %s172 = smul.u32 8, %s18
      %s173 = smul.u32 8, %s18
      %p174 = scmp.lt.s32.totalorder %s17, 3
      %s175 = scalar_select %p174, %s17, 3
      %p176 = scmp.lt.s32.totalorder %s173, 7
      %s177 = scalar_select %p176, %s173, 7
      %s178 = smul.addr %s175, 8
      %s179 = sadd.s32 %s177, %s178
      %s180 = smul.addr %s179, 4
      %s181 = scalar_lea.vmem %s2, %s180
      %s182 = smul.u32 8, %s18
      %v183 = vld [vmem:[%s171] sm:$0xff]
      %v184 = vld [vmem:[%s171 + $0x8] sm:$0xff]
      %v185 = vld [vmem:[%s171 + $0x10] sm:$0xff]
      %v186 = vld [vmem:[%s171 + $0x18] sm:$0xff]
      %v187 = vld [vmem:[%s171 + $0x20] sm:$0xff]
      %v188 = vld [vmem:[%s171 + $0x28] sm:$0xff]
      %v189 = vld [vmem:[%s171 + $0x30] sm:$0xff]
      %v190 = vld [vmem:[%s171 + $0x38] sm:$0xff]
      %v191 = vld [vmem:[%s1] sm:$0x7]
      %193 = vset.pattern.permute.xlu0 0
      %194 = vperm.xlu0 %193, %v183
      %v195 = vpop.permute.xlu0 %194
      %198 = vset.pattern.permute.xlu0 0
      %199 = vperm.xlu0 %198, %v184
      %v200 = vpop.permute.xlu0 %199
      %203 = vset.pattern.permute.xlu0 0
      %204 = vperm.xlu0 %203, %v185
      %v205 = vpop.permute.xlu0 %204
      %208 = vset.pattern.permute.xlu0 0
      %209 = vperm.xlu0 %208, %v186
      %v210 = vpop.permute.xlu0 %209
      %213 = vset.pattern.permute.xlu0 0
      %214 = vperm.xlu0 %213, %v187
      %v215 = vpop.permute.xlu0 %214
      %218 = vset.pattern.permute.xlu0 0
      %219 = vperm.xlu0 %218, %v188
      %v220 = vpop.permute.xlu0 %219
      %223 = vset.pattern.permute.xlu0 0
      %224 = vperm.xlu0 %223, %v189
      %v225 = vpop.permute.xlu0 %224
      %228 = vset.pattern.permute.xlu0 0
      %229 = vperm.xlu0 %228, %v190
      %v230 = vpop.permute.xlu0 %229
      %v232 = vperm.slane %v191, 0
      %v233 = vmul.f32 %v195, %v232
      %v234 = vmul.f32 %v200, %v232
      %v235 = vmul.f32 %v205, %v232
      %v236 = vmul.f32 %v210, %v232
      %v237 = vmul.f32 %v215, %v232
      %v238 = vmul.f32 %v220, %v232
      %v239 = vmul.f32 %v225, %v232
      %v240 = vmul.f32 %v230, %v232
      %241 = vset.pattern.permute.xlu0 1
      %242 = vperm.xlu0 %241, %v183
      %v243 = vpop.permute.xlu0 %242
      %245 = vset.pattern.permute.xlu0 1
      %246 = vperm.xlu0 %245, %v184
      %v247 = vpop.permute.xlu0 %246
      %249 = vset.pattern.permute.xlu0 1
      %250 = vperm.xlu0 %249, %v185
      %v251 = vpop.permute.xlu0 %250
      %253 = vset.pattern.permute.xlu0 1
      %254 = vperm.xlu0 %253, %v186
      %v255 = vpop.permute.xlu0 %254
      %257 = vset.pattern.permute.xlu0 1
      %258 = vperm.xlu0 %257, %v187
      %v259 = vpop.permute.xlu0 %258
      %261 = vset.pattern.permute.xlu0 1
      %262 = vperm.xlu0 %261, %v188
      %v263 = vpop.permute.xlu0 %262
      %265 = vset.pattern.permute.xlu0 1
      %266 = vperm.xlu0 %265, %v189
      %v267 = vpop.permute.xlu0 %266
      %269 = vset.pattern.permute.xlu0 1
      %270 = vperm.xlu0 %269, %v190
      %v271 = vpop.permute.xlu0 %270
      %v273 = vperm.slane %v191, 1
      %v274 = vmul.f32 %v243, %v273
      %v275 = vmul.f32 %v247, %v273
      %v276 = vmul.f32 %v251, %v273
      %v277 = vmul.f32 %v255, %v273
      %v278 = vmul.f32 %v259, %v273
      %v279 = vmul.f32 %v263, %v273
      %v280 = vmul.f32 %v267, %v273
      %v281 = vmul.f32 %v271, %v273
      %v282 = vadd.f32 %v233, %v274
      %v283 = vadd.f32 %v234, %v275
      %v284 = vadd.f32 %v235, %v276
      %v285 = vadd.f32 %v236, %v277
      %v286 = vadd.f32 %v237, %v278
      %v287 = vadd.f32 %v238, %v279
      %v288 = vadd.f32 %v239, %v280
      %v289 = vadd.f32 %v240, %v281
      %290 = vset.pattern.permute.xlu0 2
      %291 = vperm.xlu0 %290, %v183
      %v292 = vpop.permute.xlu0 %291
      %294 = vset.pattern.permute.xlu0 2
      %295 = vperm.xlu0 %294, %v184
      %v296 = vpop.permute.xlu0 %295
      %298 = vset.pattern.permute.xlu0 2
      %299 = vperm.xlu0 %298, %v185
      %v300 = vpop.permute.xlu0 %299
      %302 = vset.pattern.permute.xlu0 2
      %303 = vperm.xlu0 %302, %v186
      %v304 = vpop.permute.xlu0 %303
      %306 = vset.pattern.permute.xlu0 2
      %307 = vperm.xlu0 %306, %v187
      %v308 = vpop.permute.xlu0 %307
      %310 = vset.pattern.permute.xlu0 2
      %311 = vperm.xlu0 %310, %v188
      %v312 = vpop.permute.xlu0 %311
      %314 = vset.pattern.permute.xlu0 2
      %315 = vperm.xlu0 %314, %v189
      %v316 = vpop.permute.xlu0 %315
      %318 = vset.pattern.permute.xlu0 2
      %319 = vperm.xlu0 %318, %v190
      %v320 = vpop.permute.xlu0 %319
      %v322 = vperm.slane %v191, 2
      %v323 = vmul.f32 %v292, %v322
      %v324 = vmul.f32 %v296, %v322
      %v325 = vmul.f32 %v300, %v322
      %v326 = vmul.f32 %v304, %v322
      %v327 = vmul.f32 %v308, %v322
      %v328 = vmul.f32 %v312, %v322
      %v329 = vmul.f32 %v316, %v322
      %v330 = vmul.f32 %v320, %v322
      %v331 = vadd.f32 %v282, %v323
      %v332 = vadd.f32 %v283, %v324
      %v333 = vadd.f32 %v284, %v325
      %v334 = vadd.f32 %v285, %v326
      %v335 = vadd.f32 %v286, %v327
      %v336 = vadd.f32 %v287, %v328
      %v337 = vadd.f32 %v288, %v329
      %v338 = vadd.f32 %v289, %v330
      %v339 = vmax.f32 %v331, 0.0
      %v340 = vmax.f32 %v332, 0.0
      %v341 = vmax.f32 %v333, 0.0
      %v342 = vmax.f32 %v334, 0.0
      %v343 = vmax.f32 %v335, 0.0
      %v344 = vmax.f32 %v336, 0.0
      %v345 = vmax.f32 %v337, 0.0
      %v346 = vmax.f32 %v338, 0.0
      %v347 = vpack.c.bf16 %v339, %v339
      %v348 = vpack.c.bf16 %v340, %v340
      %v349 = vpack.c.bf16 %v341, %v341
      %v350 = vpack.c.bf16 %v342, %v342
      %v351 = vpack.c.bf16 %v343, %v343
      %v352 = vpack.c.bf16 %v344, %v344
      %v353 = vpack.c.bf16 %v345, %v345
      %v354 = vpack.c.bf16 %v346, %v346
      %355 = vst [vmem:[%s181] sm:$0xf] %v347
      %356 = vst [vmem:[%s181 + $0x4] sm:$0xf] %v348
      %357 = vst [vmem:[%s181 + $0x8] sm:$0xf] %v349
      %358 = vst [vmem:[%s181 + $0xc] sm:$0xf] %v350
      %359 = vst [vmem:[%s181 + $0x10] sm:$0xf] %v351
      %360 = vst [vmem:[%s181 + $0x14] sm:$0xf] %v352
      %361 = vst [vmem:[%s181 + $0x18] sm:$0xf] %v353
      %362 = vst [vmem:[%s181 + $0x1c] sm:$0xf] %v354
      %s363 = smul.u32 8, %s18
      %p364 = scmp.lt.s32.totalorder %s17, 3
      %s365 = scalar_select %p364, %s17, 3
      %p366 = scmp.lt.s32.totalorder %s363, 7
      %s367 = scalar_select %p366, %s363, 7
      %s368 = smul.addr %s365, 8
      %s369 = sadd.s32 %s367, %s368
      %s370 = smul.addr %s369, 4
      %s371 = scalar_lea.vmem %s2, %s370
      // Predicated region
      $region29: #{full_generator_forward.27} parent=27 // pred_check
        %p372 = pneg %p94
      $region30: #{full_generator_forward.27} parent=27 // pred_check_branch
        %374 = sbr.rel (%p372) target = $region32
      $region31: #{full_generator_forward.27} parent=27 // pred_region
        %s375 = smul.u32 8, %s18
      $region32: #{full_generator_forward.27} parent=27 // pred_fallthru
        _
    $region28: #{full_generator_forward.27} parent=5 // pred_fallthru
      _
    %p376 = scmp.le.s32.totalorder 2, %s8
    // Predicated region
    $region33: #{full_generator_forward.27} parent=5 // pred_check
      %p377 = pneg %p376
    $region34: #{full_generator_forward.27} parent=5 // pred_check_branch
      %379 = sbr.rel (%p377) target = $region36
    $region35: #{full_generator_forward.27} parent=5 // pred_region
      %s380 = ssub.s32 %s8, 2
      // Predicated region
      $region37: #{full_generator_forward.27} parent=35 // pred_check
        %p381 = pneg %p100
      $region38: #{full_generator_forward.27} parent=35 // pred_check_branch
        %383 = sbr.rel (%p381) target = $region40
      $region39: #{full_generator_forward.27} parent=35 // pred_region
        %s384 = smul.u32 8, %s20
        %p385 = scmp.lt.s32.totalorder %s19, 3
        %s386 = scalar_select %p385, %s19, 3
        %p387 = scmp.lt.s32.totalorder %s384, 7
        %s388 = scalar_select %p387, %s384, 7
        %s389 = smul.addr %s386, 8
        %s390 = sadd.s32 %s388, %s389
        %s391 = smul.addr %s390, 4
        %s392 = scalar_lea.vmem %s2, %s391
      $region40: #{full_generator_forward.27} parent=35 // pred_fallthru
        _
    $region36: #{full_generator_forward.27} parent=5 // pred_fallthru
      _
  $region6: #{full_generator_forward.27} parent=0 // loop_footer
    %s12 = sadd.s32 1, %s8
  $region7: #{full_generator_forward.27} parent=0 // loop_footer_branch
    %7 = sbr.rel target = $region3
  $region8: #{full_generator_forward.27} parent=0 // loop_exit
    _

// kernel: full_generator_forward.31
$region0: #{full_generator_forward.31}
  #allocation0 [shape = 'u32[]', space=smem, size = 0x4, offset = 0x4, fixed_abs, tag = 'smem constant byte address 0x4 - core index']
  #allocation1 [shape = 'u32[72,128]{1,0:T(1,128)}', space=vmem, size = 0x9000, scoped, tag = 'internal scratch']
  %s0 = inlined_call_operand.vmem [shape: f32[2,256,3], index: 0, kind: input, shape index: {}]
  %s1 = inlined_call_operand.vmem [shape: f32[2,256,3], index: 1, kind: input, shape index: {}]
  %s2 = inlined_call_operand.vmem [shape: f32[3,128], index: 2, kind: input, shape index: {}]
  %s3 = inlined_call_operand.vmem [shape: bf16[128,128], index: 3, kind: input, shape index: {}]
  %s4 = inlined_call_operand.vmem [shape: bf16[128,128], index: 4, kind: input, shape index: {}]
  %s5 = inlined_call_operand.vmem [shape: f32[2,1,8,128], index: 5, kind: output, shape index: {}]
  %s6 = sld [smem:[#allocation0]]
  $region53: #{full_generator_forward.31} parent=0
    _
  %s8 = ssub.s32 1, %s6
  %s9 = scalar_select 0, %s8, %s6
  loop: start=0, step=1, limit=4
  $region2: #{full_generator_forward.31} parent=0 // loop_pre_header
    _
  $region3: #{full_generator_forward.31} parent=0 // loop_header
    %s11 = sphi 0, %s15
    %p12 = scmp.ge.s32.totalorder %s11, 4
    %s18 = sphi 0, %s30
    %s19 = sphi 0, %s26
    %s20 = sphi 0, %s18
    %s21 = sphi 0, %s19
    %s22 = sphi 0, %s20
    %s23 = sphi 0, %s21
    %s35 = sphi 0, %s37
    %s38 = sphi 0, %s35
    %s39 = sphi 0, %s38
    %s55 = sphi 0, %s39
    %s63 = sphi 0, %s65
    %s66 = sphi 0, %s63
    %s67 = sphi 0, %s66
    %s83 = sphi 0, %s67
    %s87 = sphi 0, %s87
    %s89 = sphi 0, %s87
    %s90 = sphi 0, %s89
    %s104 = sphi 0, %s90
    %s108 = sphi 0, %s108
    %s110 = sphi 0, %s108
    %s111 = sphi 0, %s110
    %s125 = sphi 0, %s111
    %s129 = sphi 0, %s129
    %s131 = sphi 0, %s129
    %s132 = sphi 0, %s131
    %s146 = sphi 0, %s132
    %s154 = sphi 0, %s156
    %s157 = sphi 0, %s154
    %s158 = sphi 0, %s157
    %s174 = sphi 0, %s158
  $region4: #{full_generator_forward.31} parent=0 // loop_header_branch
    %14 = sbr.rel (%p12) target = $region8
  $region5: #{full_generator_forward.31} parent=0 // loop_body
    %s16 = ssub.s32 %s11, 1
    %s17 = ssub.s32 %s11, 2
    %s24 = sadd.s32 1, %s19
    %p25 = scmp.ge.s32.totalorder %s24, 1
    %s26 = scalar_select %p25, 0, %s24
    %s27 = sadd.s32 1, %s18
    %s28 = scalar_select %p25, %s27, %s18
    %p29 = scmp.ge.s32.totalorder %s28, 2
    %s30 = scalar_select %p29, 0, %s28
    %s31 = ssub.s32 %s18, %s30
    %s32 = ssub.s32 %s19, %s26
    %s33 = sor.u32 %s31, %s32
    %p34 = scmp.eq.s32.totalorder %s33, 0
    %s36 = sadd.s32 %s35, 1
    %s37 = scalar_select %p34, %s35, %s36
    %p40 = pneg %p34
    %p41 = scmp.eq.s32.totalorder %s11, 1
    %p42 = por %p40, %p41
    %p43 = scmp.ne.s32.totalorder %s35, %s38
    %p44 = scmp.eq.s32.totalorder %s11, 0
    %p45 = por %p43, %p44
    %p46 = scmp.ne.s32.totalorder %s35, %s38
    %p47 = scmp.eq.s32.totalorder %s16, 1
    %p48 = por %p46, %p47
    %p49 = scmp.ne.s32.totalorder %s38, %s39
    %p50 = scmp.eq.s32.totalorder %s16, 0
    %p51 = por %p49, %p50
    %p52 = scmp.ne.s32.totalorder %s38, %s39
    %p53 = scmp.eq.s32.totalorder %s17, 1
    %p54 = por %p52, %p53
    %p56 = scmp.ne.s32.totalorder %s39, %s55
    %p57 = scmp.eq.s32.totalorder %s17, 0
    %p58 = por %p56, %p57
    %s59 = ssub.s32 %s18, %s30
    %s60 = ssub.s32 %s19, %s26
    %s61 = sor.u32 %s59, %s60
    %p62 = scmp.eq.s32.totalorder %s61, 0
    %s64 = sadd.s32 %s63, 1
    %s65 = scalar_select %p62, %s63, %s64
    %p68 = pneg %p62
    %p69 = scmp.eq.s32.totalorder %s11, 1
    %p70 = por %p68, %p69
    %p71 = scmp.ne.s32.totalorder %s63, %s66
    %p72 = scmp.eq.s32.totalorder %s11, 0
    %p73 = por %p71, %p72
    %p74 = scmp.ne.s32.totalorder %s63, %s66
    %p75 = scmp.eq.s32.totalorder %s16, 1
    %p76 = por %p74, %p75
    %p77 = scmp.ne.s32.totalorder %s66, %s67
    %p78 = scmp.eq.s32.totalorder %s16, 0
    %p79 = por %p77, %p78
    %p80 = scmp.ne.s32.totalorder %s66, %s67
    %p81 = scmp.eq.s32.totalorder %s17, 1
    %p82 = por %p80, %p81
    %p84 = scmp.ne.s32.totalorder %s67, %s83
    %p85 = scmp.eq.s32.totalorder %s17, 0
    %p86 = por %p84, %p85
    %s88 = sadd.s32 %s87, 1
    %p91 = scmp.eq.s32.totalorder %s11, 1
    %p92 = scmp.ne.s32.totalorder %s87, %s89
    %p93 = scmp.eq.s32.totalorder %s11, 0
    %p94 = por %p92, %p93
    %p95 = scmp.ne.s32.totalorder %s87, %s89
    %p96 = scmp.eq.s32.totalorder %s16, 1
    %p97 = por %p95, %p96
    %p98 = scmp.ne.s32.totalorder %s89, %s90
    %p99 = scmp.eq.s32.totalorder %s16, 0
    %p100 = por %p98, %p99
    %p101 = scmp.ne.s32.totalorder %s89, %s90
    %p102 = scmp.eq.s32.totalorder %s17, 1
    %p103 = por %p101, %p102
    %p105 = scmp.ne.s32.totalorder %s90, %s104
    %p106 = scmp.eq.s32.totalorder %s17, 0
    %p107 = por %p105, %p106
    %s109 = sadd.s32 %s108, 1
    %p112 = scmp.eq.s32.totalorder %s11, 1
    %p113 = scmp.ne.s32.totalorder %s108, %s110
    %p114 = scmp.eq.s32.totalorder %s11, 0
    %p115 = por %p113, %p114
    %p116 = scmp.ne.s32.totalorder %s108, %s110
    %p117 = scmp.eq.s32.totalorder %s16, 1
    %p118 = por %p116, %p117
    %p119 = scmp.ne.s32.totalorder %s110, %s111
    %p120 = scmp.eq.s32.totalorder %s16, 0
    %p121 = por %p119, %p120
    %p122 = scmp.ne.s32.totalorder %s110, %s111
    %p123 = scmp.eq.s32.totalorder %s17, 1
    %p124 = por %p122, %p123
    %p126 = scmp.ne.s32.totalorder %s111, %s125
    %p127 = scmp.eq.s32.totalorder %s17, 0
    %p128 = por %p126, %p127
    %s130 = sadd.s32 %s129, 1
    %p133 = scmp.eq.s32.totalorder %s11, 1
    %p134 = scmp.ne.s32.totalorder %s129, %s131
    %p135 = scmp.eq.s32.totalorder %s11, 0
    %p136 = por %p134, %p135
    %p137 = scmp.ne.s32.totalorder %s129, %s131
    %p138 = scmp.eq.s32.totalorder %s16, 1
    %p139 = por %p137, %p138
    %p140 = scmp.ne.s32.totalorder %s131, %s132
    %p141 = scmp.eq.s32.totalorder %s16, 0
    %p142 = por %p140, %p141
    %p143 = scmp.ne.s32.totalorder %s131, %s132
    %p144 = scmp.eq.s32.totalorder %s17, 1
    %p145 = por %p143, %p144
    %p147 = scmp.ne.s32.totalorder %s132, %s146
    %p148 = scmp.eq.s32.totalorder %s17, 0
    %p149 = por %p147, %p148
    %s150 = ssub.s32 %s18, %s30
    %s151 = ssub.s32 %s19, %s26
    %s152 = sor.u32 %s150, %s151
    %p153 = scmp.eq.s32.totalorder %s152, 0
    %s155 = sadd.s32 %s154, 1
    %s156 = scalar_select %p153, %s154, %s155
    %p159 = pneg %p153
    %p160 = scmp.eq.s32.totalorder %s11, 1
    %p161 = por %p159, %p160
    %p162 = scmp.ne.s32.totalorder %s154, %s157
    %p163 = scmp.eq.s32.totalorder %s11, 0
    %p164 = por %p162, %p163
    %p165 = scmp.ne.s32.totalorder %s154, %s157
    %p166 = scmp.eq.s32.totalorder %s16, 1
    %p167 = por %p165, %p166
    %p168 = scmp.ne.s32.totalorder %s157, %s158
    %p169 = scmp.eq.s32.totalorder %s16, 0
    %p170 = por %p168, %p169
    %p171 = scmp.ne.s32.totalorder %s157, %s158
    %p172 = scmp.eq.s32.totalorder %s17, 1
    %p173 = por %p171, %p172
    %p175 = scmp.ne.s32.totalorder %s158, %s174
    %p176 = scmp.eq.s32.totalorder %s17, 0
    %p177 = por %p175, %p176
    %p178 = scmp.le.s32.totalorder 1, %s11
    %p179 = scmp.lt.s32.totalorder %s11, 3
    %p180 = pnand %p178, %p179
    %p181 = pneg %p180
    // Predicated region
    $region9: #{full_generator_forward.31} parent=5 // pred_check
      _
    $region10: #{full_generator_forward.31} parent=5 // pred_check_branch
      %183 = sbr.rel (%p180) target = $region12
    $region11: #{full_generator_forward.31} parent=5 // pred_region
      %s184 = ssub.s32 %s11, 1
      // Predicated region
      $region13: #{full_generator_forward.31} parent=11 // pred_check
        %p185 = pneg %p100
      $region14: #{full_generator_forward.31} parent=11 // pred_check_branch
        %187 = sbr.rel (%p185) target = $region16
      $region15: #{full_generator_forward.31} parent=11 // pred_region
        _
      $region16: #{full_generator_forward.31} parent=11 // pred_fallthru
        _
      // Predicated region
      $region17: #{full_generator_forward.31} parent=11 // pred_check
        %p188 = pneg %p121
      $region18: #{full_generator_forward.31} parent=11 // pred_check_branch
        %190 = sbr.rel (%p188) target = $region20
      $region19: #{full_generator_forward.31} parent=11 // pred_region
        _
      $region20: #{full_generator_forward.31} parent=11 // pred_fallthru
        _
      // Predicated region
      $region21: #{full_generator_forward.31} parent=11 // pred_check
        %p191 = pneg %p142
      $region22: #{full_generator_forward.31} parent=11 // pred_check_branch
        %193 = sbr.rel (%p191) target = $region24
      $region23: #{full_generator_forward.31} parent=11 // pred_region
        _
      $region24: #{full_generator_forward.31} parent=11 // pred_fallthru
        _
    $region12: #{full_generator_forward.31} parent=5 // pred_fallthru
      _
    %p194 = scmp.lt.s32.totalorder %s11, 2
    // Predicated region
    $region25: #{full_generator_forward.31} parent=5 // pred_check
      %p195 = pneg %p194
    $region26: #{full_generator_forward.31} parent=5 // pred_check_branch
      %197 = sbr.rel (%p195) target = $region28
    $region27: #{full_generator_forward.31} parent=5 // pred_region
      // Predicated region
      $region29: #{full_generator_forward.31} parent=27 // pred_check
        %p198 = pneg %p45
      $region30: #{full_generator_forward.31} parent=27 // pred_check_branch
        %200 = sbr.rel (%p198) target = $region32
      $region31: #{full_generator_forward.31} parent=27 // pred_region
        %s201 = smul.u32 32, %s19
        %p202 = scmp.lt.s32.totalorder %s18, 1
        %s203 = scalar_select %p202, %s18, 1
        %p204 = scmp.lt.s32.totalorder %s201, 31
        %s205 = scalar_select %p204, %s201, 31
        %s206 = smul.addr %s203, 32
        %s207 = sadd.s32 %s205, %s206
        %s208 = smul.addr %s207, 8
        %s209 = scalar_lea.vmem %s0, %s208
        %s210 = smul.u32 32, %s19
      $region32: #{full_generator_forward.31} parent=27 // pred_fallthru
        _
      // Predicated region
      $region33: #{full_generator_forward.31} parent=27 // pred_check
        %p211 = pneg %p73
      $region34: #{full_generator_forward.31} parent=27 // pred_check_branch
        %213 = sbr.rel (%p211) target = $region36
      $region35: #{full_generator_forward.31} parent=27 // pred_region
        %s214 = smul.u32 32, %s19
        %p215 = scmp.lt.s32.totalorder %s18, 1
        %s216 = scalar_select %p215, %s18, 1
        %p217 = scmp.lt.s32.totalorder %s214, 31
        %s218 = scalar_select %p217, %s214, 31
        %s219 = smul.addr %s216, 32
        %s220 = sadd.s32 %s218, %s219
        %s221 = smul.addr %s220, 8
        %s222 = scalar_lea.vmem %s1, %s221
        %s223 = smul.u32 32, %s19
      $region36: #{full_generator_forward.31} parent=27 // pred_fallthru
        _
    $region28: #{full_generator_forward.31} parent=5 // pred_fallthru
      _
    %p224 = scmp.le.s32.totalorder 1, %s11
    %p225 = scmp.lt.s32.totalorder %s11, 3
    %p226 = pnand %p224, %p225
    %p227 = pneg %p226
    // Predicated region
    $region37: #{full_generator_forward.31} parent=5 // pred_check
      _
    $region38: #{full_generator_forward.31} parent=5 // pred_check_branch
      %229 = sbr.rel (%p226) target = $region40
    $region39: #{full_generator_forward.31} parent=5 // pred_region
      %s230 = ssub.s32 %s11, 1
      %s231 = smul.u32 32, %s21
      %p232 = scmp.lt.s32.totalorder %s20, 1
      %s233 = scalar_select %p232, %s20, 1
      %p234 = scmp.lt.s32.totalorder %s231, 31
      %s235 = scalar_select %p234, %s231, 31
      %s236 = smul.addr %s233, 32
      %s237 = sadd.s32 %s235, %s236
      %s238 = smul.addr %s237, 8
      %s239 = scalar_lea.vmem %s0, %s238
      %p240 = pneg %p51
      %p241 = pneg %p48
      %s242 = smul.u32 32, %s21
      %p243 = scmp.lt.s32.totalorder %s20, 1
      %s244 = scalar_select %p243, %s20, 1
      %p245 = scmp.lt.s32.totalorder %s242, 31
      %s246 = scalar_select %p245, %s242, 31
      %s247 = smul.addr %s244, 32
      %s248 = sadd.s32 %s246, %s247
      %s249 = smul.addr %s248, 8
      %s250 = scalar_lea.vmem %s1, %s249
      %p251 = pneg %p79
      %p252 = pneg %p76
      %p253 = pneg %p100
      %p254 = pneg %p97
      %p255 = pneg %p121
      %p256 = pneg %p118
      %p257 = pneg %p142
      %p258 = pneg %p139
      %p259 = pneg %p170
      %p260 = pneg %p167
      %p261 = scmp.lt.s32.totalorder %s20, 1
      %s262 = scalar_select %p261, %s20, 1
      %p263 = scmp.lt.s32.totalorder %s21, 0
      %s264 = scalar_select %p263, %s21, 0
      %s265 = sadd.s32 %s264, %s262
      %s266 = smul.addr %s265, 8
      %s267 = scalar_lea.vmem %s5, %s266
      %s268 = smul.u32 32, %s21
      %p269 = scmp.lt.s32.totalorder %s20, 1
      %s270 = scalar_select %p269, %s20, 1
      %p271 = scmp.lt.s32.totalorder %s268, 31
      %s272 = scalar_select %p271, %s268, 31
      %s273 = smul.addr %s270, 32
      %s274 = sadd.s32 %s272, %s273
      %s275 = smul.addr %s274, 8
      %s276 = scalar_lea.vmem %s0, %s275
      %s277 = smul.u32 32, %s21
      %s278 = smul.u32 32, %s21
      %p279 = scmp.lt.s32.totalorder %s20, 1
      %s280 = scalar_select %p279, %s20, 1
      %p281 = scmp.lt.s32.totalorder %s278, 31
      %s282 = scalar_select %p281, %s278, 31
      %s283 = smul.addr %s280, 32
      %s284 = sadd.s32 %s282, %s283
      %s285 = smul.addr %s284, 8
      %s286 = scalar_lea.vmem %s1, %s285
      %s287 = smul.u32 32, %s21
      %p288 = scmp.lt.s32.totalorder %s20, 1
      %s289 = scalar_select %p288, %s20, 1
      %p290 = scmp.lt.s32.totalorder %s21, 0
      %s291 = scalar_select %p290, %s21, 0
      %s292 = sadd.s32 %s291, %s289
      %s293 = smul.addr %s292, 8
      %s294 = scalar_lea.vmem %s5, %s293
      %v295 = vld [vmem:[%s2] sm:$0x7]
      %v296 = vld [vmem:[%s3] sm:$0xf]
      %v297 = vld [vmem:[%s3 + $0x4] sm:$0xf]
      %v298 = vld [vmem:[%s3 + $0x8] sm:$0xf]
      %v299 = vld [vmem:[%s3 + $0xc] sm:$0xf]
      %v300 = vld [vmem:[%s3 + $0x10] sm:$0xf]
      %v301 = vld [vmem:[%s3 + $0x14] sm:$0xf]
      %v302 = vld [vmem:[%s3 + $0x18] sm:$0xf]
      %v303 = vld [vmem:[%s3 + $0x1c] sm:$0xf]
      %v304 = vld [vmem:[%s3 + $0x20] sm:$0xf]
      %v305 = vld [vmem:[%s3 + $0x24] sm:$0xf]
      %v306 = vld [vmem:[%s3 + $0x28] sm:$0xf]
      %v307 = vld [vmem:[%s3 + $0x2c] sm:$0xf]
      %v308 = vld [vmem:[%s3 + $0x30] sm:$0xf]
      %v309 = vld [vmem:[%s3 + $0x34] sm:$0xf]
      %v310 = vld [vmem:[%s3 + $0x38] sm:$0xf]
      %v311 = vld [vmem:[%s3 + $0x3c] sm:$0xf]
      %v312 = vld [vmem:[%s4] sm:$0xf]
      %v313 = vld [vmem:[%s4 + $0x4] sm:$0xf]
      %v314 = vld [vmem:[%s4 + $0x8] sm:$0xf]
      %v315 = vld [vmem:[%s4 + $0xc] sm:$0xf]
      %v316 = vld [vmem:[%s4 + $0x10] sm:$0xf]
      %v317 = vld [vmem:[%s4 + $0x14] sm:$0xf]
      %v318 = vld [vmem:[%s4 + $0x18] sm:$0xf]
      %v319 = vld [vmem:[%s4 + $0x1c] sm:$0xf]
      %v320 = vld [vmem:[%s4 + $0x20] sm:$0xf]
      %v321 = vld [vmem:[%s4 + $0x24] sm:$0xf]
      %v322 = vld [vmem:[%s4 + $0x28] sm:$0xf]
      %v323 = vld [vmem:[%s4 + $0x2c] sm:$0xf]
      %v324 = vld [vmem:[%s4 + $0x30] sm:$0xf]
      %v325 = vld [vmem:[%s4 + $0x34] sm:$0xf]
      %v326 = vld [vmem:[%s4 + $0x38] sm:$0xf]
      %v327 = vld [vmem:[%s4 + $0x3c] sm:$0xf]
      %v328 = vld [vmem:[%s276] sm:$0xff]
      %v329 = vld [vmem:[%s276 + $0x8] sm:$0xff]
      %v330 = vld [vmem:[%s276 + $0x10] sm:$0xff]
      %v331 = vld [vmem:[%s276 + $0x18] sm:$0xff]
      %v332 = vld [vmem:[%s276 + $0x20] sm:$0xff]
      %v333 = vld [vmem:[%s276 + $0x28] sm:$0xff]
      %v334 = vld [vmem:[%s276 + $0x30] sm:$0xff]
      %v335 = vld [vmem:[%s276 + $0x38] sm:$0xff]
      %v336 = vld [vmem:[%s276 + $0x40] sm:$0xff]
      %v337 = vld [vmem:[%s276 + $0x48] sm:$0xff]
      %v338 = vld [vmem:[%s276 + $0x50] sm:$0xff]
      %v339 = vld [vmem:[%s276 + $0x58] sm:$0xff]
      %v340 = vld [vmem:[%s276 + $0x60] sm:$0xff]
      %v341 = vld [vmem:[%s276 + $0x68] sm:$0xff]
      %v342 = vld [vmem:[%s276 + $0x70] sm:$0xff]
      %v343 = vld [vmem:[%s276 + $0x78] sm:$0xff]
      %v344 = vld [vmem:[%s276 + $0x80] sm:$0xff]
      %v345 = vld [vmem:[%s276 + $0x88] sm:$0xff]
      %v346 = vld [vmem:[%s276 + $0x90] sm:$0xff]
      %v347 = vld [vmem:[%s276 + $0x98] sm:$0xff]
      %v348 = vld [vmem:[%s276 + $0xa0] sm:$0xff]
      %v349 = vld [vmem:[%s276 + $0xa8] sm:$0xff]
      %v350 = vld [vmem:[%s276 + $0xb0] sm:$0xff]
      %v351 = vld [vmem:[%s276 + $0xb8] sm:$0xff]
      %v352 = vld [vmem:[%s276 + $0xc0] sm:$0xff]
      %v353 = vld [vmem:[%s276 + $0xc8] sm:$0xff]
      %v354 = vld [vmem:[%s276 + $0xd0] sm:$0xff]
      %v355 = vld [vmem:[%s276 + $0xd8] sm:$0xff]
      %v356 = vld [vmem:[%s276 + $0xe0] sm:$0xff]
      %v357 = vld [vmem:[%s276 + $0xe8] sm:$0xff]
      %v358 = vld [vmem:[%s276 + $0xf0] sm:$0xff]
      %v359 = vld [vmem:[%s276 + $0xf8] sm:$0xff]
      %361 = vset.pattern.permute.xlu0 0
      %362 = vperm.xlu0 %361, %v328
      %v363 = vpop.permute.xlu0 %362
      %366 = vset.pattern.permute.xlu0 0
      %367 = vperm.xlu0 %366, %v329
      %v368 = vpop.permute.xlu0 %367
      %371 = vset.pattern.permute.xlu0 0
      %372 = vperm.xlu0 %371, %v330
      %v373 = vpop.permute.xlu0 %372
      %376 = vset.pattern.permute.xlu0 0
      %377 = vperm.xlu0 %376, %v331
      %v378 = vpop.permute.xlu0 %377
      %381 = vset.pattern.permute.xlu0 0
      %382 = vperm.xlu0 %381, %v332
      %v383 = vpop.permute.xlu0 %382
      %386 = vset.pattern.permute.xlu0 0
      %387 = vperm.xlu0 %386, %v333
      %v388 = vpop.permute.xlu0 %387
      %391 = vset.pattern.permute.xlu0 0
      %392 = vperm.xlu0 %391, %v334
      %v393 = vpop.permute.xlu0 %392
      %396 = vset.pattern.permute.xlu0 0
      %397 = vperm.xlu0 %396, %v335
      %v398 = vpop.permute.xlu0 %397
      %401 = vset.pattern.permute.xlu0 0
      %402 = vperm.xlu0 %401, %v336
      %v403 = vpop.permute.xlu0 %402
      %406 = vset.pattern.permute.xlu0 0
      %407 = vperm.xlu0 %406, %v337
      %v408 = vpop.permute.xlu0 %407
      %411 = vset.pattern.permute.xlu0 0
      %412 = vperm.xlu0 %411, %v338
      %v413 = vpop.permute.xlu0 %412
      %416 = vset.pattern.permute.xlu0 0
      %417 = vperm.xlu0 %416, %v339
      %v418 = vpop.permute.xlu0 %417
      %421 = vset.pattern.permute.xlu0 0
      %422 = vperm.xlu0 %421, %v340
      %v423 = vpop.permute.xlu0 %422
      %426 = vset.pattern.permute.xlu0 0
      %427 = vperm.xlu0 %426, %v341
      %v428 = vpop.permute.xlu0 %427
      %431 = vset.pattern.permute.xlu0 0
      %432 = vperm.xlu0 %431, %v342
      %v433 = vpop.permute.xlu0 %432
      %436 = vset.pattern.permute.xlu0 0
      %437 = vperm.xlu0 %436, %v343
      %v438 = vpop.permute.xlu0 %437
      %441 = vset.pattern.permute.xlu0 0
      %442 = vperm.xlu0 %441, %v344
      %v443 = vpop.permute.xlu0 %442
      %446 = vset.pattern.permute.xlu0 0
      %447 = vperm.xlu0 %446, %v345
      %v448 = vpop.permute.xlu0 %447
      %451 = vset.pattern.permute.xlu0 0
      %452 = vperm.xlu0 %451, %v346
      %v453 = vpop.permute.xlu0 %452
      %456 = vset.pattern.permute.xlu0 0
      %457 = vperm.xlu0 %456, %v347
      %v458 = vpop.permute.xlu0 %457
      %461 = vset.pattern.permute.xlu0 0
      %462 = vperm.xlu0 %461, %v348
      %v463 = vpop.permute.xlu0 %462
      %466 = vset.pattern.permute.xlu0 0
      %467 = vperm.xlu0 %466, %v349
      %v468 = vpop.permute.xlu0 %467
      %471 = vset.pattern.permute.xlu0 0
      %472 = vperm.xlu0 %471, %v350
      %v473 = vpop.permute.xlu0 %472
      %476 = vset.pattern.permute.xlu0 0
      %477 = vperm.xlu0 %476, %v351
      %v478 = vpop.permute.xlu0 %477
      %481 = vset.pattern.permute.xlu0 0
      %482 = vperm.xlu0 %481, %v352
      %v483 = vpop.permute.xlu0 %482
      %486 = vset.pattern.permute.xlu0 0
      %487 = vperm.xlu0 %486, %v353
      %v488 = vpop.permute.xlu0 %487
      %491 = vset.pattern.permute.xlu0 0
      %492 = vperm.xlu0 %491, %v354
      %v493 = vpop.permute.xlu0 %492
      %496 = vset.pattern.permute.xlu0 0
      %497 = vperm.xlu0 %496, %v355
      %v498 = vpop.permute.xlu0 %497
      %501 = vset.pattern.permute.xlu0 0
      %502 = vperm.xlu0 %501, %v356
      %v503 = vpop.permute.xlu0 %502
      %506 = vset.pattern.permute.xlu0 0
      %507 = vperm.xlu0 %506, %v357
      %v508 = vpop.permute.xlu0 %507
      %511 = vset.pattern.permute.xlu0 0
      %512 = vperm.xlu0 %511, %v358
      %v513 = vpop.permute.xlu0 %512
      %516 = vset.pattern.permute.xlu0 0
      %517 = vperm.xlu0 %516, %v359
      %v518 = vpop.permute.xlu0 %517
      %v520 = vperm.slane %v295, 0
      %v521 = vmul.f32 %v363, %v520
      %v522 = vmul.f32 %v368, %v520
      %v523 = vmul.f32 %v373, %v520
      %v524 = vmul.f32 %v378, %v520
      %v525 = vmul.f32 %v383, %v520
      %v526 = vmul.f32 %v388, %v520
      %v527 = vmul.f32 %v393, %v520
      %v528 = vmul.f32 %v398, %v520
      %v529 = vmul.f32 %v403, %v520
      %v530 = vmul.f32 %v408, %v520
      %v531 = vmul.f32 %v413, %v520
      %v532 = vmul.f32 %v418, %v520
      %v533 = vmul.f32 %v423, %v520
      %v534 = vmul.f32 %v428, %v520
      %v535 = vmul.f32 %v433, %v520
      %v536 = vmul.f32 %v438, %v520
      %v537 = vmul.f32 %v443, %v520
      %v538 = vmul.f32 %v448, %v520
      %v539 = vmul.f32 %v453, %v520
      %v540 = vmul.f32 %v458, %v520
      %v541 = vmul.f32 %v463, %v520
      %v542 = vmul.f32 %v468, %v520
      %v543 = vmul.f32 %v473, %v520
      %v544 = vmul.f32 %v478, %v520
      %v545 = vmul.f32 %v483, %v520
      %v546 = vmul.f32 %v488, %v520
      %v547 = vmul.f32 %v493, %v520
      %v548 = vmul.f32 %v498, %v520
      %v549 = vmul.f32 %v503, %v520
      %v550 = vmul.f32 %v508, %v520
      %v551 = vmul.f32 %v513, %v520
      %v552 = vmul.f32 %v518, %v520
      %553 = vset.pattern.permute.xlu0 1
      %554 = vperm.xlu0 %553, %v328
      %v555 = vpop.permute.xlu0 %554
      %557 = vset.pattern.permute.xlu0 1
      %558 = vperm.xlu0 %557, %v329
      %v559 = vpop.permute.xlu0 %558
      %561 = vset.pattern.permute.xlu0 1
      %562 = vperm.xlu0 %561, %v330
      %v563 = vpop.permute.xlu0 %562
      %565 = vset.pattern.permute.xlu0 1
      %566 = vperm.xlu0 %565, %v331
      %v567 = vpop.permute.xlu0 %566
      %569 = vset.pattern.permute.xlu0 1
      %570 = vperm.xlu0 %569, %v332
      %v571 = vpop.permute.xlu0 %570
      %573 = vset.pattern.permute.xlu0 1
      %574 = vperm.xlu0 %573, %v333
      %v575 = vpop.permute.xlu0 %574
      %577 = vset.pattern.permute.xlu0 1
      %578 = vperm.xlu0 %577, %v334
      %v579 = vpop.permute.xlu0 %578
      %581 = vset.pattern.permute.xlu0 1
      %582 = vperm.xlu0 %581, %v335
      %v583 = vpop.permute.xlu0 %582
      %585 = vset.pattern.permute.xlu0 1
      %586 = vperm.xlu0 %585, %v336
      %v587 = vpop.permute.xlu0 %586
      %589 = vset.pattern.permute.xlu0 1
      %590 = vperm.xlu0 %589, %v337
      %v591 = vpop.permute.xlu0 %590
      %593 = vset.pattern.permute.xlu0 1
      %594 = vperm.xlu0 %593, %v338
      %v595 = vpop.permute.xlu0 %594
      %597 = vset.pattern.permute.xlu0 1
      %598 = vperm.xlu0 %597, %v339
      %v599 = vpop.permute.xlu0 %598
      %601 = vset.pattern.permute.xlu0 1
      %602 = vperm.xlu0 %601, %v340
      %v603 = vpop.permute.xlu0 %602
      %605 = vset.pattern.permute.xlu0 1
      %606 = vperm.xlu0 %605, %v341
      %v607 = vpop.permute.xlu0 %606
      %609 = vset.pattern.permute.xlu0 1
      %610 = vperm.xlu0 %609, %v342
      %v611 = vpop.permute.xlu0 %610
      %613 = vset.pattern.permute.xlu0 1
      %614 = vperm.xlu0 %613, %v343
      %v615 = vpop.permute.xlu0 %614
      %617 = vset.pattern.permute.xlu0 1
      %618 = vperm.xlu0 %617, %v344
      %v619 = vpop.permute.xlu0 %618
      %621 = vset.pattern.permute.xlu0 1
      %622 = vperm.xlu0 %621, %v345
      %v623 = vpop.permute.xlu0 %622
      %625 = vset.pattern.permute.xlu0 1
      %626 = vperm.xlu0 %625, %v346
      %v627 = vpop.permute.xlu0 %626
      %629 = vset.pattern.permute.xlu0 1
      %630 = vperm.xlu0 %629, %v347
      %v631 = vpop.permute.xlu0 %630
      %633 = vset.pattern.permute.xlu0 1
      %634 = vperm.xlu0 %633, %v348
      %v635 = vpop.permute.xlu0 %634
      %637 = vset.pattern.permute.xlu0 1
      %638 = vperm.xlu0 %637, %v349
      %v639 = vpop.permute.xlu0 %638
      %641 = vset.pattern.permute.xlu0 1
      %642 = vperm.xlu0 %641, %v350
      %v643 = vpop.permute.xlu0 %642
      %645 = vset.pattern.permute.xlu0 1
      %646 = vperm.xlu0 %645, %v351
      %v647 = vpop.permute.xlu0 %646
      %649 = vset.pattern.permute.xlu0 1
      %650 = vperm.xlu0 %649, %v352
      %v651 = vpop.permute.xlu0 %650
      %653 = vset.pattern.permute.xlu0 1
      %654 = vperm.xlu0 %653, %v353
      %v655 = vpop.permute.xlu0 %654
      %657 = vset.pattern.permute.xlu0 1
      %658 = vperm.xlu0 %657, %v354
      %v659 = vpop.permute.xlu0 %658
      %661 = vset.pattern.permute.xlu0 1
      %662 = vperm.xlu0 %661, %v355
      %v663 = vpop.permute.xlu0 %662
      %665 = vset.pattern.permute.xlu0 1
      %666 = vperm.xlu0 %665, %v356
      %v667 = vpop.permute.xlu0 %666
      %669 = vset.pattern.permute.xlu0 1
      %670 = vperm.xlu0 %669, %v357
      %v671 = vpop.permute.xlu0 %670
      %673 = vset.pattern.permute.xlu0 1
      %674 = vperm.xlu0 %673, %v358
      %v675 = vpop.permute.xlu0 %674
      %677 = vset.pattern.permute.xlu0 1
      %678 = vperm.xlu0 %677, %v359
      %v679 = vpop.permute.xlu0 %678
      %v681 = vperm.slane %v295, 1
      %v682 = vmul.f32 %v555, %v681
      %v683 = vmul.f32 %v559, %v681
      %v684 = vmul.f32 %v563, %v681
      %v685 = vmul.f32 %v567, %v681
      %v686 = vmul.f32 %v571, %v681
      %v687 = vmul.f32 %v575, %v681
      %v688 = vmul.f32 %v579, %v681
      %v689 = vmul.f32 %v583, %v681
      %v690 = vmul.f32 %v587, %v681
      %v691 = vmul.f32 %v591, %v681
      %v692 = vmul.f32 %v595, %v681
      %v693 = vmul.f32 %v599, %v681
      %v694 = vmul.f32 %v603, %v681
      %v695 = vmul.f32 %v607, %v681
      %v696 = vmul.f32 %v611, %v681
      %v697 = vmul.f32 %v615, %v681
      %v698 = vmul.f32 %v619, %v681
      %v699 = vmul.f32 %v623, %v681
      %v700 = vmul.f32 %v627, %v681
      %v701 = vmul.f32 %v631, %v681
      %v702 = vmul.f32 %v635, %v681
      %v703 = vmul.f32 %v639, %v681
      %v704 = vmul.f32 %v643, %v681
      %v705 = vmul.f32 %v647, %v681
      %v706 = vmul.f32 %v651, %v681
      %v707 = vmul.f32 %v655, %v681
      %v708 = vmul.f32 %v659, %v681
      %v709 = vmul.f32 %v663, %v681
      %v710 = vmul.f32 %v667, %v681
      %v711 = vmul.f32 %v671, %v681
      %v712 = vmul.f32 %v675, %v681
      %v713 = vmul.f32 %v679, %v681
      %v714 = vadd.f32 %v521, %v682
      %v715 = vadd.f32 %v522, %v683
      %v716 = vadd.f32 %v523, %v684
      %v717 = vadd.f32 %v524, %v685
      %v718 = vadd.f32 %v525, %v686
      %v719 = vadd.f32 %v526, %v687
      %v720 = vadd.f32 %v527, %v688
      %v721 = vadd.f32 %v528, %v689
      %v722 = vadd.f32 %v529, %v690
      %v723 = vadd.f32 %v530, %v691
      %v724 = vadd.f32 %v531, %v692
      %v725 = vadd.f32 %v532, %v693
      %v726 = vadd.f32 %v533, %v694
      %v727 = vadd.f32 %v534, %v695
      %v728 = vadd.f32 %v535, %v696
      %v729 = vadd.f32 %v536, %v697
      %v730 = vadd.f32 %v537, %v698
      %v731 = vadd.f32 %v538, %v699
      %v732 = vadd.f32 %v539, %v700
      %v733 = vadd.f32 %v540, %v701
      %v734 = vadd.f32 %v541, %v702
      %v735 = vadd.f32 %v542, %v703
      %v736 = vadd.f32 %v543, %v704
      %v737 = vadd.f32 %v544, %v705
      %v738 = vadd.f32 %v545, %v706
      %v739 = vadd.f32 %v546, %v707
      %v740 = vadd.f32 %v547, %v708
      %v741 = vadd.f32 %v548, %v709
      %v742 = vadd.f32 %v549, %v710
      %v743 = vadd.f32 %v550, %v711
      %v744 = vadd.f32 %v551, %v712
      %v745 = vadd.f32 %v552, %v713
      %746 = vset.pattern.permute.xlu0 2
      %747 = vperm.xlu0 %746, %v328
      %v748 = vpop.permute.xlu0 %747
      %750 = vset.pattern.permute.xlu0 2
      %751 = vperm.xlu0 %750, %v329
      %v752 = vpop.permute.xlu0 %751
      %754 = vset.pattern.permute.xlu0 2
      %755 = vperm.xlu0 %754, %v330
      %v756 = vpop.permute.xlu0 %755
      %758 = vset.pattern.permute.xlu0 2
      %759 = vperm.xlu0 %758, %v331
      %v760 = vpop.permute.xlu0 %759
      %762 = vset.pattern.permute.xlu0 2
      %763 = vperm.xlu0 %762, %v332
      %v764 = vpop.permute.xlu0 %763
      %766 = vset.pattern.permute.xlu0 2
      %767 = vperm.xlu0 %766, %v333
      %v768 = vpop.permute.xlu0 %767
      %770 = vset.pattern.permute.xlu0 2
      %771 = vperm.xlu0 %770, %v334
      %v772 = vpop.permute.xlu0 %771
      %774 = vset.pattern.permute.xlu0 2
      %775 = vperm.xlu0 %774, %v335
      %v776 = vpop.permute.xlu0 %775
      %778 = vset.pattern.permute.xlu0 2
      %779 = vperm.xlu0 %778, %v336
      %v780 = vpop.permute.xlu0 %779
      %782 = vset.pattern.permute.xlu0 2
      %783 = vperm.xlu0 %782, %v337
      %v784 = vpop.permute.xlu0 %783
      %786 = vset.pattern.permute.xlu0 2
      %787 = vperm.xlu0 %786, %v338
      %v788 = vpop.permute.xlu0 %787
      %790 = vset.pattern.permute.xlu0 2
      %791 = vperm.xlu0 %790, %v339
      %v792 = vpop.permute.xlu0 %791
      %794 = vset.pattern.permute.xlu0 2
      %795 = vperm.xlu0 %794, %v340
      %v796 = vpop.permute.xlu0 %795
      %798 = vset.pattern.permute.xlu0 2
      %799 = vperm.xlu0 %798, %v341
      %v800 = vpop.permute.xlu0 %799
      %802 = vset.pattern.permute.xlu0 2
      %803 = vperm.xlu0 %802, %v342
      %v804 = vpop.permute.xlu0 %803
      %806 = vset.pattern.permute.xlu0 2
      %807 = vperm.xlu0 %806, %v343
      %v808 = vpop.permute.xlu0 %807
      %810 = vset.pattern.permute.xlu0 2
      %811 = vperm.xlu0 %810, %v344
      %v812 = vpop.permute.xlu0 %811
      %814 = vset.pattern.permute.xlu0 2
      %815 = vperm.xlu0 %814, %v345
      %v816 = vpop.permute.xlu0 %815
      %818 = vset.pattern.permute.xlu0 2
      %819 = vperm.xlu0 %818, %v346
      %v820 = vpop.permute.xlu0 %819
      %822 = vset.pattern.permute.xlu0 2
      %823 = vperm.xlu0 %822, %v347
      %v824 = vpop.permute.xlu0 %823
      %826 = vset.pattern.permute.xlu0 2
      %827 = vperm.xlu0 %826, %v348
      %v828 = vpop.permute.xlu0 %827
      %830 = vset.pattern.permute.xlu0 2
      %831 = vperm.xlu0 %830, %v349
      %v832 = vpop.permute.xlu0 %831
      %834 = vset.pattern.permute.xlu0 2
      %835 = vperm.xlu0 %834, %v350
      %v836 = vpop.permute.xlu0 %835
      %838 = vset.pattern.permute.xlu0 2
      %839 = vperm.xlu0 %838, %v351
      %v840 = vpop.permute.xlu0 %839
      %842 = vset.pattern.permute.xlu0 2
      %843 = vperm.xlu0 %842, %v352
      %v844 = vpop.permute.xlu0 %843
      %846 = vset.pattern.permute.xlu0 2
      %847 = vperm.xlu0 %846, %v353
      %v848 = vpop.permute.xlu0 %847
      %850 = vset.pattern.permute.xlu0 2
      %851 = vperm.xlu0 %850, %v354
      %v852 = vpop.permute.xlu0 %851
      %854 = vset.pattern.permute.xlu0 2
      %855 = vperm.xlu0 %854, %v355
      %v856 = vpop.permute.xlu0 %855
      %858 = vset.pattern.permute.xlu0 2
      %859 = vperm.xlu0 %858, %v356
      %v860 = vpop.permute.xlu0 %859
      %862 = vset.pattern.permute.xlu0 2
      %863 = vperm.xlu0 %862, %v357
      %v864 = vpop.permute.xlu0 %863
      %866 = vset.pattern.permute.xlu0 2
      %867 = vperm.xlu0 %866, %v358
      %v868 = vpop.permute.xlu0 %867
      %870 = vset.pattern.permute.xlu0 2
      %871 = vperm.xlu0 %870, %v359
      %v872 = vpop.permute.xlu0 %871
      %v874 = vperm.slane %v295, 2
      %v875 = vmul.f32 %v748, %v874
      %v876 = vmul.f32 %v752, %v874
      %v877 = vmul.f32 %v756, %v874
      %v878 = vmul.f32 %v760, %v874
      %v879 = vmul.f32 %v764, %v874
      %v880 = vmul.f32 %v768, %v874
      %v881 = vmul.f32 %v772, %v874
      %v882 = vmul.f32 %v776, %v874
      %v883 = vmul.f32 %v780, %v874
      %v884 = vmul.f32 %v784, %v874
      %v885 = vmul.f32 %v788, %v874
      %v886 = vmul.f32 %v792, %v874
      %v887 = vmul.f32 %v796, %v874
      %v888 = vmul.f32 %v800, %v874
      %v889 = vmul.f32 %v804, %v874
      %v890 = vmul.f32 %v808, %v874
      %v891 = vmul.f32 %v812, %v874
      %v892 = vmul.f32 %v816, %v874
      %v893 = vmul.f32 %v820, %v874
      %v894 = vmul.f32 %v824, %v874
      %v895 = vmul.f32 %v828, %v874
      %v896 = vmul.f32 %v832, %v874
      %v897 = vmul.f32 %v836, %v874
      %v898 = vmul.f32 %v840, %v874
      %v899 = vmul.f32 %v844, %v874
      %v900 = vmul.f32 %v848, %v874
      %v901 = vmul.f32 %v852, %v874
      %v902 = vmul.f32 %v856, %v874
      %v903 = vmul.f32 %v860, %v874
      %v904 = vmul.f32 %v864, %v874
      %v905 = vmul.f32 %v868, %v874
      %v906 = vmul.f32 %v872, %v874
      %v907 = vadd.f32 %v714, %v875
      %v908 = vadd.f32 %v715, %v876
      %v909 = vadd.f32 %v716, %v877
      %v910 = vadd.f32 %v717, %v878
      %v911 = vadd.f32 %v718, %v879
      %v912 = vadd.f32 %v719, %v880
      %v913 = vadd.f32 %v720, %v881
      %v914 = vadd.f32 %v721, %v882
      %v915 = vadd.f32 %v722, %v883
      %v916 = vadd.f32 %v723, %v884
      %v917 = vadd.f32 %v724, %v885
      %v918 = vadd.f32 %v725, %v886
      %v919 = vadd.f32 %v726, %v887
      %v920 = vadd.f32 %v727, %v888
      %v921 = vadd.f32 %v728, %v889
      %v922 = vadd.f32 %v729, %v890
      %v923 = vadd.f32 %v730, %v891
      %v924 = vadd.f32 %v731, %v892
      %v925 = vadd.f32 %v732, %v893
      %v926 = vadd.f32 %v733, %v894
      %v927 = vadd.f32 %v734, %v895
      %v928 = vadd.f32 %v735, %v896
      %v929 = vadd.f32 %v736, %v897
      %v930 = vadd.f32 %v737, %v898
      %v931 = vadd.f32 %v738, %v899
      %v932 = vadd.f32 %v739, %v900
      %v933 = vadd.f32 %v740, %v901
      %v934 = vadd.f32 %v741, %v902
      %v935 = vadd.f32 %v742, %v903
      %v936 = vadd.f32 %v743, %v904
      %v937 = vadd.f32 %v744, %v905
      %v938 = vadd.f32 %v745, %v906
      %vm939 = vcmp.ge.f32.partialorder %v907, 0.0
      %vm940 = vcmp.ge.f32.partialorder %v908, 0.0
      %vm941 = vcmp.ge.f32.partialorder %v909, 0.0
      %vm942 = vcmp.ge.f32.partialorder %v910, 0.0
      %vm943 = vcmp.ge.f32.partialorder %v911, 0.0
      %vm944 = vcmp.ge.f32.partialorder %v912, 0.0
      %vm945 = vcmp.ge.f32.partialorder %v913, 0.0
      %vm946 = vcmp.ge.f32.partialorder %v914, 0.0
      %vm947 = vcmp.ge.f32.partialorder %v915, 0.0
      %vm948 = vcmp.ge.f32.partialorder %v916, 0.0
      %vm949 = vcmp.ge.f32.partialorder %v917, 0.0
      %vm950 = vcmp.ge.f32.partialorder %v918, 0.0
      %vm951 = vcmp.ge.f32.partialorder %v919, 0.0
      %vm952 = vcmp.ge.f32.partialorder %v920, 0.0
      %vm953 = vcmp.ge.f32.partialorder %v921, 0.0
      %vm954 = vcmp.ge.f32.partialorder %v922, 0.0
      %vm955 = vcmp.ge.f32.partialorder %v923, 0.0
      %vm956 = vcmp.ge.f32.partialorder %v924, 0.0
      %vm957 = vcmp.ge.f32.partialorder %v925, 0.0
      %vm958 = vcmp.ge.f32.partialorder %v926, 0.0
      %vm959 = vcmp.ge.f32.partialorder %v927, 0.0
      %vm960 = vcmp.ge.f32.partialorder %v928, 0.0
      %vm961 = vcmp.ge.f32.partialorder %v929, 0.0
      %vm962 = vcmp.ge.f32.partialorder %v930, 0.0
      %vm963 = vcmp.ge.f32.partialorder %v931, 0.0
      %vm964 = vcmp.ge.f32.partialorder %v932, 0.0
      %vm965 = vcmp.ge.f32.partialorder %v933, 0.0
      %vm966 = vcmp.ge.f32.partialorder %v934, 0.0
      %vm967 = vcmp.ge.f32.partialorder %v935, 0.0
      %vm968 = vcmp.ge.f32.partialorder %v936, 0.0
      %vm969 = vcmp.ge.f32.partialorder %v937, 0.0
      %vm970 = vcmp.ge.f32.partialorder %v938, 0.0
      %v971 = vmul.f32 %v907, 0.2
      %v972 = vmul.f32 %v908, 0.2
      %v973 = vmul.f32 %v909, 0.2
      %v974 = vmul.f32 %v910, 0.2
      %v975 = vmul.f32 %v911, 0.2
      %v976 = vmul.f32 %v912, 0.2
      %v977 = vmul.f32 %v913, 0.2
      %v978 = vmul.f32 %v914, 0.2
      %v979 = vmul.f32 %v915, 0.2
      %v980 = vmul.f32 %v916, 0.2
      %v981 = vmul.f32 %v917, 0.2
      %v982 = vmul.f32 %v918, 0.2
      %v983 = vmul.f32 %v919, 0.2
      %v984 = vmul.f32 %v920, 0.2
      %v985 = vmul.f32 %v921, 0.2
      %v986 = vmul.f32 %v922, 0.2
      %v987 = vmul.f32 %v923, 0.2
      %v988 = vmul.f32 %v924, 0.2
      %v989 = vmul.f32 %v925, 0.2
      %v990 = vmul.f32 %v926, 0.2
      %v991 = vmul.f32 %v927, 0.2
      %v992 = vmul.f32 %v928, 0.2
      %v993 = vmul.f32 %v929, 0.2
      %v994 = vmul.f32 %v930, 0.2
      %v995 = vmul.f32 %v931, 0.2
      %v996 = vmul.f32 %v932, 0.2
      %v997 = vmul.f32 %v933, 0.2
      %v998 = vmul.f32 %v934, 0.2
      %v999 = vmul.f32 %v935, 0.2
      %v1000 = vmul.f32 %v936, 0.2
      %v1001 = vmul.f32 %v937, 0.2
      %v1002 = vmul.f32 %v938, 0.2
      %v1003 = vsel %vm939, %v907, %v971
      %v1004 = vsel %vm940, %v908, %v972
      %v1005 = vsel %vm941, %v909, %v973
      %v1006 = vsel %vm942, %v910, %v974
      %v1007 = vsel %vm943, %v911, %v975
      %v1008 = vsel %vm944, %v912, %v976
      %v1009 = vsel %vm945, %v913, %v977
      %v1010 = vsel %vm946, %v914, %v978
      %v1011 = vsel %vm947, %v915, %v979
      %v1012 = vsel %vm948, %v916, %v980
      %v1013 = vsel %vm949, %v917, %v981
      %v1014 = vsel %vm950, %v918, %v982
      %v1015 = vsel %vm951, %v919, %v983
      %v1016 = vsel %vm952, %v920, %v984
      %v1017 = vsel %vm953, %v921, %v985
      %v1018 = vsel %vm954, %v922, %v986
      %v1019 = vsel %vm955, %v923, %v987
      %v1020 = vsel %vm956, %v924, %v988
      %v1021 = vsel %vm957, %v925, %v989
      %v1022 = vsel %vm958, %v926, %v990
      %v1023 = vsel %vm959, %v927, %v991
      %v1024 = vsel %vm960, %v928, %v992
      %v1025 = vsel %vm961, %v929, %v993
      %v1026 = vsel %vm962, %v930, %v994
      %v1027 = vsel %vm963, %v931, %v995
      %v1028 = vsel %vm964, %v932, %v996
      %v1029 = vsel %vm965, %v933, %v997
      %v1030 = vsel %vm966, %v934, %v998
      %v1031 = vsel %vm967, %v935, %v999
      %v1032 = vsel %vm968, %v936, %v1000
      %v1033 = vsel %vm969, %v937, %v1001
      %v1034 = vsel %vm970, %v938, %v1002
      %v1035 = vpack.c.bf16 %v1004, %v1003
      %v1036 = vpack.c.bf16 %v1006, %v1005
      %v1037 = vpack.c.bf16 %v1008, %v1007
      %v1038 = vpack.c.bf16 %v1010, %v1009
      %v1039 = vpack.c.bf16 %v1012, %v1011
      %v1040 = vpack.c.bf16 %v1014, %v1013
      %v1041 = vpack.c.bf16 %v1016, %v1015
      %v1042 = vpack.c.bf16 %v1018, %v1017
      %v1043 = vpack.c.bf16 %v1020, %v1019
      %v1044 = vpack.c.bf16 %v1022, %v1021
      %v1045 = vpack.c.bf16 %v1024, %v1023
      %v1046 = vpack.c.bf16 %v1026, %v1025
      %v1047 = vpack.c.bf16 %v1028, %v1027
      %v1048 = vpack.c.bf16 %v1030, %v1029
      %v1049 = vpack.c.bf16 %v1032, %v1031
      %v1050 = vpack.c.bf16 %v1034, %v1033
      %v1067 = vunpack.c.l.b16 %v296
      %v1068 = vunpack.c.l.b16 %v297
      %v1069 = vunpack.c.l.b16 %v298
      %v1070 = vunpack.c.l.b16 %v299
      %v1071 = vunpack.c.l.b16 %v300
      %v1072 = vunpack.c.l.b16 %v301
      %v1073 = vunpack.c.l.b16 %v302
      %v1074 = vunpack.c.l.b16 %v303
      %v1075 = vunpack.c.l.b16 %v304
      %v1076 = vunpack.c.l.b16 %v305
      %v1077 = vunpack.c.l.b16 %v306
      %v1078 = vunpack.c.l.b16 %v307
      %v1079 = vunpack.c.l.b16 %v308
      %v1080 = vunpack.c.l.b16 %v309
      %v1081 = vunpack.c.l.b16 %v310
      %v1082 = vunpack.c.l.b16 %v311
      %v1083 = vpack.c.b16 %v1068, %v1067
      %v1084 = vpack.c.b16 %v1070, %v1069
      %v1085 = vpack.c.b16 %v1072, %v1071
      %v1086 = vpack.c.b16 %v1074, %v1073
      %v1087 = vpack.c.b16 %v1076, %v1075
      %v1088 = vpack.c.b16 %v1078, %v1077
      %v1089 = vpack.c.b16 %v1080, %v1079
      %v1090 = vpack.c.b16 %v1082, %v1081
      %1099 = vmatpush.bf16.msra.mxu0 %v1090
      %1100 = vmatpush.bf16.msra.mxu0 %v1089
      %1101 = vmatpush.bf16.msra.mxu0 %v1088
      %1102 = vmatpush.bf16.msra.mxu0 %v1087
      %1103 = vmatpush.bf16.msra.mxu0 %v1086
      %1104 = vmatpush.bf16.msra.mxu0 %v1085
      %1105 = vmatpush.bf16.msra.mxu0 %v1084
      %1106 = vmatpush.bf16.msra.mxu0 %v1083
      %1107 = vmatmul.bf16.gmra.mxu0 %v1035
      %v1108 = vpop.f32.mrf.mxu0
      %v1109 = vadd.f32 0.0, %v1108
      %v1110 = vpop.f32.mrf.mxu0
      %v1111 = vadd.f32 0.0, %v1110
      %1112 = vmatmul.bf16.gmra.mxu0 %v1036
      %v1113 = vpop.f32.mrf.mxu0
      %v1114 = vadd.f32 0.0, %v1113
      %v1115 = vpop.f32.mrf.mxu0
      %v1116 = vadd.f32 0.0, %v1115
      %1117 = vmatmul.bf16.gmra.mxu0 %v1037
      %v1118 = vpop.f32.mrf.mxu0
      %v1119 = vadd.f32 0.0, %v1118
      %v1120 = vpop.f32.mrf.mxu0
      %v1121 = vadd.f32 0.0, %v1120
      %1122 = vmatmul.bf16.gmra.mxu0 %v1038
      %v1123 = vpop.f32.mrf.mxu0
      %v1124 = vadd.f32 0.0, %v1123
      %v1125 = vpop.f32.mrf.mxu0
      %v1126 = vadd.f32 0.0, %v1125
      %1127 = vmatmul.bf16.gmra.mxu0 %v1039
      %v1128 = vpop.f32.mrf.mxu0
      %v1129 = vadd.f32 0.0, %v1128
      %v1130 = vpop.f32.mrf.mxu0
      %v1131 = vadd.f32 0.0, %v1130
      %1132 = vmatmul.bf16.gmra.mxu0 %v1040
      %v1133 = vpop.f32.mrf.mxu0
      %v1134 = vadd.f32 0.0, %v1133
      %v1135 = vpop.f32.mrf.mxu0
      %v1136 = vadd.f32 0.0, %v1135
      %1137 = vmatmul.bf16.gmra.mxu0 %v1041
      %v1138 = vpop.f32.mrf.mxu0
      %v1139 = vadd.f32 0.0, %v1138
      %v1140 = vpop.f32.mrf.mxu0
      %v1141 = vadd.f32 0.0, %v1140
      %1142 = vmatmul.bf16.gmra.mxu0 %v1042
      %v1143 = vpop.f32.mrf.mxu0
      %v1144 = vadd.f32 0.0, %v1143
      %v1145 = vpop.f32.mrf.mxu0
      %v1146 = vadd.f32 0.0, %v1145
      %1147 = vmatmul.bf16.gmra.mxu0 %v1043
      %v1148 = vpop.f32.mrf.mxu0
      %v1149 = vadd.f32 0.0, %v1148
      %v1150 = vpop.f32.mrf.mxu0
      %v1151 = vadd.f32 0.0, %v1150
      %1152 = vmatmul.bf16.gmra.mxu0 %v1044
      %v1153 = vpop.f32.mrf.mxu0
      %v1154 = vadd.f32 0.0, %v1153
      %v1155 = vpop.f32.mrf.mxu0
      %v1156 = vadd.f32 0.0, %v1155
      %1157 = vmatmul.bf16.gmra.mxu0 %v1045
      %v1158 = vpop.f32.mrf.mxu0
      %v1159 = vadd.f32 0.0, %v1158
      %v1160 = vpop.f32.mrf.mxu0
      %v1161 = vadd.f32 0.0, %v1160
      %1162 = vmatmul.bf16.gmra.mxu0 %v1046
      %v1163 = vpop.f32.mrf.mxu0
      %v1164 = vadd.f32 0.0, %v1163
      %v1165 = vpop.f32.mrf.mxu0
      %v1166 = vadd.f32 0.0, %v1165
      %1167 = vmatmul.bf16.gmra.mxu0 %v1047
      %v1168 = vpop.f32.mrf.mxu0
      %v1169 = vadd.f32 0.0, %v1168
      %v1170 = vpop.f32.mrf.mxu0
      %v1171 = vadd.f32 0.0, %v1170
      %1172 = vmatmul.bf16.gmra.mxu0 %v1048
      %v1173 = vpop.f32.mrf.mxu0
      %v1174 = vadd.f32 0.0, %v1173
      %v1175 = vpop.f32.mrf.mxu0
      %v1176 = vadd.f32 0.0, %v1175
      %1177 = vmatmul.bf16.gmra.mxu0 %v1049
      %v1178 = vpop.f32.mrf.mxu0
      %v1179 = vadd.f32 0.0, %v1178
      %v1180 = vpop.f32.mrf.mxu0
      %v1181 = vadd.f32 0.0, %v1180
      %1182 = vmatmul.bf16.gmra.mxu0 %v1050
      %v1183 = vpop.f32.mrf.mxu0
      %v1184 = vadd.f32 0.0, %v1183
      %v1185 = vpop.f32.mrf.mxu0
      %v1186 = vadd.f32 0.0, %v1185
      %1187 = vdwg.mxu0
      %vm1188 = vcmp.ge.f32.partialorder %v1109, 0.0
      %vm1189 = vcmp.ge.f32.partialorder %v1111, 0.0
      %vm1190 = vcmp.ge.f32.partialorder %v1114, 0.0
      %vm1191 = vcmp.ge.f32.partialorder %v1116, 0.0
      %vm1192 = vcmp.ge.f32.partialorder %v1119, 0.0
      %vm1193 = vcmp.ge.f32.partialorder %v1121, 0.0
      %vm1194 = vcmp.ge.f32.partialorder %v1124, 0.0
      %vm1195 = vcmp.ge.f32.partialorder %v1126, 0.0
      %vm1196 = vcmp.ge.f32.partialorder %v1129, 0.0
      %vm1197 = vcmp.ge.f32.partialorder %v1131, 0.0
      %vm1198 = vcmp.ge.f32.partialorder %v1134, 0.0
      %vm1199 = vcmp.ge.f32.partialorder %v1136, 0.0
      %vm1200 = vcmp.ge.f32.partialorder %v1139, 0.0
      %vm1201 = vcmp.ge.f32.partialorder %v1141, 0.0
      %vm1202 = vcmp.ge.f32.partialorder %v1144, 0.0
      %vm1203 = vcmp.ge.f32.partialorder %v1146, 0.0
      %vm1204 = vcmp.ge.f32.partialorder %v1149, 0.0
      %vm1205 = vcmp.ge.f32.partialorder %v1151, 0.0
      %vm1206 = vcmp.ge.f32.partialorder %v1154, 0.0
      %vm1207 = vcmp.ge.f32.partialorder %v1156, 0.0
      %vm1208 = vcmp.ge.f32.partialorder %v1159, 0.0
      %vm1209 = vcmp.ge.f32.partialorder %v1161, 0.0
      %vm1210 = vcmp.ge.f32.partialorder %v1164, 0.0
      %vm1211 = vcmp.ge.f32.partialorder %v1166, 0.0
      %vm1212 = vcmp.ge.f32.partialorder %v1169, 0.0
      %vm1213 = vcmp.ge.f32.partialorder %v1171, 0.0
      %vm1214 = vcmp.ge.f32.partialorder %v1174, 0.0
      %vm1215 = vcmp.ge.f32.partialorder %v1176, 0.0
      %vm1216 = vcmp.ge.f32.partialorder %v1179, 0.0
      %vm1217 = vcmp.ge.f32.partialorder %v1181, 0.0
      %vm1218 = vcmp.ge.f32.partialorder %v1184, 0.0
      %vm1219 = vcmp.ge.f32.partialorder %v1186, 0.0
      %v1220 = vmul.f32 %v1109, 0.2
      %v1221 = vmul.f32 %v1111, 0.2
      %v1222 = vmul.f32 %v1114, 0.2
      %v1223 = vmul.f32 %v1116, 0.2
      %v1224 = vmul.f32 %v1119, 0.2
      %v1225 = vmul.f32 %v1121, 0.2
      %v1226 = vmul.f32 %v1124, 0.2
      %v1227 = vmul.f32 %v1126, 0.2
      %v1228 = vmul.f32 %v1129, 0.2
      %v1229 = vmul.f32 %v1131, 0.2
      %v1230 = vmul.f32 %v1134, 0.2
      %v1231 = vmul.f32 %v1136, 0.2
      %v1232 = vmul.f32 %v1139, 0.2
      %v1233 = vmul.f32 %v1141, 0.2
      %v1234 = vmul.f32 %v1144, 0.2
      %v1235 = vmul.f32 %v1146, 0.2
      %v1236 = vmul.f32 %v1149, 0.2
      %v1237 = vmul.f32 %v1151, 0.2
      %v1238 = vmul.f32 %v1154, 0.2
      %v1239 = vmul.f32 %v1156, 0.2
      %v1240 = vmul.f32 %v1159, 0.2
      %v1241 = vmul.f32 %v1161, 0.2
      %v1242 = vmul.f32 %v1164, 0.2
      %v1243 = vmul.f32 %v1166, 0.2
      %v1244 = vmul.f32 %v1169, 0.2
      %v1245 = vmul.f32 %v1171, 0.2
      %v1246 = vmul.f32 %v1174, 0.2
      %v1247 = vmul.f32 %v1176, 0.2
      %v1248 = vmul.f32 %v1179, 0.2
      %v1249 = vmul.f32 %v1181, 0.2
      %v1250 = vmul.f32 %v1184, 0.2
      %v1251 = vmul.f32 %v1186, 0.2
      %v1252 = vsel %vm1188, %v1109, %v1220
      %v1253 = vsel %vm1189, %v1111, %v1221
      %v1254 = vsel %vm1190, %v1114, %v1222
      %v1255 = vsel %vm1191, %v1116, %v1223
      %v1256 = vsel %vm1192, %v1119, %v1224
      %v1257 = vsel %vm1193, %v1121, %v1225
      %v1258 = vsel %vm1194, %v1124, %v1226
      %v1259 = vsel %vm1195, %v1126, %v1227
      %v1260 = vsel %vm1196, %v1129, %v1228
      %v1261 = vsel %vm1197, %v1131, %v1229
      %v1262 = vsel %vm1198, %v1134, %v1230
      %v1263 = vsel %vm1199, %v1136, %v1231
      %v1264 = vsel %vm1200, %v1139, %v1232
      %v1265 = vsel %vm1201, %v1141, %v1233
      %v1266 = vsel %vm1202, %v1144, %v1234
      %v1267 = vsel %vm1203, %v1146, %v1235
      %v1268 = vsel %vm1204, %v1149, %v1236
      %v1269 = vsel %vm1205, %v1151, %v1237
      %v1270 = vsel %vm1206, %v1154, %v1238
      %v1271 = vsel %vm1207, %v1156, %v1239
      %v1272 = vsel %vm1208, %v1159, %v1240
      %v1273 = vsel %vm1209, %v1161, %v1241
      %v1274 = vsel %vm1210, %v1164, %v1242
      %v1275 = vsel %vm1211, %v1166, %v1243
      %v1276 = vsel %vm1212, %v1169, %v1244
      %v1277 = vsel %vm1213, %v1171, %v1245
      %v1278 = vsel %vm1214, %v1174, %v1246
      %v1279 = vsel %vm1215, %v1176, %v1247
      %v1280 = vsel %vm1216, %v1179, %v1248
      %v1281 = vsel %vm1217, %v1181, %v1249
      %v1282 = vsel %vm1218, %v1184, %v1250
      %v1283 = vsel %vm1219, %v1186, %v1251
      %v1284 = vld [vmem:[%s286] sm:$0xff]
      %v1285 = vld [vmem:[%s286 + $0x8] sm:$0xff]
      %v1286 = vld [vmem:[%s286 + $0x10] sm:$0xff]
      %v1287 = vld [vmem:[%s286 + $0x18] sm:$0xff]
      %v1288 = vld [vmem:[%s286 + $0x20] sm:$0xff]
      %v1289 = vld [vmem:[%s286 + $0x28] sm:$0xff]
      %v1290 = vld [vmem:[%s286 + $0x30] sm:$0xff]
      %v1291 = vld [vmem:[%s286 + $0x38] sm:$0xff]
      %v1292 = vld [vmem:[%s286 + $0x40] sm:$0xff]
      %v1293 = vld [vmem:[%s286 + $0x48] sm:$0xff]
      %v1294 = vld [vmem:[%s286 + $0x50] sm:$0xff]
      %v1295 = vld [vmem:[%s286 + $0x58] sm:$0xff]
      %v1296 = vld [vmem:[%s286 + $0x60] sm:$0xff]
      %v1297 = vld [vmem:[%s286 + $0x68] sm:$0xff]
      %v1298 = vld [vmem:[%s286 + $0x70] sm:$0xff]
      %v1299 = vld [vmem:[%s286 + $0x78] sm:$0xff]
      %v1300 = vld [vmem:[%s286 + $0x80] sm:$0xff]
      %v1301 = vld [vmem:[%s286 + $0x88] sm:$0xff]
      %v1302 = vld [vmem:[%s286 + $0x90] sm:$0xff]
      %v1303 = vld [vmem:[%s286 + $0x98] sm:$0xff]
      %v1304 = vld [vmem:[%s286 + $0xa0] sm:$0xff]
      %v1305 = vld [vmem:[%s286 + $0xa8] sm:$0xff]
      %v1306 = vld [vmem:[%s286 + $0xb0] sm:$0xff]
      %v1307 = vld [vmem:[%s286 + $0xb8] sm:$0xff]
      %v1308 = vld [vmem:[%s286 + $0xc0] sm:$0xff]
      %v1309 = vld [vmem:[%s286 + $0xc8] sm:$0xff]
      %v1310 = vld [vmem:[%s286 + $0xd0] sm:$0xff]
      %v1311 = vld [vmem:[%s286 + $0xd8] sm:$0xff]
      %v1312 = vld [vmem:[%s286 + $0xe0] sm:$0xff]
      %v1313 = vld [vmem:[%s286 + $0xe8] sm:$0xff]
      %v1314 = vld [vmem:[%s286 + $0xf0] sm:$0xff]
      %v1315 = vld [vmem:[%s286 + $0xf8] sm:$0xff]
      %1317 = vset.pattern.permute.xlu0 0
      %1318 = vperm.xlu0 %1317, %v1284
      %v1319 = vpop.permute.xlu0 %1318
      %1322 = vset.pattern.permute.xlu0 0
      %1323 = vperm.xlu0 %1322, %v1285
      %v1324 = vpop.permute.xlu0 %1323
      %1327 = vset.pattern.permute.xlu0 0
      %1328 = vperm.xlu0 %1327, %v1286
      %v1329 = vpop.permute.xlu0 %1328
      %1332 = vset.pattern.permute.xlu0 0
      %1333 = vperm.xlu0 %1332, %v1287
      %v1334 = vpop.permute.xlu0 %1333
      %1337 = vset.pattern.permute.xlu0 0
      %1338 = vperm.xlu0 %1337, %v1288
      %v1339 = vpop.permute.xlu0 %1338
      %1342 = vset.pattern.permute.xlu0 0
      %1343 = vperm.xlu0 %1342, %v1289
      %v1344 = vpop.permute.xlu0 %1343
      %1347 = vset.pattern.permute.xlu0 0
      %1348 = vperm.xlu0 %1347, %v1290
      %v1349 = vpop.permute.xlu0 %1348
      %1352 = vset.pattern.permute.xlu0 0
      %1353 = vperm.xlu0 %1352, %v1291
      %v1354 = vpop.permute.xlu0 %1353
      %1357 = vset.pattern.permute.xlu0 0
      %1358 = vperm.xlu0 %1357, %v1292
      %v1359 = vpop.permute.xlu0 %1358
      %1362 = vset.pattern.permute.xlu0 0
      %1363 = vperm.xlu0 %1362, %v1293
      %v1364 = vpop.permute.xlu0 %1363
      %1367 = vset.pattern.permute.xlu0 0
      %1368 = vperm.xlu0 %1367, %v1294
      %v1369 = vpop.permute.xlu0 %1368
      %1372 = vset.pattern.permute.xlu0 0
      %1373 = vperm.xlu0 %1372, %v1295
      %v1374 = vpop.permute.xlu0 %1373
      %1377 = vset.pattern.permute.xlu0 0
      %1378 = vperm.xlu0 %1377, %v1296
      %v1379 = vpop.permute.xlu0 %1378
      %1382 = vset.pattern.permute.xlu0 0
      %1383 = vperm.xlu0 %1382, %v1297
      %v1384 = vpop.permute.xlu0 %1383
      %1387 = vset.pattern.permute.xlu0 0
      %1388 = vperm.xlu0 %1387, %v1298
      %v1389 = vpop.permute.xlu0 %1388
      %1392 = vset.pattern.permute.xlu0 0
      %1393 = vperm.xlu0 %1392, %v1299
      %v1394 = vpop.permute.xlu0 %1393
      %1397 = vset.pattern.permute.xlu0 0
      %1398 = vperm.xlu0 %1397, %v1300
      %v1399 = vpop.permute.xlu0 %1398
      %1402 = vset.pattern.permute.xlu0 0
      %1403 = vperm.xlu0 %1402, %v1301
      %v1404 = vpop.permute.xlu0 %1403
      %1407 = vset.pattern.permute.xlu0 0
      %1408 = vperm.xlu0 %1407, %v1302
      %v1409 = vpop.permute.xlu0 %1408
      %1412 = vset.pattern.permute.xlu0 0
      %1413 = vperm.xlu0 %1412, %v1303
      %v1414 = vpop.permute.xlu0 %1413
      %1417 = vset.pattern.permute.xlu0 0
      %1418 = vperm.xlu0 %1417, %v1304
      %v1419 = vpop.permute.xlu0 %1418
      %1422 = vset.pattern.permute.xlu0 0
      %1423 = vperm.xlu0 %1422, %v1305
      %v1424 = vpop.permute.xlu0 %1423
      %1427 = vset.pattern.permute.xlu0 0
      %1428 = vperm.xlu0 %1427, %v1306
      %v1429 = vpop.permute.xlu0 %1428
      %1432 = vset.pattern.permute.xlu0 0
      %1433 = vperm.xlu0 %1432, %v1307
      %v1434 = vpop.permute.xlu0 %1433
      %1437 = vset.pattern.permute.xlu0 0
      %1438 = vperm.xlu0 %1437, %v1308
      %v1439 = vpop.permute.xlu0 %1438
      %1442 = vset.pattern.permute.xlu0 0
      %1443 = vperm.xlu0 %1442, %v1309
      %v1444 = vpop.permute.xlu0 %1443
      %1447 = vset.pattern.permute.xlu0 0
      %1448 = vperm.xlu0 %1447, %v1310
      %v1449 = vpop.permute.xlu0 %1448
      %1452 = vset.pattern.permute.xlu0 0
      %1453 = vperm.xlu0 %1452, %v1311
      %v1454 = vpop.permute.xlu0 %1453
      %1457 = vset.pattern.permute.xlu0 0
      %1458 = vperm.xlu0 %1457, %v1312
      %v1459 = vpop.permute.xlu0 %1458
      %1462 = vset.pattern.permute.xlu0 0
      %1463 = vperm.xlu0 %1462, %v1313
      %v1464 = vpop.permute.xlu0 %1463
      %1467 = vset.pattern.permute.xlu0 0
      %1468 = vperm.xlu0 %1467, %v1314
      %v1469 = vpop.permute.xlu0 %1468
      %1472 = vset.pattern.permute.xlu0 0
      %1473 = vperm.xlu0 %1472, %v1315
      %v1474 = vpop.permute.xlu0 %1473
      %v1476 = vmul.f32 %v1319, %v520
      %v1477 = vmul.f32 %v1324, %v520
      %v1478 = vmul.f32 %v1329, %v520
      %v1479 = vmul.f32 %v1334, %v520
      %v1480 = vmul.f32 %v1339, %v520
      %v1481 = vmul.f32 %v1344, %v520
      %v1482 = vmul.f32 %v1349, %v520
      %v1483 = vmul.f32 %v1354, %v520
      %v1484 = vmul.f32 %v1359, %v520
      %v1485 = vmul.f32 %v1364, %v520
      %v1486 = vmul.f32 %v1369, %v520
      %v1487 = vmul.f32 %v1374, %v520
      %v1488 = vmul.f32 %v1379, %v520
      %v1489 = vmul.f32 %v1384, %v520
      %v1490 = vmul.f32 %v1389, %v520
      %v1491 = vmul.f32 %v1394, %v520
      %v1492 = vmul.f32 %v1399, %v520
      %v1493 = vmul.f32 %v1404, %v520
      %v1494 = vmul.f32 %v1409, %v520
      %v1495 = vmul.f32 %v1414, %v520
      %v1496 = vmul.f32 %v1419, %v520
      %v1497 = vmul.f32 %v1424, %v520
      %v1498 = vmul.f32 %v1429, %v520
      %v1499 = vmul.f32 %v1434, %v520
      %v1500 = vmul.f32 %v1439, %v520
      %v1501 = vmul.f32 %v1444, %v520
      %v1502 = vmul.f32 %v1449, %v520
      %v1503 = vmul.f32 %v1454, %v520
      %v1504 = vmul.f32 %v1459, %v520
      %v1505 = vmul.f32 %v1464, %v520
      %v1506 = vmul.f32 %v1469, %v520
      %v1507 = vmul.f32 %v1474, %v520
      %1508 = vset.pattern.permute.xlu0 1
      %1509 = vperm.xlu0 %1508, %v1284
      %v1510 = vpop.permute.xlu0 %1509
      %1512 = vset.pattern.permute.xlu0 1
      %1513 = vperm.xlu0 %1512, %v1285
      %v1514 = vpop.permute.xlu0 %1513
      %1516 = vset.pattern.permute.xlu0 1
      %1517 = vperm.xlu0 %1516, %v1286
      %v1518 = vpop.permute.xlu0 %1517
      %1520 = vset.pattern.permute.xlu0 1
      %1521 = vperm.xlu0 %1520, %v1287
      %v1522 = vpop.permute.xlu0 %1521
      %1524 = vset.pattern.permute.xlu0 1
      %1525 = vperm.xlu0 %1524, %v1288
      %v1526 = vpop.permute.xlu0 %1525
      %1528 = vset.pattern.permute.xlu0 1
      %1529 = vperm.xlu0 %1528, %v1289
      %v1530 = vpop.permute.xlu0 %1529
      %1532 = vset.pattern.permute.xlu0 1
      %1533 = vperm.xlu0 %1532, %v1290
      %v1534 = vpop.permute.xlu0 %1533
      %1536 = vset.pattern.permute.xlu0 1
      %1537 = vperm.xlu0 %1536, %v1291
      %v1538 = vpop.permute.xlu0 %1537
      %1540 = vset.pattern.permute.xlu0 1
      %1541 = vperm.xlu0 %1540, %v1292
      %v1542 = vpop.permute.xlu0 %1541
      %1544 = vset.pattern.permute.xlu0 1
      %1545 = vperm.xlu0 %1544, %v1293
      %v1546 = vpop.permute.xlu0 %1545
      %1548 = vset.pattern.permute.xlu0 1
      %1549 = vperm.xlu0 %1548, %v1294
      %v1550 = vpop.permute.xlu0 %1549
      %1552 = vset.pattern.permute.xlu0 1
      %1553 = vperm.xlu0 %1552, %v1295
      %v1554 = vpop.permute.xlu0 %1553
      %1556 = vset.pattern.permute.xlu0 1
      %1557 = vperm.xlu0 %1556, %v1296
      %v1558 = vpop.permute.xlu0 %1557
      %1560 = vset.pattern.permute.xlu0 1
      %1561 = vperm.xlu0 %1560, %v1297
      %v1562 = vpop.permute.xlu0 %1561
      %1564 = vset.pattern.permute.xlu0 1
      %1565 = vperm.xlu0 %1564, %v1298
      %v1566 = vpop.permute.xlu0 %1565
      %1568 = vset.pattern.permute.xlu0 1
      %1569 = vperm.xlu0 %1568, %v1299
      %v1570 = vpop.permute.xlu0 %1569
      %1572 = vset.pattern.permute.xlu0 1
      %1573 = vperm.xlu0 %1572, %v1300
      %v1574 = vpop.permute.xlu0 %1573
      %1576 = vset.pattern.permute.xlu0 1
      %1577 = vperm.xlu0 %1576, %v1301
      %v1578 = vpop.permute.xlu0 %1577
      %1580 = vset.pattern.permute.xlu0 1
      %1581 = vperm.xlu0 %1580, %v1302
      %v1582 = vpop.permute.xlu0 %1581
      %1584 = vset.pattern.permute.xlu0 1
      %1585 = vperm.xlu0 %1584, %v1303
      %v1586 = vpop.permute.xlu0 %1585
      %1588 = vset.pattern.permute.xlu0 1
      %1589 = vperm.xlu0 %1588, %v1304
      %v1590 = vpop.permute.xlu0 %1589
      %1592 = vset.pattern.permute.xlu0 1
      %1593 = vperm.xlu0 %1592, %v1305
      %v1594 = vpop.permute.xlu0 %1593
      %1596 = vset.pattern.permute.xlu0 1
      %1597 = vperm.xlu0 %1596, %v1306
      %v1598 = vpop.permute.xlu0 %1597
      %1600 = vset.pattern.permute.xlu0 1
      %1601 = vperm.xlu0 %1600, %v1307
      %v1602 = vpop.permute.xlu0 %1601
      %1604 = vset.pattern.permute.xlu0 1
      %1605 = vperm.xlu0 %1604, %v1308
      %v1606 = vpop.permute.xlu0 %1605
      %1608 = vset.pattern.permute.xlu0 1
      %1609 = vperm.xlu0 %1608, %v1309
      %v1610 = vpop.permute.xlu0 %1609
      %1612 = vset.pattern.permute.xlu0 1
      %1613 = vperm.xlu0 %1612, %v1310
      %v1614 = vpop.permute.xlu0 %1613
      %1616 = vset.pattern.permute.xlu0 1
      %1617 = vperm.xlu0 %1616, %v1311
      %v1618 = vpop.permute.xlu0 %1617
      %1620 = vset.pattern.permute.xlu0 1
      %1621 = vperm.xlu0 %1620, %v1312
      %v1622 = vpop.permute.xlu0 %1621
      %1624 = vset.pattern.permute.xlu0 1
      %1625 = vperm.xlu0 %1624, %v1313
      %v1626 = vpop.permute.xlu0 %1625
      %1628 = vset.pattern.permute.xlu0 1
      %1629 = vperm.xlu0 %1628, %v1314
      %v1630 = vpop.permute.xlu0 %1629
      %1632 = vset.pattern.permute.xlu0 1
      %1633 = vperm.xlu0 %1632, %v1315
      %v1634 = vpop.permute.xlu0 %1633
      %v1636 = vmul.f32 %v1510, %v681
      %v1637 = vmul.f32 %v1514, %v681
      %v1638 = vmul.f32 %v1518, %v681
      %v1639 = vmul.f32 %v1522, %v681
      %v1640 = vmul.f32 %v1526, %v681
      %v1641 = vmul.f32 %v1530, %v681
      %v1642 = vmul.f32 %v1534, %v681
      %v1643 = vmul.f32 %v1538, %v681
      %v1644 = vmul.f32 %v1542, %v681
      %v1645 = vmul.f32 %v1546, %v681
      %v1646 = vmul.f32 %v1550, %v681
      %v1647 = vmul.f32 %v1554, %v681
      %v1648 = vmul.f32 %v1558, %v681
      %v1649 = vmul.f32 %v1562, %v681
      %v1650 = vmul.f32 %v1566, %v681
      %v1651 = vmul.f32 %v1570, %v681
      %v1652 = vmul.f32 %v1574, %v681
      %v1653 = vmul.f32 %v1578, %v681
      %v1654 = vmul.f32 %v1582, %v681
      %v1655 = vmul.f32 %v1586, %v681
      %v1656 = vmul.f32 %v1590, %v681
      %v1657 = vmul.f32 %v1594, %v681
      %v1658 = vmul.f32 %v1598, %v681
      %v1659 = vmul.f32 %v1602, %v681
      %v1660 = vmul.f32 %v1606, %v681
      %v1661 = vmul.f32 %v1610, %v681
      %v1662 = vmul.f32 %v1614, %v681
      %v1663 = vmul.f32 %v1618, %v681
      %v1664 = vmul.f32 %v1622, %v681
      %v1665 = vmul.f32 %v1626, %v681
      %v1666 = vmul.f32 %v1630, %v681
      %v1667 = vmul.f32 %v1634, %v681
      %v1668 = vadd.f32 %v1476, %v1636
      %v1669 = vadd.f32 %v1477, %v1637
      %v1670 = vadd.f32 %v1478, %v1638
      %v1671 = vadd.f32 %v1479, %v1639
      %v1672 = vadd.f32 %v1480, %v1640
      %v1673 = vadd.f32 %v1481, %v1641
      %v1674 = vadd.f32 %v1482, %v1642
      %v1675 = vadd.f32 %v1483, %v1643
      %v1676 = vadd.f32 %v1484, %v1644
      %v1677 = vadd.f32 %v1485, %v1645
      %v1678 = vadd.f32 %v1486, %v1646
      %v1679 = vadd.f32 %v1487, %v1647
      %v1680 = vadd.f32 %v1488, %v1648
      %v1681 = vadd.f32 %v1489, %v1649
      %v1682 = vadd.f32 %v1490, %v1650
      %v1683 = vadd.f32 %v1491, %v1651
      %v1684 = vadd.f32 %v1492, %v1652
      %v1685 = vadd.f32 %v1493, %v1653
      %v1686 = vadd.f32 %v1494, %v1654
      %v1687 = vadd.f32 %v1495, %v1655
      %v1688 = vadd.f32 %v1496, %v1656
      %v1689 = vadd.f32 %v1497, %v1657
      %v1690 = vadd.f32 %v1498, %v1658
      %v1691 = vadd.f32 %v1499, %v1659
      %v1692 = vadd.f32 %v1500, %v1660
      %v1693 = vadd.f32 %v1501, %v1661
      %v1694 = vadd.f32 %v1502, %v1662
      %v1695 = vadd.f32 %v1503, %v1663
      %v1696 = vadd.f32 %v1504, %v1664
      %v1697 = vadd.f32 %v1505, %v1665
      %v1698 = vadd.f32 %v1506, %v1666
      %v1699 = vadd.f32 %v1507, %v1667
      %1700 = vset.pattern.permute.xlu0 2
      %1701 = vperm.xlu0 %1700, %v1284
      %v1702 = vpop.permute.xlu0 %1701
      %1704 = vset.pattern.permute.xlu0 2
      %1705 = vperm.xlu0 %1704, %v1285
      %v1706 = vpop.permute.xlu0 %1705
      %1708 = vset.pattern.permute.xlu0 2
      %1709 = vperm.xlu0 %1708, %v1286
      %v1710 = vpop.permute.xlu0 %1709
      %1712 = vset.pattern.permute.xlu0 2
      %1713 = vperm.xlu0 %1712, %v1287
      %v1714 = vpop.permute.xlu0 %1713
      %1716 = vset.pattern.permute.xlu0 2
      %1717 = vperm.xlu0 %1716, %v1288
      %v1718 = vpop.permute.xlu0 %1717
      %1720 = vset.pattern.permute.xlu0 2
      %1721 = vperm.xlu0 %1720, %v1289
      %v1722 = vpop.permute.xlu0 %1721
      %1724 = vset.pattern.permute.xlu0 2
      %1725 = vperm.xlu0 %1724, %v1290
      %v1726 = vpop.permute.xlu0 %1725
      %1728 = vset.pattern.permute.xlu0 2
      %1729 = vperm.xlu0 %1728, %v1291
      %v1730 = vpop.permute.xlu0 %1729
      %1732 = vset.pattern.permute.xlu0 2
      %1733 = vperm.xlu0 %1732, %v1292
      %v1734 = vpop.permute.xlu0 %1733
      %1736 = vset.pattern.permute.xlu0 2
      %1737 = vperm.xlu0 %1736, %v1293
      %v1738 = vpop.permute.xlu0 %1737
      %1740 = vset.pattern.permute.xlu0 2
      %1741 = vperm.xlu0 %1740, %v1294
      %v1742 = vpop.permute.xlu0 %1741
      %1744 = vset.pattern.permute.xlu0 2
      %1745 = vperm.xlu0 %1744, %v1295
      %v1746 = vpop.permute.xlu0 %1745
      %1748 = vset.pattern.permute.xlu0 2
      %1749 = vperm.xlu0 %1748, %v1296
      %v1750 = vpop.permute.xlu0 %1749
      %1752 = vset.pattern.permute.xlu0 2
      %1753 = vperm.xlu0 %1752, %v1297
      %v1754 = vpop.permute.xlu0 %1753
      %1756 = vset.pattern.permute.xlu0 2
      %1757 = vperm.xlu0 %1756, %v1298
      %v1758 = vpop.permute.xlu0 %1757
      %1760 = vset.pattern.permute.xlu0 2
      %1761 = vperm.xlu0 %1760, %v1299
      %v1762 = vpop.permute.xlu0 %1761
      %1764 = vset.pattern.permute.xlu0 2
      %1765 = vperm.xlu0 %1764, %v1300
      %v1766 = vpop.permute.xlu0 %1765
      %1768 = vset.pattern.permute.xlu0 2
      %1769 = vperm.xlu0 %1768, %v1301
      %v1770 = vpop.permute.xlu0 %1769
      %1772 = vset.pattern.permute.xlu0 2
      %1773 = vperm.xlu0 %1772, %v1302
      %v1774 = vpop.permute.xlu0 %1773
      %1776 = vset.pattern.permute.xlu0 2
      %1777 = vperm.xlu0 %1776, %v1303
      %v1778 = vpop.permute.xlu0 %1777
      %1780 = vset.pattern.permute.xlu0 2
      %1781 = vperm.xlu0 %1780, %v1304
      %v1782 = vpop.permute.xlu0 %1781
      %1784 = vset.pattern.permute.xlu0 2
      %1785 = vperm.xlu0 %1784, %v1305
      %v1786 = vpop.permute.xlu0 %1785
      %1788 = vset.pattern.permute.xlu0 2
      %1789 = vperm.xlu0 %1788, %v1306
      %v1790 = vpop.permute.xlu0 %1789
      %1792 = vset.pattern.permute.xlu0 2
      %1793 = vperm.xlu0 %1792, %v1307
      %v1794 = vpop.permute.xlu0 %1793
      %1796 = vset.pattern.permute.xlu0 2
      %1797 = vperm.xlu0 %1796, %v1308
      %v1798 = vpop.permute.xlu0 %1797
      %1800 = vset.pattern.permute.xlu0 2
      %1801 = vperm.xlu0 %1800, %v1309
      %v1802 = vpop.permute.xlu0 %1801
      %1804 = vset.pattern.permute.xlu0 2
      %1805 = vperm.xlu0 %1804, %v1310
      %v1806 = vpop.permute.xlu0 %1805
      %1808 = vset.pattern.permute.xlu0 2
      %1809 = vperm.xlu0 %1808, %v1311
      %v1810 = vpop.permute.xlu0 %1809
      %1812 = vset.pattern.permute.xlu0 2
      %1813 = vperm.xlu0 %1812, %v1312
      %v1814 = vpop.permute.xlu0 %1813
      %1816 = vset.pattern.permute.xlu0 2
      %1817 = vperm.xlu0 %1816, %v1313
      %v1818 = vpop.permute.xlu0 %1817
      %1820 = vset.pattern.permute.xlu0 2
      %1821 = vperm.xlu0 %1820, %v1314
      %v1822 = vpop.permute.xlu0 %1821
      %1824 = vset.pattern.permute.xlu0 2
      %1825 = vperm.xlu0 %1824, %v1315
      %v1826 = vpop.permute.xlu0 %1825
      %v1828 = vmul.f32 %v1702, %v874
      %v1829 = vmul.f32 %v1706, %v874
      %v1830 = vmul.f32 %v1710, %v874
      %v1831 = vmul.f32 %v1714, %v874
      %v1832 = vmul.f32 %v1718, %v874
      %v1833 = vmul.f32 %v1722, %v874
      %v1834 = vmul.f32 %v1726, %v874
      %v1835 = vmul.f32 %v1730, %v874
      %v1836 = vmul.f32 %v1734, %v874
      %v1837 = vmul.f32 %v1738, %v874
      %v1838 = vmul.f32 %v1742, %v874
      %v1839 = vmul.f32 %v1746, %v874
      %v1840 = vmul.f32 %v1750, %v874
      %v1841 = vmul.f32 %v1754, %v874
      %v1842 = vmul.f32 %v1758, %v874
      %v1843 = vmul.f32 %v1762, %v874
      %v1844 = vmul.f32 %v1766, %v874
      %v1845 = vmul.f32 %v1770, %v874
      %v1846 = vmul.f32 %v1774, %v874
      %v1847 = vmul.f32 %v1778, %v874
      %v1848 = vmul.f32 %v1782, %v874
      %v1849 = vmul.f32 %v1786, %v874
      %v1850 = vmul.f32 %v1790, %v874
      %v1851 = vmul.f32 %v1794, %v874
      %v1852 = vmul.f32 %v1798, %v874
      %v1853 = vmul.f32 %v1802, %v874
      %v1854 = vmul.f32 %v1806, %v874
      %v1855 = vmul.f32 %v1810, %v874
      %v1856 = vmul.f32 %v1814, %v874
      %v1857 = vmul.f32 %v1818, %v874
      %v1858 = vmul.f32 %v1822, %v874
      %v1859 = vmul.f32 %v1826, %v874
      %v1860 = vadd.f32 %v1668, %v1828
      %v1861 = vadd.f32 %v1669, %v1829
      %v1862 = vadd.f32 %v1670, %v1830
      %v1863 = vadd.f32 %v1671, %v1831
      %v1864 = vadd.f32 %v1672, %v1832
      %v1865 = vadd.f32 %v1673, %v1833
      %v1866 = vadd.f32 %v1674, %v1834
      %v1867 = vadd.f32 %v1675, %v1835
      %v1868 = vadd.f32 %v1676, %v1836
      %v1869 = vadd.f32 %v1677, %v1837
      %v1870 = vadd.f32 %v1678, %v1838
      %v1871 = vadd.f32 %v1679, %v1839
      %v1872 = vadd.f32 %v1680, %v1840
      %v1873 = vadd.f32 %v1681, %v1841
      %v1874 = vadd.f32 %v1682, %v1842
      %v1875 = vadd.f32 %v1683, %v1843
      %v1876 = vadd.f32 %v1684, %v1844
      %v1877 = vadd.f32 %v1685, %v1845
      %v1878 = vadd.f32 %v1686, %v1846
      %v1879 = vadd.f32 %v1687, %v1847
      %v1880 = vadd.f32 %v1688, %v1848
      %v1881 = vadd.f32 %v1689, %v1849
      %v1882 = vadd.f32 %v1690, %v1850
      %v1883 = vadd.f32 %v1691, %v1851
      %v1884 = vadd.f32 %v1692, %v1852
      %v1885 = vadd.f32 %v1693, %v1853
      %v1886 = vadd.f32 %v1694, %v1854
      %v1887 = vadd.f32 %v1695, %v1855
      %v1888 = vadd.f32 %v1696, %v1856
      %v1889 = vadd.f32 %v1697, %v1857
      %v1890 = vadd.f32 %v1698, %v1858
      %v1891 = vadd.f32 %v1699, %v1859
      %vm1892 = vcmp.ge.f32.partialorder %v1860, 0.0
      %vm1893 = vcmp.ge.f32.partialorder %v1861, 0.0
      %vm1894 = vcmp.ge.f32.partialorder %v1862, 0.0
      %vm1895 = vcmp.ge.f32.partialorder %v1863, 0.0
      %vm1896 = vcmp.ge.f32.partialorder %v1864, 0.0
      %vm1897 = vcmp.ge.f32.partialorder %v1865, 0.0
      %vm1898 = vcmp.ge.f32.partialorder %v1866, 0.0
      %vm1899 = vcmp.ge.f32.partialorder %v1867, 0.0
      %vm1900 = vcmp.ge.f32.partialorder %v1868, 0.0
      %vm1901 = vcmp.ge.f32.partialorder %v1869, 0.0
      %vm1902 = vcmp.ge.f32.partialorder %v1870, 0.0
      %vm1903 = vcmp.ge.f32.partialorder %v1871, 0.0
      %vm1904 = vcmp.ge.f32.partialorder %v1872, 0.0
      %vm1905 = vcmp.ge.f32.partialorder %v1873, 0.0
      %vm1906 = vcmp.ge.f32.partialorder %v1874, 0.0
      %vm1907 = vcmp.ge.f32.partialorder %v1875, 0.0
      %vm1908 = vcmp.ge.f32.partialorder %v1876, 0.0
      %vm1909 = vcmp.ge.f32.partialorder %v1877, 0.0
      %vm1910 = vcmp.ge.f32.partialorder %v1878, 0.0
      %vm1911 = vcmp.ge.f32.partialorder %v1879, 0.0
      %vm1912 = vcmp.ge.f32.partialorder %v1880, 0.0
      %vm1913 = vcmp.ge.f32.partialorder %v1881, 0.0
      %vm1914 = vcmp.ge.f32.partialorder %v1882, 0.0
      %vm1915 = vcmp.ge.f32.partialorder %v1883, 0.0
      %vm1916 = vcmp.ge.f32.partialorder %v1884, 0.0
      %vm1917 = vcmp.ge.f32.partialorder %v1885, 0.0
      %vm1918 = vcmp.ge.f32.partialorder %v1886, 0.0
      %vm1919 = vcmp.ge.f32.partialorder %v1887, 0.0
      %vm1920 = vcmp.ge.f32.partialorder %v1888, 0.0
      %vm1921 = vcmp.ge.f32.partialorder %v1889, 0.0
      %vm1922 = vcmp.ge.f32.partialorder %v1890, 0.0
      %vm1923 = vcmp.ge.f32.partialorder %v1891, 0.0
      %v1924 = vmul.f32 %v1860, 0.2
      %v1925 = vmul.f32 %v1861, 0.2
      %v1926 = vmul.f32 %v1862, 0.2
      %v1927 = vmul.f32 %v1863, 0.2
      %v1928 = vmul.f32 %v1864, 0.2
      %v1929 = vmul.f32 %v1865, 0.2
      %v1930 = vmul.f32 %v1866, 0.2
      %v1931 = vmul.f32 %v1867, 0.2
      %v1932 = vmul.f32 %v1868, 0.2
      %v1933 = vmul.f32 %v1869, 0.2
      %v1934 = vmul.f32 %v1870, 0.2
      %v1935 = vmul.f32 %v1871, 0.2
      %v1936 = vmul.f32 %v1872, 0.2
      %v1937 = vmul.f32 %v1873, 0.2
      %v1938 = vmul.f32 %v1874, 0.2
      %v1939 = vmul.f32 %v1875, 0.2
      %v1940 = vmul.f32 %v1876, 0.2
      %v1941 = vmul.f32 %v1877, 0.2
      %v1942 = vmul.f32 %v1878, 0.2
      %v1943 = vmul.f32 %v1879, 0.2
      %v1944 = vmul.f32 %v1880, 0.2
      %v1945 = vmul.f32 %v1881, 0.2
      %v1946 = vmul.f32 %v1882, 0.2
      %v1947 = vmul.f32 %v1883, 0.2
      %v1948 = vmul.f32 %v1884, 0.2
      %v1949 = vmul.f32 %v1885, 0.2
      %v1950 = vmul.f32 %v1886, 0.2
      %v1951 = vmul.f32 %v1887, 0.2
      %v1952 = vmul.f32 %v1888, 0.2
      %v1953 = vmul.f32 %v1889, 0.2
      %v1954 = vmul.f32 %v1890, 0.2
      %v1955 = vmul.f32 %v1891, 0.2
      %v1956 = vsel %vm1892, %v1860, %v1924
      %v1957 = vsel %vm1893, %v1861, %v1925
      %v1958 = vsel %vm1894, %v1862, %v1926
      %v1959 = vsel %vm1895, %v1863, %v1927
      %v1960 = vsel %vm1896, %v1864, %v1928
      %v1961 = vsel %vm1897, %v1865, %v1929
      %v1962 = vsel %vm1898, %v1866, %v1930
      %v1963 = vsel %vm1899, %v1867, %v1931
      %v1964 = vsel %vm1900, %v1868, %v1932
      %v1965 = vsel %vm1901, %v1869, %v1933
      %v1966 = vsel %vm1902, %v1870, %v1934
      %v1967 = vsel %vm1903, %v1871, %v1935
      %v1968 = vsel %vm1904, %v1872, %v1936
      %v1969 = vsel %vm1905, %v1873, %v1937
      %v1970 = vsel %vm1906, %v1874, %v1938
      %v1971 = vsel %vm1907, %v1875, %v1939
      %v1972 = vsel %vm1908, %v1876, %v1940
      %v1973 = vsel %vm1909, %v1877, %v1941
      %v1974 = vsel %vm1910, %v1878, %v1942
      %v1975 = vsel %vm1911, %v1879, %v1943
      %v1976 = vsel %vm1912, %v1880, %v1944
      %v1977 = vsel %vm1913, %v1881, %v1945
      %v1978 = vsel %vm1914, %v1882, %v1946
      %v1979 = vsel %vm1915, %v1883, %v1947
      %v1980 = vsel %vm1916, %v1884, %v1948
      %v1981 = vsel %vm1917, %v1885, %v1949
      %v1982 = vsel %vm1918, %v1886, %v1950
      %v1983 = vsel %vm1919, %v1887, %v1951
      %v1984 = vsel %vm1920, %v1888, %v1952
      %v1985 = vsel %vm1921, %v1889, %v1953
      %v1986 = vsel %vm1922, %v1890, %v1954
      %v1987 = vsel %vm1923, %v1891, %v1955
      %v1988 = vpack.c.bf16 %v1957, %v1956
      %v1989 = vpack.c.bf16 %v1959, %v1958
      %v1990 = vpack.c.bf16 %v1961, %v1960
      %v1991 = vpack.c.bf16 %v1963, %v1962
      %v1992 = vpack.c.bf16 %v1965, %v1964
      %v1993 = vpack.c.bf16 %v1967, %v1966
      %v1994 = vpack.c.bf16 %v1969, %v1968
      %v1995 = vpack.c.bf16 %v1971, %v1970
      %v1996 = vpack.c.bf16 %v1973, %v1972
      %v1997 = vpack.c.bf16 %v1975, %v1974
      %v1998 = vpack.c.bf16 %v1977, %v1976
      %v1999 = vpack.c.bf16 %v1979, %v1978
      %v2000 = vpack.c.bf16 %v1981, %v1980
      %v2001 = vpack.c.bf16 %v1983, %v1982
      %v2002 = vpack.c.bf16 %v1985, %v1984
      %v2003 = vpack.c.bf16 %v1987, %v1986
      %2004 = vmatpush.bf16.msra.mxu0 %v1090
      %2005 = vmatpush.bf16.msra.mxu0 %v1089
      %2006 = vmatpush.bf16.msra.mxu0 %v1088
      %2007 = vmatpush.bf16.msra.mxu0 %v1087
      %2008 = vmatpush.bf16.msra.mxu0 %v1086
      %2009 = vmatpush.bf16.msra.mxu0 %v1085
      %2010 = vmatpush.bf16.msra.mxu0 %v1084
      %2011 = vmatpush.bf16.msra.mxu0 %v1083
      %2012 = vmatmul.bf16.gmra.mxu0 %v1988
      %v2013 = vpop.f32.mrf.mxu0
      %v2014 = vadd.f32 0.0, %v2013
      %v2015 = vpop.f32.mrf.mxu0
      %v2016 = vadd.f32 0.0, %v2015
      %2017 = vmatmul.bf16.gmra.mxu0 %v1989
      %v2018 = vpop.f32.mrf.mxu0
      %v2019 = vadd.f32 0.0, %v2018
      %v2020 = vpop.f32.mrf.mxu0
      %v2021 = vadd.f32 0.0, %v2020
      %2022 = vmatmul.bf16.gmra.mxu0 %v1990
      %v2023 = vpop.f32.mrf.mxu0
      %v2024 = vadd.f32 0.0, %v2023
      %v2025 = vpop.f32.mrf.mxu0
      %v2026 = vadd.f32 0.0, %v2025
      %2027 = vmatmul.bf16.gmra.mxu0 %v1991
      %v2028 = vpop.f32.mrf.mxu0
      %v2029 = vadd.f32 0.0, %v2028
      %v2030 = vpop.f32.mrf.mxu0
      %v2031 = vadd.f32 0.0, %v2030
      %2032 = vmatmul.bf16.gmra.mxu0 %v1992
      %v2033 = vpop.f32.mrf.mxu0
      %v2034 = vadd.f32 0.0, %v2033
      %v2035 = vpop.f32.mrf.mxu0
      %v2036 = vadd.f32 0.0, %v2035
      %2037 = vmatmul.bf16.gmra.mxu0 %v1993
      %v2038 = vpop.f32.mrf.mxu0
      %v2039 = vadd.f32 0.0, %v2038
      %v2040 = vpop.f32.mrf.mxu0
      %v2041 = vadd.f32 0.0, %v2040
      %2042 = vmatmul.bf16.gmra.mxu0 %v1994
      %v2043 = vpop.f32.mrf.mxu0
      %v2044 = vadd.f32 0.0, %v2043
      %v2045 = vpop.f32.mrf.mxu0
      %v2046 = vadd.f32 0.0, %v2045
      %2047 = vmatmul.bf16.gmra.mxu0 %v1995
      %v2048 = vpop.f32.mrf.mxu0
      %v2049 = vadd.f32 0.0, %v2048
      %v2050 = vpop.f32.mrf.mxu0
      %v2051 = vadd.f32 0.0, %v2050
      %2052 = vmatmul.bf16.gmra.mxu0 %v1996
      %v2053 = vpop.f32.mrf.mxu0
      %v2054 = vadd.f32 0.0, %v2053
      %v2055 = vpop.f32.mrf.mxu0
      %v2056 = vadd.f32 0.0, %v2055
      %2057 = vmatmul.bf16.gmra.mxu0 %v1997
      %v2058 = vpop.f32.mrf.mxu0
      %v2059 = vadd.f32 0.0, %v2058
      %v2060 = vpop.f32.mrf.mxu0
      %v2061 = vadd.f32 0.0, %v2060
      %2062 = vmatmul.bf16.gmra.mxu0 %v1998
      %v2063 = vpop.f32.mrf.mxu0
      %v2064 = vadd.f32 0.0, %v2063
      %v2065 = vpop.f32.mrf.mxu0
      %v2066 = vadd.f32 0.0, %v2065
      %2067 = vmatmul.bf16.gmra.mxu0 %v1999
      %v2068 = vpop.f32.mrf.mxu0
      %v2069 = vadd.f32 0.0, %v2068
      %v2070 = vpop.f32.mrf.mxu0
      %v2071 = vadd.f32 0.0, %v2070
      %2072 = vmatmul.bf16.gmra.mxu0 %v2000
      %v2073 = vpop.f32.mrf.mxu0
      %v2074 = vadd.f32 0.0, %v2073
      %v2075 = vpop.f32.mrf.mxu0
      %v2076 = vadd.f32 0.0, %v2075
      %2077 = vmatmul.bf16.gmra.mxu0 %v2001
      %v2078 = vpop.f32.mrf.mxu0
      %v2079 = vadd.f32 0.0, %v2078
      %v2080 = vpop.f32.mrf.mxu0
      %v2081 = vadd.f32 0.0, %v2080
      %2082 = vmatmul.bf16.gmra.mxu0 %v2002
      %v2083 = vpop.f32.mrf.mxu0
      %v2084 = vadd.f32 0.0, %v2083
      %v2085 = vpop.f32.mrf.mxu0
      %v2086 = vadd.f32 0.0, %v2085
      %2087 = vmatmul.bf16.gmra.mxu0 %v2003
      %v2088 = vpop.f32.mrf.mxu0
      %v2089 = vadd.f32 0.0, %v2088
      %v2090 = vpop.f32.mrf.mxu0
      %v2091 = vadd.f32 0.0, %v2090
      %2092 = vdwg.mxu0
      %vm2093 = vcmp.ge.f32.partialorder %v2014, 0.0
      %vm2094 = vcmp.ge.f32.partialorder %v2016, 0.0
      %vm2095 = vcmp.ge.f32.partialorder %v2019, 0.0
      %vm2096 = vcmp.ge.f32.partialorder %v2021, 0.0
      %vm2097 = vcmp.ge.f32.partialorder %v2024, 0.0
      %vm2098 = vcmp.ge.f32.partialorder %v2026, 0.0
      %vm2099 = vcmp.ge.f32.partialorder %v2029, 0.0
      %vm2100 = vcmp.ge.f32.partialorder %v2031, 0.0
      %vm2101 = vcmp.ge.f32.partialorder %v2034, 0.0
      %vm2102 = vcmp.ge.f32.partialorder %v2036, 0.0
      %vm2103 = vcmp.ge.f32.partialorder %v2039, 0.0
      %vm2104 = vcmp.ge.f32.partialorder %v2041, 0.0
      %vm2105 = vcmp.ge.f32.partialorder %v2044, 0.0
      %vm2106 = vcmp.ge.f32.partialorder %v2046, 0.0
      %vm2107 = vcmp.ge.f32.partialorder %v2049, 0.0
      %vm2108 = vcmp.ge.f32.partialorder %v2051, 0.0
      %vm2109 = vcmp.ge.f32.partialorder %v2054, 0.0
      %vm2110 = vcmp.ge.f32.partialorder %v2056, 0.0
      %vm2111 = vcmp.ge.f32.partialorder %v2059, 0.0
      %vm2112 = vcmp.ge.f32.partialorder %v2061, 0.0
      %vm2113 = vcmp.ge.f32.partialorder %v2064, 0.0
      %vm2114 = vcmp.ge.f32.partialorder %v2066, 0.0
      %vm2115 = vcmp.ge.f32.partialorder %v2069, 0.0
      %vm2116 = vcmp.ge.f32.partialorder %v2071, 0.0
      %vm2117 = vcmp.ge.f32.partialorder %v2074, 0.0
      %vm2118 = vcmp.ge.f32.partialorder %v2076, 0.0
      %vm2119 = vcmp.ge.f32.partialorder %v2079, 0.0
      %vm2120 = vcmp.ge.f32.partialorder %v2081, 0.0
      %vm2121 = vcmp.ge.f32.partialorder %v2084, 0.0
      %vm2122 = vcmp.ge.f32.partialorder %v2086, 0.0
      %vm2123 = vcmp.ge.f32.partialorder %v2089, 0.0
      %vm2124 = vcmp.ge.f32.partialorder %v2091, 0.0
      %v2125 = vmul.f32 %v2014, 0.2
      %v2126 = vmul.f32 %v2016, 0.2
      %v2127 = vmul.f32 %v2019, 0.2
      %v2128 = vmul.f32 %v2021, 0.2
      %v2129 = vmul.f32 %v2024, 0.2
      %v2130 = vmul.f32 %v2026, 0.2
      %v2131 = vmul.f32 %v2029, 0.2
      %v2132 = vmul.f32 %v2031, 0.2
      %v2133 = vmul.f32 %v2034, 0.2
      %v2134 = vmul.f32 %v2036, 0.2
      %v2135 = vmul.f32 %v2039, 0.2
      %v2136 = vmul.f32 %v2041, 0.2
      %v2137 = vmul.f32 %v2044, 0.2
      %v2138 = vmul.f32 %v2046, 0.2
      %v2139 = vmul.f32 %v2049, 0.2
      %v2140 = vmul.f32 %v2051, 0.2
      %v2141 = vmul.f32 %v2054, 0.2
      %v2142 = vmul.f32 %v2056, 0.2
      %v2143 = vmul.f32 %v2059, 0.2
      %v2144 = vmul.f32 %v2061, 0.2
      %v2145 = vmul.f32 %v2064, 0.2
      %v2146 = vmul.f32 %v2066, 0.2
      %v2147 = vmul.f32 %v2069, 0.2
      %v2148 = vmul.f32 %v2071, 0.2
      %v2149 = vmul.f32 %v2074, 0.2
      %v2150 = vmul.f32 %v2076, 0.2
      %v2151 = vmul.f32 %v2079, 0.2
      %v2152 = vmul.f32 %v2081, 0.2
      %v2153 = vmul.f32 %v2084, 0.2
      %v2154 = vmul.f32 %v2086, 0.2
      %v2155 = vmul.f32 %v2089, 0.2
      %v2156 = vmul.f32 %v2091, 0.2
      %v2157 = vsel %vm2093, %v2014, %v2125
      %v2158 = vsel %vm2094, %v2016, %v2126
      %v2159 = vsel %vm2095, %v2019, %v2127
      %v2160 = vsel %vm2096, %v2021, %v2128
      %v2161 = vsel %vm2097, %v2024, %v2129
      %v2162 = vsel %vm2098, %v2026, %v2130
      %v2163 = vsel %vm2099, %v2029, %v2131
      %v2164 = vsel %vm2100, %v2031, %v2132
      %v2165 = vsel %vm2101, %v2034, %v2133
      %v2166 = vsel %vm2102, %v2036, %v2134
      %v2167 = vsel %vm2103, %v2039, %v2135
      %v2168 = vsel %vm2104, %v2041, %v2136
      %v2169 = vsel %vm2105, %v2044, %v2137
      %v2170 = vsel %vm2106, %v2046, %v2138
      %v2171 = vsel %vm2107, %v2049, %v2139
      %v2172 = vsel %vm2108, %v2051, %v2140
      %v2173 = vsel %vm2109, %v2054, %v2141
      %v2174 = vsel %vm2110, %v2056, %v2142
      %v2175 = vsel %vm2111, %v2059, %v2143
      %v2176 = vsel %vm2112, %v2061, %v2144
      %v2177 = vsel %vm2113, %v2064, %v2145
      %v2178 = vsel %vm2114, %v2066, %v2146
      %v2179 = vsel %vm2115, %v2069, %v2147
      %v2180 = vsel %vm2116, %v2071, %v2148
      %v2181 = vsel %vm2117, %v2074, %v2149
      %v2182 = vsel %vm2118, %v2076, %v2150
      %v2183 = vsel %vm2119, %v2079, %v2151
      %v2184 = vsel %vm2120, %v2081, %v2152
      %v2185 = vsel %vm2121, %v2084, %v2153
      %v2186 = vsel %vm2122, %v2086, %v2154
      %v2187 = vsel %vm2123, %v2089, %v2155
      %v2188 = vsel %vm2124, %v2091, %v2156
      %v2189 = vpack.c.bf16 %v2158, %v2157
      %v2190 = vpack.c.bf16 %v2160, %v2159
      %v2191 = vpack.c.bf16 %v2162, %v2161
      %v2192 = vpack.c.bf16 %v2164, %v2163
      %v2193 = vpack.c.bf16 %v2166, %v2165
      %v2194 = vpack.c.bf16 %v2168, %v2167
      %v2195 = vpack.c.bf16 %v2170, %v2169
      %v2196 = vpack.c.bf16 %v2172, %v2171
      %v2197 = vpack.c.bf16 %v2174, %v2173
      %v2198 = vpack.c.bf16 %v2176, %v2175
      %v2199 = vpack.c.bf16 %v2178, %v2177
      %v2200 = vpack.c.bf16 %v2180, %v2179
      %v2201 = vpack.c.bf16 %v2182, %v2181
      %v2202 = vpack.c.bf16 %v2184, %v2183
      %v2203 = vpack.c.bf16 %v2186, %v2185
      %v2204 = vpack.c.bf16 %v2188, %v2187
      %v2221 = vunpack.c.l.b16 %v312
      %v2222 = vunpack.c.l.b16 %v313
      %v2223 = vunpack.c.l.b16 %v314
      %v2224 = vunpack.c.l.b16 %v315
      %v2225 = vunpack.c.l.b16 %v316
      %v2226 = vunpack.c.l.b16 %v317
      %v2227 = vunpack.c.l.b16 %v318
      %v2228 = vunpack.c.l.b16 %v319
      %v2229 = vunpack.c.l.b16 %v320
      %v2230 = vunpack.c.l.b16 %v321
      %v2231 = vunpack.c.l.b16 %v322
      %v2232 = vunpack.c.l.b16 %v323
      %v2233 = vunpack.c.l.b16 %v324
      %v2234 = vunpack.c.l.b16 %v325
      %v2235 = vunpack.c.l.b16 %v326
      %v2236 = vunpack.c.l.b16 %v327
      %v2237 = vpack.c.b16 %v2222, %v2221
      %v2238 = vpack.c.b16 %v2224, %v2223
      %v2239 = vpack.c.b16 %v2226, %v2225
      %v2240 = vpack.c.b16 %v2228, %v2227
      %v2241 = vpack.c.b16 %v2230, %v2229
      %v2242 = vpack.c.b16 %v2232, %v2231
      %v2243 = vpack.c.b16 %v2234, %v2233
      %v2244 = vpack.c.b16 %v2236, %v2235
      %2253 = vmatpush.bf16.msra.mxu0 %v2244
      %2254 = vmatpush.bf16.msra.mxu0 %v2243
      %2255 = vmatpush.bf16.msra.mxu0 %v2242
      %2256 = vmatpush.bf16.msra.mxu0 %v2241
      %2257 = vmatpush.bf16.msra.mxu0 %v2240
      %2258 = vmatpush.bf16.msra.mxu0 %v2239
      %2259 = vmatpush.bf16.msra.mxu0 %v2238
      %2260 = vmatpush.bf16.msra.mxu0 %v2237
      %2261 = vmatmul.bf16.gmra.mxu0 %v2189
      %v2262 = vpop.f32.mrf.mxu0
      %v2263 = vadd.f32 0.0, %v2262
      %v2264 = vpop.f32.mrf.mxu0
      %v2265 = vadd.f32 0.0, %v2264
      %2266 = vmatmul.bf16.gmra.mxu0 %v2190
      %v2267 = vpop.f32.mrf.mxu0
      %v2268 = vadd.f32 0.0, %v2267
      %v2269 = vpop.f32.mrf.mxu0
      %v2270 = vadd.f32 0.0, %v2269
      %2271 = vmatmul.bf16.gmra.mxu0 %v2191
      %v2272 = vpop.f32.mrf.mxu0
      %v2273 = vadd.f32 0.0, %v2272
      %v2274 = vpop.f32.mrf.mxu0
      %v2275 = vadd.f32 0.0, %v2274
      %2276 = vmatmul.bf16.gmra.mxu0 %v2192
      %v2277 = vpop.f32.mrf.mxu0
      %v2278 = vadd.f32 0.0, %v2277
      %v2279 = vpop.f32.mrf.mxu0
      %v2280 = vadd.f32 0.0, %v2279
      %2281 = vmatmul.bf16.gmra.mxu0 %v2193
      %v2282 = vpop.f32.mrf.mxu0
      %v2283 = vadd.f32 0.0, %v2282
      %v2284 = vpop.f32.mrf.mxu0
      %v2285 = vadd.f32 0.0, %v2284
      %2286 = vmatmul.bf16.gmra.mxu0 %v2194
      %v2287 = vpop.f32.mrf.mxu0
      %v2288 = vadd.f32 0.0, %v2287
      %v2289 = vpop.f32.mrf.mxu0
      %v2290 = vadd.f32 0.0, %v2289
      %2291 = vmatmul.bf16.gmra.mxu0 %v2195
      %v2292 = vpop.f32.mrf.mxu0
      %v2293 = vadd.f32 0.0, %v2292
      %v2294 = vpop.f32.mrf.mxu0
      %v2295 = vadd.f32 0.0, %v2294
      %2296 = vmatmul.bf16.gmra.mxu0 %v2196
      %v2297 = vpop.f32.mrf.mxu0
      %v2298 = vadd.f32 0.0, %v2297
      %v2299 = vpop.f32.mrf.mxu0
      %v2300 = vadd.f32 0.0, %v2299
      %2301 = vmatmul.bf16.gmra.mxu0 %v2197
      %v2302 = vpop.f32.mrf.mxu0
      %v2303 = vadd.f32 0.0, %v2302
      %v2304 = vpop.f32.mrf.mxu0
      %v2305 = vadd.f32 0.0, %v2304
      %2306 = vmatmul.bf16.gmra.mxu0 %v2198
      %v2307 = vpop.f32.mrf.mxu0
      %v2308 = vadd.f32 0.0, %v2307
      %v2309 = vpop.f32.mrf.mxu0
      %v2310 = vadd.f32 0.0, %v2309
      %2311 = vmatmul.bf16.gmra.mxu0 %v2199
      %v2312 = vpop.f32.mrf.mxu0
      %v2313 = vadd.f32 0.0, %v2312
      %v2314 = vpop.f32.mrf.mxu0
      %v2315 = vadd.f32 0.0, %v2314
      %2316 = vmatmul.bf16.gmra.mxu0 %v2200
      %v2317 = vpop.f32.mrf.mxu0
      %v2318 = vadd.f32 0.0, %v2317
      %v2319 = vpop.f32.mrf.mxu0
      %v2320 = vadd.f32 0.0, %v2319
      %2321 = vmatmul.bf16.gmra.mxu0 %v2201
      %v2322 = vpop.f32.mrf.mxu0
      %v2323 = vadd.f32 0.0, %v2322
      %v2324 = vpop.f32.mrf.mxu0
      %v2325 = vadd.f32 0.0, %v2324
      %2326 = vmatmul.bf16.gmra.mxu0 %v2202
      %v2327 = vpop.f32.mrf.mxu0
      %v2328 = vadd.f32 0.0, %v2327
      %v2329 = vpop.f32.mrf.mxu0
      %v2330 = vadd.f32 0.0, %v2329
      %2331 = vmatmul.bf16.gmra.mxu0 %v2203
      %v2332 = vpop.f32.mrf.mxu0
      %v2333 = vadd.f32 0.0, %v2332
      %v2334 = vpop.f32.mrf.mxu0
      %v2335 = vadd.f32 0.0, %v2334
      %2336 = vmatmul.bf16.gmra.mxu0 %v2204
      %v2337 = vpop.f32.mrf.mxu0
      %v2338 = vadd.f32 0.0, %v2337
      %v2339 = vpop.f32.mrf.mxu0
      %v2340 = vadd.f32 0.0, %v2339
      %2341 = vdwg.mxu0
      %v2342 = vsub.f32 %v1003, %v1956
      %v2343 = vsub.f32 %v1004, %v1957
      %v2344 = vsub.f32 %v1005, %v1958
      %v2345 = vsub.f32 %v1006, %v1959
      %v2346 = vsub.f32 %v1007, %v1960
      %v2347 = vsub.f32 %v1008, %v1961
      %v2348 = vsub.f32 %v1009, %v1962
      %v2349 = vsub.f32 %v1010, %v1963
      %v2350 = vsub.f32 %v1011, %v1964
      %v2351 = vsub.f32 %v1012, %v1965
      %v2352 = vsub.f32 %v1013, %v1966
      %v2353 = vsub.f32 %v1014, %v1967
      %v2354 = vsub.f32 %v1015, %v1968
      %v2355 = vsub.f32 %v1016, %v1969
      %v2356 = vsub.f32 %v1017, %v1970
      %v2357 = vsub.f32 %v1018, %v1971
      %v2358 = vsub.f32 %v1019, %v1972
      %v2359 = vsub.f32 %v1020, %v1973
      %v2360 = vsub.f32 %v1021, %v1974
      %v2361 = vsub.f32 %v1022, %v1975
      %v2362 = vsub.f32 %v1023, %v1976
      %v2363 = vsub.f32 %v1024, %v1977
      %v2364 = vsub.f32 %v1025, %v1978
      %v2365 = vsub.f32 %v1026, %v1979
      %v2366 = vsub.f32 %v1027, %v1980
      %v2367 = vsub.f32 %v1028, %v1981
      %v2368 = vsub.f32 %v1029, %v1982
      %v2369 = vsub.f32 %v1030, %v1983
      %v2370 = vsub.f32 %v1031, %v1984
      %v2371 = vsub.f32 %v1032, %v1985
      %v2372 = vsub.f32 %v1033, %v1986
      %v2373 = vsub.f32 %v1034, %v1987
      %v2374 = vand.u32 2147483647, %v2342
      %v2375 = vand.u32 2147483647, %v2343
      %v2376 = vand.u32 2147483647, %v2344
      %v2377 = vand.u32 2147483647, %v2345
      %v2378 = vand.u32 2147483647, %v2346
      %v2379 = vand.u32 2147483647, %v2347
      %v2380 = vand.u32 2147483647, %v2348
      %v2381 = vand.u32 2147483647, %v2349
      %v2382 = vand.u32 2147483647, %v2350
      %v2383 = vand.u32 2147483647, %v2351
      %v2384 = vand.u32 2147483647, %v2352
      %v2385 = vand.u32 2147483647, %v2353
      %v2386 = vand.u32 2147483647, %v2354
      %v2387 = vand.u32 2147483647, %v2355
      %v2388 = vand.u32 2147483647, %v2356
      %v2389 = vand.u32 2147483647, %v2357
      %v2390 = vand.u32 2147483647, %v2358
      %v2391 = vand.u32 2147483647, %v2359
      %v2392 = vand.u32 2147483647, %v2360
      %v2393 = vand.u32 2147483647, %v2361
      %v2394 = vand.u32 2147483647, %v2362
      %v2395 = vand.u32 2147483647, %v2363
      %v2396 = vand.u32 2147483647, %v2364
      %v2397 = vand.u32 2147483647, %v2365
      %v2398 = vand.u32 2147483647, %v2366
      %v2399 = vand.u32 2147483647, %v2367
      %v2400 = vand.u32 2147483647, %v2368
      %v2401 = vand.u32 2147483647, %v2369
      %v2402 = vand.u32 2147483647, %v2370
      %v2403 = vand.u32 2147483647, %v2371
      %v2404 = vand.u32 2147483647, %v2372
      %v2405 = vand.u32 2147483647, %v2373
      %v2406 = vadd.f32 %v2374, %v2375
      %v2407 = vadd.f32 %v2406, %v2376
      %v2408 = vadd.f32 %v2407, %v2377
      %v2409 = vadd.f32 %v2408, %v2378
      %v2410 = vadd.f32 %v2409, %v2379
      %v2411 = vadd.f32 %v2410, %v2380
      %v2412 = vadd.f32 %v2411, %v2381
      %v2413 = vadd.f32 %v2412, %v2382
      %v2414 = vadd.f32 %v2413, %v2383
      %v2415 = vadd.f32 %v2414, %v2384
      %v2416 = vadd.f32 %v2415, %v2385
      %v2417 = vadd.f32 %v2416, %v2386
      %v2418 = vadd.f32 %v2417, %v2387
      %v2419 = vadd.f32 %v2418, %v2388
      %v2420 = vadd.f32 %v2419, %v2389
      %v2421 = vadd.f32 %v2420, %v2390
      %v2422 = vadd.f32 %v2421, %v2391
      %v2423 = vadd.f32 %v2422, %v2392
      %v2424 = vadd.f32 %v2423, %v2393
      %v2425 = vadd.f32 %v2424, %v2394
      %v2426 = vadd.f32 %v2425, %v2395
      %v2427 = vadd.f32 %v2426, %v2396
      %v2428 = vadd.f32 %v2427, %v2397
      %v2429 = vadd.f32 %v2428, %v2398
      %v2430 = vadd.f32 %v2429, %v2399
      %v2431 = vadd.f32 %v2430, %v2400
      %v2432 = vadd.f32 %v2431, %v2401
      %v2433 = vadd.f32 %v2432, %v2402
      %v2434 = vadd.f32 %v2433, %v2403
      %v2435 = vadd.f32 %v2434, %v2404
      %v2436 = vadd.f32 %v2435, %v2405
      %2437 = vadd.xlane.f32.xlu0 %v2436
      %v2438 = vpop.xlane.xlu0 %2437
      %v2439 = vrot.slane %v2438, 4
      %v2440 = vadd.f32 %v2438, %v2439
      %v2441 = vrot.slane %v2440, 2
      %v2442 = vadd.f32 %v2440, %v2441
      %v2443 = vrot.slane %v2442, 1
      %v2444 = vadd.f32 %v2442, %v2443
      %s2445 = vtos %v2444
      %v2446 = vsub.f32 %v1252, %v2157
      %v2447 = vsub.f32 %v1253, %v2158
      %v2448 = vsub.f32 %v1254, %v2159
      %v2449 = vsub.f32 %v1255, %v2160
      %v2450 = vsub.f32 %v1256, %v2161
      %v2451 = vsub.f32 %v1257, %v2162
      %v2452 = vsub.f32 %v1258, %v2163
      %v2453 = vsub.f32 %v1259, %v2164
      %v2454 = vsub.f32 %v1260, %v2165
      %v2455 = vsub.f32 %v1261, %v2166
      %v2456 = vsub.f32 %v1262, %v2167
      %v2457 = vsub.f32 %v1263, %v2168
      %v2458 = vsub.f32 %v1264, %v2169
      %v2459 = vsub.f32 %v1265, %v2170
      %v2460 = vsub.f32 %v1266, %v2171
      %v2461 = vsub.f32 %v1267, %v2172
      %v2462 = vsub.f32 %v1268, %v2173
      %v2463 = vsub.f32 %v1269, %v2174
      %v2464 = vsub.f32 %v1270, %v2175
      %v2465 = vsub.f32 %v1271, %v2176
      %v2466 = vsub.f32 %v1272, %v2177
      %v2467 = vsub.f32 %v1273, %v2178
      %v2468 = vsub.f32 %v1274, %v2179
      %v2469 = vsub.f32 %v1275, %v2180
      %v2470 = vsub.f32 %v1276, %v2181
      %v2471 = vsub.f32 %v1277, %v2182
      %v2472 = vsub.f32 %v1278, %v2183
      %v2473 = vsub.f32 %v1279, %v2184
      %v2474 = vsub.f32 %v1280, %v2185
      %v2475 = vsub.f32 %v1281, %v2186
      %v2476 = vsub.f32 %v1282, %v2187
      %v2477 = vsub.f32 %v1283, %v2188
      %v2478 = vand.u32 2147483647, %v2446
      %v2479 = vand.u32 2147483647, %v2447
      %v2480 = vand.u32 2147483647, %v2448
      %v2481 = vand.u32 2147483647, %v2449
      %v2482 = vand.u32 2147483647, %v2450
      %v2483 = vand.u32 2147483647, %v2451
      %v2484 = vand.u32 2147483647, %v2452
      %v2485 = vand.u32 2147483647, %v2453
      %v2486 = vand.u32 2147483647, %v2454
      %v2487 = vand.u32 2147483647, %v2455
      %v2488 = vand.u32 2147483647, %v2456
      %v2489 = vand.u32 2147483647, %v2457
      %v2490 = vand.u32 2147483647, %v2458
      %v2491 = vand.u32 2147483647, %v2459
      %v2492 = vand.u32 2147483647, %v2460
      %v2493 = vand.u32 2147483647, %v2461
      %v2494 = vand.u32 2147483647, %v2462
      %v2495 = vand.u32 2147483647, %v2463
      %v2496 = vand.u32 2147483647, %v2464
      %v2497 = vand.u32 2147483647, %v2465
      %v2498 = vand.u32 2147483647, %v2466
      %v2499 = vand.u32 2147483647, %v2467
      %v2500 = vand.u32 2147483647, %v2468
      %v2501 = vand.u32 2147483647, %v2469
      %v2502 = vand.u32 2147483647, %v2470
      %v2503 = vand.u32 2147483647, %v2471
      %v2504 = vand.u32 2147483647, %v2472
      %v2505 = vand.u32 2147483647, %v2473
      %v2506 = vand.u32 2147483647, %v2474
      %v2507 = vand.u32 2147483647, %v2475
      %v2508 = vand.u32 2147483647, %v2476
      %v2509 = vand.u32 2147483647, %v2477
      %v2510 = vadd.f32 %v2478, %v2479
      %v2511 = vadd.f32 %v2510, %v2480
      %v2512 = vadd.f32 %v2511, %v2481
      %v2513 = vadd.f32 %v2512, %v2482
      %v2514 = vadd.f32 %v2513, %v2483
      %v2515 = vadd.f32 %v2514, %v2484
      %v2516 = vadd.f32 %v2515, %v2485
      %v2517 = vadd.f32 %v2516, %v2486
      %v2518 = vadd.f32 %v2517, %v2487
      %v2519 = vadd.f32 %v2518, %v2488
      %v2520 = vadd.f32 %v2519, %v2489
      %v2521 = vadd.f32 %v2520, %v2490
      %v2522 = vadd.f32 %v2521, %v2491
      %v2523 = vadd.f32 %v2522, %v2492
      %v2524 = vadd.f32 %v2523, %v2493
      %v2525 = vadd.f32 %v2524, %v2494
      %v2526 = vadd.f32 %v2525, %v2495
      %v2527 = vadd.f32 %v2526, %v2496
      %v2528 = vadd.f32 %v2527, %v2497
      %v2529 = vadd.f32 %v2528, %v2498
      %v2530 = vadd.f32 %v2529, %v2499
      %v2531 = vadd.f32 %v2530, %v2500
      %v2532 = vadd.f32 %v2531, %v2501
      %v2533 = vadd.f32 %v2532, %v2502
      %v2534 = vadd.f32 %v2533, %v2503
      %v2535 = vadd.f32 %v2534, %v2504
      %v2536 = vadd.f32 %v2535, %v2505
      %v2537 = vadd.f32 %v2536, %v2506
      %v2538 = vadd.f32 %v2537, %v2507
      %v2539 = vadd.f32 %v2538, %v2508
      %v2540 = vadd.f32 %v2539, %v2509
      %2541 = vadd.xlane.f32.xlu0 %v2540
      %v2542 = vpop.xlane.xlu0 %2541
      %v2543 = vrot.slane %v2542, 4
      %v2544 = vadd.f32 %v2542, %v2543
      %v2545 = vrot.slane %v2544, 2
      %v2546 = vadd.f32 %v2544, %v2545
      %v2547 = vrot.slane %v2546, 1
      %v2548 = vadd.f32 %v2546, %v2547
      %s2549 = vtos %v2548
      %s2550 = sadd.f32 %s2445, %s2549
      %v2551 = vsub.f32 0.0, %v2263
      %v2552 = vsub.f32 0.0, %v2265
      %v2553 = vsub.f32 0.0, %v2268
      %v2554 = vsub.f32 0.0, %v2270
      %v2555 = vsub.f32 0.0, %v2273
      %v2556 = vsub.f32 0.0, %v2275
      %v2557 = vsub.f32 0.0, %v2278
      %v2558 = vsub.f32 0.0, %v2280
      %v2559 = vsub.f32 0.0, %v2283
      %v2560 = vsub.f32 0.0, %v2285
      %v2561 = vsub.f32 0.0, %v2288
      %v2562 = vsub.f32 0.0, %v2290
      %v2563 = vsub.f32 0.0, %v2293
      %v2564 = vsub.f32 0.0, %v2295
      %v2565 = vsub.f32 0.0, %v2298
      %v2566 = vsub.f32 0.0, %v2300
      %v2567 = vsub.f32 0.0, %v2303
      %v2568 = vsub.f32 0.0, %v2305
      %v2569 = vsub.f32 0.0, %v2308
      %v2570 = vsub.f32 0.0, %v2310
      %v2571 = vsub.f32 0.0, %v2313
      %v2572 = vsub.f32 0.0, %v2315
      %v2573 = vsub.f32 0.0, %v2318
      %v2574 = vsub.f32 0.0, %v2320
      %v2575 = vsub.f32 0.0, %v2323
      %v2576 = vsub.f32 0.0, %v2325
      %v2577 = vsub.f32 0.0, %v2328
      %v2578 = vsub.f32 0.0, %v2330
      %v2579 = vsub.f32 0.0, %v2333
      %v2580 = vsub.f32 0.0, %v2335
      %v2581 = vsub.f32 0.0, %v2338
      %v2582 = vsub.f32 0.0, %v2340
      %v2583 = vadd.f32 %v2551, %v2552
      %v2584 = vadd.f32 %v2583, %v2553
      %v2585 = vadd.f32 %v2584, %v2554
      %v2586 = vadd.f32 %v2585, %v2555
      %v2587 = vadd.f32 %v2586, %v2556
      %v2588 = vadd.f32 %v2587, %v2557
      %v2589 = vadd.f32 %v2588, %v2558
      %v2590 = vadd.f32 %v2589, %v2559
      %v2591 = vadd.f32 %v2590, %v2560
      %v2592 = vadd.f32 %v2591, %v2561
      %v2593 = vadd.f32 %v2592, %v2562
      %v2594 = vadd.f32 %v2593, %v2563
      %v2595 = vadd.f32 %v2594, %v2564
      %v2596 = vadd.f32 %v2595, %v2565
      %v2597 = vadd.f32 %v2596, %v2566
      %v2598 = vadd.f32 %v2597, %v2567
      %v2599 = vadd.f32 %v2598, %v2568
      %v2600 = vadd.f32 %v2599, %v2569
      %v2601 = vadd.f32 %v2600, %v2570
      %v2602 = vadd.f32 %v2601, %v2571
      %v2603 = vadd.f32 %v2602, %v2572
      %v2604 = vadd.f32 %v2603, %v2573
      %v2605 = vadd.f32 %v2604, %v2574
      %v2606 = vadd.f32 %v2605, %v2575
      %v2607 = vadd.f32 %v2606, %v2576
      %v2608 = vadd.f32 %v2607, %v2577
      %v2609 = vadd.f32 %v2608, %v2578
      %v2610 = vadd.f32 %v2609, %v2579
      %v2611 = vadd.f32 %v2610, %v2580
      %v2612 = vadd.f32 %v2611, %v2581
      %v2613 = vadd.f32 %v2612, %v2582
      %2614 = vadd.xlane.f32.xlu0 %v2613
      %v2615 = vpop.xlane.xlu0 %2614
      %v2616 = vrot.slane %v2615, 4
      %v2617 = vadd.f32 %v2615, %v2616
      %v2618 = vrot.slane %v2617, 2
      %v2619 = vadd.f32 %v2617, %v2618
      %v2620 = vrot.slane %v2619, 1
      %v2621 = vadd.f32 %v2619, %v2620
      %s2622 = vtos %v2621
      %s2623 = smul.f32 %s2550, 0.00012207031
      %s2624 = smul.f32 %s2622, 0.001953125
      %s2625 = sadd.f32 %s2623, %s2624
      %v2626 = vstv %s2625
      %2627 = vst [vmem:[%s294] sm:$0xff] %v2626
      %p2628 = scmp.lt.s32.totalorder %s20, 1
      %s2629 = scalar_select %p2628, %s20, 1
      %p2630 = scmp.lt.s32.totalorder %s21, 0
      %s2631 = scalar_select %p2630, %s21, 0
      %s2632 = sadd.s32 %s2631, %s2629
      %s2633 = smul.addr %s2632, 8
      %s2634 = scalar_lea.vmem %s5, %s2633
      // Predicated region
      $region41: #{full_generator_forward.31} parent=39 // pred_check
        %p2635 = pneg %p167
      $region42: #{full_generator_forward.31} parent=39 // pred_check_branch
        %2637 = sbr.rel (%p2635) target = $region44
      $region43: #{full_generator_forward.31} parent=39 // pred_region
        _
      $region44: #{full_generator_forward.31} parent=39 // pred_fallthru
        _
    $region40: #{full_generator_forward.31} parent=5 // pred_fallthru
      _
    %p2638 = scmp.le.s32.totalorder 2, %s11
    // Predicated region
    $region45: #{full_generator_forward.31} parent=5 // pred_check
      %p2639 = pneg %p2638
    $region46: #{full_generator_forward.31} parent=5 // pred_check_branch
      %2641 = sbr.rel (%p2639) target = $region48
    $region47: #{full_generator_forward.31} parent=5 // pred_region
      %s2642 = ssub.s32 %s11, 2
      // Predicated region
      $region49: #{full_generator_forward.31} parent=47 // pred_check
        %p2643 = pneg %p173
      $region50: #{full_generator_forward.31} parent=47 // pred_check_branch
        %2645 = sbr.rel (%p2643) target = $region52
      $region51: #{full_generator_forward.31} parent=47 // pred_region
        %p2646 = scmp.lt.s32.totalorder %s22, 1
        %s2647 = scalar_select %p2646, %s22, 1
        %p2648 = scmp.lt.s32.totalorder %s23, 0
        %s2649 = scalar_select %p2648, %s23, 0
        %s2650 = sadd.s32 %s2649, %s2647
        %s2651 = smul.addr %s2650, 8
        %s2652 = scalar_lea.vmem %s5, %s2651
      $region52: #{full_generator_forward.31} parent=47 // pred_fallthru
        _
    $region48: #{full_generator_forward.31} parent=5 // pred_fallthru
      _
  $region6: #{full_generator_forward.31} parent=0 // loop_footer
    %s15 = sadd.s32 1, %s11
  $region7: #{full_generator_forward.31} parent=0 // loop_footer_branch
    %10 = sbr.rel target = $region3
  $region8: #{full_generator_forward.31} parent=0 // loop_exit
    _

// kernel: full_generator_forward.28
$region0: #{full_generator_forward.28}
  #allocation0 [shape = 'u32[]', space=smem, size = 0x4, offset = 0x4, fixed_abs, tag = 'smem constant byte address 0x4 - core index']
  #allocation1 [shape = 'u32[72,128]{1,0:T(1,128)}', space=vmem, size = 0x9000, scoped, tag = 'internal scratch']
  %s0 = inlined_call_operand.vmem [shape: bf16[64,128], index: 0, kind: input, shape index: {}]
  %s1 = inlined_call_operand.vmem [shape: bf16[128,128], index: 1, kind: input, shape index: {}]
  %s2 = inlined_call_operand.vmem [shape: bf16[64,128], index: 2, kind: output, shape index: {}]
  %s3 = sld [smem:[#allocation0]]
  $region18: #{full_generator_forward.28} parent=0
    _
  %s5 = ssub.s32 1, %s3
  %s6 = scalar_select 0, %s5, %s3
  // Predicated region
  $region2: #{full_generator_forward.28} parent=0 // pred_check
    _
  $region3: #{full_generator_forward.28} parent=0 // pred_check_branch
    %8 = sbr.rel (0) target = $region5
  $region4: #{full_generator_forward.28} parent=0 // pred_region
    _
  $region5: #{full_generator_forward.28} parent=0 // pred_fallthru
    _
  // Predicated region
  $region6: #{full_generator_forward.28} parent=0 // pred_check
    _
  $region7: #{full_generator_forward.28} parent=0 // pred_check_branch
    %10 = sbr.rel (0) target = $region9
  $region8: #{full_generator_forward.28} parent=0 // pred_region
    _
  $region9: #{full_generator_forward.28} parent=0 // pred_fallthru
    _
  %v11 = vld [vmem:[%s0] sm:$0xf]
  %v12 = vld [vmem:[%s0 + $0x4] sm:$0xf]
  %v13 = vld [vmem:[%s0 + $0x8] sm:$0xf]
  %v14 = vld [vmem:[%s0 + $0xc] sm:$0xf]
  %v15 = vld [vmem:[%s0 + $0x10] sm:$0xf]
  %v16 = vld [vmem:[%s0 + $0x14] sm:$0xf]
  %v17 = vld [vmem:[%s0 + $0x18] sm:$0xf]
  %v18 = vld [vmem:[%s0 + $0x1c] sm:$0xf]
  %v19 = vld [vmem:[%s1] sm:$0xf]
  %v20 = vld [vmem:[%s1 + $0x4] sm:$0xf]
  %v21 = vld [vmem:[%s1 + $0x8] sm:$0xf]
  %v22 = vld [vmem:[%s1 + $0xc] sm:$0xf]
  %v23 = vld [vmem:[%s1 + $0x10] sm:$0xf]
  %v24 = vld [vmem:[%s1 + $0x14] sm:$0xf]
  %v25 = vld [vmem:[%s1 + $0x18] sm:$0xf]
  %v26 = vld [vmem:[%s1 + $0x1c] sm:$0xf]
  %v27 = vld [vmem:[%s1 + $0x20] sm:$0xf]
  %v28 = vld [vmem:[%s1 + $0x24] sm:$0xf]
  %v29 = vld [vmem:[%s1 + $0x28] sm:$0xf]
  %v30 = vld [vmem:[%s1 + $0x2c] sm:$0xf]
  %v31 = vld [vmem:[%s1 + $0x30] sm:$0xf]
  %v32 = vld [vmem:[%s1 + $0x34] sm:$0xf]
  %v33 = vld [vmem:[%s1 + $0x38] sm:$0xf]
  %v34 = vld [vmem:[%s1 + $0x3c] sm:$0xf]
  %v43 = vunpack.c.l.b16 %v11
  %v44 = vunpack.c.l.b16 %v12
  %v45 = vunpack.c.l.b16 %v13
  %v46 = vunpack.c.l.b16 %v14
  %v47 = vunpack.c.l.b16 %v15
  %v48 = vunpack.c.l.b16 %v16
  %v49 = vunpack.c.l.b16 %v17
  %v50 = vunpack.c.l.b16 %v18
  %v51 = vpack.c.b16 %v44, %v43
  %v52 = vpack.c.b16 %v46, %v45
  %v53 = vpack.c.b16 %v48, %v47
  %v54 = vpack.c.b16 %v50, %v49
  %v75 = vunpack.c.l.b16 %v19
  %v76 = vunpack.c.l.b16 %v20
  %v77 = vunpack.c.l.b16 %v21
  %v78 = vunpack.c.l.b16 %v22
  %v79 = vunpack.c.l.b16 %v23
  %v80 = vunpack.c.l.b16 %v24
  %v81 = vunpack.c.l.b16 %v25
  %v82 = vunpack.c.l.b16 %v26
  %v83 = vunpack.c.l.b16 %v27
  %v84 = vunpack.c.l.b16 %v28
  %v85 = vunpack.c.l.b16 %v29
  %v86 = vunpack.c.l.b16 %v30
  %v87 = vunpack.c.l.b16 %v31
  %v88 = vunpack.c.l.b16 %v32
  %v89 = vunpack.c.l.b16 %v33
  %v90 = vunpack.c.l.b16 %v34
  %v91 = vpack.c.b16 %v76, %v75
  %v92 = vpack.c.b16 %v78, %v77
  %v93 = vpack.c.b16 %v80, %v79
  %v94 = vpack.c.b16 %v82, %v81
  %v95 = vpack.c.b16 %v84, %v83
  %v96 = vpack.c.b16 %v86, %v85
  %v97 = vpack.c.b16 %v88, %v87
  %v98 = vpack.c.b16 %v90, %v89
  %107 = vmatpush.bf16.msra.mxu0 %v98
  %108 = vmatpush.bf16.msra.mxu0 %v97
  %109 = vmatpush.bf16.msra.mxu0 %v96
  %110 = vmatpush.bf16.msra.mxu0 %v95
  %111 = vmatpush.bf16.msra.mxu0 %v94
  %112 = vmatpush.bf16.msra.mxu0 %v93
  %113 = vmatpush.bf16.msra.mxu0 %v92
  %114 = vmatpush.bf16.msra.mxu0 %v91
  %115 = vmatmul.bf16.gmra.mxu0 %v51
  %v116 = vpop.f32.mrf.mxu0
  %v117 = vadd.f32 0.0, %v116
  %v118 = vpop.f32.mrf.mxu0
  %v119 = vadd.f32 0.0, %v118
  %120 = vmatmul.bf16.gmra.mxu0 %v52
  %v121 = vpop.f32.mrf.mxu0
  %v122 = vadd.f32 0.0, %v121
  %v123 = vpop.f32.mrf.mxu0
  %v124 = vadd.f32 0.0, %v123
  %125 = vmatmul.bf16.gmra.mxu0 %v53
  %v126 = vpop.f32.mrf.mxu0
  %v127 = vadd.f32 0.0, %v126
  %v128 = vpop.f32.mrf.mxu0
  %v129 = vadd.f32 0.0, %v128
  %130 = vmatmul.bf16.gmra.mxu0 %v54
  %v131 = vpop.f32.mrf.mxu0
  %v132 = vadd.f32 0.0, %v131
  %v133 = vpop.f32.mrf.mxu0
  %v134 = vadd.f32 0.0, %v133
  %135 = vdwg.mxu0
  %v136 = vmax.f32 %v117, 0.0
  %v137 = vmax.f32 %v119, 0.0
  %v138 = vmax.f32 %v122, 0.0
  %v139 = vmax.f32 %v124, 0.0
  %v140 = vmax.f32 %v127, 0.0
  %v141 = vmax.f32 %v129, 0.0
  %v142 = vmax.f32 %v132, 0.0
  %v143 = vmax.f32 %v134, 0.0
  %v144 = vpack.c.bf16 %v136, %v136
  %v145 = vpack.c.bf16 %v137, %v137
  %v146 = vpack.c.bf16 %v138, %v138
  %v147 = vpack.c.bf16 %v139, %v139
  %v148 = vpack.c.bf16 %v140, %v140
  %v149 = vpack.c.bf16 %v141, %v141
  %v150 = vpack.c.bf16 %v142, %v142
  %v151 = vpack.c.bf16 %v143, %v143
  %152 = vst [vmem:[%s2] sm:$0xf] %v144
  %153 = vst [vmem:[%s2 + $0x4] sm:$0xf] %v145
  %154 = vst [vmem:[%s2 + $0x8] sm:$0xf] %v146
  %155 = vst [vmem:[%s2 + $0xc] sm:$0xf] %v147
  %156 = vst [vmem:[%s2 + $0x10] sm:$0xf] %v148
  %157 = vst [vmem:[%s2 + $0x14] sm:$0xf] %v149
  %158 = vst [vmem:[%s2 + $0x18] sm:$0xf] %v150
  %159 = vst [vmem:[%s2 + $0x1c] sm:$0xf] %v151
  // Predicated region
  $region10: #{full_generator_forward.28} parent=0 // pred_check
    _
  $region11: #{full_generator_forward.28} parent=0 // pred_check_branch
    %161 = sbr.rel (0) target = $region13
  $region12: #{full_generator_forward.28} parent=0 // pred_region
    _
  $region13: #{full_generator_forward.28} parent=0 // pred_fallthru
    _
  // Predicated region
  $region14: #{full_generator_forward.28} parent=0 // pred_check
    _
  $region15: #{full_generator_forward.28} parent=0 // pred_check_branch
    %163 = sbr.rel (0) target = $region17
  $region16: #{full_generator_forward.28} parent=0 // pred_region
    _
  $region17: #{full_generator_forward.28} parent=0 // pred_fallthru
    _

// kernel: full_generator_forward.23
$region0: #{full_generator_forward.23}
  #allocation0 [shape = 'u32[]', space=smem, size = 0x4, offset = 0x4, fixed_abs, tag = 'smem constant byte address 0x4 - core index']
  #allocation1 [shape = 'u32[72,128]{1,0:T(1,128)}', space=vmem, size = 0x9000, scoped, tag = 'internal scratch']
  %s0 = inlined_call_operand.vmem [shape: f32[4,256,3], index: 0, kind: input, shape index: {}]
  %s1 = inlined_call_operand.vmem [shape: f32[3,128], index: 1, kind: input, shape index: {}]
  %s2 = inlined_call_operand.vmem [shape: bf16[4,256,128], index: 2, kind: output, shape index: {}]
  %s3 = sld [smem:[#allocation0]]
  $region41: #{full_generator_forward.23} parent=0
    _
  %s5 = ssub.s32 1, %s3
  %s6 = scalar_select 0, %s5, %s3
  loop: start=0, step=1, limit=6
  $region2: #{full_generator_forward.23} parent=0 // loop_pre_header
    _
  $region3: #{full_generator_forward.23} parent=0 // loop_header
    %s8 = sphi 0, %s12
    %p9 = scmp.ge.s32.totalorder %s8, 6
    %s15 = sphi 0, %s27
    %s16 = sphi 0, %s23
    %s17 = sphi 0, %s15
    %s18 = sphi 0, %s16
    %s19 = sphi 0, %s17
    %s20 = sphi 0, %s18
    %s32 = sphi 0, %s34
    %s35 = sphi 0, %s32
    %s36 = sphi 0, %s35
    %s52 = sphi 0, %s36
    %s56 = sphi 0, %s56
    %s58 = sphi 0, %s56
    %s59 = sphi 0, %s58
    %s73 = sphi 0, %s59
    %s81 = sphi 0, %s83
    %s84 = sphi 0, %s81
    %s85 = sphi 0, %s84
    %s101 = sphi 0, %s85
  $region4: #{full_generator_forward.23} parent=0 // loop_header_branch
    %11 = sbr.rel (%p9) target = $region8
  $region5: #{full_generator_forward.23} parent=0 // loop_body
    %s13 = ssub.s32 %s8, 1
    %s14 = ssub.s32 %s8, 2
    %s21 = sadd.s32 1, %s16
    %p22 = scmp.ge.s32.totalorder %s21, 1
    %s23 = scalar_select %p22, 0, %s21
    %s24 = sadd.s32 1, %s15
    %s25 = scalar_select %p22, %s24, %s15
    %p26 = scmp.ge.s32.totalorder %s25, 4
    %s27 = scalar_select %p26, 0, %s25
    %s28 = ssub.s32 %s15, %s27
    %s29 = ssub.s32 %s16, %s23
    %s30 = sor.u32 %s28, %s29
    %p31 = scmp.eq.s32.totalorder %s30, 0
    %s33 = sadd.s32 %s32, 1
    %s34 = scalar_select %p31, %s32, %s33
    %p37 = pneg %p31
    %p38 = scmp.eq.s32.totalorder %s8, 3
    %p39 = por %p37, %p38
    %p40 = scmp.ne.s32.totalorder %s32, %s35
    %p41 = scmp.eq.s32.totalorder %s8, 0
    %p42 = por %p40, %p41
    %p43 = scmp.ne.s32.totalorder %s32, %s35
    %p44 = scmp.eq.s32.totalorder %s13, 3
    %p45 = por %p43, %p44
    %p46 = scmp.ne.s32.totalorder %s35, %s36
    %p47 = scmp.eq.s32.totalorder %s13, 0
    %p48 = por %p46, %p47
    %p49 = scmp.ne.s32.totalorder %s35, %s36
    %p50 = scmp.eq.s32.totalorder %s14, 3
    %p51 = por %p49, %p50
    %p53 = scmp.ne.s32.totalorder %s36, %s52
    %p54 = scmp.eq.s32.totalorder %s14, 0
    %p55 = por %p53, %p54
    %s57 = sadd.s32 %s56, 1
    %p60 = scmp.eq.s32.totalorder %s8, 3
    %p61 = scmp.ne.s32.totalorder %s56, %s58
    %p62 = scmp.eq.s32.totalorder %s8, 0
    %p63 = por %p61, %p62
    %p64 = scmp.ne.s32.totalorder %s56, %s58
    %p65 = scmp.eq.s32.totalorder %s13, 3
    %p66 = por %p64, %p65
    %p67 = scmp.ne.s32.totalorder %s58, %s59
    %p68 = scmp.eq.s32.totalorder %s13, 0
    %p69 = por %p67, %p68
    %p70 = scmp.ne.s32.totalorder %s58, %s59
    %p71 = scmp.eq.s32.totalorder %s14, 3
    %p72 = por %p70, %p71
    %p74 = scmp.ne.s32.totalorder %s59, %s73
    %p75 = scmp.eq.s32.totalorder %s14, 0
    %p76 = por %p74, %p75
    %s77 = ssub.s32 %s15, %s27
    %s78 = ssub.s32 %s16, %s23
    %s79 = sor.u32 %s77, %s78
    %p80 = scmp.eq.s32.totalorder %s79, 0
    %s82 = sadd.s32 %s81, 1
    %s83 = scalar_select %p80, %s81, %s82
    %p86 = pneg %p80
    %p87 = scmp.eq.s32.totalorder %s8, 3
    %p88 = por %p86, %p87
    %p89 = scmp.ne.s32.totalorder %s81, %s84
    %p90 = scmp.eq.s32.totalorder %s8, 0
    %p91 = por %p89, %p90
    %p92 = scmp.ne.s32.totalorder %s81, %s84
    %p93 = scmp.eq.s32.totalorder %s13, 3
    %p94 = por %p92, %p93
    %p95 = scmp.ne.s32.totalorder %s84, %s85
    %p96 = scmp.eq.s32.totalorder %s13, 0
    %p97 = por %p95, %p96
    %p98 = scmp.ne.s32.totalorder %s84, %s85
    %p99 = scmp.eq.s32.totalorder %s14, 3
    %p100 = por %p98, %p99
    %p102 = scmp.ne.s32.totalorder %s85, %s101
    %p103 = scmp.eq.s32.totalorder %s14, 0
    %p104 = por %p102, %p103
    %p105 = scmp.le.s32.totalorder 1, %s8
    %p106 = scmp.lt.s32.totalorder %s8, 5
    %p107 = pnand %p105, %p106
    %p108 = pneg %p107
    // Predicated region
    $region9: #{full_generator_forward.23} parent=5 // pred_check
      _
    $region10: #{full_generator_forward.23} parent=5 // pred_check_branch
      %110 = sbr.rel (%p107) target = $region12
    $region11: #{full_generator_forward.23} parent=5 // pred_region
      %s111 = ssub.s32 %s8, 1
      // Predicated region
      $region13: #{full_generator_forward.23} parent=11 // pred_check
        %p112 = pneg %p69
      $region14: #{full_generator_forward.23} parent=11 // pred_check_branch
        %114 = sbr.rel (%p112) target = $region16
      $region15: #{full_generator_forward.23} parent=11 // pred_region
        _
      $region16: #{full_generator_forward.23} parent=11 // pred_fallthru
        _
    $region12: #{full_generator_forward.23} parent=5 // pred_fallthru
      _
    %p115 = scmp.lt.s32.totalorder %s8, 4
    // Predicated region
    $region17: #{full_generator_forward.23} parent=5 // pred_check
      %p116 = pneg %p115
    $region18: #{full_generator_forward.23} parent=5 // pred_check_branch
      %118 = sbr.rel (%p116) target = $region20
    $region19: #{full_generator_forward.23} parent=5 // pred_region
      // Predicated region
      $region21: #{full_generator_forward.23} parent=19 // pred_check
        %p119 = pneg %p42
      $region22: #{full_generator_forward.23} parent=19 // pred_check_branch
        %121 = sbr.rel (%p119) target = $region24
      $region23: #{full_generator_forward.23} parent=19 // pred_region
        %s122 = smul.u32 32, %s16
        %p123 = scmp.lt.s32.totalorder %s15, 3
        %s124 = scalar_select %p123, %s15, 3
        %p125 = scmp.lt.s32.totalorder %s122, 31
        %s126 = scalar_select %p125, %s122, 31
        %s127 = smul.addr %s124, 32
        %s128 = sadd.s32 %s126, %s127
        %s129 = smul.addr %s128, 8
        %s130 = scalar_lea.vmem %s0, %s129
        %s131 = smul.u32 32, %s16
      $region24: #{full_generator_forward.23} parent=19 // pred_fallthru
        _
    $region20: #{full_generator_forward.23} parent=5 // pred_fallthru
      _
    %p132 = scmp.le.s32.totalorder 1, %s8
    %p133 = scmp.lt.s32.totalorder %s8, 5
    %p134 = pnand %p132, %p133
    %p135 = pneg %p134
    // Predicated region
    $region25: #{full_generator_forward.23} parent=5 // pred_check
      _
    $region26: #{full_generator_forward.23} parent=5 // pred_check_branch
      %137 = sbr.rel (%p134) target = $region28
    $region27: #{full_generator_forward.23} parent=5 // pred_region
      %s138 = ssub.s32 %s8, 1
      %s139 = smul.u32 32, %s18
      %p140 = scmp.lt.s32.totalorder %s17, 3
      %s141 = scalar_select %p140, %s17, 3
      %p142 = scmp.lt.s32.totalorder %s139, 31
      %s143 = scalar_select %p142, %s139, 31
      %s144 = smul.addr %s141, 32
      %s145 = sadd.s32 %s143, %s144
      %s146 = smul.addr %s145, 8
      %s147 = scalar_lea.vmem %s0, %s146
      %p148 = pneg %p48
      %p149 = pneg %p45
      %p150 = pneg %p69
      %p151 = pneg %p66
      %p152 = pneg %p97
      %p153 = pneg %p94
      %s154 = smul.u32 32, %s18
      %p155 = scmp.lt.s32.totalorder %s17, 3
      %s156 = scalar_select %p155, %s17, 3
      %p157 = scmp.lt.s32.totalorder %s154, 31
      %s158 = scalar_select %p157, %s154, 31
      %s159 = smul.addr %s156, 32
      %s160 = sadd.s32 %s158, %s159
      %s161 = smul.addr %s160, 4
      %s162 = scalar_lea.vmem %s2, %s161
      %s163 = smul.u32 32, %s18
      %p164 = scmp.lt.s32.totalorder %s17, 3
      %s165 = scalar_select %p164, %s17, 3
      %p166 = scmp.lt.s32.totalorder %s163, 31
      %s167 = scalar_select %p166, %s163, 31
      %s168 = smul.addr %s165, 32
      %s169 = sadd.s32 %s167, %s168
      %s170 = smul.addr %s169, 8
      %s171 = scalar_lea.vmem %s0, %s170
      %s172 = smul.u32 32, %s18
      %s173 = smul.u32 32, %s18
      %p174 = scmp.lt.s32.totalorder %s17, 3
      %s175 = scalar_select %p174, %s17, 3
      %p176 = scmp.lt.s32.totalorder %s173, 31
      %s177 = scalar_select %p176, %s173, 31
      %s178 = smul.addr %s175, 32
      %s179 = sadd.s32 %s177, %s178
      %s180 = smul.addr %s179, 4
      %s181 = scalar_lea.vmem %s2, %s180
      %s182 = smul.u32 32, %s18
      %v183 = vld [vmem:[%s171] sm:$0xff]
      %v184 = vld [vmem:[%s171 + $0x8] sm:$0xff]
      %v185 = vld [vmem:[%s171 + $0x10] sm:$0xff]
      %v186 = vld [vmem:[%s171 + $0x18] sm:$0xff]
      %v187 = vld [vmem:[%s171 + $0x20] sm:$0xff]
      %v188 = vld [vmem:[%s171 + $0x28] sm:$0xff]
      %v189 = vld [vmem:[%s171 + $0x30] sm:$0xff]
      %v190 = vld [vmem:[%s171 + $0x38] sm:$0xff]
      %v191 = vld [vmem:[%s171 + $0x40] sm:$0xff]
      %v192 = vld [vmem:[%s171 + $0x48] sm:$0xff]
      %v193 = vld [vmem:[%s171 + $0x50] sm:$0xff]
      %v194 = vld [vmem:[%s171 + $0x58] sm:$0xff]
      %v195 = vld [vmem:[%s171 + $0x60] sm:$0xff]
      %v196 = vld [vmem:[%s171 + $0x68] sm:$0xff]
      %v197 = vld [vmem:[%s171 + $0x70] sm:$0xff]
      %v198 = vld [vmem:[%s171 + $0x78] sm:$0xff]
      %v199 = vld [vmem:[%s171 + $0x80] sm:$0xff]
      %v200 = vld [vmem:[%s171 + $0x88] sm:$0xff]
      %v201 = vld [vmem:[%s171 + $0x90] sm:$0xff]
      %v202 = vld [vmem:[%s171 + $0x98] sm:$0xff]
      %v203 = vld [vmem:[%s171 + $0xa0] sm:$0xff]
      %v204 = vld [vmem:[%s171 + $0xa8] sm:$0xff]
      %v205 = vld [vmem:[%s171 + $0xb0] sm:$0xff]
      %v206 = vld [vmem:[%s171 + $0xb8] sm:$0xff]
      %v207 = vld [vmem:[%s171 + $0xc0] sm:$0xff]
      %v208 = vld [vmem:[%s171 + $0xc8] sm:$0xff]
      %v209 = vld [vmem:[%s171 + $0xd0] sm:$0xff]
      %v210 = vld [vmem:[%s171 + $0xd8] sm:$0xff]
      %v211 = vld [vmem:[%s171 + $0xe0] sm:$0xff]
      %v212 = vld [vmem:[%s171 + $0xe8] sm:$0xff]
      %v213 = vld [vmem:[%s171 + $0xf0] sm:$0xff]
      %v214 = vld [vmem:[%s171 + $0xf8] sm:$0xff]
      %v215 = vld [vmem:[%s1] sm:$0x7]
      %217 = vset.pattern.permute.xlu0 0
      %218 = vperm.xlu0 %217, %v183
      %v219 = vpop.permute.xlu0 %218
      %222 = vset.pattern.permute.xlu0 0
      %223 = vperm.xlu0 %222, %v184
      %v224 = vpop.permute.xlu0 %223
      %227 = vset.pattern.permute.xlu0 0
      %228 = vperm.xlu0 %227, %v185
      %v229 = vpop.permute.xlu0 %228
      %232 = vset.pattern.permute.xlu0 0
      %233 = vperm.xlu0 %232, %v186
      %v234 = vpop.permute.xlu0 %233
      %237 = vset.pattern.permute.xlu0 0
      %238 = vperm.xlu0 %237, %v187
      %v239 = vpop.permute.xlu0 %238
      %242 = vset.pattern.permute.xlu0 0
      %243 = vperm.xlu0 %242, %v188
      %v244 = vpop.permute.xlu0 %243
      %247 = vset.pattern.permute.xlu0 0
      %248 = vperm.xlu0 %247, %v189
      %v249 = vpop.permute.xlu0 %248
      %252 = vset.pattern.permute.xlu0 0
      %253 = vperm.xlu0 %252, %v190
      %v254 = vpop.permute.xlu0 %253
      %257 = vset.pattern.permute.xlu0 0
      %258 = vperm.xlu0 %257, %v191
      %v259 = vpop.permute.xlu0 %258
      %262 = vset.pattern.permute.xlu0 0
      %263 = vperm.xlu0 %262, %v192
      %v264 = vpop.permute.xlu0 %263
      %267 = vset.pattern.permute.xlu0 0
      %268 = vperm.xlu0 %267, %v193
      %v269 = vpop.permute.xlu0 %268
      %272 = vset.pattern.permute.xlu0 0
      %273 = vperm.xlu0 %272, %v194
      %v274 = vpop.permute.xlu0 %273
      %277 = vset.pattern.permute.xlu0 0
      %278 = vperm.xlu0 %277, %v195
      %v279 = vpop.permute.xlu0 %278
      %282 = vset.pattern.permute.xlu0 0
      %283 = vperm.xlu0 %282, %v196
      %v284 = vpop.permute.xlu0 %283
      %287 = vset.pattern.permute.xlu0 0
      %288 = vperm.xlu0 %287, %v197
      %v289 = vpop.permute.xlu0 %288
      %292 = vset.pattern.permute.xlu0 0
      %293 = vperm.xlu0 %292, %v198
      %v294 = vpop.permute.xlu0 %293
      %297 = vset.pattern.permute.xlu0 0
      %298 = vperm.xlu0 %297, %v199
      %v299 = vpop.permute.xlu0 %298
      %302 = vset.pattern.permute.xlu0 0
      %303 = vperm.xlu0 %302, %v200
      %v304 = vpop.permute.xlu0 %303
      %307 = vset.pattern.permute.xlu0 0
      %308 = vperm.xlu0 %307, %v201
      %v309 = vpop.permute.xlu0 %308
      %312 = vset.pattern.permute.xlu0 0
      %313 = vperm.xlu0 %312, %v202
      %v314 = vpop.permute.xlu0 %313
      %317 = vset.pattern.permute.xlu0 0
      %318 = vperm.xlu0 %317, %v203
      %v319 = vpop.permute.xlu0 %318
      %322 = vset.pattern.permute.xlu0 0
      %323 = vperm.xlu0 %322, %v204
      %v324 = vpop.permute.xlu0 %323
      %327 = vset.pattern.permute.xlu0 0
      %328 = vperm.xlu0 %327, %v205
      %v329 = vpop.permute.xlu0 %328
      %332 = vset.pattern.permute.xlu0 0
      %333 = vperm.xlu0 %332, %v206
      %v334 = vpop.permute.xlu0 %333
      %337 = vset.pattern.permute.xlu0 0
      %338 = vperm.xlu0 %337, %v207
      %v339 = vpop.permute.xlu0 %338
      %342 = vset.pattern.permute.xlu0 0
      %343 = vperm.xlu0 %342, %v208
      %v344 = vpop.permute.xlu0 %343
      %347 = vset.pattern.permute.xlu0 0
      %348 = vperm.xlu0 %347, %v209
      %v349 = vpop.permute.xlu0 %348
      %352 = vset.pattern.permute.xlu0 0
      %353 = vperm.xlu0 %352, %v210
      %v354 = vpop.permute.xlu0 %353
      %357 = vset.pattern.permute.xlu0 0
      %358 = vperm.xlu0 %357, %v211
      %v359 = vpop.permute.xlu0 %358
      %362 = vset.pattern.permute.xlu0 0
      %363 = vperm.xlu0 %362, %v212
      %v364 = vpop.permute.xlu0 %363
      %367 = vset.pattern.permute.xlu0 0
      %368 = vperm.xlu0 %367, %v213
      %v369 = vpop.permute.xlu0 %368
      %372 = vset.pattern.permute.xlu0 0
      %373 = vperm.xlu0 %372, %v214
      %v374 = vpop.permute.xlu0 %373
      %v376 = vperm.slane %v215, 0
      %v377 = vmul.f32 %v219, %v376
      %v378 = vmul.f32 %v224, %v376
      %v379 = vmul.f32 %v229, %v376
      %v380 = vmul.f32 %v234, %v376
      %v381 = vmul.f32 %v239, %v376
      %v382 = vmul.f32 %v244, %v376
      %v383 = vmul.f32 %v249, %v376
      %v384 = vmul.f32 %v254, %v376
      %v385 = vmul.f32 %v259, %v376
      %v386 = vmul.f32 %v264, %v376
      %v387 = vmul.f32 %v269, %v376
      %v388 = vmul.f32 %v274, %v376
      %v389 = vmul.f32 %v279, %v376
      %v390 = vmul.f32 %v284, %v376
      %v391 = vmul.f32 %v289, %v376
      %v392 = vmul.f32 %v294, %v376
      %v393 = vmul.f32 %v299, %v376
      %v394 = vmul.f32 %v304, %v376
      %v395 = vmul.f32 %v309, %v376
      %v396 = vmul.f32 %v314, %v376
      %v397 = vmul.f32 %v319, %v376
      %v398 = vmul.f32 %v324, %v376
      %v399 = vmul.f32 %v329, %v376
      %v400 = vmul.f32 %v334, %v376
      %v401 = vmul.f32 %v339, %v376
      %v402 = vmul.f32 %v344, %v376
      %v403 = vmul.f32 %v349, %v376
      %v404 = vmul.f32 %v354, %v376
      %v405 = vmul.f32 %v359, %v376
      %v406 = vmul.f32 %v364, %v376
      %v407 = vmul.f32 %v369, %v376
      %v408 = vmul.f32 %v374, %v376
      %409 = vset.pattern.permute.xlu0 1
      %410 = vperm.xlu0 %409, %v183
      %v411 = vpop.permute.xlu0 %410
      %413 = vset.pattern.permute.xlu0 1
      %414 = vperm.xlu0 %413, %v184
      %v415 = vpop.permute.xlu0 %414
      %417 = vset.pattern.permute.xlu0 1
      %418 = vperm.xlu0 %417, %v185
      %v419 = vpop.permute.xlu0 %418
      %421 = vset.pattern.permute.xlu0 1
      %422 = vperm.xlu0 %421, %v186
      %v423 = vpop.permute.xlu0 %422
      %425 = vset.pattern.permute.xlu0 1
      %426 = vperm.xlu0 %425, %v187
      %v427 = vpop.permute.xlu0 %426
      %429 = vset.pattern.permute.xlu0 1
      %430 = vperm.xlu0 %429, %v188
      %v431 = vpop.permute.xlu0 %430
      %433 = vset.pattern.permute.xlu0 1
      %434 = vperm.xlu0 %433, %v189
      %v435 = vpop.permute.xlu0 %434
      %437 = vset.pattern.permute.xlu0 1
      %438 = vperm.xlu0 %437, %v190
      %v439 = vpop.permute.xlu0 %438
      %441 = vset.pattern.permute.xlu0 1
      %442 = vperm.xlu0 %441, %v191
      %v443 = vpop.permute.xlu0 %442
      %445 = vset.pattern.permute.xlu0 1
      %446 = vperm.xlu0 %445, %v192
      %v447 = vpop.permute.xlu0 %446
      %449 = vset.pattern.permute.xlu0 1
      %450 = vperm.xlu0 %449, %v193
      %v451 = vpop.permute.xlu0 %450
      %453 = vset.pattern.permute.xlu0 1
      %454 = vperm.xlu0 %453, %v194
      %v455 = vpop.permute.xlu0 %454
      %457 = vset.pattern.permute.xlu0 1
      %458 = vperm.xlu0 %457, %v195
      %v459 = vpop.permute.xlu0 %458
      %461 = vset.pattern.permute.xlu0 1
      %462 = vperm.xlu0 %461, %v196
      %v463 = vpop.permute.xlu0 %462
      %465 = vset.pattern.permute.xlu0 1
      %466 = vperm.xlu0 %465, %v197
      %v467 = vpop.permute.xlu0 %466
      %469 = vset.pattern.permute.xlu0 1
      %470 = vperm.xlu0 %469, %v198
      %v471 = vpop.permute.xlu0 %470
      %473 = vset.pattern.permute.xlu0 1
      %474 = vperm.xlu0 %473, %v199
      %v475 = vpop.permute.xlu0 %474
      %477 = vset.pattern.permute.xlu0 1
      %478 = vperm.xlu0 %477, %v200
      %v479 = vpop.permute.xlu0 %478
      %481 = vset.pattern.permute.xlu0 1
      %482 = vperm.xlu0 %481, %v201
      %v483 = vpop.permute.xlu0 %482
      %485 = vset.pattern.permute.xlu0 1
      %486 = vperm.xlu0 %485, %v202
      %v487 = vpop.permute.xlu0 %486
      %489 = vset.pattern.permute.xlu0 1
      %490 = vperm.xlu0 %489, %v203
      %v491 = vpop.permute.xlu0 %490
      %493 = vset.pattern.permute.xlu0 1
      %494 = vperm.xlu0 %493, %v204
      %v495 = vpop.permute.xlu0 %494
      %497 = vset.pattern.permute.xlu0 1
      %498 = vperm.xlu0 %497, %v205
      %v499 = vpop.permute.xlu0 %498
      %501 = vset.pattern.permute.xlu0 1
      %502 = vperm.xlu0 %501, %v206
      %v503 = vpop.permute.xlu0 %502
      %505 = vset.pattern.permute.xlu0 1
      %506 = vperm.xlu0 %505, %v207
      %v507 = vpop.permute.xlu0 %506
      %509 = vset.pattern.permute.xlu0 1
      %510 = vperm.xlu0 %509, %v208
      %v511 = vpop.permute.xlu0 %510
      %513 = vset.pattern.permute.xlu0 1
      %514 = vperm.xlu0 %513, %v209
      %v515 = vpop.permute.xlu0 %514
      %517 = vset.pattern.permute.xlu0 1
      %518 = vperm.xlu0 %517, %v210
      %v519 = vpop.permute.xlu0 %518
      %521 = vset.pattern.permute.xlu0 1
      %522 = vperm.xlu0 %521, %v211
      %v523 = vpop.permute.xlu0 %522
      %525 = vset.pattern.permute.xlu0 1
      %526 = vperm.xlu0 %525, %v212
      %v527 = vpop.permute.xlu0 %526
      %529 = vset.pattern.permute.xlu0 1
      %530 = vperm.xlu0 %529, %v213
      %v531 = vpop.permute.xlu0 %530
      %533 = vset.pattern.permute.xlu0 1
      %534 = vperm.xlu0 %533, %v214
      %v535 = vpop.permute.xlu0 %534
      %v537 = vperm.slane %v215, 1
      %v538 = vmul.f32 %v411, %v537
      %v539 = vmul.f32 %v415, %v537
      %v540 = vmul.f32 %v419, %v537
      %v541 = vmul.f32 %v423, %v537
      %v542 = vmul.f32 %v427, %v537
      %v543 = vmul.f32 %v431, %v537
      %v544 = vmul.f32 %v435, %v537
      %v545 = vmul.f32 %v439, %v537
      %v546 = vmul.f32 %v443, %v537
      %v547 = vmul.f32 %v447, %v537
      %v548 = vmul.f32 %v451, %v537
      %v549 = vmul.f32 %v455, %v537
      %v550 = vmul.f32 %v459, %v537
      %v551 = vmul.f32 %v463, %v537
      %v552 = vmul.f32 %v467, %v537
      %v553 = vmul.f32 %v471, %v537
      %v554 = vmul.f32 %v475, %v537
      %v555 = vmul.f32 %v479, %v537
      %v556 = vmul.f32 %v483, %v537
      %v557 = vmul.f32 %v487, %v537
      %v558 = vmul.f32 %v491, %v537
      %v559 = vmul.f32 %v495, %v537
      %v560 = vmul.f32 %v499, %v537
      %v561 = vmul.f32 %v503, %v537
      %v562 = vmul.f32 %v507, %v537
      %v563 = vmul.f32 %v511, %v537
      %v564 = vmul.f32 %v515, %v537
      %v565 = vmul.f32 %v519, %v537
      %v566 = vmul.f32 %v523, %v537
      %v567 = vmul.f32 %v527, %v537
      %v568 = vmul.f32 %v531, %v537
      %v569 = vmul.f32 %v535, %v537
      %v570 = vadd.f32 %v377, %v538
      %v571 = vadd.f32 %v378, %v539
      %v572 = vadd.f32 %v379, %v540
      %v573 = vadd.f32 %v380, %v541
      %v574 = vadd.f32 %v381, %v542
      %v575 = vadd.f32 %v382, %v543
      %v576 = vadd.f32 %v383, %v544
      %v577 = vadd.f32 %v384, %v545
      %v578 = vadd.f32 %v385, %v546
      %v579 = vadd.f32 %v386, %v547
      %v580 = vadd.f32 %v387, %v548
      %v581 = vadd.f32 %v388, %v549
      %v582 = vadd.f32 %v389, %v550
      %v583 = vadd.f32 %v390, %v551
      %v584 = vadd.f32 %v391, %v552
      %v585 = vadd.f32 %v392, %v553
      %v586 = vadd.f32 %v393, %v554
      %v587 = vadd.f32 %v394, %v555
      %v588 = vadd.f32 %v395, %v556
      %v589 = vadd.f32 %v396, %v557
      %v590 = vadd.f32 %v397, %v558
      %v591 = vadd.f32 %v398, %v559
      %v592 = vadd.f32 %v399, %v560
      %v593 = vadd.f32 %v400, %v561
      %v594 = vadd.f32 %v401, %v562
      %v595 = vadd.f32 %v402, %v563
      %v596 = vadd.f32 %v403, %v564
      %v597 = vadd.f32 %v404, %v565
      %v598 = vadd.f32 %v405, %v566
      %v599 = vadd.f32 %v406, %v567
      %v600 = vadd.f32 %v407, %v568
      %v601 = vadd.f32 %v408, %v569
      %602 = vset.pattern.permute.xlu0 2
      %603 = vperm.xlu0 %602, %v183
      %v604 = vpop.permute.xlu0 %603
      %606 = vset.pattern.permute.xlu0 2
      %607 = vperm.xlu0 %606, %v184
      %v608 = vpop.permute.xlu0 %607
      %610 = vset.pattern.permute.xlu0 2
      %611 = vperm.xlu0 %610, %v185
      %v612 = vpop.permute.xlu0 %611
      %614 = vset.pattern.permute.xlu0 2
      %615 = vperm.xlu0 %614, %v186
      %v616 = vpop.permute.xlu0 %615
      %618 = vset.pattern.permute.xlu0 2
      %619 = vperm.xlu0 %618, %v187
      %v620 = vpop.permute.xlu0 %619
      %622 = vset.pattern.permute.xlu0 2
      %623 = vperm.xlu0 %622, %v188
      %v624 = vpop.permute.xlu0 %623
      %626 = vset.pattern.permute.xlu0 2
      %627 = vperm.xlu0 %626, %v189
      %v628 = vpop.permute.xlu0 %627
      %630 = vset.pattern.permute.xlu0 2
      %631 = vperm.xlu0 %630, %v190
      %v632 = vpop.permute.xlu0 %631
      %634 = vset.pattern.permute.xlu0 2
      %635 = vperm.xlu0 %634, %v191
      %v636 = vpop.permute.xlu0 %635
      %638 = vset.pattern.permute.xlu0 2
      %639 = vperm.xlu0 %638, %v192
      %v640 = vpop.permute.xlu0 %639
      %642 = vset.pattern.permute.xlu0 2
      %643 = vperm.xlu0 %642, %v193
      %v644 = vpop.permute.xlu0 %643
      %646 = vset.pattern.permute.xlu0 2
      %647 = vperm.xlu0 %646, %v194
      %v648 = vpop.permute.xlu0 %647
      %650 = vset.pattern.permute.xlu0 2
      %651 = vperm.xlu0 %650, %v195
      %v652 = vpop.permute.xlu0 %651
      %654 = vset.pattern.permute.xlu0 2
      %655 = vperm.xlu0 %654, %v196
      %v656 = vpop.permute.xlu0 %655
      %658 = vset.pattern.permute.xlu0 2
      %659 = vperm.xlu0 %658, %v197
      %v660 = vpop.permute.xlu0 %659
      %662 = vset.pattern.permute.xlu0 2
      %663 = vperm.xlu0 %662, %v198
      %v664 = vpop.permute.xlu0 %663
      %666 = vset.pattern.permute.xlu0 2
      %667 = vperm.xlu0 %666, %v199
      %v668 = vpop.permute.xlu0 %667
      %670 = vset.pattern.permute.xlu0 2
      %671 = vperm.xlu0 %670, %v200
      %v672 = vpop.permute.xlu0 %671
      %674 = vset.pattern.permute.xlu0 2
      %675 = vperm.xlu0 %674, %v201
      %v676 = vpop.permute.xlu0 %675
      %678 = vset.pattern.permute.xlu0 2
      %679 = vperm.xlu0 %678, %v202
      %v680 = vpop.permute.xlu0 %679
      %682 = vset.pattern.permute.xlu0 2
      %683 = vperm.xlu0 %682, %v203
      %v684 = vpop.permute.xlu0 %683
      %686 = vset.pattern.permute.xlu0 2
      %687 = vperm.xlu0 %686, %v204
      %v688 = vpop.permute.xlu0 %687
      %690 = vset.pattern.permute.xlu0 2
      %691 = vperm.xlu0 %690, %v205
      %v692 = vpop.permute.xlu0 %691
      %694 = vset.pattern.permute.xlu0 2
      %695 = vperm.xlu0 %694, %v206
      %v696 = vpop.permute.xlu0 %695
      %698 = vset.pattern.permute.xlu0 2
      %699 = vperm.xlu0 %698, %v207
      %v700 = vpop.permute.xlu0 %699
      %702 = vset.pattern.permute.xlu0 2
      %703 = vperm.xlu0 %702, %v208
      %v704 = vpop.permute.xlu0 %703
      %706 = vset.pattern.permute.xlu0 2
      %707 = vperm.xlu0 %706, %v209
      %v708 = vpop.permute.xlu0 %707
      %710 = vset.pattern.permute.xlu0 2
      %711 = vperm.xlu0 %710, %v210
      %v712 = vpop.permute.xlu0 %711
      %714 = vset.pattern.permute.xlu0 2
      %715 = vperm.xlu0 %714, %v211
      %v716 = vpop.permute.xlu0 %715
      %718 = vset.pattern.permute.xlu0 2
      %719 = vperm.xlu0 %718, %v212
      %v720 = vpop.permute.xlu0 %719
      %722 = vset.pattern.permute.xlu0 2
      %723 = vperm.xlu0 %722, %v213
      %v724 = vpop.permute.xlu0 %723
      %726 = vset.pattern.permute.xlu0 2
      %727 = vperm.xlu0 %726, %v214
      %v728 = vpop.permute.xlu0 %727
      %v730 = vperm.slane %v215, 2
      %v731 = vmul.f32 %v604, %v730
      %v732 = vmul.f32 %v608, %v730
      %v733 = vmul.f32 %v612, %v730
      %v734 = vmul.f32 %v616, %v730
      %v735 = vmul.f32 %v620, %v730
      %v736 = vmul.f32 %v624, %v730
      %v737 = vmul.f32 %v628, %v730
      %v738 = vmul.f32 %v632, %v730
      %v739 = vmul.f32 %v636, %v730
      %v740 = vmul.f32 %v640, %v730
      %v741 = vmul.f32 %v644, %v730
      %v742 = vmul.f32 %v648, %v730
      %v743 = vmul.f32 %v652, %v730
      %v744 = vmul.f32 %v656, %v730
      %v745 = vmul.f32 %v660, %v730
      %v746 = vmul.f32 %v664, %v730
      %v747 = vmul.f32 %v668, %v730
      %v748 = vmul.f32 %v672, %v730
      %v749 = vmul.f32 %v676, %v730
      %v750 = vmul.f32 %v680, %v730
      %v751 = vmul.f32 %v684, %v730
      %v752 = vmul.f32 %v688, %v730
      %v753 = vmul.f32 %v692, %v730
      %v754 = vmul.f32 %v696, %v730
      %v755 = vmul.f32 %v700, %v730
      %v756 = vmul.f32 %v704, %v730
      %v757 = vmul.f32 %v708, %v730
      %v758 = vmul.f32 %v712, %v730
      %v759 = vmul.f32 %v716, %v730
      %v760 = vmul.f32 %v720, %v730
      %v761 = vmul.f32 %v724, %v730
      %v762 = vmul.f32 %v728, %v730
      %v763 = vadd.f32 %v570, %v731
      %v764 = vadd.f32 %v571, %v732
      %v765 = vadd.f32 %v572, %v733
      %v766 = vadd.f32 %v573, %v734
      %v767 = vadd.f32 %v574, %v735
      %v768 = vadd.f32 %v575, %v736
      %v769 = vadd.f32 %v576, %v737
      %v770 = vadd.f32 %v577, %v738
      %v771 = vadd.f32 %v578, %v739
      %v772 = vadd.f32 %v579, %v740
      %v773 = vadd.f32 %v580, %v741
      %v774 = vadd.f32 %v581, %v742
      %v775 = vadd.f32 %v582, %v743
      %v776 = vadd.f32 %v583, %v744
      %v777 = vadd.f32 %v584, %v745
      %v778 = vadd.f32 %v585, %v746
      %v779 = vadd.f32 %v586, %v747
      %v780 = vadd.f32 %v587, %v748
      %v781 = vadd.f32 %v588, %v749
      %v782 = vadd.f32 %v589, %v750
      %v783 = vadd.f32 %v590, %v751
      %v784 = vadd.f32 %v591, %v752
      %v785 = vadd.f32 %v592, %v753
      %v786 = vadd.f32 %v593, %v754
      %v787 = vadd.f32 %v594, %v755
      %v788 = vadd.f32 %v595, %v756
      %v789 = vadd.f32 %v596, %v757
      %v790 = vadd.f32 %v597, %v758
      %v791 = vadd.f32 %v598, %v759
      %v792 = vadd.f32 %v599, %v760
      %v793 = vadd.f32 %v600, %v761
      %v794 = vadd.f32 %v601, %v762
      %v795 = vmax.f32 %v763, 0.0
      %v796 = vmax.f32 %v764, 0.0
      %v797 = vmax.f32 %v765, 0.0
      %v798 = vmax.f32 %v766, 0.0
      %v799 = vmax.f32 %v767, 0.0
      %v800 = vmax.f32 %v768, 0.0
      %v801 = vmax.f32 %v769, 0.0
      %v802 = vmax.f32 %v770, 0.0
      %v803 = vmax.f32 %v771, 0.0
      %v804 = vmax.f32 %v772, 0.0
      %v805 = vmax.f32 %v773, 0.0
      %v806 = vmax.f32 %v774, 0.0
      %v807 = vmax.f32 %v775, 0.0
      %v808 = vmax.f32 %v776, 0.0
      %v809 = vmax.f32 %v777, 0.0
      %v810 = vmax.f32 %v778, 0.0
      %v811 = vmax.f32 %v779, 0.0
      %v812 = vmax.f32 %v780, 0.0
      %v813 = vmax.f32 %v781, 0.0
      %v814 = vmax.f32 %v782, 0.0
      %v815 = vmax.f32 %v783, 0.0
      %v816 = vmax.f32 %v784, 0.0
      %v817 = vmax.f32 %v785, 0.0
      %v818 = vmax.f32 %v786, 0.0
      %v819 = vmax.f32 %v787, 0.0
      %v820 = vmax.f32 %v788, 0.0
      %v821 = vmax.f32 %v789, 0.0
      %v822 = vmax.f32 %v790, 0.0
      %v823 = vmax.f32 %v791, 0.0
      %v824 = vmax.f32 %v792, 0.0
      %v825 = vmax.f32 %v793, 0.0
      %v826 = vmax.f32 %v794, 0.0
      %v827 = vpack.c.bf16 %v795, %v795
      %v828 = vpack.c.bf16 %v796, %v796
      %v829 = vpack.c.bf16 %v797, %v797
      %v830 = vpack.c.bf16 %v798, %v798
      %v831 = vpack.c.bf16 %v799, %v799
      %v832 = vpack.c.bf16 %v800, %v800
      %v833 = vpack.c.bf16 %v801, %v801
      %v834 = vpack.c.bf16 %v802, %v802
      %v835 = vpack.c.bf16 %v803, %v803
      %v836 = vpack.c.bf16 %v804, %v804
      %v837 = vpack.c.bf16 %v805, %v805
      %v838 = vpack.c.bf16 %v806, %v806
      %v839 = vpack.c.bf16 %v807, %v807
      %v840 = vpack.c.bf16 %v808, %v808
      %v841 = vpack.c.bf16 %v809, %v809
      %v842 = vpack.c.bf16 %v810, %v810
      %v843 = vpack.c.bf16 %v811, %v811
      %v844 = vpack.c.bf16 %v812, %v812
      %v845 = vpack.c.bf16 %v813, %v813
      %v846 = vpack.c.bf16 %v814, %v814
      %v847 = vpack.c.bf16 %v815, %v815
      %v848 = vpack.c.bf16 %v816, %v816
      %v849 = vpack.c.bf16 %v817, %v817
      %v850 = vpack.c.bf16 %v818, %v818
      %v851 = vpack.c.bf16 %v819, %v819
      %v852 = vpack.c.bf16 %v820, %v820
      %v853 = vpack.c.bf16 %v821, %v821
      %v854 = vpack.c.bf16 %v822, %v822
      %v855 = vpack.c.bf16 %v823, %v823
      %v856 = vpack.c.bf16 %v824, %v824
      %v857 = vpack.c.bf16 %v825, %v825
      %v858 = vpack.c.bf16 %v826, %v826
      %859 = vst [vmem:[%s181] sm:$0xf] %v827
      %860 = vst [vmem:[%s181 + $0x4] sm:$0xf] %v828
      %861 = vst [vmem:[%s181 + $0x8] sm:$0xf] %v829
      %862 = vst [vmem:[%s181 + $0xc] sm:$0xf] %v830
      %863 = vst [vmem:[%s181 + $0x10] sm:$0xf] %v831
      %864 = vst [vmem:[%s181 + $0x14] sm:$0xf] %v832
      %865 = vst [vmem:[%s181 + $0x18] sm:$0xf] %v833
      %866 = vst [vmem:[%s181 + $0x1c] sm:$0xf] %v834
      %867 = vst [vmem:[%s181 + $0x20] sm:$0xf] %v835
      %868 = vst [vmem:[%s181 + $0x24] sm:$0xf] %v836
      %869 = vst [vmem:[%s181 + $0x28] sm:$0xf] %v837
      %870 = vst [vmem:[%s181 + $0x2c] sm:$0xf] %v838
      %871 = vst [vmem:[%s181 + $0x30] sm:$0xf] %v839
      %872 = vst [vmem:[%s181 + $0x34] sm:$0xf] %v840
      %873 = vst [vmem:[%s181 + $0x38] sm:$0xf] %v841
      %874 = vst [vmem:[%s181 + $0x3c] sm:$0xf] %v842
      %875 = vst [vmem:[%s181 + $0x40] sm:$0xf] %v843
      %876 = vst [vmem:[%s181 + $0x44] sm:$0xf] %v844
      %877 = vst [vmem:[%s181 + $0x48] sm:$0xf] %v845
      %878 = vst [vmem:[%s181 + $0x4c] sm:$0xf] %v846
      %879 = vst [vmem:[%s181 + $0x50] sm:$0xf] %v847
      %880 = vst [vmem:[%s181 + $0x54] sm:$0xf] %v848
      %881 = vst [vmem:[%s181 + $0x58] sm:$0xf] %v849
      %882 = vst [vmem:[%s181 + $0x5c] sm:$0xf] %v850
      %883 = vst [vmem:[%s181 + $0x60] sm:$0xf] %v851
      %884 = vst [vmem:[%s181 + $0x64] sm:$0xf] %v852
      %885 = vst [vmem:[%s181 + $0x68] sm:$0xf] %v853
      %886 = vst [vmem:[%s181 + $0x6c] sm:$0xf] %v854
      %887 = vst [vmem:[%s181 + $0x70] sm:$0xf] %v855
      %888 = vst [vmem:[%s181 + $0x74] sm:$0xf] %v856
      %889 = vst [vmem:[%s181 + $0x78] sm:$0xf] %v857
      %890 = vst [vmem:[%s181 + $0x7c] sm:$0xf] %v858
      %s891 = smul.u32 32, %s18
      %p892 = scmp.lt.s32.totalorder %s17, 3
      %s893 = scalar_select %p892, %s17, 3
      %p894 = scmp.lt.s32.totalorder %s891, 31
      %s895 = scalar_select %p894, %s891, 31
      %s896 = smul.addr %s893, 32
      %s897 = sadd.s32 %s895, %s896
      %s898 = smul.addr %s897, 4
      %s899 = scalar_lea.vmem %s2, %s898
      // Predicated region
      $region29: #{full_generator_forward.23} parent=27 // pred_check
        %p900 = pneg %p94
      $region30: #{full_generator_forward.23} parent=27 // pred_check_branch
        %902 = sbr.rel (%p900) target = $region32
      $region31: #{full_generator_forward.23} parent=27 // pred_region
        %s903 = smul.u32 32, %s18
      $region32: #{full_generator_forward.23} parent=27 // pred_fallthru
        _
    $region28: #{full_generator_forward.23} parent=5 // pred_fallthru
      _
    %p904 = scmp.le.s32.totalorder 2, %s8
    // Predicated region
    $region33: #{full_generator_forward.23} parent=5 // pred_check
      %p905 = pneg %p904
    $region34: #{full_generator_forward.23} parent=5 // pred_check_branch
      %907 = sbr.rel (%p905) target = $region36
    $region35: #{full_generator_forward.23} parent=5 // pred_region
      %s908 = ssub.s32 %s8, 2
      // Predicated region
      $region37: #{full_generator_forward.23} parent=35 // pred_check
        %p909 = pneg %p100
      $region38: #{full_generator_forward.23} parent=35 // pred_check_branch
        %911 = sbr.rel (%p909) target = $region40
      $region39: #{full_generator_forward.23} parent=35 // pred_region
        %s912 = smul.u32 32, %s20
        %p913 = scmp.lt.s32.totalorder %s19, 3
        %s914 = scalar_select %p913, %s19, 3
        %p915 = scmp.lt.s32.totalorder %s912, 31
        %s916 = scalar_select %p915, %s912, 31
        %s917 = smul.addr %s914, 32
        %s918 = sadd.s32 %s916, %s917
        %s919 = smul.addr %s918, 4
        %s920 = scalar_lea.vmem %s2, %s919
      $region40: #{full_generator_forward.23} parent=35 // pred_fallthru
        _
    $region36: #{full_generator_forward.23} parent=5 // pred_fallthru
      _
  $region6: #{full_generator_forward.23} parent=0 // loop_footer
    %s12 = sadd.s32 1, %s8
  $region7: #{full_generator_forward.23} parent=0 // loop_footer_branch
    %7 = sbr.rel target = $region3
  $region8: #{full_generator_forward.23} parent=0 // loop_exit
    _

// kernel: full_generator_forward.25
$region0: #{full_generator_forward.25}
  #allocation0 [shape = 'u32[]', space=smem, size = 0x4, offset = 0x4, fixed_abs, tag = 'smem constant byte address 0x4 - core index']
  #allocation1 [shape = 'u32[72,128]{1,0:T(1,128)}', space=vmem, size = 0x9000, scoped, tag = 'internal scratch']
  #allocation2 [shape = 'f32[128,128]{1,0:T(8,128)}', space=vmem, size = 0x10000, scoped, tag = 'scratch operand']
  %s0 = inlined_call_operand.vmem [shape: bf16[4,256,128], index: 0, kind: input, shape index: {}]
  %s1 = inlined_call_operand.vmem [shape: f32[4,128,128], index: 1, kind: output, shape index: {}]
  %s2 = sld [smem:[#allocation0]]
  $region45: #{full_generator_forward.25} parent=0
    _
  %s4 = ssub.s32 1, %s2
  %s5 = scalar_select 0, %s4, %s2
  loop: start=0, step=1, limit=6
  $region2: #{full_generator_forward.25} parent=0 // loop_pre_header
    _
  $region3: #{full_generator_forward.25} parent=0 // loop_header
    %s7 = sphi 0, %s11
    %p8 = scmp.ge.s32.totalorder %s7, 6
    %s14 = sphi 0, %s26
    %s15 = sphi 0, %s22
    %s16 = sphi 0, %s14
    %s17 = sphi 0, %s15
    %s18 = sphi 0, %s16
    %s19 = sphi 0, %s17
    %s31 = sphi 0, %s33
    %s34 = sphi 0, %s31
    %s35 = sphi 0, %s34
    %s51 = sphi 0, %s35
    %s57 = sphi 0, %s59
    %s60 = sphi 0, %s57
    %s61 = sphi 0, %s60
    %s77 = sphi 0, %s61
  $region4: #{full_generator_forward.25} parent=0 // loop_header_branch
    %10 = sbr.rel (%p8) target = $region8
  $region5: #{full_generator_forward.25} parent=0 // loop_body
    %s12 = ssub.s32 %s7, 1
    %s13 = ssub.s32 %s7, 2
    %s20 = sadd.s32 1, %s15
    %p21 = scmp.ge.s32.totalorder %s20, 1
    %s22 = scalar_select %p21, 0, %s20
    %s23 = sadd.s32 1, %s14
    %s24 = scalar_select %p21, %s23, %s14
    %p25 = scmp.ge.s32.totalorder %s24, 4
    %s26 = scalar_select %p25, 0, %s24
    %s27 = ssub.s32 %s14, %s26
    %s28 = ssub.s32 %s15, %s22
    %s29 = sor.u32 %s27, %s28
    %p30 = scmp.eq.s32.totalorder %s29, 0
    %s32 = sadd.s32 %s31, 1
    %s33 = scalar_select %p30, %s31, %s32
    %p36 = pneg %p30
    %p37 = scmp.eq.s32.totalorder %s7, 3
    %p38 = por %p36, %p37
    %p39 = scmp.ne.s32.totalorder %s31, %s34
    %p40 = scmp.eq.s32.totalorder %s7, 0
    %p41 = por %p39, %p40
    %p42 = scmp.ne.s32.totalorder %s31, %s34
    %p43 = scmp.eq.s32.totalorder %s12, 3
    %p44 = por %p42, %p43
    %p45 = scmp.ne.s32.totalorder %s34, %s35
    %p46 = scmp.eq.s32.totalorder %s12, 0
    %p47 = por %p45, %p46
    %p48 = scmp.ne.s32.totalorder %s34, %s35
    %p49 = scmp.eq.s32.totalorder %s13, 3
    %p50 = por %p48, %p49
    %p52 = scmp.ne.s32.totalorder %s35, %s51
    %p53 = scmp.eq.s32.totalorder %s13, 0
    %p54 = por %p52, %p53
    %s55 = ssub.s32 %s14, %s26
    %p56 = scmp.eq.s32.totalorder %s55, 0
    %s58 = sadd.s32 %s57, 1
    %s59 = scalar_select %p56, %s57, %s58
    %p62 = pneg %p56
    %p63 = scmp.eq.s32.totalorder %s7, 3
    %p64 = por %p62, %p63
    %p65 = scmp.ne.s32.totalorder %s57, %s60
    %p66 = scmp.eq.s32.totalorder %s7, 0
    %p67 = por %p65, %p66
    %p68 = scmp.ne.s32.totalorder %s57, %s60
    %p69 = scmp.eq.s32.totalorder %s12, 3
    %p70 = por %p68, %p69
    %p71 = scmp.ne.s32.totalorder %s60, %s61
    %p72 = scmp.eq.s32.totalorder %s12, 0
    %p73 = por %p71, %p72
    %p74 = scmp.ne.s32.totalorder %s60, %s61
    %p75 = scmp.eq.s32.totalorder %s13, 3
    %p76 = por %p74, %p75
    %p78 = scmp.ne.s32.totalorder %s61, %s77
    %p79 = scmp.eq.s32.totalorder %s13, 0
    %p80 = por %p78, %p79
    %p81 = scmp.le.s32.totalorder 1, %s7
    %p82 = scmp.lt.s32.totalorder %s7, 5
    %p83 = pnand %p81, %p82
    %p84 = pneg %p83
    // Predicated region
    $region9: #{full_generator_forward.25} parent=5 // pred_check
      _
    $region10: #{full_generator_forward.25} parent=5 // pred_check_branch
      %86 = sbr.rel (%p83) target = $region12
    $region11: #{full_generator_forward.25} parent=5 // pred_region
      %s87 = ssub.s32 %s7, 1
    $region12: #{full_generator_forward.25} parent=5 // pred_fallthru
      _
    %p88 = scmp.lt.s32.totalorder %s7, 4
    // Predicated region
    $region13: #{full_generator_forward.25} parent=5 // pred_check
      %p89 = pneg %p88
    $region14: #{full_generator_forward.25} parent=5 // pred_check_branch
      %91 = sbr.rel (%p89) target = $region16
    $region15: #{full_generator_forward.25} parent=5 // pred_region
      // Predicated region
      $region17: #{full_generator_forward.25} parent=15 // pred_check
        %p92 = pneg %p41
      $region18: #{full_generator_forward.25} parent=15 // pred_check_branch
        %94 = sbr.rel (%p92) target = $region20
      $region19: #{full_generator_forward.25} parent=15 // pred_region
        %s95 = smul.u32 32, %s15
        %p96 = scmp.lt.s32.totalorder %s14, 3
        %s97 = scalar_select %p96, %s14, 3
        %p98 = scmp.lt.s32.totalorder %s95, 31
        %s99 = scalar_select %p98, %s95, 31
        %s100 = smul.addr %s97, 32
        %s101 = sadd.s32 %s99, %s100
        %s102 = smul.addr %s101, 4
        %s103 = scalar_lea.vmem %s0, %s102
        %s104 = smul.u32 32, %s15
      $region20: #{full_generator_forward.25} parent=15 // pred_fallthru
        _
    $region16: #{full_generator_forward.25} parent=5 // pred_fallthru
      _
    %p105 = scmp.le.s32.totalorder 1, %s7
    %p106 = scmp.lt.s32.totalorder %s7, 5
    %p107 = pnand %p105, %p106
    %p108 = pneg %p107
    // Predicated region
    $region21: #{full_generator_forward.25} parent=5 // pred_check
      _
    $region22: #{full_generator_forward.25} parent=5 // pred_check_branch
      %110 = sbr.rel (%p107) target = $region24
    $region23: #{full_generator_forward.25} parent=5 // pred_region
      %s111 = ssub.s32 %s7, 1
      %s112 = smul.u32 32, %s17
      %p113 = scmp.lt.s32.totalorder %s16, 3
      %s114 = scalar_select %p113, %s16, 3
      %p115 = scmp.lt.s32.totalorder %s112, 31
      %s116 = scalar_select %p115, %s112, 31
      %s117 = smul.addr %s114, 32
      %s118 = sadd.s32 %s116, %s117
      %s119 = smul.addr %s118, 4
      %s120 = scalar_lea.vmem %s0, %s119
      %p121 = pneg %p47
      %p122 = pneg %p44
      %p123 = pneg %p73
      %p124 = pneg %p70
      %p125 = scmp.lt.s32.totalorder %s16, 3
      %s126 = scalar_select %p125, %s16, 3
      %s127 = smul.addr %s126, 16
      %s128 = smul.addr %s127, 8
      %s129 = scalar_lea.vmem %s1, %s128
      %s130 = smul.u32 32, %s17
      %p131 = scmp.lt.s32.totalorder %s16, 3
      %s132 = scalar_select %p131, %s16, 3
      %p133 = scmp.lt.s32.totalorder %s130, 31
      %s134 = scalar_select %p133, %s130, 31
      %s135 = smul.addr %s132, 32
      %s136 = sadd.s32 %s134, %s135
      %s137 = smul.addr %s136, 4
      %s138 = scalar_lea.vmem %s0, %s137
      %s139 = smul.u32 32, %s17
      %p140 = scmp.lt.s32.totalorder %s16, 3
      %s141 = scalar_select %p140, %s16, 3
      %s142 = smul.addr %s141, 16
      %s143 = smul.addr %s142, 8
      %s144 = scalar_lea.vmem %s1, %s143
      %p145 = scmp.eq.s32.totalorder %s17, 0
      // Predicated region
      $region25: #{full_generator_forward.25} parent=23 // pred_check
        %p146 = pneg %p145
      $region26: #{full_generator_forward.25} parent=23 // pred_check_branch
        %148 = sbr.rel (%p146) target = $region28
      $region27: #{full_generator_forward.25} parent=23 // pred_region
        %149 = vst [vmem:[#allocation2] sm:$0xff] 0.0
        %150 = vst [vmem:[#allocation2 + $0x8] sm:$0xff] 0.0
        %151 = vst [vmem:[#allocation2 + $0x10] sm:$0xff] 0.0
        %152 = vst [vmem:[#allocation2 + $0x18] sm:$0xff] 0.0
        %153 = vst [vmem:[#allocation2 + $0x20] sm:$0xff] 0.0
        %154 = vst [vmem:[#allocation2 + $0x28] sm:$0xff] 0.0
        %155 = vst [vmem:[#allocation2 + $0x30] sm:$0xff] 0.0
        %156 = vst [vmem:[#allocation2 + $0x38] sm:$0xff] 0.0
        %157 = vst [vmem:[#allocation2 + $0x40] sm:$0xff] 0.0
        %158 = vst [vmem:[#allocation2 + $0x48] sm:$0xff] 0.0
        %159 = vst [vmem:[#allocation2 + $0x50] sm:$0xff] 0.0
        %160 = vst [vmem:[#allocation2 + $0x58] sm:$0xff] 0.0
        %161 = vst [vmem:[#allocation2 + $0x60] sm:$0xff] 0.0
        %162 = vst [vmem:[#allocation2 + $0x68] sm:$0xff] 0.0
        %163 = vst [vmem:[#allocation2 + $0x70] sm:$0xff] 0.0
        %164 = vst [vmem:[#allocation2 + $0x78] sm:$0xff] 0.0
      $region28: #{full_generator_forward.25} parent=23 // pred_fallthru
        _
      %v165 = vld [vmem:[%s138] sm:$0xf]
      %v166 = vld [vmem:[%s138 + $0x4] sm:$0xf]
      %v167 = vld [vmem:[%s138 + $0x8] sm:$0xf]
      %v168 = vld [vmem:[%s138 + $0xc] sm:$0xf]
      %v169 = vld [vmem:[%s138 + $0x10] sm:$0xf]
      %v170 = vld [vmem:[%s138 + $0x14] sm:$0xf]
      %v171 = vld [vmem:[%s138 + $0x18] sm:$0xf]
      %v172 = vld [vmem:[%s138 + $0x1c] sm:$0xf]
      %v173 = vld [vmem:[%s138 + $0x20] sm:$0xf]
      %v174 = vld [vmem:[%s138 + $0x24] sm:$0xf]
      %v175 = vld [vmem:[%s138 + $0x28] sm:$0xf]
      %v176 = vld [vmem:[%s138 + $0x2c] sm:$0xf]
      %v177 = vld [vmem:[%s138 + $0x30] sm:$0xf]
      %v178 = vld [vmem:[%s138 + $0x34] sm:$0xf]
      %v179 = vld [vmem:[%s138 + $0x38] sm:$0xf]
      %v180 = vld [vmem:[%s138 + $0x3c] sm:$0xf]
      %v181 = vld [vmem:[%s138 + $0x40] sm:$0xf]
      %v182 = vld [vmem:[%s138 + $0x44] sm:$0xf]
      %v183 = vld [vmem:[%s138 + $0x48] sm:$0xf]
      %v184 = vld [vmem:[%s138 + $0x4c] sm:$0xf]
      %v185 = vld [vmem:[%s138 + $0x50] sm:$0xf]
      %v186 = vld [vmem:[%s138 + $0x54] sm:$0xf]
      %v187 = vld [vmem:[%s138 + $0x58] sm:$0xf]
      %v188 = vld [vmem:[%s138 + $0x5c] sm:$0xf]
      %v189 = vld [vmem:[%s138 + $0x60] sm:$0xf]
      %v190 = vld [vmem:[%s138 + $0x64] sm:$0xf]
      %v191 = vld [vmem:[%s138 + $0x68] sm:$0xf]
      %v192 = vld [vmem:[%s138 + $0x6c] sm:$0xf]
      %v193 = vld [vmem:[%s138 + $0x70] sm:$0xf]
      %v194 = vld [vmem:[%s138 + $0x74] sm:$0xf]
      %v195 = vld [vmem:[%s138 + $0x78] sm:$0xf]
      %v196 = vld [vmem:[%s138 + $0x7c] sm:$0xf]
      %v197 = vunpack.c.l.bf16 %v165
      %v198 = vunpack.c.l.bf16 %v166
      %v199 = vunpack.c.l.bf16 %v167
      %v200 = vunpack.c.l.bf16 %v168
      %v201 = vunpack.c.l.bf16 %v169
      %v202 = vunpack.c.l.bf16 %v170
      %v203 = vunpack.c.l.bf16 %v171
      %v204 = vunpack.c.l.bf16 %v172
      %v205 = vunpack.c.l.bf16 %v173
      %v206 = vunpack.c.l.bf16 %v174
      %v207 = vunpack.c.l.bf16 %v175
      %v208 = vunpack.c.l.bf16 %v176
      %v209 = vunpack.c.l.bf16 %v177
      %v210 = vunpack.c.l.bf16 %v178
      %v211 = vunpack.c.l.bf16 %v179
      %v212 = vunpack.c.l.bf16 %v180
      %v213 = vunpack.c.l.bf16 %v181
      %v214 = vunpack.c.l.bf16 %v182
      %v215 = vunpack.c.l.bf16 %v183
      %v216 = vunpack.c.l.bf16 %v184
      %v217 = vunpack.c.l.bf16 %v185
      %v218 = vunpack.c.l.bf16 %v186
      %v219 = vunpack.c.l.bf16 %v187
      %v220 = vunpack.c.l.bf16 %v188
      %v221 = vunpack.c.l.bf16 %v189
      %v222 = vunpack.c.l.bf16 %v190
      %v223 = vunpack.c.l.bf16 %v191
      %v224 = vunpack.c.l.bf16 %v192
      %v225 = vunpack.c.l.bf16 %v193
      %v226 = vunpack.c.l.bf16 %v194
      %v227 = vunpack.c.l.bf16 %v195
      %v228 = vunpack.c.l.bf16 %v196
      %v229 = vld [vmem:[#allocation2] sm:$0xff]
      %v230 = vld [vmem:[#allocation2 + $0x8] sm:$0xff]
      %v231 = vld [vmem:[#allocation2 + $0x10] sm:$0xff]
      %v232 = vld [vmem:[#allocation2 + $0x18] sm:$0xff]
      %v233 = vld [vmem:[#allocation2 + $0x20] sm:$0xff]
      %v234 = vld [vmem:[#allocation2 + $0x28] sm:$0xff]
      %v235 = vld [vmem:[#allocation2 + $0x30] sm:$0xff]
      %v236 = vld [vmem:[#allocation2 + $0x38] sm:$0xff]
      %v237 = vld [vmem:[#allocation2 + $0x40] sm:$0xff]
      %v238 = vld [vmem:[#allocation2 + $0x48] sm:$0xff]
      %v239 = vld [vmem:[#allocation2 + $0x50] sm:$0xff]
      %v240 = vld [vmem:[#allocation2 + $0x58] sm:$0xff]
      %v241 = vld [vmem:[#allocation2 + $0x60] sm:$0xff]
      %v242 = vld [vmem:[#allocation2 + $0x68] sm:$0xff]
      %v243 = vld [vmem:[#allocation2 + $0x70] sm:$0xff]
      %v244 = vld [vmem:[#allocation2 + $0x78] sm:$0xff]
      %245 = vxpose.xlu0.b32.start [1/16] %v197, 128
      %246 = vxpose.xlu0.b32.cont [2/16] %v198, 128
      %247 = vxpose.xlu0.b32.cont [3/16] %v199, 128
      %248 = vxpose.xlu0.b32.cont [4/16] %v200, 128
      %249 = vxpose.xlu0.b32.cont [5/16] %v201, 128
      %250 = vxpose.xlu0.b32.cont [6/16] %v202, 128
      %251 = vxpose.xlu0.b32.cont [7/16] %v203, 128
      %252 = vxpose.xlu0.b32.cont [8/16] %v204, 128
      %253 = vxpose.xlu0.b32.cont [9/16] %v205, 128
      %254 = vxpose.xlu0.b32.cont [10/16] %v206, 128
      %255 = vxpose.xlu0.b32.cont [11/16] %v207, 128
      %256 = vxpose.xlu0.b32.cont [12/16] %v208, 128
      %257 = vxpose.xlu0.b32.cont [13/16] %v209, 128
      %258 = vxpose.xlu0.b32.cont [14/16] %v210, 128
      %259 = vxpose.xlu0.b32.cont [15/16] %v211, 128
      %260 = vxpose.xlu0.b32.end [16/16] %v212, 128
      %v261 = vpop.trf.xlu0
      %v262 = vpop.trf.xlu0
      %v263 = vpop.trf.xlu0
      %v264 = vpop.trf.xlu0
      %v265 = vpop.trf.xlu0
      %v266 = vpop.trf.xlu0
      %v267 = vpop.trf.xlu0
      %v268 = vpop.trf.xlu0
      %v269 = vpop.trf.xlu0
      %v270 = vpop.trf.xlu0
      %v271 = vpop.trf.xlu0
      %v272 = vpop.trf.xlu0
      %v273 = vpop.trf.xlu0
      %v274 = vpop.trf.xlu0
      %v275 = vpop.trf.xlu0
      %v276 = vpop.trf.xlu0
      %277 = vxpose.xlu0.b32.start [1/16] %v213, 128
      %278 = vxpose.xlu0.b32.cont [2/16] %v214, 128
      %279 = vxpose.xlu0.b32.cont [3/16] %v215, 128
      %280 = vxpose.xlu0.b32.cont [4/16] %v216, 128
      %281 = vxpose.xlu0.b32.cont [5/16] %v217, 128
      %282 = vxpose.xlu0.b32.cont [6/16] %v218, 128
      %283 = vxpose.xlu0.b32.cont [7/16] %v219, 128
      %284 = vxpose.xlu0.b32.cont [8/16] %v220, 128
      %285 = vxpose.xlu0.b32.cont [9/16] %v221, 128
      %286 = vxpose.xlu0.b32.cont [10/16] %v222, 128
      %287 = vxpose.xlu0.b32.cont [11/16] %v223, 128
      %288 = vxpose.xlu0.b32.cont [12/16] %v224, 128
      %289 = vxpose.xlu0.b32.cont [13/16] %v225, 128
      %290 = vxpose.xlu0.b32.cont [14/16] %v226, 128
      %291 = vxpose.xlu0.b32.cont [15/16] %v227, 128
      %292 = vxpose.xlu0.b32.end [16/16] %v228, 128
      %v293 = vpop.trf.xlu0
      %v294 = vpop.trf.xlu0
      %v295 = vpop.trf.xlu0
      %v296 = vpop.trf.xlu0
      %v297 = vpop.trf.xlu0
      %v298 = vpop.trf.xlu0
      %v299 = vpop.trf.xlu0
      %v300 = vpop.trf.xlu0
      %v301 = vpop.trf.xlu0
      %v302 = vpop.trf.xlu0
      %v303 = vpop.trf.xlu0
      %v304 = vpop.trf.xlu0
      %v305 = vpop.trf.xlu0
      %v306 = vpop.trf.xlu0
      %v307 = vpop.trf.xlu0
      %v308 = vpop.trf.xlu0
      %309 = vmatpush.msra.mxu0 %v212
      %310 = vmatpush.msra.mxu0 %v211
      %311 = vmatpush.msra.mxu0 %v210
      %312 = vmatpush.msra.mxu0 %v209
      %313 = vmatpush.msra.mxu0 %v208
      %314 = vmatpush.msra.mxu0 %v207
      %315 = vmatpush.msra.mxu0 %v206
      %316 = vmatpush.msra.mxu0 %v205
      %317 = vmatpush.msra.mxu0 %v204
      %318 = vmatpush.msra.mxu0 %v203
      %319 = vmatpush.msra.mxu0 %v202
      %320 = vmatpush.msra.mxu0 %v201
      %321 = vmatpush.msra.mxu0 %v200
      %322 = vmatpush.msra.mxu0 %v199
      %323 = vmatpush.msra.mxu0 %v198
      %324 = vmatpush.msra.mxu0 %v197
      %325 = vmatmul.f32.gmra.mxu0 %v261
      %v326 = vpop.f32.mrf.mxu0
      %v327 = vadd.f32 0.0, %v326
      %328 = vmatmul.f32.gmra.mxu0 %v262
      %v329 = vpop.f32.mrf.mxu0
      %v330 = vadd.f32 0.0, %v329
      %331 = vmatmul.f32.gmra.mxu0 %v263
      %v332 = vpop.f32.mrf.mxu0
      %v333 = vadd.f32 0.0, %v332
      %334 = vmatmul.f32.gmra.mxu0 %v264
      %v335 = vpop.f32.mrf.mxu0
      %v336 = vadd.f32 0.0, %v335
      %337 = vmatmul.f32.gmra.mxu0 %v265
      %v338 = vpop.f32.mrf.mxu0
      %v339 = vadd.f32 0.0, %v338
      %340 = vmatmul.f32.gmra.mxu0 %v266
      %v341 = vpop.f32.mrf.mxu0
      %v342 = vadd.f32 0.0, %v341
      %343 = vmatmul.f32.gmra.mxu0 %v267
      %v344 = vpop.f32.mrf.mxu0
      %v345 = vadd.f32 0.0, %v344
      %346 = vmatmul.f32.gmra.mxu0 %v268
      %v347 = vpop.f32.mrf.mxu0
      %v348 = vadd.f32 0.0, %v347
      %349 = vmatmul.f32.gmra.mxu0 %v269
      %v350 = vpop.f32.mrf.mxu0
      %v351 = vadd.f32 0.0, %v350
      %352 = vmatmul.f32.gmra.mxu0 %v270
      %v353 = vpop.f32.mrf.mxu0
      %v354 = vadd.f32 0.0, %v353
      %355 = vmatmul.f32.gmra.mxu0 %v271
      %v356 = vpop.f32.mrf.mxu0
      %v357 = vadd.f32 0.0, %v356
      %358 = vmatmul.f32.gmra.mxu0 %v272
      %v359 = vpop.f32.mrf.mxu0
      %v360 = vadd.f32 0.0, %v359
      %361 = vmatmul.f32.gmra.mxu0 %v273
      %v362 = vpop.f32.mrf.mxu0
      %v363 = vadd.f32 0.0, %v362
      %364 = vmatmul.f32.gmra.mxu0 %v274
      %v365 = vpop.f32.mrf.mxu0
      %v366 = vadd.f32 0.0, %v365
      %367 = vmatmul.f32.gmra.mxu0 %v275
      %v368 = vpop.f32.mrf.mxu0
      %v369 = vadd.f32 0.0, %v368
      %370 = vmatmul.f32.gmra.mxu0 %v276
      %v371 = vpop.f32.mrf.mxu0
      %v372 = vadd.f32 0.0, %v371
      %373 = vdwg.mxu0
      %374 = vmatpush.msra.mxu0 %v228
      %375 = vmatpush.msra.mxu0 %v227
      %376 = vmatpush.msra.mxu0 %v226
      %377 = vmatpush.msra.mxu0 %v225
      %378 = vmatpush.msra.mxu0 %v224
      %379 = vmatpush.msra.mxu0 %v223
      %380 = vmatpush.msra.mxu0 %v222
      %381 = vmatpush.msra.mxu0 %v221
      %382 = vmatpush.msra.mxu0 %v220
      %383 = vmatpush.msra.mxu0 %v219
      %384 = vmatpush.msra.mxu0 %v218
      %385 = vmatpush.msra.mxu0 %v217
      %386 = vmatpush.msra.mxu0 %v216
      %387 = vmatpush.msra.mxu0 %v215
      %388 = vmatpush.msra.mxu0 %v214
      %389 = vmatpush.msra.mxu0 %v213
      %390 = vmatmul.f32.gmra.mxu0 %v293
      %v391 = vpop.f32.mrf.mxu0
      %v392 = vadd.f32 %v327, %v391
      %393 = vmatmul.f32.gmra.mxu0 %v294
      %v394 = vpop.f32.mrf.mxu0
      %v395 = vadd.f32 %v330, %v394
      %396 = vmatmul.f32.gmra.mxu0 %v295
      %v397 = vpop.f32.mrf.mxu0
      %v398 = vadd.f32 %v333, %v397
      %399 = vmatmul.f32.gmra.mxu0 %v296
      %v400 = vpop.f32.mrf.mxu0
      %v401 = vadd.f32 %v336, %v400
      %402 = vmatmul.f32.gmra.mxu0 %v297
      %v403 = vpop.f32.mrf.mxu0
      %v404 = vadd.f32 %v339, %v403
      %405 = vmatmul.f32.gmra.mxu0 %v298
      %v406 = vpop.f32.mrf.mxu0
      %v407 = vadd.f32 %v342, %v406
      %408 = vmatmul.f32.gmra.mxu0 %v299
      %v409 = vpop.f32.mrf.mxu0
      %v410 = vadd.f32 %v345, %v409
      %411 = vmatmul.f32.gmra.mxu0 %v300
      %v412 = vpop.f32.mrf.mxu0
      %v413 = vadd.f32 %v348, %v412
      %414 = vmatmul.f32.gmra.mxu0 %v301
      %v415 = vpop.f32.mrf.mxu0
      %v416 = vadd.f32 %v351, %v415
      %417 = vmatmul.f32.gmra.mxu0 %v302
      %v418 = vpop.f32.mrf.mxu0
      %v419 = vadd.f32 %v354, %v418
      %420 = vmatmul.f32.gmra.mxu0 %v303
      %v421 = vpop.f32.mrf.mxu0
      %v422 = vadd.f32 %v357, %v421
      %423 = vmatmul.f32.gmra.mxu0 %v304
      %v424 = vpop.f32.mrf.mxu0
      %v425 = vadd.f32 %v360, %v424
      %426 = vmatmul.f32.gmra.mxu0 %v305
      %v427 = vpop.f32.mrf.mxu0
      %v428 = vadd.f32 %v363, %v427
      %429 = vmatmul.f32.gmra.mxu0 %v306
      %v430 = vpop.f32.mrf.mxu0
      %v431 = vadd.f32 %v366, %v430
      %432 = vmatmul.f32.gmra.mxu0 %v307
      %v433 = vpop.f32.mrf.mxu0
      %v434 = vadd.f32 %v369, %v433
      %435 = vmatmul.f32.gmra.mxu0 %v308
      %v436 = vpop.f32.mrf.mxu0
      %v437 = vadd.f32 %v372, %v436
      %438 = vdwg.mxu0
      %v439 = vadd.f32 %v229, %v392
      %v440 = vadd.f32 %v230, %v395
      %v441 = vadd.f32 %v231, %v398
      %v442 = vadd.f32 %v232, %v401
      %v443 = vadd.f32 %v233, %v404
      %v444 = vadd.f32 %v234, %v407
      %v445 = vadd.f32 %v235, %v410
      %v446 = vadd.f32 %v236, %v413
      %v447 = vadd.f32 %v237, %v416
      %v448 = vadd.f32 %v238, %v419
      %v449 = vadd.f32 %v239, %v422
      %v450 = vadd.f32 %v240, %v425
      %v451 = vadd.f32 %v241, %v428
      %v452 = vadd.f32 %v242, %v431
      %v453 = vadd.f32 %v243, %v434
      %v454 = vadd.f32 %v244, %v437
      %455 = vst [vmem:[#allocation2] sm:$0xff] %v439
      %456 = vst [vmem:[#allocation2 + $0x8] sm:$0xff] %v440
      %457 = vst [vmem:[#allocation2 + $0x10] sm:$0xff] %v441
      %458 = vst [vmem:[#allocation2 + $0x18] sm:$0xff] %v442
      %459 = vst [vmem:[#allocation2 + $0x20] sm:$0xff] %v443
      %460 = vst [vmem:[#allocation2 + $0x28] sm:$0xff] %v444
      %461 = vst [vmem:[#allocation2 + $0x30] sm:$0xff] %v445
      %462 = vst [vmem:[#allocation2 + $0x38] sm:$0xff] %v446
      %463 = vst [vmem:[#allocation2 + $0x40] sm:$0xff] %v447
      %464 = vst [vmem:[#allocation2 + $0x48] sm:$0xff] %v448
      %465 = vst [vmem:[#allocation2 + $0x50] sm:$0xff] %v449
      %466 = vst [vmem:[#allocation2 + $0x58] sm:$0xff] %v450
      %467 = vst [vmem:[#allocation2 + $0x60] sm:$0xff] %v451
      %468 = vst [vmem:[#allocation2 + $0x68] sm:$0xff] %v452
      %469 = vst [vmem:[#allocation2 + $0x70] sm:$0xff] %v453
      %470 = vst [vmem:[#allocation2 + $0x78] sm:$0xff] %v454
      // Predicated region
      $region29: #{full_generator_forward.25} parent=23 // pred_check
        %p471 = pneg %p145
      $region30: #{full_generator_forward.25} parent=23 // pred_check_branch
        %473 = sbr.rel (%p471) target = $region32
      $region31: #{full_generator_forward.25} parent=23 // pred_region
        %v474 = vld [vmem:[#allocation2] sm:$0xff]
        %v475 = vld [vmem:[#allocation2 + $0x8] sm:$0xff]
        %v476 = vld [vmem:[#allocation2 + $0x10] sm:$0xff]
        %v477 = vld [vmem:[#allocation2 + $0x18] sm:$0xff]
        %v478 = vld [vmem:[#allocation2 + $0x20] sm:$0xff]
        %v479 = vld [vmem:[#allocation2 + $0x28] sm:$0xff]
        %v480 = vld [vmem:[#allocation2 + $0x30] sm:$0xff]
        %v481 = vld [vmem:[#allocation2 + $0x38] sm:$0xff]
        %v482 = vld [vmem:[#allocation2 + $0x40] sm:$0xff]
        %v483 = vld [vmem:[#allocation2 + $0x48] sm:$0xff]
        %v484 = vld [vmem:[#allocation2 + $0x50] sm:$0xff]
        %v485 = vld [vmem:[#allocation2 + $0x58] sm:$0xff]
        %v486 = vld [vmem:[#allocation2 + $0x60] sm:$0xff]
        %v487 = vld [vmem:[#allocation2 + $0x68] sm:$0xff]
        %v488 = vld [vmem:[#allocation2 + $0x70] sm:$0xff]
        %v489 = vld [vmem:[#allocation2 + $0x78] sm:$0xff]
        %490 = vst [vmem:[%s144] sm:$0xff] %v474
        %491 = vst [vmem:[%s144 + $0x8] sm:$0xff] %v475
        %492 = vst [vmem:[%s144 + $0x10] sm:$0xff] %v476
        %493 = vst [vmem:[%s144 + $0x18] sm:$0xff] %v477
        %494 = vst [vmem:[%s144 + $0x20] sm:$0xff] %v478
        %495 = vst [vmem:[%s144 + $0x28] sm:$0xff] %v479
        %496 = vst [vmem:[%s144 + $0x30] sm:$0xff] %v480
        %497 = vst [vmem:[%s144 + $0x38] sm:$0xff] %v481
        %498 = vst [vmem:[%s144 + $0x40] sm:$0xff] %v482
        %499 = vst [vmem:[%s144 + $0x48] sm:$0xff] %v483
        %500 = vst [vmem:[%s144 + $0x50] sm:$0xff] %v484
        %501 = vst [vmem:[%s144 + $0x58] sm:$0xff] %v485
        %502 = vst [vmem:[%s144 + $0x60] sm:$0xff] %v486
        %503 = vst [vmem:[%s144 + $0x68] sm:$0xff] %v487
        %504 = vst [vmem:[%s144 + $0x70] sm:$0xff] %v488
        %505 = vst [vmem:[%s144 + $0x78] sm:$0xff] %v489
      $region32: #{full_generator_forward.25} parent=23 // pred_fallthru
        _
      %p506 = scmp.lt.s32.totalorder %s16, 3
      %s507 = scalar_select %p506, %s16, 3
      %s508 = smul.addr %s507, 16
      %s509 = smul.addr %s508, 8
      %s510 = scalar_lea.vmem %s1, %s509
      // Predicated region
      $region33: #{full_generator_forward.25} parent=23 // pred_check
        %p511 = pneg %p70
      $region34: #{full_generator_forward.25} parent=23 // pred_check_branch
        %513 = sbr.rel (%p511) target = $region36
      $region35: #{full_generator_forward.25} parent=23 // pred_region
        _
      $region36: #{full_generator_forward.25} parent=23 // pred_fallthru
        _
    $region24: #{full_generator_forward.25} parent=5 // pred_fallthru
      _
    %p514 = scmp.le.s32.totalorder 2, %s7
    // Predicated region
    $region37: #{full_generator_forward.25} parent=5 // pred_check
      %p515 = pneg %p514
    $region38: #{full_generator_forward.25} parent=5 // pred_check_branch
      %517 = sbr.rel (%p515) target = $region40
    $region39: #{full_generator_forward.25} parent=5 // pred_region
      %s518 = ssub.s32 %s7, 2
      // Predicated region
      $region41: #{full_generator_forward.25} parent=39 // pred_check
        %p519 = pneg %p76
      $region42: #{full_generator_forward.25} parent=39 // pred_check_branch
        %521 = sbr.rel (%p519) target = $region44
      $region43: #{full_generator_forward.25} parent=39 // pred_region
        %p522 = scmp.lt.s32.totalorder %s18, 3
        %s523 = scalar_select %p522, %s18, 3
        %s524 = smul.addr %s523, 16
        %s525 = smul.addr %s524, 8
        %s526 = scalar_lea.vmem %s1, %s525
      $region44: #{full_generator_forward.25} parent=39 // pred_fallthru
        _
    $region40: #{full_generator_forward.25} parent=5 // pred_fallthru
      _
  $region6: #{full_generator_forward.25} parent=0 // loop_footer
    %s11 = sadd.s32 1, %s7
  $region7: #{full_generator_forward.25} parent=0 // loop_footer_branch
    %6 = sbr.rel target = $region3
  $region8: #{full_generator_forward.25} parent=0 // loop_exit
    _

// kernel: full_generator_forward.24
$region0: #{full_generator_forward.24}
  #allocation0 [shape = 'u32[]', space=smem, size = 0x4, offset = 0x4, fixed_abs, tag = 'smem constant byte address 0x4 - core index']
  #allocation1 [shape = 'u32[72,128]{1,0:T(1,128)}', space=vmem, size = 0x9000, scoped, tag = 'internal scratch']
  %s0 = inlined_call_operand.vmem [shape: bf16[256,128], index: 0, kind: input, shape index: {}]
  %s1 = inlined_call_operand.vmem [shape: bf16[128,128], index: 1, kind: input, shape index: {}]
  %s2 = inlined_call_operand.vmem [shape: bf16[256,128], index: 2, kind: output, shape index: {}]
  %s3 = sld [smem:[#allocation0]]
  $region18: #{full_generator_forward.24} parent=0
    _
  %s5 = ssub.s32 1, %s3
  %s6 = scalar_select 0, %s5, %s3
  // Predicated region
  $region2: #{full_generator_forward.24} parent=0 // pred_check
    _
  $region3: #{full_generator_forward.24} parent=0 // pred_check_branch
    %8 = sbr.rel (0) target = $region5
  $region4: #{full_generator_forward.24} parent=0 // pred_region
    _
  $region5: #{full_generator_forward.24} parent=0 // pred_fallthru
    _
  // Predicated region
  $region6: #{full_generator_forward.24} parent=0 // pred_check
    _
  $region7: #{full_generator_forward.24} parent=0 // pred_check_branch
    %10 = sbr.rel (0) target = $region9
  $region8: #{full_generator_forward.24} parent=0 // pred_region
    _
  $region9: #{full_generator_forward.24} parent=0 // pred_fallthru
    _
  %v11 = vld [vmem:[%s0] sm:$0xf]
  %v12 = vld [vmem:[%s0 + $0x4] sm:$0xf]
  %v13 = vld [vmem:[%s0 + $0x8] sm:$0xf]
  %v14 = vld [vmem:[%s0 + $0xc] sm:$0xf]
  %v15 = vld [vmem:[%s0 + $0x10] sm:$0xf]
  %v16 = vld [vmem:[%s0 + $0x14] sm:$0xf]
  %v17 = vld [vmem:[%s0 + $0x18] sm:$0xf]
  %v18 = vld [vmem:[%s0 + $0x1c] sm:$0xf]
  %v19 = vld [vmem:[%s0 + $0x20] sm:$0xf]
  %v20 = vld [vmem:[%s0 + $0x24] sm:$0xf]
  %v21 = vld [vmem:[%s0 + $0x28] sm:$0xf]
  %v22 = vld [vmem:[%s0 + $0x2c] sm:$0xf]
  %v23 = vld [vmem:[%s0 + $0x30] sm:$0xf]
  %v24 = vld [vmem:[%s0 + $0x34] sm:$0xf]
  %v25 = vld [vmem:[%s0 + $0x38] sm:$0xf]
  %v26 = vld [vmem:[%s0 + $0x3c] sm:$0xf]
  %v27 = vld [vmem:[%s0 + $0x40] sm:$0xf]
  %v28 = vld [vmem:[%s0 + $0x44] sm:$0xf]
  %v29 = vld [vmem:[%s0 + $0x48] sm:$0xf]
  %v30 = vld [vmem:[%s0 + $0x4c] sm:$0xf]
  %v31 = vld [vmem:[%s0 + $0x50] sm:$0xf]
  %v32 = vld [vmem:[%s0 + $0x54] sm:$0xf]
  %v33 = vld [vmem:[%s0 + $0x58] sm:$0xf]
  %v34 = vld [vmem:[%s0 + $0x5c] sm:$0xf]
  %v35 = vld [vmem:[%s0 + $0x60] sm:$0xf]
  %v36 = vld [vmem:[%s0 + $0x64] sm:$0xf]
  %v37 = vld [vmem:[%s0 + $0x68] sm:$0xf]
  %v38 = vld [vmem:[%s0 + $0x6c] sm:$0xf]
  %v39 = vld [vmem:[%s0 + $0x70] sm:$0xf]
  %v40 = vld [vmem:[%s0 + $0x74] sm:$0xf]
  %v41 = vld [vmem:[%s0 + $0x78] sm:$0xf]
  %v42 = vld [vmem:[%s0 + $0x7c] sm:$0xf]
  %v43 = vld [vmem:[%s1] sm:$0xf]
  %v44 = vld [vmem:[%s1 + $0x4] sm:$0xf]
  %v45 = vld [vmem:[%s1 + $0x8] sm:$0xf]
  %v46 = vld [vmem:[%s1 + $0xc] sm:$0xf]
  %v47 = vld [vmem:[%s1 + $0x10] sm:$0xf]
  %v48 = vld [vmem:[%s1 + $0x14] sm:$0xf]
  %v49 = vld [vmem:[%s1 + $0x18] sm:$0xf]
  %v50 = vld [vmem:[%s1 + $0x1c] sm:$0xf]
  %v51 = vld [vmem:[%s1 + $0x20] sm:$0xf]
  %v52 = vld [vmem:[%s1 + $0x24] sm:$0xf]
  %v53 = vld [vmem:[%s1 + $0x28] sm:$0xf]
  %v54 = vld [vmem:[%s1 + $0x2c] sm:$0xf]
  %v55 = vld [vmem:[%s1 + $0x30] sm:$0xf]
  %v56 = vld [vmem:[%s1 + $0x34] sm:$0xf]
  %v57 = vld [vmem:[%s1 + $0x38] sm:$0xf]
  %v58 = vld [vmem:[%s1 + $0x3c] sm:$0xf]
  %v91 = vunpack.c.l.b16 %v11
  %v92 = vunpack.c.l.b16 %v12
  %v93 = vunpack.c.l.b16 %v13
  %v94 = vunpack.c.l.b16 %v14
  %v95 = vunpack.c.l.b16 %v15
  %v96 = vunpack.c.l.b16 %v16
  %v97 = vunpack.c.l.b16 %v17
  %v98 = vunpack.c.l.b16 %v18
  %v99 = vunpack.c.l.b16 %v19
  %v100 = vunpack.c.l.b16 %v20
  %v101 = vunpack.c.l.b16 %v21
  %v102 = vunpack.c.l.b16 %v22
  %v103 = vunpack.c.l.b16 %v23
  %v104 = vunpack.c.l.b16 %v24
  %v105 = vunpack.c.l.b16 %v25
  %v106 = vunpack.c.l.b16 %v26
  %v107 = vunpack.c.l.b16 %v27
  %v108 = vunpack.c.l.b16 %v28
  %v109 = vunpack.c.l.b16 %v29
  %v110 = vunpack.c.l.b16 %v30
  %v111 = vunpack.c.l.b16 %v31
  %v112 = vunpack.c.l.b16 %v32
  %v113 = vunpack.c.l.b16 %v33
  %v114 = vunpack.c.l.b16 %v34
  %v115 = vunpack.c.l.b16 %v35
  %v116 = vunpack.c.l.b16 %v36
  %v117 = vunpack.c.l.b16 %v37
  %v118 = vunpack.c.l.b16 %v38
  %v119 = vunpack.c.l.b16 %v39
  %v120 = vunpack.c.l.b16 %v40
  %v121 = vunpack.c.l.b16 %v41
  %v122 = vunpack.c.l.b16 %v42
  %v123 = vpack.c.b16 %v92, %v91
  %v124 = vpack.c.b16 %v94, %v93
  %v125 = vpack.c.b16 %v96, %v95
  %v126 = vpack.c.b16 %v98, %v97
  %v127 = vpack.c.b16 %v100, %v99
  %v128 = vpack.c.b16 %v102, %v101
  %v129 = vpack.c.b16 %v104, %v103
  %v130 = vpack.c.b16 %v106, %v105
  %v131 = vpack.c.b16 %v108, %v107
  %v132 = vpack.c.b16 %v110, %v109
  %v133 = vpack.c.b16 %v112, %v111
  %v134 = vpack.c.b16 %v114, %v113
  %v135 = vpack.c.b16 %v116, %v115
  %v136 = vpack.c.b16 %v118, %v117
  %v137 = vpack.c.b16 %v120, %v119
  %v138 = vpack.c.b16 %v122, %v121
  %v171 = vunpack.c.l.b16 %v43
  %v172 = vunpack.c.l.b16 %v44
  %v173 = vunpack.c.l.b16 %v45
  %v174 = vunpack.c.l.b16 %v46
  %v175 = vunpack.c.l.b16 %v47
  %v176 = vunpack.c.l.b16 %v48
  %v177 = vunpack.c.l.b16 %v49
  %v178 = vunpack.c.l.b16 %v50
  %v179 = vunpack.c.l.b16 %v51
  %v180 = vunpack.c.l.b16 %v52
  %v181 = vunpack.c.l.b16 %v53
  %v182 = vunpack.c.l.b16 %v54
  %v183 = vunpack.c.l.b16 %v55
  %v184 = vunpack.c.l.b16 %v56
  %v185 = vunpack.c.l.b16 %v57
  %v186 = vunpack.c.l.b16 %v58
  %v187 = vpack.c.b16 %v172, %v171
  %v188 = vpack.c.b16 %v174, %v173
  %v189 = vpack.c.b16 %v176, %v175
  %v190 = vpack.c.b16 %v178, %v177
  %v191 = vpack.c.b16 %v180, %v179
  %v192 = vpack.c.b16 %v182, %v181
  %v193 = vpack.c.b16 %v184, %v183
  %v194 = vpack.c.b16 %v186, %v185
  %203 = vmatpush.bf16.msra.mxu0 %v194
  %204 = vmatpush.bf16.msra.mxu0 %v193
  %205 = vmatpush.bf16.msra.mxu0 %v192
  %206 = vmatpush.bf16.msra.mxu0 %v191
  %207 = vmatpush.bf16.msra.mxu0 %v190
  %208 = vmatpush.bf16.msra.mxu0 %v189
  %209 = vmatpush.bf16.msra.mxu0 %v188
  %210 = vmatpush.bf16.msra.mxu0 %v187
  %211 = vmatmul.bf16.gmra.mxu0 %v123
  %v212 = vpop.f32.mrf.mxu0
  %v213 = vadd.f32 0.0, %v212
  %v214 = vpop.f32.mrf.mxu0
  %v215 = vadd.f32 0.0, %v214
  %216 = vmatmul.bf16.gmra.mxu0 %v124
  %v217 = vpop.f32.mrf.mxu0
  %v218 = vadd.f32 0.0, %v217
  %v219 = vpop.f32.mrf.mxu0
  %v220 = vadd.f32 0.0, %v219
  %221 = vmatmul.bf16.gmra.mxu0 %v125
  %v222 = vpop.f32.mrf.mxu0
  %v223 = vadd.f32 0.0, %v222
  %v224 = vpop.f32.mrf.mxu0
  %v225 = vadd.f32 0.0, %v224
  %226 = vmatmul.bf16.gmra.mxu0 %v126
  %v227 = vpop.f32.mrf.mxu0
  %v228 = vadd.f32 0.0, %v227
  %v229 = vpop.f32.mrf.mxu0
  %v230 = vadd.f32 0.0, %v229
  %231 = vmatmul.bf16.gmra.mxu0 %v127
  %v232 = vpop.f32.mrf.mxu0
  %v233 = vadd.f32 0.0, %v232
  %v234 = vpop.f32.mrf.mxu0
  %v235 = vadd.f32 0.0, %v234
  %236 = vmatmul.bf16.gmra.mxu0 %v128
  %v237 = vpop.f32.mrf.mxu0
  %v238 = vadd.f32 0.0, %v237
  %v239 = vpop.f32.mrf.mxu0
  %v240 = vadd.f32 0.0, %v239
  %241 = vmatmul.bf16.gmra.mxu0 %v129
  %v242 = vpop.f32.mrf.mxu0
  %v243 = vadd.f32 0.0, %v242
  %v244 = vpop.f32.mrf.mxu0
  %v245 = vadd.f32 0.0, %v244
  %246 = vmatmul.bf16.gmra.mxu0 %v130
  %v247 = vpop.f32.mrf.mxu0
  %v248 = vadd.f32 0.0, %v247
  %v249 = vpop.f32.mrf.mxu0
  %v250 = vadd.f32 0.0, %v249
  %251 = vmatmul.bf16.gmra.mxu0 %v131
  %v252 = vpop.f32.mrf.mxu0
  %v253 = vadd.f32 0.0, %v252
  %v254 = vpop.f32.mrf.mxu0
  %v255 = vadd.f32 0.0, %v254
  %256 = vmatmul.bf16.gmra.mxu0 %v132
  %v257 = vpop.f32.mrf.mxu0
  %v258 = vadd.f32 0.0, %v257
  %v259 = vpop.f32.mrf.mxu0
  %v260 = vadd.f32 0.0, %v259
  %261 = vmatmul.bf16.gmra.mxu0 %v133
  %v262 = vpop.f32.mrf.mxu0
  %v263 = vadd.f32 0.0, %v262
  %v264 = vpop.f32.mrf.mxu0
  %v265 = vadd.f32 0.0, %v264
  %266 = vmatmul.bf16.gmra.mxu0 %v134
  %v267 = vpop.f32.mrf.mxu0
  %v268 = vadd.f32 0.0, %v267
  %v269 = vpop.f32.mrf.mxu0
  %v270 = vadd.f32 0.0, %v269
  %271 = vmatmul.bf16.gmra.mxu0 %v135
  %v272 = vpop.f32.mrf.mxu0
  %v273 = vadd.f32 0.0, %v272
  %v274 = vpop.f32.mrf.mxu0
  %v275 = vadd.f32 0.0, %v274
  %276 = vmatmul.bf16.gmra.mxu0 %v136
  %v277 = vpop.f32.mrf.mxu0
  %v278 = vadd.f32 0.0, %v277
  %v279 = vpop.f32.mrf.mxu0
  %v280 = vadd.f32 0.0, %v279
  %281 = vmatmul.bf16.gmra.mxu0 %v137
  %v282 = vpop.f32.mrf.mxu0
  %v283 = vadd.f32 0.0, %v282
  %v284 = vpop.f32.mrf.mxu0
  %v285 = vadd.f32 0.0, %v284
  %286 = vmatmul.bf16.gmra.mxu0 %v138
  %v287 = vpop.f32.mrf.mxu0
  %v288 = vadd.f32 0.0, %v287
  %v289 = vpop.f32.mrf.mxu0
  %v290 = vadd.f32 0.0, %v289
  %291 = vdwg.mxu0
  %v292 = vmax.f32 %v213, 0.0
  %v293 = vmax.f32 %v215, 0.0
  %v294 = vmax.f32 %v218, 0.0
  %v295 = vmax.f32 %v220, 0.0
  %v296 = vmax.f32 %v223, 0.0
  %v297 = vmax.f32 %v225, 0.0
  %v298 = vmax.f32 %v228, 0.0
  %v299 = vmax.f32 %v230, 0.0
  %v300 = vmax.f32 %v233, 0.0
  %v301 = vmax.f32 %v235, 0.0
  %v302 = vmax.f32 %v238, 0.0
  %v303 = vmax.f32 %v240, 0.0
  %v304 = vmax.f32 %v243, 0.0
  %v305 = vmax.f32 %v245, 0.0
  %v306 = vmax.f32 %v248, 0.0
  %v307 = vmax.f32 %v250, 0.0
  %v308 = vmax.f32 %v253, 0.0
  %v309 = vmax.f32 %v255, 0.0
  %v310 = vmax.f32 %v258, 0.0
  %v311 = vmax.f32 %v260, 0.0
  %v312 = vmax.f32 %v263, 0.0
  %v313 = vmax.f32 %v265, 0.0
  %v314 = vmax.f32 %v268, 0.0
  %v315 = vmax.f32 %v270, 0.0
  %v316 = vmax.f32 %v273, 0.0
  %v317 = vmax.f32 %v275, 0.0
  %v318 = vmax.f32 %v278, 0.0
  %v319 = vmax.f32 %v280, 0.0
  %v320 = vmax.f32 %v283, 0.0
  %v321 = vmax.f32 %v285, 0.0
  %v322 = vmax.f32 %v288, 0.0
  %v323 = vmax.f32 %v290, 0.0
  %v324 = vpack.c.bf16 %v292, %v292
  %v325 = vpack.c.bf16 %v293, %v293
  %v326 = vpack.c.bf16 %v294, %v294
  %v327 = vpack.c.bf16 %v295, %v295
  %v328 = vpack.c.bf16 %v296, %v296
  %v329 = vpack.c.bf16 %v297, %v297
  %v330 = vpack.c.bf16 %v298, %v298
  %v331 = vpack.c.bf16 %v299, %v299
  %v332 = vpack.c.bf16 %v300, %v300
  %v333 = vpack.c.bf16 %v301, %v301
  %v334 = vpack.c.bf16 %v302, %v302
  %v335 = vpack.c.bf16 %v303, %v303
  %v336 = vpack.c.bf16 %v304, %v304
  %v337 = vpack.c.bf16 %v305, %v305
  %v338 = vpack.c.bf16 %v306, %v306
  %v339 = vpack.c.bf16 %v307, %v307
  %v340 = vpack.c.bf16 %v308, %v308
  %v341 = vpack.c.bf16 %v309, %v309
  %v342 = vpack.c.bf16 %v310, %v310
  %v343 = vpack.c.bf16 %v311, %v311
  %v344 = vpack.c.bf16 %v312, %v312
  %v345 = vpack.c.bf16 %v313, %v313
  %v346 = vpack.c.bf16 %v314, %v314
  %v347 = vpack.c.bf16 %v315, %v315
  %v348 = vpack.c.bf16 %v316, %v316
  %v349 = vpack.c.bf16 %v317, %v317
  %v350 = vpack.c.bf16 %v318, %v318
  %v351 = vpack.c.bf16 %v319, %v319
  %v352 = vpack.c.bf16 %v320, %v320
  %v353 = vpack.c.bf16 %v321, %v321
  %v354 = vpack.c.bf16 %v322, %v322
  %v355 = vpack.c.bf16 %v323, %v323
  %356 = vst [vmem:[%s2] sm:$0xf] %v324
  %357 = vst [vmem:[%s2 + $0x4] sm:$0xf] %v325
  %358 = vst [vmem:[%s2 + $0x8] sm:$0xf] %v326
  %359 = vst [vmem:[%s2 + $0xc] sm:$0xf] %v327
  %360 = vst [vmem:[%s2 + $0x10] sm:$0xf] %v328
  %361 = vst [vmem:[%s2 + $0x14] sm:$0xf] %v329
  %362 = vst [vmem:[%s2 + $0x18] sm:$0xf] %v330
  %363 = vst [vmem:[%s2 + $0x1c] sm:$0xf] %v331
  %364 = vst [vmem:[%s2 + $0x20] sm:$0xf] %v332
  %365 = vst [vmem:[%s2 + $0x24] sm:$0xf] %v333
  %366 = vst [vmem:[%s2 + $0x28] sm:$0xf] %v334
  %367 = vst [vmem:[%s2 + $0x2c] sm:$0xf] %v335
  %368 = vst [vmem:[%s2 + $0x30] sm:$0xf] %v336
  %369 = vst [vmem:[%s2 + $0x34] sm:$0xf] %v337
  %370 = vst [vmem:[%s2 + $0x38] sm:$0xf] %v338
  %371 = vst [vmem:[%s2 + $0x3c] sm:$0xf] %v339
  %372 = vst [vmem:[%s2 + $0x40] sm:$0xf] %v340
  %373 = vst [vmem:[%s2 + $0x44] sm:$0xf] %v341
  %374 = vst [vmem:[%s2 + $0x48] sm:$0xf] %v342
  %375 = vst [vmem:[%s2 + $0x4c] sm:$0xf] %v343
  %376 = vst [vmem:[%s2 + $0x50] sm:$0xf] %v344
  %377 = vst [vmem:[%s2 + $0x54] sm:$0xf] %v345
  %378 = vst [vmem:[%s2 + $0x58] sm:$0xf] %v346
  %379 = vst [vmem:[%s2 + $0x5c] sm:$0xf] %v347
  %380 = vst [vmem:[%s2 + $0x60] sm:$0xf] %v348
  %381 = vst [vmem:[%s2 + $0x64] sm:$0xf] %v349
  %382 = vst [vmem:[%s2 + $0x68] sm:$0xf] %v350
  %383 = vst [vmem:[%s2 + $0x6c] sm:$0xf] %v351
  %384 = vst [vmem:[%s2 + $0x70] sm:$0xf] %v352
  %385 = vst [vmem:[%s2 + $0x74] sm:$0xf] %v353
  %386 = vst [vmem:[%s2 + $0x78] sm:$0xf] %v354
  %387 = vst [vmem:[%s2 + $0x7c] sm:$0xf] %v355
  // Predicated region
  $region10: #{full_generator_forward.24} parent=0 // pred_check
    _
  $region11: #{full_generator_forward.24} parent=0 // pred_check_branch
    %389 = sbr.rel (0) target = $region13
  $region12: #{full_generator_forward.24} parent=0 // pred_region
    _
  $region13: #{full_generator_forward.24} parent=0 // pred_fallthru
    _
  // Predicated region
  $region14: #{full_generator_forward.24} parent=0 // pred_check
    _
  $region15: #{full_generator_forward.24} parent=0 // pred_check_branch
    %391 = sbr.rel (0) target = $region17
  $region16: #{full_generator_forward.24} parent=0 // pred_region
    _
  $region17: #{full_generator_forward.24} parent=0 // pred_fallthru
    _

// kernel: full_generator_forward.41
$region0: #{full_generator_forward.41}
  #allocation0 [shape = 'u32[]', space=smem, size = 0x4, offset = 0x4, fixed_abs, tag = 'smem constant byte address 0x4 - core index']
  #allocation1 [shape = 'u32[72,128]{1,0:T(1,128)}', space=vmem, size = 0x9000, scoped, tag = 'internal scratch']
  #allocation2 [shape = 'f32[1,128]{1,0:T(1,128)}', space=vmem, size = 0x200, scoped, tag = 'scratch operand']
  %s0 = inlined_call_operand.vmem [shape: f32[112,128], index: 0, kind: input, shape index: {}]
  %s1 = inlined_call_operand.vmem [shape: f32[1,128], index: 1, kind: output, shape index: {}]
  %s2 = sld [smem:[#allocation0]]
  $region22: #{full_generator_forward.41} parent=0
    _
  %s4 = ssub.s32 1, %s2
  %s5 = scalar_select 0, %s4, %s2
  // Predicated region
  $region2: #{full_generator_forward.41} parent=0 // pred_check
    _
  $region3: #{full_generator_forward.41} parent=0 // pred_check_branch
    %7 = sbr.rel (0) target = $region5
  $region4: #{full_generator_forward.41} parent=0 // pred_region
    _
  $region5: #{full_generator_forward.41} parent=0 // pred_fallthru
    _
  %p8 = scmp.eq.s32.totalorder 0, 0
  // Predicated region
  $region6: #{full_generator_forward.41} parent=0 // pred_check
    %p9 = pneg %p8
  $region7: #{full_generator_forward.41} parent=0 // pred_check_branch
    %11 = sbr.rel (%p9) target = $region9
  $region8: #{full_generator_forward.41} parent=0 // pred_region
    %12 = vst [vmem:[#allocation2] sm:$0x1] 0.0
  $region9: #{full_generator_forward.41} parent=0 // pred_fallthru
    _
  %v13 = vld [vmem:[#allocation2] sm:$0x1]
  %v14 = vld [vmem:[%s0] sm:$0xff]
  %v15 = vld [vmem:[%s0 + $0x8] sm:$0xff]
  %v16 = vld [vmem:[%s0 + $0x10] sm:$0xff]
  %v17 = vld [vmem:[%s0 + $0x18] sm:$0xff]
  %v18 = vld [vmem:[%s0 + $0x20] sm:$0xff]
  %v19 = vld [vmem:[%s0 + $0x28] sm:$0xff]
  %v20 = vld [vmem:[%s0 + $0x30] sm:$0xff]
  %v21 = vld [vmem:[%s0 + $0x38] sm:$0xff]
  %v22 = vld [vmem:[%s0 + $0x40] sm:$0xff]
  %v23 = vld [vmem:[%s0 + $0x48] sm:$0xff]
  %v24 = vld [vmem:[%s0 + $0x50] sm:$0xff]
  %v25 = vld [vmem:[%s0 + $0x58] sm:$0xff]
  %v26 = vld [vmem:[%s0 + $0x60] sm:$0xff]
  %v27 = vld [vmem:[%s0 + $0x68] sm:$0xff]
  %v28 = vadd.f32 %v14, %v15
  %v29 = vadd.f32 %v28, %v16
  %v30 = vadd.f32 %v29, %v17
  %v31 = vadd.f32 %v30, %v18
  %v32 = vadd.f32 %v31, %v19
  %v33 = vadd.f32 %v32, %v20
  %v34 = vadd.f32 %v33, %v21
  %v35 = vadd.f32 %v34, %v22
  %v36 = vadd.f32 %v35, %v23
  %v37 = vadd.f32 %v36, %v24
  %v38 = vadd.f32 %v37, %v25
  %v39 = vadd.f32 %v38, %v26
  %v40 = vadd.f32 %v39, %v27
  %v41 = vrot.slane %v40, 4
  %v42 = vadd.f32 %v40, %v41
  %v43 = vrot.slane %v42, 2
  %v44 = vadd.f32 %v42, %v43
  %v45 = vrot.slane %v44, 1
  %v46 = vadd.f32 %v44, %v45
  %v47 = vadd.f32 %v13, %v46
  %48 = vst [vmem:[#allocation2] sm:$0x1] %v47
  // Predicated region
  $region10: #{full_generator_forward.41} parent=0 // pred_check
    %p49 = pneg %p8
  $region11: #{full_generator_forward.41} parent=0 // pred_check_branch
    %51 = sbr.rel (%p49) target = $region13
  $region12: #{full_generator_forward.41} parent=0 // pred_region
    %v52 = vld [vmem:[#allocation2] sm:$0x1]
    %53 = vst [vmem:[%s1] sm:$0x1] %v52
  $region13: #{full_generator_forward.41} parent=0 // pred_fallthru
    _
  // Predicated region
  $region14: #{full_generator_forward.41} parent=0 // pred_check
    _
  $region15: #{full_generator_forward.41} parent=0 // pred_check_branch
    %55 = sbr.rel (0) target = $region17
  $region16: #{full_generator_forward.41} parent=0 // pred_region
    _
  $region17: #{full_generator_forward.41} parent=0 // pred_fallthru
    _
  // Predicated region
  $region18: #{full_generator_forward.41} parent=0 // pred_check
    _
  $region19: #{full_generator_forward.41} parent=0 // pred_check_branch
    %57 = sbr.rel (0) target = $region21
  $region20: #{full_generator_forward.41} parent=0 // pred_region
    _
  $region21: #{full_generator_forward.41} parent=0 // pred_fallthru
    _

</llo_original>
